<compile_context>
chip_gen: v7x
topology: tpu7x:2x2x1
jax: 0.10.0
libtpu: 0.0.40
codegen_flags: <defaults>
</compile_context>

<pallas_src>
import numpy as np

import jax
import jax.numpy as jnp
from jax import lax
from jax.experimental import pallas as pl
from jax.experimental.pallas import tpu as pltpu


# ---------------------------------------------------------------------------
# Fused two-pass encoder kernel (grid = (pass, sample))
# ---------------------------------------------------------------------------
def _encoder_kernel(p1_ref, w1_ref, b1_ref,
                    g2_ref, w2_ref, b2_ref, gamma_ref, beta_ref,
                    g3_ref, w3_ref, b3_ref,
                    wl1_ref, bl1_ref, wl2_ref, bl2_ref,
                    o_ref, stat0_ref, stat1_ref):
    f32, bf16 = jnp.float32, jnp.bfloat16
    pass_idx = pl.program_id(0)
    b = pl.program_id(1)
    n_batch = pl.num_programs(1)

    def conv1_conv2():
        # Conv2d(1, 8, 3, stride=2, padding=1) + ReLU : 28 -> 14
        a1 = jnp.dot(p1_ref[0], w1_ref[...], preferred_element_type=f32) + b1_ref[...]
        a1 = jnp.maximum(a1, 0.0).astype(bf16)            # (196, 8); cast once for the MXU
        # Conv2d(8, 16, 3, stride=2, padding=1) : 14 -> 7 (pre-BatchNorm)
        y2 = None
        for t in range(9):
            pt = jnp.dot(g2_ref[t], a1, preferred_element_type=f32)    # (49, 8)  gather (bf16 MXU)
            ct = jnp.dot(pt, w2_ref[t], preferred_element_type=f32)    # (49, 16) tap weight (f32)
            y2 = ct if y2 is None else y2 + ct
        return y2 + b2_ref[...]                           # (49, 16)

    # --- Pass 0: accumulate BatchNorm batch statistics over all samples -----
    @pl.when(pass_idx == 0)
    def _pass0_stats():
        @pl.when(b == 0)
        def _init():
            stat0_ref[...] = jnp.zeros_like(stat0_ref)    # running sum
            stat1_ref[...] = jnp.zeros_like(stat1_ref)    # running sum of squares

        y2 = conv1_conv2()
        stat0_ref[...] += jnp.sum(y2, axis=0, keepdims=True)
        stat1_ref[...] += jnp.sum(y2 * y2, axis=0, keepdims=True)
        o_ref[0] = jnp.zeros(o_ref.shape[1:], f32)        # deterministic placeholder; pass 1 rewrites

    # --- Pass 1: finalize stats, normalize, conv3 + flatten + MLP -----------
    @pl.when(pass_idx == 1)
    def _pass1_forward():
        @pl.when(b == 0)
        def _finalize():
            cnt = 49.0 * n_batch                          # rows per sample * samples
            mean = stat0_ref[...] / cnt
            var = jnp.maximum(stat1_ref[...] / cnt - mean * mean, 0.0)
            stat0_ref[...] = mean                         # scratches now hold (mean, rstd)
            stat1_ref[...] = lax.rsqrt(var + 1e-5)

        y2 = conv1_conv2()                                # cheap recompute (sub-MFLOP)
        a2 = (y2 - stat0_ref[...]) * stat1_ref[...] * gamma_ref[...] + beta_ref[...]
        a2 = jnp.maximum(a2, 0.0).astype(bf16)            # (49, 16); VPU math in f32, cast for MXU

        # Conv2d(16, 32, 3, stride=2, padding=0) + ReLU : 7 -> 3
        y3 = None
        for t in range(9):
            pt = jnp.dot(g3_ref[t], a2, preferred_element_type=f32)    # (9, 16)
            ct = jnp.dot(pt, w3_ref[t], preferred_element_type=f32)    # (9, 32)
            y3 = ct if y3 is None else y3 + ct
        a3 = jnp.maximum(y3 + b3_ref[...], 0.0)           # (9, 32), rows = spatial p = h*3+w

        # Flatten (PyTorch (C,H,W) order folded into wl1) + Linear(288,128) + ReLU
        h = bl1_ref[...]                                  # (1, 128)
        for p in range(9):
            h = h + jnp.dot(a3[p:p + 1, :], wl1_ref[p], preferred_element_type=f32)
        h = jnp.maximum(h, 0.0)

        # Linear(128, e_dim), zero-padded to 128 lanes for a lane-dense store.
        o_ref[0] = jnp.dot(h, wl2_ref[...], preferred_element_type=f32) + bl2_ref[...]


# ---------------------------------------------------------------------------
# pallas_call wrapper
# ---------------------------------------------------------------------------
def encoder_pallas(patches1, prepped, g2, g3):
    n = patches1.shape[0]
    z2 = lambda p, b: (0, 0)
    z3 = lambda p, b: (0, 0, 0)

    args = (patches1, prepped["w1"], prepped["b1"],
            g2, prepped["w2"], prepped["b2"], prepped["gamma"], prepped["beta"],
            g3, prepped["w3"], prepped["b3"],
            prepped["wl1"], prepped["bl1"], prepped["wl2"], prepped["bl2"])

    in_specs = [
        pl.BlockSpec((1, 196, 9), lambda p, b: (b, 0, 0)),   # per-sample conv1 patches
        pl.BlockSpec((9, 8), z2),                            # w1
        pl.BlockSpec((1, 8), z2),                            # b1
        pl.BlockSpec((9, 49, 196), z3),                      # g2 (bf16, batch-independent)
        pl.BlockSpec((9, 8, 16), z3),                        # w2
        pl.BlockSpec((1, 16), z2),                           # b2
        pl.BlockSpec((1, 16), z2),                           # gamma
        pl.BlockSpec((1, 16), z2),                           # beta
        pl.BlockSpec((9, 9, 49), z3),                        # g3 (bf16, batch-independent)
        pl.BlockSpec((9, 16, 32), z3),                       # w3
        pl.BlockSpec((1, 32), z2),                           # b3
        pl.BlockSpec((9, 32, 128), z3),                      # wl1
        pl.BlockSpec((1, 128), z2),                          # bl1
        pl.BlockSpec((128, 128), z2),                        # wl2 (padded to 128 lanes)
        pl.BlockSpec((1, 128), z2),                          # bl2 (padded to 128 lanes)
    ]

    return pl.pallas_call(
        _encoder_kernel,
        out_shape=jax.ShapeDtypeStruct((n, 1, 128), jnp.float32),
        grid_spec=pltpu.PrefetchScalarGridSpec(
            num_scalar_prefetch=0,
            grid=(2, n),                                     # (pass, sample)
            in_specs=in_specs,
            out_specs=pl.BlockSpec((1, 1, 128), lambda p, b: (b, 0, 0)),
            scratch_shapes=[
                pltpu.VMEM((1, 16), jnp.float32),            # BN sum  -> mean
                pltpu.VMEM((1, 16), jnp.float32),            # BN sumsq -> rstd
            ],
        ),
        compiler_params=pltpu.CompilerParams(
            # Both axes sequential: the BN stats scratch is shared across grid steps.
            dimension_semantics=("arbitrary", "arbitrary"),
            vmem_limit_bytes=32 * 1024 * 1024,
        ),
    )(*args)


# ---------------------------------------------------------------------------
# Host / XLA-side glue
# ---------------------------------------------------------------------------
def _im2col_conv1(image):
    """image: (N, 1, 28, 28) NCHW -> (N, 196, 9) patch tensor, columns ordered (kh, kw)."""
    n = image.shape[0]
    x = jnp.pad(image[:, 0], ((0, 0), (1, 1), (1, 1)))          # (N, 30, 30)
    cols = [x[:, kh:kh + 28:2, kw:kw + 28:2]                    # (N, 14, 14) each
            for kh in range(3) for kw in range(3)]
    return jnp.stack(cols, axis=-1).reshape(n, 196, 9)


@jax.jit
def encoder_forward(prepped, g2, g3, image):
    patches1 = _im2col_conv1(image)                              # fused by XLA, same jit region
    out = encoder_pallas(patches1, prepped, g2, g3)              # (N, 1, 128)
    return out.reshape(image.shape[0], 128)


def build_gather_matrices():
    """Batch-independent 0/1 gather matrices (bf16) implementing the strided 3x3 patch
    extraction for conv2 (14->7, pad 1) and conv3 (7->3, pad 0) as per-tap matmuls."""
    g2 = np.zeros((9, 49, 196), np.float32)
    g3 = np.zeros((9, 9, 49), np.float32)
    for kh in range(3):
        for kw in range(3):
            t = kh * 3 + kw
            for ho in range(7):
                for wo in range(7):
                    h, w = 2 * ho + kh - 1, 2 * wo + kw - 1
                    if 0 <= h < 14 and 0 <= w < 14:
                        g2[t, ho * 7 + wo, h * 14 + w] = 1.0
            for ho in range(3):
                for wo in range(3):
                    h, w = 2 * ho + kh, 2 * wo + kw
                    g3[t, ho * 3 + wo, h * 7 + w] = 1.0
    return jnp.asarray(g2, jnp.bfloat16), jnp.asarray(g3, jnp.bfloat16)


def prepare_params(params):
    """One-time host-side repack of the PyTorch-layout parameters into kernel layout."""
    e_dim = params["w_l2"].shape[0]
    assert e_dim <= 128
    return dict(
        w1=params["w_c1"].reshape(8, 9).T,                                  # (9, 8)
        b1=params["b_c1"].reshape(1, 8),
        w2=jnp.transpose(params["w_c2"], (2, 3, 1, 0)).reshape(9, 8, 16),   # (t, ci, co)
        b2=params["b_c2"].reshape(1, 16),
        gamma=params["gamma"].reshape(1, 16),
        beta=params["beta"].reshape(1, 16),
        w3=jnp.transpose(params["w_c3"], (2, 3, 1, 0)).reshape(9, 16, 32),  # (t, ci, co)
        b3=params["b_c3"].reshape(1, 32),
        # Linear(288,128): permute input columns so the PyTorch (C,H,W) flatten is
        # absorbed into the weight; wl1[p, c, k] = w_l1[k, c*9 + p].
        wl1=jnp.transpose(params["w_l1"].reshape(128, 32, 9), (2, 1, 0)),   # (9, 32, 128)
        bl1=params["b_l1"].reshape(1, 128),
        # Linear(128, e_dim) zero-padded to 128 output lanes (lane-dense store).
        wl2=jnp.pad(params["w_l2"].T, ((0, 0), (0, 128 - e_dim))),          # (128, 128)
        bl2=jnp.pad(params["b_l2"].reshape(1, -1), ((0, 0), (0, 128 - e_dim))),
    )


def init_params(key, encoded_space_dim):
    keys = jax.random.split(key, 10)

    def u(k, shape, fan_in):
        bound = 1.0 / jnp.sqrt(jnp.float32(fan_in))
        return jax.random.uniform(k, shape, jnp.float32, -bound, bound)

    return dict(
        w_c1=u(keys[0], (8, 1, 3, 3), 1 * 9),    b_c1=u(keys[1], (8,), 1 * 9),
        w_c2=u(keys[2], (16, 8, 3, 3), 8 * 9),   b_c2=u(keys[3], (16,), 8 * 9),
        w_c3=u(keys[4], (32, 16, 3, 3), 16 * 9), b_c3=u(keys[5], (32,), 16 * 9),
        gamma=jnp.ones((16,), jnp.float32),      beta=jnp.zeros((16,), jnp.float32),
        w_l1=u(keys[6], (128, 288), 288),        b_l1=u(keys[7], (128,), 288),
        w_l2=u(keys[8], (encoded_space_dim, 128), 128),
        b_l2=u(keys[9], (encoded_space_dim,), 128),
    )


def encoder_reference(params, image):
    """Plain-XLA reference mirroring the PyTorch module (training-mode BatchNorm)."""
    hp = lax.Precision.HIGHEST
    dn = ("NCHW", "OIHW", "NCHW")

    def conv(x, w, b, pad):
        y = lax.conv_general_dilated(x, w, (2, 2), ((pad, pad), (pad, pad)),
                                     dimension_numbers=dn, precision=hp)
        return y + b[None, :, None, None]

    x = jnp.maximum(conv(image, params["w_c1"], params["b_c1"], 1), 0.0)
    x = conv(x, params["w_c2"], params["b_c2"], 1)
    mean = jnp.mean(x, axis=(0, 2, 3), keepdims=True)
    var = jnp.mean((x - mean) ** 2, axis=(0, 2, 3), keepdims=True)
    x = (x - mean) / jnp.sqrt(var + 1e-5)
    x = x * params["gamma"][None, :, None, None] + params["beta"][None, :, None, None]
    x = jnp.maximum(x, 0.0)
    x = jnp.maximum(conv(x, params["w_c3"], params["b_c3"], 0), 0.0)
    flat = x.reshape(x.shape[0], -1)
    h = jnp.maximum(jnp.dot(flat, params["w_l1"].T, precision=hp) + params["b_l1"], 0.0)
    return jnp.dot(h, params["w_l2"].T, precision=hp) + params["b_l2"]


if __name__ == "__main__":
    encoded_space_dim = 16
    batch = 2
    key = jax.random.PRNGKey(0)
    k_img, k_par = jax.random.split(key)

    image = jax.random.normal(k_img, (batch, 1, 28, 28), dtype=jnp.float32)
    params = init_params(k_par, encoded_space_dim)

    prepped = prepare_params(params)          # one-time weight repack
    g2, g3 = build_gather_matrices()          # batch-independent geometry constants

    out_padded = jax.block_until_ready(encoder_forward(prepped, g2, g3, image))
    out = out_padded[:, :encoded_space_dim]
    assert out.shape == (batch, encoded_space_dim), out.shape

    ref = jax.block_until_ready(encoder_reference(params, image))
    np.testing.assert_allclose(np.asarray(out), np.asarray(ref), rtol=2e-2, atol=2e-2)

    print("KERNEL_OK")
</pallas_src>

<mosaic_0001>
module attributes {stable_mosaic.version = 11 : i64} {
  func.func @_encoder_kernel(%arg0: i32, %arg1: i32, %arg2: memref<1x196x9xf32, #tpu.memory_space<vmem>>, %arg3: memref<9x8xf32, #tpu.memory_space<vmem>>, %arg4: memref<1x8xf32, #tpu.memory_space<vmem>>, %arg5: memref<9x49x196xbf16, #tpu.memory_space<vmem>>, %arg6: memref<9x8x16xf32, #tpu.memory_space<vmem>>, %arg7: memref<1x16xf32, #tpu.memory_space<vmem>>, %arg8: memref<1x16xf32, #tpu.memory_space<vmem>>, %arg9: memref<1x16xf32, #tpu.memory_space<vmem>>, %arg10: memref<9x9x49xbf16, #tpu.memory_space<vmem>>, %arg11: memref<9x16x32xf32, #tpu.memory_space<vmem>>, %arg12: memref<1x32xf32, #tpu.memory_space<vmem>>, %arg13: memref<9x32x128xf32, #tpu.memory_space<vmem>>, %arg14: memref<1x128xf32, #tpu.memory_space<vmem>>, %arg15: memref<128x128xf32, #tpu.memory_space<vmem>>, %arg16: memref<1x128xf32, #tpu.memory_space<vmem>>, %arg17: memref<1x1x128xf32, #tpu.memory_space<vmem>>, %arg18: memref<1x16xf32, #tpu.memory_space<vmem>>, %arg19: memref<1x16xf32, #tpu.memory_space<vmem>>) attributes {dimension_semantics = [#tpu.dimension_semantics<arbitrary>, #tpu.dimension_semantics<arbitrary>], iteration_bounds = array<i64: 2, 2>, scalar_prefetch = 0 : i64, scratch_operands = 2 : i64, tpu.core_type = #tpu.core_type<tc>, window_params = [{transform_indices = @transform_0, window_bounds = array<i64: 1, 196, 9>}, {pipeline_mode = #tpu.pipeline_mode<synchronous>, transform_indices = @transform_1, window_bounds = array<i64: 9, 8>}, {pipeline_mode = #tpu.pipeline_mode<synchronous>, transform_indices = @transform_2, window_bounds = array<i64: 1, 8>}, {pipeline_mode = #tpu.pipeline_mode<synchronous>, transform_indices = @transform_3, window_bounds = array<i64: 9, 49, 196>}, {pipeline_mode = #tpu.pipeline_mode<synchronous>, transform_indices = @transform_4, window_bounds = array<i64: 9, 8, 16>}, {pipeline_mode = #tpu.pipeline_mode<synchronous>, transform_indices = @transform_5, window_bounds = array<i64: 1, 16>}, {pipeline_mode = #tpu.pipeline_mode<synchronous>, transform_indices = @transform_6, window_bounds = array<i64: 1, 16>}, {pipeline_mode = #tpu.pipeline_mode<synchronous>, transform_indices = @transform_7, window_bounds = array<i64: 1, 16>}, {pipeline_mode = #tpu.pipeline_mode<synchronous>, transform_indices = @transform_8, window_bounds = array<i64: 9, 9, 49>}, {pipeline_mode = #tpu.pipeline_mode<synchronous>, transform_indices = @transform_9, window_bounds = array<i64: 9, 16, 32>}, {pipeline_mode = #tpu.pipeline_mode<synchronous>, transform_indices = @transform_10, window_bounds = array<i64: 1, 32>}, {pipeline_mode = #tpu.pipeline_mode<synchronous>, transform_indices = @transform_11, window_bounds = array<i64: 9, 32, 128>}, {pipeline_mode = #tpu.pipeline_mode<synchronous>, transform_indices = @transform_12, window_bounds = array<i64: 1, 128>}, {pipeline_mode = #tpu.pipeline_mode<synchronous>, transform_indices = @transform_13, window_bounds = array<i64: 128, 128>}, {pipeline_mode = #tpu.pipeline_mode<synchronous>, transform_indices = @transform_14, window_bounds = array<i64: 1, 128>}, {transform_indices = @transform_15, window_bounds = array<i64: 1, 1, 128>}]} {
    %c0_i32 = arith.constant 0 : i32
    %0 = arith.cmpi eq, %arg0, %c0_i32 : i32
    %1 = arith.extui %0 : i1 to i32
    %c0_i32_0 = arith.constant 0 : i32
    %2 = arith.cmpi ne, %1, %c0_i32_0 : i32
    scf.if %2 {
      %c0_i32_2 = arith.constant 0 : i32
      %6 = arith.cmpi eq, %arg1, %c0_i32_2 : i32
      %7 = arith.extui %6 : i1 to i32
      %c0_i32_3 = arith.constant 0 : i32
      %8 = arith.cmpi ne, %7, %c0_i32_3 : i32
      scf.if %8 {
        %cst_91 = arith.constant 0.000000e+00 : f32
        %99 = vector.broadcast %cst_91 : f32 to vector<1x16xf32>
        %c0_92 = arith.constant 0 : index
        %c0_93 = arith.constant 0 : index
        %100 = vector.load %arg18[%c0_92, %c0_93] : memref<1x16xf32, #tpu.memory_space<vmem>>, vector<1x16xf32>
        tpu.vector_store %arg18[%c0_92, %c0_93], %99 {strides = array<i32>} : memref<1x16xf32, #tpu.memory_space<vmem>>, vector<1x16xf32>,
        %cst_94 = arith.constant 0.000000e+00 : f32
        %101 = vector.broadcast %cst_94 : f32 to vector<1x16xf32>
        %c0_95 = arith.constant 0 : index
        %c0_96 = arith.constant 0 : index
        %102 = vector.load %arg19[%c0_95, %c0_96] : memref<1x16xf32, #tpu.memory_space<vmem>>, vector<1x16xf32>
        tpu.vector_store %arg19[%c0_95, %c0_96], %101 {strides = array<i32>} : memref<1x16xf32, #tpu.memory_space<vmem>>, vector<1x16xf32>,
      } else {
      }
      %c0 = arith.constant 0 : index
      %c0_4 = arith.constant 0 : index
      %c0_5 = arith.constant 0 : index
      %9 = vector.load %arg2[%c0, %c0_4, %c0_5] : memref<1x196x9xf32, #tpu.memory_space<vmem>>, vector<1x196x9xf32>
      %10 = vector.shape_cast %9 : vector<1x196x9xf32> to vector<196x9xf32>
      %c0_6 = arith.constant 0 : index
      %c0_7 = arith.constant 0 : index
      %11 = vector.load %arg3[%c0_6, %c0_7] : memref<9x8xf32, #tpu.memory_space<vmem>>, vector<9x8xf32>
      %cst = arith.constant dense<0.000000e+00> : vector<196x8xf32>
      %12 = tpu.matmul %10, %11, %cst {dimension_numbers = #tpu.dot_dimension_numbers<[1], [0], [0], [1], [0, 0, 1, 1], [], []>} : vector<196x9xf32>, vector<9x8xf32>, vector<196x8xf32> -> vector<196x8xf32>
      %c0_8 = arith.constant 0 : index
      %c0_9 = arith.constant 0 : index
      %13 = vector.load %arg4[%c0_8, %c0_9] : memref<1x8xf32, #tpu.memory_space<vmem>>, vector<1x8xf32>
      %14 = vector.broadcast %13 : vector<1x8xf32> to vector<196x8xf32>
      %15 = arith.addf %12, %14 : vector<196x8xf32>
      %cst_10 = arith.constant 0.000000e+00 : f32
      %16 = vector.broadcast %cst_10 : f32 to vector<196x8xf32>
      %17 = arith.maximumf %15, %16 : vector<196x8xf32>
      %18 = arith.truncf %17 : vector<196x8xf32> to vector<196x8xbf16>
      %c0_11 = arith.constant 0 : index
      %c0_12 = arith.constant 0 : index
      %c0_13 = arith.constant 0 : index
      %19 = vector.load %arg5[%c0_11, %c0_12, %c0_13] : memref<9x49x196xbf16, #tpu.memory_space<vmem>>, vector<1x49x196xbf16>
      %20 = vector.shape_cast %19 : vector<1x49x196xbf16> to vector<49x196xbf16>
      %cst_14 = arith.constant dense<0.000000e+00> : vector<49x8xf32>
      %21 = tpu.matmul %20, %18, %cst_14 {dimension_numbers = #tpu.dot_dimension_numbers<[1], [0], [0], [1], [0, 0, 1, 1], [], []>} : vector<49x196xbf16>, vector<196x8xbf16>, vector<49x8xf32> -> vector<49x8xf32>
      %c0_15 = arith.constant 0 : index
      %c0_16 = arith.constant 0 : index
      %c0_17 = arith.constant 0 : index
      %22 = vector.load %arg6[%c0_15, %c0_16, %c0_17] : memref<9x8x16xf32, #tpu.memory_space<vmem>>, vector<1x8x16xf32>
      %23 = vector.shape_cast %22 : vector<1x8x16xf32> to vector<8x16xf32>
      %cst_18 = arith.constant dense<0.000000e+00> : vector<49x16xf32>
      %24 = tpu.matmul %21, %23, %cst_18 {dimension_numbers = #tpu.dot_dimension_numbers<[1], [0], [0], [1], [0, 0, 1, 1], [], []>} : vector<49x8xf32>, vector<8x16xf32>, vector<49x16xf32> -> vector<49x16xf32>
      %c1 = arith.constant 1 : index
      %c0_19 = arith.constant 0 : index
      %c0_20 = arith.constant 0 : index
      %25 = vector.load %arg5[%c1, %c0_19, %c0_20] : memref<9x49x196xbf16, #tpu.memory_space<vmem>>, vector<1x49x196xbf16>
      %26 = vector.shape_cast %25 : vector<1x49x196xbf16> to vector<49x196xbf16>
      %cst_21 = arith.constant dense<0.000000e+00> : vector<49x8xf32>
      %27 = tpu.matmul %26, %18, %cst_21 {dimension_numbers = #tpu.dot_dimension_numbers<[1], [0], [0], [1], [0, 0, 1, 1], [], []>} : vector<49x196xbf16>, vector<196x8xbf16>, vector<49x8xf32> -> vector<49x8xf32>
      %c1_22 = arith.constant 1 : index
      %c0_23 = arith.constant 0 : index
      %c0_24 = arith.constant 0 : index
      %28 = vector.load %arg6[%c1_22, %c0_23, %c0_24] : memref<9x8x16xf32, #tpu.memory_space<vmem>>, vector<1x8x16xf32>
      %29 = vector.shape_cast %28 : vector<1x8x16xf32> to vector<8x16xf32>
      %cst_25 = arith.constant dense<0.000000e+00> : vector<49x16xf32>
      %30 = tpu.matmul %27, %29, %cst_25 {dimension_numbers = #tpu.dot_dimension_numbers<[1], [0], [0], [1], [0, 0, 1, 1], [], []>} : vector<49x8xf32>, vector<8x16xf32>, vector<49x16xf32> -> vector<49x16xf32>
      %31 = arith.addf %24, %30 : vector<49x16xf32>
      %c2 = arith.constant 2 : index
      %c0_26 = arith.constant 0 : index
      %c0_27 = arith.constant 0 : index
      %32 = vector.load %arg5[%c2, %c0_26, %c0_27] : memref<9x49x196xbf16, #tpu.memory_space<vmem>>, vector<1x49x196xbf16>
      %33 = vector.shape_cast %32 : vector<1x49x196xbf16> to vector<49x196xbf16>
      %cst_28 = arith.constant dense<0.000000e+00> : vector<49x8xf32>
      %34 = tpu.matmul %33, %18, %cst_28 {dimension_numbers = #tpu.dot_dimension_numbers<[1], [0], [0], [1], [0, 0, 1, 1], [], []>} : vector<49x196xbf16>, vector<196x8xbf16>, vector<49x8xf32> -> vector<49x8xf32>
      %c2_29 = arith.constant 2 : index
      %c0_30 = arith.constant 0 : index
      %c0_31 = arith.constant 0 : index
      %35 = vector.load %arg6[%c2_29, %c0_30, %c0_31] : memref<9x8x16xf32, #tpu.memory_space<vmem>>, vector<1x8x16xf32>
      %36 = vector.shape_cast %35 : vector<1x8x16xf32> to vector<8x16xf32>
      %cst_32 = arith.constant dense<0.000000e+00> : vector<49x16xf32>
      %37 = tpu.matmul %34, %36, %cst_32 {dimension_numbers = #tpu.dot_dimension_numbers<[1], [0], [0], [1], [0, 0, 1, 1], [], []>} : vector<49x8xf32>, vector<8x16xf32>, vector<49x16xf32> -> vector<49x16xf32>
      %38 = arith.addf %31, %37 : vector<49x16xf32>
      %c3 = arith.constant 3 : index
      %c0_33 = arith.constant 0 : index
      %c0_34 = arith.constant 0 : index
      %39 = vector.load %arg5[%c3, %c0_33, %c0_34] : memref<9x49x196xbf16, #tpu.memory_space<vmem>>, vector<1x49x196xbf16>
      %40 = vector.shape_cast %39 : vector<1x49x196xbf16> to vector<49x196xbf16>
      %cst_35 = arith.constant dense<0.000000e+00> : vector<49x8xf32>
      %41 = tpu.matmul %40, %18, %cst_35 {dimension_numbers = #tpu.dot_dimension_numbers<[1], [0], [0], [1], [0, 0, 1, 1], [], []>} : vector<49x196xbf16>, vector<196x8xbf16>, vector<49x8xf32> -> vector<49x8xf32>
      %c3_36 = arith.constant 3 : index
      %c0_37 = arith.constant 0 : index
      %c0_38 = arith.constant 0 : index
      %42 = vector.load %arg6[%c3_36, %c0_37, %c0_38] : memref<9x8x16xf32, #tpu.memory_space<vmem>>, vector<1x8x16xf32>
      %43 = vector.shape_cast %42 : vector<1x8x16xf32> to vector<8x16xf32>
      %cst_39 = arith.constant dense<0.000000e+00> : vector<49x16xf32>
      %44 = tpu.matmul %41, %43, %cst_39 {dimension_numbers = #tpu.dot_dimension_numbers<[1], [0], [0], [1], [0, 0, 1, 1], [], []>} : vector<49x8xf32>, vector<8x16xf32>, vector<49x16xf32> -> vector<49x16xf32>
      %45 = arith.addf %38, %44 : vector<49x16xf32>
      %c4 = arith.constant 4 : index
      %c0_40 = arith.constant 0 : index
      %c0_41 = arith.constant 0 : index
      %46 = vector.load %arg5[%c4, %c0_40, %c0_41] : memref<9x49x196xbf16, #tpu.memory_space<vmem>>, vector<1x49x196xbf16>
      %47 = vector.shape_cast %46 : vector<1x49x196xbf16> to vector<49x196xbf16>
      %cst_42 = arith.constant dense<0.000000e+00> : vector<49x8xf32>
      %48 = tpu.matmul %47, %18, %cst_42 {dimension_numbers = #tpu.dot_dimension_numbers<[1], [0], [0], [1], [0, 0, 1, 1], [], []>} : vector<49x196xbf16>, vector<196x8xbf16>, vector<49x8xf32> -> vector<49x8xf32>
      %c4_43 = arith.constant 4 : index
      %c0_44 = arith.constant 0 : index
      %c0_45 = arith.constant 0 : index
      %49 = vector.load %arg6[%c4_43, %c0_44, %c0_45] : memref<9x8x16xf32, #tpu.memory_space<vmem>>, vector<1x8x16xf32>
      %50 = vector.shape_cast %49 : vector<1x8x16xf32> to vector<8x16xf32>
      %cst_46 = arith.constant dense<0.000000e+00> : vector<49x16xf32>
      %51 = tpu.matmul %48, %50, %cst_46 {dimension_numbers = #tpu.dot_dimension_numbers<[1], [0], [0], [1], [0, 0, 1, 1], [], []>} : vector<49x8xf32>, vector<8x16xf32>, vector<49x16xf32> -> vector<49x16xf32>
      %52 = arith.addf %45, %51 : vector<49x16xf32>
      %c5 = arith.constant 5 : index
      %c0_47 = arith.constant 0 : index
      %c0_48 = arith.constant 0 : index
      %53 = vector.load %arg5[%c5, %c0_47, %c0_48] : memref<9x49x196xbf16, #tpu.memory_space<vmem>>, vector<1x49x196xbf16>
      %54 = vector.shape_cast %53 : vector<1x49x196xbf16> to vector<49x196xbf16>
      %cst_49 = arith.constant dense<0.000000e+00> : vector<49x8xf32>
      %55 = tpu.matmul %54, %18, %cst_49 {dimension_numbers = #tpu.dot_dimension_numbers<[1], [0], [0], [1], [0, 0, 1, 1], [], []>} : vector<49x196xbf16>, vector<196x8xbf16>, vector<49x8xf32> -> vector<49x8xf32>
      %c5_50 = arith.constant 5 : index
      %c0_51 = arith.constant 0 : index
      %c0_52 = arith.constant 0 : index
      %56 = vector.load %arg6[%c5_50, %c0_51, %c0_52] : memref<9x8x16xf32, #tpu.memory_space<vmem>>, vector<1x8x16xf32>
      %57 = vector.shape_cast %56 : vector<1x8x16xf32> to vector<8x16xf32>
      %cst_53 = arith.constant dense<0.000000e+00> : vector<49x16xf32>
      %58 = tpu.matmul %55, %57, %cst_53 {dimension_numbers = #tpu.dot_dimension_numbers<[1], [0], [0], [1], [0, 0, 1, 1], [], []>} : vector<49x8xf32>, vector<8x16xf32>, vector<49x16xf32> -> vector<49x16xf32>
      %59 = arith.addf %52, %58 : vector<49x16xf32>
      %c6 = arith.constant 6 : index
      %c0_54 = arith.constant 0 : index
      %c0_55 = arith.constant 0 : index
      %60 = vector.load %arg5[%c6, %c0_54, %c0_55] : memref<9x49x196xbf16, #tpu.memory_space<vmem>>, vector<1x49x196xbf16>
      %61 = vector.shape_cast %60 : vector<1x49x196xbf16> to vector<49x196xbf16>
      %cst_56 = arith.constant dense<0.000000e+00> : vector<49x8xf32>
      %62 = tpu.matmul %61, %18, %cst_56 {dimension_numbers = #tpu.dot_dimension_numbers<[1], [0], [0], [1], [0, 0, 1, 1], [], []>} : vector<49x196xbf16>, vector<196x8xbf16>, vector<49x8xf32> -> vector<49x8xf32>
      %c6_57 = arith.constant 6 : index
      %c0_58 = arith.constant 0 : index
      %c0_59 = arith.constant 0 : index
      %63 = vector.load %arg6[%c6_57, %c0_58, %c0_59] : memref<9x8x16xf32, #tpu.memory_space<vmem>>, vector<1x8x16xf32>
      %64 = vector.shape_cast %63 : vector<1x8x16xf32> to vector<8x16xf32>
      %cst_60 = arith.constant dense<0.000000e+00> : vector<49x16xf32>
      %65 = tpu.matmul %62, %64, %cst_60 {dimension_numbers = #tpu.dot_dimension_numbers<[1], [0], [0], [1], [0, 0, 1, 1], [], []>} : vector<49x8xf32>, vector<8x16xf32>, vector<49x16xf32> -> vector<49x16xf32>
      %66 = arith.addf %59, %65 : vector<49x16xf32>
      %c7 = arith.constant 7 : index
      %c0_61 = arith.constant 0 : index
      %c0_62 = arith.constant 0 : index
      %67 = vector.load %arg5[%c7, %c0_61, %c0_62] : memref<9x49x196xbf16, #tpu.memory_space<vmem>>, vector<1x49x196xbf16>
      %68 = vector.shape_cast %67 : vector<1x49x196xbf16> to vector<49x196xbf16>
      %cst_63 = arith.constant dense<0.000000e+00> : vector<49x8xf32>
      %69 = tpu.matmul %68, %18, %cst_63 {dimension_numbers = #tpu.dot_dimension_numbers<[1], [0], [0], [1], [0, 0, 1, 1], [], []>} : vector<49x196xbf16>, vector<196x8xbf16>, vector<49x8xf32> -> vector<49x8xf32>
      %c7_64 = arith.constant 7 : index
      %c0_65 = arith.constant 0 : index
      %c0_66 = arith.constant 0 : index
      %70 = vector.load %arg6[%c7_64, %c0_65, %c0_66] : memref<9x8x16xf32, #tpu.memory_space<vmem>>, vector<1x8x16xf32>
      %71 = vector.shape_cast %70 : vector<1x8x16xf32> to vector<8x16xf32>
      %cst_67 = arith.constant dense<0.000000e+00> : vector<49x16xf32>
      %72 = tpu.matmul %69, %71, %cst_67 {dimension_numbers = #tpu.dot_dimension_numbers<[1], [0], [0], [1], [0, 0, 1, 1], [], []>} : vector<49x8xf32>, vector<8x16xf32>, vector<49x16xf32> -> vector<49x16xf32>
      %73 = arith.addf %66, %72 : vector<49x16xf32>
      %c8 = arith.constant 8 : index
      %c0_68 = arith.constant 0 : index
      %c0_69 = arith.constant 0 : index
      %74 = vector.load %arg5[%c8, %c0_68, %c0_69] : memref<9x49x196xbf16, #tpu.memory_space<vmem>>, vector<1x49x196xbf16>
      %75 = vector.shape_cast %74 : vector<1x49x196xbf16> to vector<49x196xbf16>
      %cst_70 = arith.constant dense<0.000000e+00> : vector<49x8xf32>
      %76 = tpu.matmul %75, %18, %cst_70 {dimension_numbers = #tpu.dot_dimension_numbers<[1], [0], [0], [1], [0, 0, 1, 1], [], []>} : vector<49x196xbf16>, vector<196x8xbf16>, vector<49x8xf32> -> vector<49x8xf32>
      %c8_71 = arith.constant 8 : index
      %c0_72 = arith.constant 0 : index
      %c0_73 = arith.constant 0 : index
      %77 = vector.load %arg6[%c8_71, %c0_72, %c0_73] : memref<9x8x16xf32, #tpu.memory_space<vmem>>, vector<1x8x16xf32>
      %78 = vector.shape_cast %77 : vector<1x8x16xf32> to vector<8x16xf32>
      %cst_74 = arith.constant dense<0.000000e+00> : vector<49x16xf32>
      %79 = tpu.matmul %76, %78, %cst_74 {dimension_numbers = #tpu.dot_dimension_numbers<[1], [0], [0], [1], [0, 0, 1, 1], [], []>} : vector<49x8xf32>, vector<8x16xf32>, vector<49x16xf32> -> vector<49x16xf32>
      %80 = arith.addf %73, %79 : vector<49x16xf32>
      %c0_75 = arith.constant 0 : index
      %c0_76 = arith.constant 0 : index
      %81 = vector.load %arg7[%c0_75, %c0_76] : memref<1x16xf32, #tpu.memory_space<vmem>>, vector<1x16xf32>
      %82 = vector.broadcast %81 : vector<1x16xf32> to vector<49x16xf32>
      %83 = arith.addf %80, %82 : vector<49x16xf32>
      %c0_77 = arith.constant 0 : index
      %c0_78 = arith.constant 0 : index
      %84 = vector.load %arg18[%c0_77, %c0_78] : memref<1x16xf32, #tpu.memory_space<vmem>>, vector<1x16xf32>
      %cst_79 = arith.constant dense<0.000000e+00> : vector<16xf32>
      %85 = vector.multi_reduction <add>, %83, %cst_79 [0] : vector<49x16xf32> to vector<16xf32>
      %86 = vector.shape_cast %85 : vector<16xf32> to vector<1x16xf32>
      %87 = arith.addf %84, %86 : vector<1x16xf32>
      %c0_80 = arith.constant 0 : index
      %c0_81 = arith.constant 0 : index
      %88 = vector.load %arg18[%c0_80, %c0_81] : memref<1x16xf32, #tpu.memory_space<vmem>>, vector<1x16xf32>
      tpu.vector_store %arg18[%c0_80, %c0_81], %87 {strides = array<i32>} : memref<1x16xf32, #tpu.memory_space<vmem>>, vector<1x16xf32>,
      %c0_82 = arith.constant 0 : index
      %c0_83 = arith.constant 0 : index
      %89 = vector.load %arg19[%c0_82, %c0_83] : memref<1x16xf32, #tpu.memory_space<vmem>>, vector<1x16xf32>
      %90 = arith.mulf %83, %83 : vector<49x16xf32>
      %cst_84 = arith.constant dense<0.000000e+00> : vector<16xf32>
      %91 = vector.multi_reduction <add>, %90, %cst_84 [0] : vector<49x16xf32> to vector<16xf32>
      %92 = vector.shape_cast %91 : vector<16xf32> to vector<1x16xf32>
      %93 = arith.addf %89, %92 : vector<1x16xf32>
      %c0_85 = arith.constant 0 : index
      %c0_86 = arith.constant 0 : index
      %94 = vector.load %arg19[%c0_85, %c0_86] : memref<1x16xf32, #tpu.memory_space<vmem>>, vector<1x16xf32>
      tpu.vector_store %arg19[%c0_85, %c0_86], %93 {strides = array<i32>} : memref<1x16xf32, #tpu.memory_space<vmem>>, vector<1x16xf32>,
      %cst_87 = arith.constant 0.000000e+00 : f32
      %95 = vector.broadcast %cst_87 : f32 to vector<1x128xf32>
      %c0_88 = arith.constant 0 : index
      %c0_89 = arith.constant 0 : index
      %c0_90 = arith.constant 0 : index
      %96 = vector.load %arg17[%c0_88, %c0_89, %c0_90] : memref<1x1x128xf32, #tpu.memory_space<vmem>>, vector<1x1x128xf32>
      %97 = vector.shape_cast %96 : vector<1x1x128xf32> to vector<1x128xf32>
      %98 = vector.shape_cast %95 : vector<1x128xf32> to vector<1x1x128xf32>
      tpu.vector_store %arg17[%c0_88, %c0_89, %c0_90], %98 {strides = array<i32>} : memref<1x1x128xf32, #tpu.memory_space<vmem>>, vector<1x1x128xf32>,
    } else {
    }
    %c1_i32 = arith.constant 1 : i32
    %3 = arith.cmpi eq, %arg0, %c1_i32 : i32
    %4 = arith.extui %3 : i1 to i32
    %c0_i32_1 = arith.constant 0 : i32
    %5 = arith.cmpi ne, %4, %c0_i32_1 : i32
    scf.if %5 {
      %c0_i32_2 = arith.constant 0 : i32
      %6 = arith.cmpi eq, %arg1, %c0_i32_2 : i32
      %7 = arith.extui %6 : i1 to i32
      %c0_i32_3 = arith.constant 0 : i32
      %8 = arith.cmpi ne, %7, %c0_i32_3 : i32
      scf.if %8 {
        %c0_208 = arith.constant 0 : index
        %c0_209 = arith.constant 0 : index
        %221 = vector.load %arg18[%c0_208, %c0_209] : memref<1x16xf32, #tpu.memory_space<vmem>>, vector<1x16xf32>
        %cst_210 = arith.constant 9.800000e+01 : f32
        %222 = vector.broadcast %cst_210 : f32 to vector<1x16xf32>
        %223 = arith.divf %221, %222 : vector<1x16xf32>
        %c0_211 = arith.constant 0 : index
        %c0_212 = arith.constant 0 : index
        %224 = vector.load %arg19[%c0_211, %c0_212] : memref<1x16xf32, #tpu.memory_space<vmem>>, vector<1x16xf32>
        %cst_213 = arith.constant 9.800000e+01 : f32
        %225 = vector.broadcast %cst_213 : f32 to vector<1x16xf32>
        %226 = arith.divf %224, %225 : vector<1x16xf32>
        %227 = arith.mulf %223, %223 : vector<1x16xf32>
        %228 = arith.subf %226, %227 : vector<1x16xf32>
        %cst_214 = arith.constant 0.000000e+00 : f32
        %229 = vector.broadcast %cst_214 : f32 to vector<1x16xf32>
        %230 = arith.maximumf %228, %229 : vector<1x16xf32>
        %c0_215 = arith.constant 0 : index
        %c0_216 = arith.constant 0 : index
        %231 = vector.load %arg18[%c0_215, %c0_216] : memref<1x16xf32, #tpu.memory_space<vmem>>, vector<1x16xf32>
        tpu.vector_store %arg18[%c0_215, %c0_216], %223 {strides = array<i32>} : memref<1x16xf32, #tpu.memory_space<vmem>>, vector<1x16xf32>,
        %cst_217 = arith.constant 9.99999974E-6 : f32
        %232 = vector.broadcast %cst_217 : f32 to vector<1x16xf32>
        %233 = arith.addf %230, %232 : vector<1x16xf32>
        %234 = math.rsqrt %233 : vector<1x16xf32>
        %c0_218 = arith.constant 0 : index
        %c0_219 = arith.constant 0 : index
        %235 = vector.load %arg19[%c0_218, %c0_219] : memref<1x16xf32, #tpu.memory_space<vmem>>, vector<1x16xf32>
        tpu.vector_store %arg19[%c0_218, %c0_219], %234 {strides = array<i32>} : memref<1x16xf32, #tpu.memory_space<vmem>>, vector<1x16xf32>,
      } else {
      }
      %c0 = arith.constant 0 : index
      %c0_4 = arith.constant 0 : index
      %c0_5 = arith.constant 0 : index
      %9 = vector.load %arg2[%c0, %c0_4, %c0_5] : memref<1x196x9xf32, #tpu.memory_space<vmem>>, vector<1x196x9xf32>
      %10 = vector.shape_cast %9 : vector<1x196x9xf32> to vector<196x9xf32>
      %c0_6 = arith.constant 0 : index
      %c0_7 = arith.constant 0 : index
      %11 = vector.load %arg3[%c0_6, %c0_7] : memref<9x8xf32, #tpu.memory_space<vmem>>, vector<9x8xf32>
      %cst = arith.constant dense<0.000000e+00> : vector<196x8xf32>
      %12 = tpu.matmul %10, %11, %cst {dimension_numbers = #tpu.dot_dimension_numbers<[1], [0], [0], [1], [0, 0, 1, 1], [], []>} : vector<196x9xf32>, vector<9x8xf32>, vector<196x8xf32> -> vector<196x8xf32>
      %c0_8 = arith.constant 0 : index
      %c0_9 = arith.constant 0 : index
      %13 = vector.load %arg4[%c0_8, %c0_9] : memref<1x8xf32, #tpu.memory_space<vmem>>, vector<1x8xf32>
      %14 = vector.broadcast %13 : vector<1x8xf32> to vector<196x8xf32>
      %15 = arith.addf %12, %14 : vector<196x8xf32>
      %cst_10 = arith.constant 0.000000e+00 : f32
      %16 = vector.broadcast %cst_10 : f32 to vector<196x8xf32>
      %17 = arith.maximumf %15, %16 : vector<196x8xf32>
      %18 = arith.truncf %17 : vector<196x8xf32> to vector<196x8xbf16>
      %c0_11 = arith.constant 0 : index
      %c0_12 = arith.constant 0 : index
      %c0_13 = arith.constant 0 : index
      %19 = vector.load %arg5[%c0_11, %c0_12, %c0_13] : memref<9x49x196xbf16, #tpu.memory_space<vmem>>, vector<1x49x196xbf16>
      %20 = vector.shape_cast %19 : vector<1x49x196xbf16> to vector<49x196xbf16>
      %cst_14 = arith.constant dense<0.000000e+00> : vector<49x8xf32>
      %21 = tpu.matmul %20, %18, %cst_14 {dimension_numbers = #tpu.dot_dimension_numbers<[1], [0], [0], [1], [0, 0, 1, 1], [], []>} : vector<49x196xbf16>, vector<196x8xbf16>, vector<49x8xf32> -> vector<49x8xf32>
      %c0_15 = arith.constant 0 : index
      %c0_16 = arith.constant 0 : index
      %c0_17 = arith.constant 0 : index
      %22 = vector.load %arg6[%c0_15, %c0_16, %c0_17] : memref<9x8x16xf32, #tpu.memory_space<vmem>>, vector<1x8x16xf32>
      %23 = vector.shape_cast %22 : vector<1x8x16xf32> to vector<8x16xf32>
      %cst_18 = arith.constant dense<0.000000e+00> : vector<49x16xf32>
      %24 = tpu.matmul %21, %23, %cst_18 {dimension_numbers = #tpu.dot_dimension_numbers<[1], [0], [0], [1], [0, 0, 1, 1], [], []>} : vector<49x8xf32>, vector<8x16xf32>, vector<49x16xf32> -> vector<49x16xf32>
      %c1 = arith.constant 1 : index
      %c0_19 = arith.constant 0 : index
      %c0_20 = arith.constant 0 : index
      %25 = vector.load %arg5[%c1, %c0_19, %c0_20] : memref<9x49x196xbf16, #tpu.memory_space<vmem>>, vector<1x49x196xbf16>
      %26 = vector.shape_cast %25 : vector<1x49x196xbf16> to vector<49x196xbf16>
      %cst_21 = arith.constant dense<0.000000e+00> : vector<49x8xf32>
      %27 = tpu.matmul %26, %18, %cst_21 {dimension_numbers = #tpu.dot_dimension_numbers<[1], [0], [0], [1], [0, 0, 1, 1], [], []>} : vector<49x196xbf16>, vector<196x8xbf16>, vector<49x8xf32> -> vector<49x8xf32>
      %c1_22 = arith.constant 1 : index
      %c0_23 = arith.constant 0 : index
      %c0_24 = arith.constant 0 : index
      %28 = vector.load %arg6[%c1_22, %c0_23, %c0_24] : memref<9x8x16xf32, #tpu.memory_space<vmem>>, vector<1x8x16xf32>
      %29 = vector.shape_cast %28 : vector<1x8x16xf32> to vector<8x16xf32>
      %cst_25 = arith.constant dense<0.000000e+00> : vector<49x16xf32>
      %30 = tpu.matmul %27, %29, %cst_25 {dimension_numbers = #tpu.dot_dimension_numbers<[1], [0], [0], [1], [0, 0, 1, 1], [], []>} : vector<49x8xf32>, vector<8x16xf32>, vector<49x16xf32> -> vector<49x16xf32>
      %31 = arith.addf %24, %30 : vector<49x16xf32>
      %c2 = arith.constant 2 : index
      %c0_26 = arith.constant 0 : index
      %c0_27 = arith.constant 0 : index
      %32 = vector.load %arg5[%c2, %c0_26, %c0_27] : memref<9x49x196xbf16, #tpu.memory_space<vmem>>, vector<1x49x196xbf16>
      %33 = vector.shape_cast %32 : vector<1x49x196xbf16> to vector<49x196xbf16>
      %cst_28 = arith.constant dense<0.000000e+00> : vector<49x8xf32>
      %34 = tpu.matmul %33, %18, %cst_28 {dimension_numbers = #tpu.dot_dimension_numbers<[1], [0], [0], [1], [0, 0, 1, 1], [], []>} : vector<49x196xbf16>, vector<196x8xbf16>, vector<49x8xf32> -> vector<49x8xf32>
      %c2_29 = arith.constant 2 : index
      %c0_30 = arith.constant 0 : index
      %c0_31 = arith.constant 0 : index
      %35 = vector.load %arg6[%c2_29, %c0_30, %c0_31] : memref<9x8x16xf32, #tpu.memory_space<vmem>>, vector<1x8x16xf32>
      %36 = vector.shape_cast %35 : vector<1x8x16xf32> to vector<8x16xf32>
      %cst_32 = arith.constant dense<0.000000e+00> : vector<49x16xf32>
      %37 = tpu.matmul %34, %36, %cst_32 {dimension_numbers = #tpu.dot_dimension_numbers<[1], [0], [0], [1], [0, 0, 1, 1], [], []>} : vector<49x8xf32>, vector<8x16xf32>, vector<49x16xf32> -> vector<49x16xf32>
      %38 = arith.addf %31, %37 : vector<49x16xf32>
      %c3 = arith.constant 3 : index
      %c0_33 = arith.constant 0 : index
      %c0_34 = arith.constant 0 : index
      %39 = vector.load %arg5[%c3, %c0_33, %c0_34] : memref<9x49x196xbf16, #tpu.memory_space<vmem>>, vector<1x49x196xbf16>
      %40 = vector.shape_cast %39 : vector<1x49x196xbf16> to vector<49x196xbf16>
      %cst_35 = arith.constant dense<0.000000e+00> : vector<49x8xf32>
      %41 = tpu.matmul %40, %18, %cst_35 {dimension_numbers = #tpu.dot_dimension_numbers<[1], [0], [0], [1], [0, 0, 1, 1], [], []>} : vector<49x196xbf16>, vector<196x8xbf16>, vector<49x8xf32> -> vector<49x8xf32>
      %c3_36 = arith.constant 3 : index
      %c0_37 = arith.constant 0 : index
      %c0_38 = arith.constant 0 : index
      %42 = vector.load %arg6[%c3_36, %c0_37, %c0_38] : memref<9x8x16xf32, #tpu.memory_space<vmem>>, vector<1x8x16xf32>
      %43 = vector.shape_cast %42 : vector<1x8x16xf32> to vector<8x16xf32>
      %cst_39 = arith.constant dense<0.000000e+00> : vector<49x16xf32>
      %44 = tpu.matmul %41, %43, %cst_39 {dimension_numbers = #tpu.dot_dimension_numbers<[1], [0], [0], [1], [0, 0, 1, 1], [], []>} : vector<49x8xf32>, vector<8x16xf32>, vector<49x16xf32> -> vector<49x16xf32>
      %45 = arith.addf %38, %44 : vector<49x16xf32>
      %c4 = arith.constant 4 : index
      %c0_40 = arith.constant 0 : index
      %c0_41 = arith.constant 0 : index
      %46 = vector.load %arg5[%c4, %c0_40, %c0_41] : memref<9x49x196xbf16, #tpu.memory_space<vmem>>, vector<1x49x196xbf16>
      %47 = vector.shape_cast %46 : vector<1x49x196xbf16> to vector<49x196xbf16>
      %cst_42 = arith.constant dense<0.000000e+00> : vector<49x8xf32>
      %48 = tpu.matmul %47, %18, %cst_42 {dimension_numbers = #tpu.dot_dimension_numbers<[1], [0], [0], [1], [0, 0, 1, 1], [], []>} : vector<49x196xbf16>, vector<196x8xbf16>, vector<49x8xf32> -> vector<49x8xf32>
      %c4_43 = arith.constant 4 : index
      %c0_44 = arith.constant 0 : index
      %c0_45 = arith.constant 0 : index
      %49 = vector.load %arg6[%c4_43, %c0_44, %c0_45] : memref<9x8x16xf32, #tpu.memory_space<vmem>>, vector<1x8x16xf32>
      %50 = vector.shape_cast %49 : vector<1x8x16xf32> to vector<8x16xf32>
      %cst_46 = arith.constant dense<0.000000e+00> : vector<49x16xf32>
      %51 = tpu.matmul %48, %50, %cst_46 {dimension_numbers = #tpu.dot_dimension_numbers<[1], [0], [0], [1], [0, 0, 1, 1], [], []>} : vector<49x8xf32>, vector<8x16xf32>, vector<49x16xf32> -> vector<49x16xf32>
      %52 = arith.addf %45, %51 : vector<49x16xf32>
      %c5 = arith.constant 5 : index
      %c0_47 = arith.constant 0 : index
      %c0_48 = arith.constant 0 : index
      %53 = vector.load %arg5[%c5, %c0_47, %c0_48] : memref<9x49x196xbf16, #tpu.memory_space<vmem>>, vector<1x49x196xbf16>
      %54 = vector.shape_cast %53 : vector<1x49x196xbf16> to vector<49x196xbf16>
      %cst_49 = arith.constant dense<0.000000e+00> : vector<49x8xf32>
      %55 = tpu.matmul %54, %18, %cst_49 {dimension_numbers = #tpu.dot_dimension_numbers<[1], [0], [0], [1], [0, 0, 1, 1], [], []>} : vector<49x196xbf16>, vector<196x8xbf16>, vector<49x8xf32> -> vector<49x8xf32>
      %c5_50 = arith.constant 5 : index
      %c0_51 = arith.constant 0 : index
      %c0_52 = arith.constant 0 : index
      %56 = vector.load %arg6[%c5_50, %c0_51, %c0_52] : memref<9x8x16xf32, #tpu.memory_space<vmem>>, vector<1x8x16xf32>
      %57 = vector.shape_cast %56 : vector<1x8x16xf32> to vector<8x16xf32>
      %cst_53 = arith.constant dense<0.000000e+00> : vector<49x16xf32>
      %58 = tpu.matmul %55, %57, %cst_53 {dimension_numbers = #tpu.dot_dimension_numbers<[1], [0], [0], [1], [0, 0, 1, 1], [], []>} : vector<49x8xf32>, vector<8x16xf32>, vector<49x16xf32> -> vector<49x16xf32>
      %59 = arith.addf %52, %58 : vector<49x16xf32>
      %c6 = arith.constant 6 : index
      %c0_54 = arith.constant 0 : index
      %c0_55 = arith.constant 0 : index
      %60 = vector.load %arg5[%c6, %c0_54, %c0_55] : memref<9x49x196xbf16, #tpu.memory_space<vmem>>, vector<1x49x196xbf16>
      %61 = vector.shape_cast %60 : vector<1x49x196xbf16> to vector<49x196xbf16>
      %cst_56 = arith.constant dense<0.000000e+00> : vector<49x8xf32>
      %62 = tpu.matmul %61, %18, %cst_56 {dimension_numbers = #tpu.dot_dimension_numbers<[1], [0], [0], [1], [0, 0, 1, 1], [], []>} : vector<49x196xbf16>, vector<196x8xbf16>, vector<49x8xf32> -> vector<49x8xf32>
      %c6_57 = arith.constant 6 : index
      %c0_58 = arith.constant 0 : index
      %c0_59 = arith.constant 0 : index
      %63 = vector.load %arg6[%c6_57, %c0_58, %c0_59] : memref<9x8x16xf32, #tpu.memory_space<vmem>>, vector<1x8x16xf32>
      %64 = vector.shape_cast %63 : vector<1x8x16xf32> to vector<8x16xf32>
      %cst_60 = arith.constant dense<0.000000e+00> : vector<49x16xf32>
      %65 = tpu.matmul %62, %64, %cst_60 {dimension_numbers = #tpu.dot_dimension_numbers<[1], [0], [0], [1], [0, 0, 1, 1], [], []>} : vector<49x8xf32>, vector<8x16xf32>, vector<49x16xf32> -> vector<49x16xf32>
      %66 = arith.addf %59, %65 : vector<49x16xf32>
      %c7 = arith.constant 7 : index
      %c0_61 = arith.constant 0 : index
      %c0_62 = arith.constant 0 : index
      %67 = vector.load %arg5[%c7, %c0_61, %c0_62] : memref<9x49x196xbf16, #tpu.memory_space<vmem>>, vector<1x49x196xbf16>
      %68 = vector.shape_cast %67 : vector<1x49x196xbf16> to vector<49x196xbf16>
      %cst_63 = arith.constant dense<0.000000e+00> : vector<49x8xf32>
      %69 = tpu.matmul %68, %18, %cst_63 {dimension_numbers = #tpu.dot_dimension_numbers<[1], [0], [0], [1], [0, 0, 1, 1], [], []>} : vector<49x196xbf16>, vector<196x8xbf16>, vector<49x8xf32> -> vector<49x8xf32>
      %c7_64 = arith.constant 7 : index
      %c0_65 = arith.constant 0 : index
      %c0_66 = arith.constant 0 : index
      %70 = vector.load %arg6[%c7_64, %c0_65, %c0_66] : memref<9x8x16xf32, #tpu.memory_space<vmem>>, vector<1x8x16xf32>
      %71 = vector.shape_cast %70 : vector<1x8x16xf32> to vector<8x16xf32>
      %cst_67 = arith.constant dense<0.000000e+00> : vector<49x16xf32>
      %72 = tpu.matmul %69, %71, %cst_67 {dimension_numbers = #tpu.dot_dimension_numbers<[1], [0], [0], [1], [0, 0, 1, 1], [], []>} : vector<49x8xf32>, vector<8x16xf32>, vector<49x16xf32> -> vector<49x16xf32>
      %73 = arith.addf %66, %72 : vector<49x16xf32>
      %c8 = arith.constant 8 : index
      %c0_68 = arith.constant 0 : index
      %c0_69 = arith.constant 0 : index
      %74 = vector.load %arg5[%c8, %c0_68, %c0_69] : memref<9x49x196xbf16, #tpu.memory_space<vmem>>, vector<1x49x196xbf16>
      %75 = vector.shape_cast %74 : vector<1x49x196xbf16> to vector<49x196xbf16>
      %cst_70 = arith.constant dense<0.000000e+00> : vector<49x8xf32>
      %76 = tpu.matmul %75, %18, %cst_70 {dimension_numbers = #tpu.dot_dimension_numbers<[1], [0], [0], [1], [0, 0, 1, 1], [], []>} : vector<49x196xbf16>, vector<196x8xbf16>, vector<49x8xf32> -> vector<49x8xf32>
      %c8_71 = arith.constant 8 : index
      %c0_72 = arith.constant 0 : index
      %c0_73 = arith.constant 0 : index
      %77 = vector.load %arg6[%c8_71, %c0_72, %c0_73] : memref<9x8x16xf32, #tpu.memory_space<vmem>>, vector<1x8x16xf32>
      %78 = vector.shape_cast %77 : vector<1x8x16xf32> to vector<8x16xf32>
      %cst_74 = arith.constant dense<0.000000e+00> : vector<49x16xf32>
      %79 = tpu.matmul %76, %78, %cst_74 {dimension_numbers = #tpu.dot_dimension_numbers<[1], [0], [0], [1], [0, 0, 1, 1], [], []>} : vector<49x8xf32>, vector<8x16xf32>, vector<49x16xf32> -> vector<49x16xf32>
      %80 = arith.addf %73, %79 : vector<49x16xf32>
      %c0_75 = arith.constant 0 : index
      %c0_76 = arith.constant 0 : index
      %81 = vector.load %arg7[%c0_75, %c0_76] : memref<1x16xf32, #tpu.memory_space<vmem>>, vector<1x16xf32>
      %82 = vector.broadcast %81 : vector<1x16xf32> to vector<49x16xf32>
      %83 = arith.addf %80, %82 : vector<49x16xf32>
      %c0_77 = arith.constant 0 : index
      %c0_78 = arith.constant 0 : index
      %84 = vector.load %arg18[%c0_77, %c0_78] : memref<1x16xf32, #tpu.memory_space<vmem>>, vector<1x16xf32>
      %85 = vector.broadcast %84 : vector<1x16xf32> to vector<49x16xf32>
      %86 = arith.subf %83, %85 : vector<49x16xf32>
      %c0_79 = arith.constant 0 : index
      %c0_80 = arith.constant 0 : index
      %87 = vector.load %arg19[%c0_79, %c0_80] : memref<1x16xf32, #tpu.memory_space<vmem>>, vector<1x16xf32>
      %88 = vector.broadcast %87 : vector<1x16xf32> to vector<49x16xf32>
      %89 = arith.mulf %86, %88 : vector<49x16xf32>
      %c0_81 = arith.constant 0 : index
      %c0_82 = arith.constant 0 : index
      %90 = vector.load %arg8[%c0_81, %c0_82] : memref<1x16xf32, #tpu.memory_space<vmem>>, vector<1x16xf32>
      %91 = vector.broadcast %90 : vector<1x16xf32> to vector<49x16xf32>
      %92 = arith.mulf %89, %91 : vector<49x16xf32>
      %c0_83 = arith.constant 0 : index
      %c0_84 = arith.constant 0 : index
      %93 = vector.load %arg9[%c0_83, %c0_84] : memref<1x16xf32, #tpu.memory_space<vmem>>, vector<1x16xf32>
      %94 = vector.broadcast %93 : vector<1x16xf32> to vector<49x16xf32>
      %95 = arith.addf %92, %94 : vector<49x16xf32>
      %cst_85 = arith.constant 0.000000e+00 : f32
      %96 = vector.broadcast %cst_85 : f32 to vector<49x16xf32>
      %97 = arith.maximumf %95, %96 : vector<49x16xf32>
      %98 = arith.truncf %97 : vector<49x16xf32> to vector<49x16xbf16>
      %c0_86 = arith.constant 0 : index
      %c0_87 = arith.constant 0 : index
      %c0_88 = arith.constant 0 : index
      %99 = vector.load %arg10[%c0_86, %c0_87, %c0_88] : memref<9x9x49xbf16, #tpu.memory_space<vmem>>, vector<1x9x49xbf16>
      %100 = vector.shape_cast %99 : vector<1x9x49xbf16> to vector<9x49xbf16>
      %cst_89 = arith.constant dense<0.000000e+00> : vector<9x16xf32>
      %101 = tpu.matmul %100, %98, %cst_89 {dimension_numbers = #tpu.dot_dimension_numbers<[1], [0], [0], [1], [0, 0, 1, 1], [], []>} : vector<9x49xbf16>, vector<49x16xbf16>, vector<9x16xf32> -> vector<9x16xf32>
      %c0_90 = arith.constant 0 : index
      %c0_91 = arith.constant 0 : index
      %c0_92 = arith.constant 0 : index
      %102 = vector.load %arg11[%c0_90, %c0_91, %c0_92] : memref<9x16x32xf32, #tpu.memory_space<vmem>>, vector<1x16x32xf32>
      %103 = vector.shape_cast %102 : vector<1x16x32xf32> to vector<16x32xf32>
      %cst_93 = arith.constant dense<0.000000e+00> : vector<9x32xf32>
      %104 = tpu.matmul %101, %103, %cst_93 {dimension_numbers = #tpu.dot_dimension_numbers<[1], [0], [0], [1], [0, 0, 1, 1], [], []>} : vector<9x16xf32>, vector<16x32xf32>, vector<9x32xf32> -> vector<9x32xf32>
      %c1_94 = arith.constant 1 : index
      %c0_95 = arith.constant 0 : index
      %c0_96 = arith.constant 0 : index
      %105 = vector.load %arg10[%c1_94, %c0_95, %c0_96] : memref<9x9x49xbf16, #tpu.memory_space<vmem>>, vector<1x9x49xbf16>
      %106 = vector.shape_cast %105 : vector<1x9x49xbf16> to vector<9x49xbf16>
      %cst_97 = arith.constant dense<0.000000e+00> : vector<9x16xf32>
      %107 = tpu.matmul %106, %98, %cst_97 {dimension_numbers = #tpu.dot_dimension_numbers<[1], [0], [0], [1], [0, 0, 1, 1], [], []>} : vector<9x49xbf16>, vector<49x16xbf16>, vector<9x16xf32> -> vector<9x16xf32>
      %c1_98 = arith.constant 1 : index
      %c0_99 = arith.constant 0 : index
      %c0_100 = arith.constant 0 : index
      %108 = vector.load %arg11[%c1_98, %c0_99, %c0_100] : memref<9x16x32xf32, #tpu.memory_space<vmem>>, vector<1x16x32xf32>
      %109 = vector.shape_cast %108 : vector<1x16x32xf32> to vector<16x32xf32>
      %cst_101 = arith.constant dense<0.000000e+00> : vector<9x32xf32>
      %110 = tpu.matmul %107, %109, %cst_101 {dimension_numbers = #tpu.dot_dimension_numbers<[1], [0], [0], [1], [0, 0, 1, 1], [], []>} : vector<9x16xf32>, vector<16x32xf32>, vector<9x32xf32> -> vector<9x32xf32>
      %111 = arith.addf %104, %110 : vector<9x32xf32>
      %c2_102 = arith.constant 2 : index
      %c0_103 = arith.constant 0 : index
      %c0_104 = arith.constant 0 : index
      %112 = vector.load %arg10[%c2_102, %c0_103, %c0_104] : memref<9x9x49xbf16, #tpu.memory_space<vmem>>, vector<1x9x49xbf16>
      %113 = vector.shape_cast %112 : vector<1x9x49xbf16> to vector<9x49xbf16>
      %cst_105 = arith.constant dense<0.000000e+00> : vector<9x16xf32>
      %114 = tpu.matmul %113, %98, %cst_105 {dimension_numbers = #tpu.dot_dimension_numbers<[1], [0], [0], [1], [0, 0, 1, 1], [], []>} : vector<9x49xbf16>, vector<49x16xbf16>, vector<9x16xf32> -> vector<9x16xf32>
      %c2_106 = arith.constant 2 : index
      %c0_107 = arith.constant 0 : index
      %c0_108 = arith.constant 0 : index
      %115 = vector.load %arg11[%c2_106, %c0_107, %c0_108] : memref<9x16x32xf32, #tpu.memory_space<vmem>>, vector<1x16x32xf32>
      %116 = vector.shape_cast %115 : vector<1x16x32xf32> to vector<16x32xf32>
      %cst_109 = arith.constant dense<0.000000e+00> : vector<9x32xf32>
      %117 = tpu.matmul %114, %116, %cst_109 {dimension_numbers = #tpu.dot_dimension_numbers<[1], [0], [0], [1], [0, 0, 1, 1], [], []>} : vector<9x16xf32>, vector<16x32xf32>, vector<9x32xf32> -> vector<9x32xf32>
      %118 = arith.addf %111, %117 : vector<9x32xf32>
      %c3_110 = arith.constant 3 : index
      %c0_111 = arith.constant 0 : index
      %c0_112 = arith.constant 0 : index
      %119 = vector.load %arg10[%c3_110, %c0_111, %c0_112] : memref<9x9x49xbf16, #tpu.memory_space<vmem>>, vector<1x9x49xbf16>
      %120 = vector.shape_cast %119 : vector<1x9x49xbf16> to vector<9x49xbf16>
      %cst_113 = arith.constant dense<0.000000e+00> : vector<9x16xf32>
      %121 = tpu.matmul %120, %98, %cst_113 {dimension_numbers = #tpu.dot_dimension_numbers<[1], [0], [0], [1], [0, 0, 1, 1], [], []>} : vector<9x49xbf16>, vector<49x16xbf16>, vector<9x16xf32> -> vector<9x16xf32>
      %c3_114 = arith.constant 3 : index
      %c0_115 = arith.constant 0 : index
      %c0_116 = arith.constant 0 : index
      %122 = vector.load %arg11[%c3_114, %c0_115, %c0_116] : memref<9x16x32xf32, #tpu.memory_space<vmem>>, vector<1x16x32xf32>
      %123 = vector.shape_cast %122 : vector<1x16x32xf32> to vector<16x32xf32>
      %cst_117 = arith.constant dense<0.000000e+00> : vector<9x32xf32>
      %124 = tpu.matmul %121, %123, %cst_117 {dimension_numbers = #tpu.dot_dimension_numbers<[1], [0], [0], [1], [0, 0, 1, 1], [], []>} : vector<9x16xf32>, vector<16x32xf32>, vector<9x32xf32> -> vector<9x32xf32>
      %125 = arith.addf %118, %124 : vector<9x32xf32>
      %c4_118 = arith.constant 4 : index
      %c0_119 = arith.constant 0 : index
      %c0_120 = arith.constant 0 : index
      %126 = vector.load %arg10[%c4_118, %c0_119, %c0_120] : memref<9x9x49xbf16, #tpu.memory_space<vmem>>, vector<1x9x49xbf16>
      %127 = vector.shape_cast %126 : vector<1x9x49xbf16> to vector<9x49xbf16>
      %cst_121 = arith.constant dense<0.000000e+00> : vector<9x16xf32>
      %128 = tpu.matmul %127, %98, %cst_121 {dimension_numbers = #tpu.dot_dimension_numbers<[1], [0], [0], [1], [0, 0, 1, 1], [], []>} : vector<9x49xbf16>, vector<49x16xbf16>, vector<9x16xf32> -> vector<9x16xf32>
      %c4_122 = arith.constant 4 : index
      %c0_123 = arith.constant 0 : index
      %c0_124 = arith.constant 0 : index
      %129 = vector.load %arg11[%c4_122, %c0_123, %c0_124] : memref<9x16x32xf32, #tpu.memory_space<vmem>>, vector<1x16x32xf32>
      %130 = vector.shape_cast %129 : vector<1x16x32xf32> to vector<16x32xf32>
      %cst_125 = arith.constant dense<0.000000e+00> : vector<9x32xf32>
      %131 = tpu.matmul %128, %130, %cst_125 {dimension_numbers = #tpu.dot_dimension_numbers<[1], [0], [0], [1], [0, 0, 1, 1], [], []>} : vector<9x16xf32>, vector<16x32xf32>, vector<9x32xf32> -> vector<9x32xf32>
      %132 = arith.addf %125, %131 : vector<9x32xf32>
      %c5_126 = arith.constant 5 : index
      %c0_127 = arith.constant 0 : index
      %c0_128 = arith.constant 0 : index
      %133 = vector.load %arg10[%c5_126, %c0_127, %c0_128] : memref<9x9x49xbf16, #tpu.memory_space<vmem>>, vector<1x9x49xbf16>
      %134 = vector.shape_cast %133 : vector<1x9x49xbf16> to vector<9x49xbf16>
      %cst_129 = arith.constant dense<0.000000e+00> : vector<9x16xf32>
      %135 = tpu.matmul %134, %98, %cst_129 {dimension_numbers = #tpu.dot_dimension_numbers<[1], [0], [0], [1], [0, 0, 1, 1], [], []>} : vector<9x49xbf16>, vector<49x16xbf16>, vector<9x16xf32> -> vector<9x16xf32>
      %c5_130 = arith.constant 5 : index
      %c0_131 = arith.constant 0 : index
      %c0_132 = arith.constant 0 : index
      %136 = vector.load %arg11[%c5_130, %c0_131, %c0_132] : memref<9x16x32xf32, #tpu.memory_space<vmem>>, vector<1x16x32xf32>
      %137 = vector.shape_cast %136 : vector<1x16x32xf32> to vector<16x32xf32>
      %cst_133 = arith.constant dense<0.000000e+00> : vector<9x32xf32>
      %138 = tpu.matmul %135, %137, %cst_133 {dimension_numbers = #tpu.dot_dimension_numbers<[1], [0], [0], [1], [0, 0, 1, 1], [], []>} : vector<9x16xf32>, vector<16x32xf32>, vector<9x32xf32> -> vector<9x32xf32>
      %139 = arith.addf %132, %138 : vector<9x32xf32>
      %c6_134 = arith.constant 6 : index
      %c0_135 = arith.constant 0 : index
      %c0_136 = arith.constant 0 : index
      %140 = vector.load %arg10[%c6_134, %c0_135, %c0_136] : memref<9x9x49xbf16, #tpu.memory_space<vmem>>, vector<1x9x49xbf16>
      %141 = vector.shape_cast %140 : vector<1x9x49xbf16> to vector<9x49xbf16>
      %cst_137 = arith.constant dense<0.000000e+00> : vector<9x16xf32>
      %142 = tpu.matmul %141, %98, %cst_137 {dimension_numbers = #tpu.dot_dimension_numbers<[1], [0], [0], [1], [0, 0, 1, 1], [], []>} : vector<9x49xbf16>, vector<49x16xbf16>, vector<9x16xf32> -> vector<9x16xf32>
      %c6_138 = arith.constant 6 : index
      %c0_139 = arith.constant 0 : index
      %c0_140 = arith.constant 0 : index
      %143 = vector.load %arg11[%c6_138, %c0_139, %c0_140] : memref<9x16x32xf32, #tpu.memory_space<vmem>>, vector<1x16x32xf32>
      %144 = vector.shape_cast %143 : vector<1x16x32xf32> to vector<16x32xf32>
      %cst_141 = arith.constant dense<0.000000e+00> : vector<9x32xf32>
      %145 = tpu.matmul %142, %144, %cst_141 {dimension_numbers = #tpu.dot_dimension_numbers<[1], [0], [0], [1], [0, 0, 1, 1], [], []>} : vector<9x16xf32>, vector<16x32xf32>, vector<9x32xf32> -> vector<9x32xf32>
      %146 = arith.addf %139, %145 : vector<9x32xf32>
      %c7_142 = arith.constant 7 : index
      %c0_143 = arith.constant 0 : index
      %c0_144 = arith.constant 0 : index
      %147 = vector.load %arg10[%c7_142, %c0_143, %c0_144] : memref<9x9x49xbf16, #tpu.memory_space<vmem>>, vector<1x9x49xbf16>
      %148 = vector.shape_cast %147 : vector<1x9x49xbf16> to vector<9x49xbf16>
      %cst_145 = arith.constant dense<0.000000e+00> : vector<9x16xf32>
      %149 = tpu.matmul %148, %98, %cst_145 {dimension_numbers = #tpu.dot_dimension_numbers<[1], [0], [0], [1], [0, 0, 1, 1], [], []>} : vector<9x49xbf16>, vector<49x16xbf16>, vector<9x16xf32> -> vector<9x16xf32>
      %c7_146 = arith.constant 7 : index
      %c0_147 = arith.constant 0 : index
      %c0_148 = arith.constant 0 : index
      %150 = vector.load %arg11[%c7_146, %c0_147, %c0_148] : memref<9x16x32xf32, #tpu.memory_space<vmem>>, vector<1x16x32xf32>
      %151 = vector.shape_cast %150 : vector<1x16x32xf32> to vector<16x32xf32>
      %cst_149 = arith.constant dense<0.000000e+00> : vector<9x32xf32>
      %152 = tpu.matmul %149, %151, %cst_149 {dimension_numbers = #tpu.dot_dimension_numbers<[1], [0], [0], [1], [0, 0, 1, 1], [], []>} : vector<9x16xf32>, vector<16x32xf32>, vector<9x32xf32> -> vector<9x32xf32>
      %153 = arith.addf %146, %152 : vector<9x32xf32>
      %c8_150 = arith.constant 8 : index
      %c0_151 = arith.constant 0 : index
      %c0_152 = arith.constant 0 : index
      %154 = vector.load %arg10[%c8_150, %c0_151, %c0_152] : memref<9x9x49xbf16, #tpu.memory_space<vmem>>, vector<1x9x49xbf16>
      %155 = vector.shape_cast %154 : vector<1x9x49xbf16> to vector<9x49xbf16>
      %cst_153 = arith.constant dense<0.000000e+00> : vector<9x16xf32>
      %156 = tpu.matmul %155, %98, %cst_153 {dimension_numbers = #tpu.dot_dimension_numbers<[1], [0], [0], [1], [0, 0, 1, 1], [], []>} : vector<9x49xbf16>, vector<49x16xbf16>, vector<9x16xf32> -> vector<9x16xf32>
      %c8_154 = arith.constant 8 : index
      %c0_155 = arith.constant 0 : index
      %c0_156 = arith.constant 0 : index
      %157 = vector.load %arg11[%c8_154, %c0_155, %c0_156] : memref<9x16x32xf32, #tpu.memory_space<vmem>>, vector<1x16x32xf32>
      %158 = vector.shape_cast %157 : vector<1x16x32xf32> to vector<16x32xf32>
      %cst_157 = arith.constant dense<0.000000e+00> : vector<9x32xf32>
      %159 = tpu.matmul %156, %158, %cst_157 {dimension_numbers = #tpu.dot_dimension_numbers<[1], [0], [0], [1], [0, 0, 1, 1], [], []>} : vector<9x16xf32>, vector<16x32xf32>, vector<9x32xf32> -> vector<9x32xf32>
      %160 = arith.addf %153, %159 : vector<9x32xf32>
      %c0_158 = arith.constant 0 : index
      %c0_159 = arith.constant 0 : index
      %161 = vector.load %arg12[%c0_158, %c0_159] : memref<1x32xf32, #tpu.memory_space<vmem>>, vector<1x32xf32>
      %162 = vector.broadcast %161 : vector<1x32xf32> to vector<9x32xf32>
      %163 = arith.addf %160, %162 : vector<9x32xf32>
      %cst_160 = arith.constant 0.000000e+00 : f32
      %164 = vector.broadcast %cst_160 : f32 to vector<9x32xf32>
      %165 = arith.maximumf %163, %164 : vector<9x32xf32>
      %c0_161 = arith.constant 0 : index
      %c0_162 = arith.constant 0 : index
      %166 = vector.load %arg14[%c0_161, %c0_162] : memref<1x128xf32, #tpu.memory_space<vmem>>, vector<1x128xf32>
      %167 = vector.extract_strided_slice %165 {offsets = [0, 0], sizes = [1, 32], strides = [1, 1]} : vector<9x32xf32> to vector<1x32xf32>
      %c0_163 = arith.constant 0 : index
      %c0_164 = arith.constant 0 : index
      %c0_165 = arith.constant 0 : index
      %168 = vector.load %arg13[%c0_163, %c0_164, %c0_165] : memref<9x32x128xf32, #tpu.memory_space<vmem>>, vector<1x32x128xf32>
      %169 = vector.shape_cast %168 : vector<1x32x128xf32> to vector<32x128xf32>
      %cst_166 = arith.constant dense<0.000000e+00> : vector<1x128xf32>
      %170 = tpu.matmul %167, %169, %cst_166 {dimension_numbers = #tpu.dot_dimension_numbers<[1], [0], [0], [1], [0, 0, 1, 1], [], []>} : vector<1x32xf32>, vector<32x128xf32>, vector<1x128xf32> -> vector<1x128xf32>
      %171 = arith.addf %166, %170 : vector<1x128xf32>
      %172 = vector.extract_strided_slice %165 {offsets = [1, 0], sizes = [1, 32], strides = [1, 1]} : vector<9x32xf32> to vector<1x32xf32>
      %c1_167 = arith.constant 1 : index
      %c0_168 = arith.constant 0 : index
      %c0_169 = arith.constant 0 : index
      %173 = vector.load %arg13[%c1_167, %c0_168, %c0_169] : memref<9x32x128xf32, #tpu.memory_space<vmem>>, vector<1x32x128xf32>
      %174 = vector.shape_cast %173 : vector<1x32x128xf32> to vector<32x128xf32>
      %cst_170 = arith.constant dense<0.000000e+00> : vector<1x128xf32>
      %175 = tpu.matmul %172, %174, %cst_170 {dimension_numbers = #tpu.dot_dimension_numbers<[1], [0], [0], [1], [0, 0, 1, 1], [], []>} : vector<1x32xf32>, vector<32x128xf32>, vector<1x128xf32> -> vector<1x128xf32>
      %176 = arith.addf %171, %175 : vector<1x128xf32>
      %177 = vector.extract_strided_slice %165 {offsets = [2, 0], sizes = [1, 32], strides = [1, 1]} : vector<9x32xf32> to vector<1x32xf32>
      %c2_171 = arith.constant 2 : index
      %c0_172 = arith.constant 0 : index
      %c0_173 = arith.constant 0 : index
      %178 = vector.load %arg13[%c2_171, %c0_172, %c0_173] : memref<9x32x128xf32, #tpu.memory_space<vmem>>, vector<1x32x128xf32>
      %179 = vector.shape_cast %178 : vector<1x32x128xf32> to vector<32x128xf32>
      %cst_174 = arith.constant dense<0.000000e+00> : vector<1x128xf32>
      %180 = tpu.matmul %177, %179, %cst_174 {dimension_numbers = #tpu.dot_dimension_numbers<[1], [0], [0], [1], [0, 0, 1, 1], [], []>} : vector<1x32xf32>, vector<32x128xf32>, vector<1x128xf32> -> vector<1x128xf32>
      %181 = arith.addf %176, %180 : vector<1x128xf32>
      %182 = vector.extract_strided_slice %165 {offsets = [3, 0], sizes = [1, 32], strides = [1, 1]} : vector<9x32xf32> to vector<1x32xf32>
      %c3_175 = arith.constant 3 : index
      %c0_176 = arith.constant 0 : index
      %c0_177 = arith.constant 0 : index
      %183 = vector.load %arg13[%c3_175, %c0_176, %c0_177] : memref<9x32x128xf32, #tpu.memory_space<vmem>>, vector<1x32x128xf32>
      %184 = vector.shape_cast %183 : vector<1x32x128xf32> to vector<32x128xf32>
      %cst_178 = arith.constant dense<0.000000e+00> : vector<1x128xf32>
      %185 = tpu.matmul %182, %184, %cst_178 {dimension_numbers = #tpu.dot_dimension_numbers<[1], [0], [0], [1], [0, 0, 1, 1], [], []>} : vector<1x32xf32>, vector<32x128xf32>, vector<1x128xf32> -> vector<1x128xf32>
      %186 = arith.addf %181, %185 : vector<1x128xf32>
      %187 = vector.extract_strided_slice %165 {offsets = [4, 0], sizes = [1, 32], strides = [1, 1]} : vector<9x32xf32> to vector<1x32xf32>
      %c4_179 = arith.constant 4 : index
      %c0_180 = arith.constant 0 : index
      %c0_181 = arith.constant 0 : index
      %188 = vector.load %arg13[%c4_179, %c0_180, %c0_181] : memref<9x32x128xf32, #tpu.memory_space<vmem>>, vector<1x32x128xf32>
      %189 = vector.shape_cast %188 : vector<1x32x128xf32> to vector<32x128xf32>
      %cst_182 = arith.constant dense<0.000000e+00> : vector<1x128xf32>
      %190 = tpu.matmul %187, %189, %cst_182 {dimension_numbers = #tpu.dot_dimension_numbers<[1], [0], [0], [1], [0, 0, 1, 1], [], []>} : vector<1x32xf32>, vector<32x128xf32>, vector<1x128xf32> -> vector<1x128xf32>
      %191 = arith.addf %186, %190 : vector<1x128xf32>
      %192 = vector.extract_strided_slice %165 {offsets = [5, 0], sizes = [1, 32], strides = [1, 1]} : vector<9x32xf32> to vector<1x32xf32>
      %c5_183 = arith.constant 5 : index
      %c0_184 = arith.constant 0 : index
      %c0_185 = arith.constant 0 : index
      %193 = vector.load %arg13[%c5_183, %c0_184, %c0_185] : memref<9x32x128xf32, #tpu.memory_space<vmem>>, vector<1x32x128xf32>
      %194 = vector.shape_cast %193 : vector<1x32x128xf32> to vector<32x128xf32>
      %cst_186 = arith.constant dense<0.000000e+00> : vector<1x128xf32>
      %195 = tpu.matmul %192, %194, %cst_186 {dimension_numbers = #tpu.dot_dimension_numbers<[1], [0], [0], [1], [0, 0, 1, 1], [], []>} : vector<1x32xf32>, vector<32x128xf32>, vector<1x128xf32> -> vector<1x128xf32>
      %196 = arith.addf %191, %195 : vector<1x128xf32>
      %197 = vector.extract_strided_slice %165 {offsets = [6, 0], sizes = [1, 32], strides = [1, 1]} : vector<9x32xf32> to vector<1x32xf32>
      %c6_187 = arith.constant 6 : index
      %c0_188 = arith.constant 0 : index
      %c0_189 = arith.constant 0 : index
      %198 = vector.load %arg13[%c6_187, %c0_188, %c0_189] : memref<9x32x128xf32, #tpu.memory_space<vmem>>, vector<1x32x128xf32>
      %199 = vector.shape_cast %198 : vector<1x32x128xf32> to vector<32x128xf32>
      %cst_190 = arith.constant dense<0.000000e+00> : vector<1x128xf32>
      %200 = tpu.matmul %197, %199, %cst_190 {dimension_numbers = #tpu.dot_dimension_numbers<[1], [0], [0], [1], [0, 0, 1, 1], [], []>} : vector<1x32xf32>, vector<32x128xf32>, vector<1x128xf32> -> vector<1x128xf32>
      %201 = arith.addf %196, %200 : vector<1x128xf32>
      %202 = vector.extract_strided_slice %165 {offsets = [7, 0], sizes = [1, 32], strides = [1, 1]} : vector<9x32xf32> to vector<1x32xf32>
      %c7_191 = arith.constant 7 : index
      %c0_192 = arith.constant 0 : index
      %c0_193 = arith.constant 0 : index
      %203 = vector.load %arg13[%c7_191, %c0_192, %c0_193] : memref<9x32x128xf32, #tpu.memory_space<vmem>>, vector<1x32x128xf32>
      %204 = vector.shape_cast %203 : vector<1x32x128xf32> to vector<32x128xf32>
      %cst_194 = arith.constant dense<0.000000e+00> : vector<1x128xf32>
      %205 = tpu.matmul %202, %204, %cst_194 {dimension_numbers = #tpu.dot_dimension_numbers<[1], [0], [0], [1], [0, 0, 1, 1], [], []>} : vector<1x32xf32>, vector<32x128xf32>, vector<1x128xf32> -> vector<1x128xf32>
      %206 = arith.addf %201, %205 : vector<1x128xf32>
      %207 = vector.extract_strided_slice %165 {offsets = [8, 0], sizes = [1, 32], strides = [1, 1]} : vector<9x32xf32> to vector<1x32xf32>
      %c8_195 = arith.constant 8 : index
      %c0_196 = arith.constant 0 : index
      %c0_197 = arith.constant 0 : index
      %208 = vector.load %arg13[%c8_195, %c0_196, %c0_197] : memref<9x32x128xf32, #tpu.memory_space<vmem>>, vector<1x32x128xf32>
      %209 = vector.shape_cast %208 : vector<1x32x128xf32> to vector<32x128xf32>
      %cst_198 = arith.constant dense<0.000000e+00> : vector<1x128xf32>
      %210 = tpu.matmul %207, %209, %cst_198 {dimension_numbers = #tpu.dot_dimension_numbers<[1], [0], [0], [1], [0, 0, 1, 1], [], []>} : vector<1x32xf32>, vector<32x128xf32>, vector<1x128xf32> -> vector<1x128xf32>
      %211 = arith.addf %206, %210 : vector<1x128xf32>
      %cst_199 = arith.constant 0.000000e+00 : f32
      %212 = vector.broadcast %cst_199 : f32 to vector<1x128xf32>
      %213 = arith.maximumf %211, %212 : vector<1x128xf32>
      %c0_200 = arith.constant 0 : index
      %c0_201 = arith.constant 0 : index
      %214 = vector.load %arg15[%c0_200, %c0_201] : memref<128x128xf32, #tpu.memory_space<vmem>>, vector<128x128xf32>
      %cst_202 = arith.constant dense<0.000000e+00> : vector<1x128xf32>
      %215 = tpu.matmul %213, %214, %cst_202 {dimension_numbers = #tpu.dot_dimension_numbers<[1], [0], [0], [1], [0, 0, 1, 1], [], []>} : vector<1x128xf32>, vector<128x128xf32>, vector<1x128xf32> -> vector<1x128xf32>
      %c0_203 = arith.constant 0 : index
      %c0_204 = arith.constant 0 : index
      %216 = vector.load %arg16[%c0_203, %c0_204] : memref<1x128xf32, #tpu.memory_space<vmem>>, vector<1x128xf32>
      %217 = arith.addf %215, %216 : vector<1x128xf32>
      %c0_205 = arith.constant 0 : index
      %c0_206 = arith.constant 0 : index
      %c0_207 = arith.constant 0 : index
      %218 = vector.load %arg17[%c0_205, %c0_206, %c0_207] : memref<1x1x128xf32, #tpu.memory_space<vmem>>, vector<1x1x128xf32>
      %219 = vector.shape_cast %218 : vector<1x1x128xf32> to vector<1x128xf32>
      %220 = vector.shape_cast %217 : vector<1x128xf32> to vector<1x1x128xf32>
      tpu.vector_store %arg17[%c0_205, %c0_206, %c0_207], %220 {strides = array<i32>} : memref<1x1x128xf32, #tpu.memory_space<vmem>>, vector<1x1x128xf32>,
    } else {
    }
    return
  }
  func.func @transform_0(%arg0: i32, %arg1: i32) -> (i32, i32, i32) {
    %c0_i32 = arith.constant 0 : i32
    %c0_i32_0 = arith.constant 0 : i32
    %c0_i32_1 = arith.constant 0 : i32
    return %arg1, %c0_i32, %c0_i32_0 : i32, i32, i32
  }
  func.func @transform_1(%arg0: i32, %arg1: i32) -> (i32, i32) {
    %c0_i32 = arith.constant 0 : i32
    %c0_i32_0 = arith.constant 0 : i32
    %c0_i32_1 = arith.constant 0 : i32
    return %c0_i32, %c0_i32_0 : i32, i32
  }
  func.func @transform_2(%arg0: i32, %arg1: i32) -> (i32, i32) {
    %c0_i32 = arith.constant 0 : i32
    %c0_i32_0 = arith.constant 0 : i32
    %c0_i32_1 = arith.constant 0 : i32
    return %c0_i32, %c0_i32_0 : i32, i32
  }
  func.func @transform_3(%arg0: i32, %arg1: i32) -> (i32, i32, i32) {
    %c0_i32 = arith.constant 0 : i32
    %c0_i32_0 = arith.constant 0 : i32
    %c0_i32_1 = arith.constant 0 : i32
    %c0_i32_2 = arith.constant 0 : i32
    return %c0_i32, %c0_i32_0, %c0_i32_1 : i32, i32, i32
  }
  func.func @transform_4(%arg0: i32, %arg1: i32) -> (i32, i32, i32) {
    %c0_i32 = arith.constant 0 : i32
    %c0_i32_0 = arith.constant 0 : i32
    %c0_i32_1 = arith.constant 0 : i32
    %c0_i32_2 = arith.constant 0 : i32
    return %c0_i32, %c0_i32_0, %c0_i32_1 : i32, i32, i32
  }
  func.func @transform_5(%arg0: i32, %arg1: i32) -> (i32, i32) {
    %c0_i32 = arith.constant 0 : i32
    %c0_i32_0 = arith.constant 0 : i32
    %c0_i32_1 = arith.constant 0 : i32
    return %c0_i32, %c0_i32_0 : i32, i32
  }
  func.func @transform_6(%arg0: i32, %arg1: i32) -> (i32, i32) {
    %c0_i32 = arith.constant 0 : i32
    %c0_i32_0 = arith.constant 0 : i32
    %c0_i32_1 = arith.constant 0 : i32
    return %c0_i32, %c0_i32_0 : i32, i32
  }
  func.func @transform_7(%arg0: i32, %arg1: i32) -> (i32, i32) {
    %c0_i32 = arith.constant 0 : i32
    %c0_i32_0 = arith.constant 0 : i32
    %c0_i32_1 = arith.constant 0 : i32
    return %c0_i32, %c0_i32_0 : i32, i32
  }
  func.func @transform_8(%arg0: i32, %arg1: i32) -> (i32, i32, i32) {
    %c0_i32 = arith.constant 0 : i32
    %c0_i32_0 = arith.constant 0 : i32
    %c0_i32_1 = arith.constant 0 : i32
    %c0_i32_2 = arith.constant 0 : i32
    return %c0_i32, %c0_i32_0, %c0_i32_1 : i32, i32, i32
  }
  func.func @transform_9(%arg0: i32, %arg1: i32) -> (i32, i32, i32) {
    %c0_i32 = arith.constant 0 : i32
    %c0_i32_0 = arith.constant 0 : i32
    %c0_i32_1 = arith.constant 0 : i32
    %c0_i32_2 = arith.constant 0 : i32
    return %c0_i32, %c0_i32_0, %c0_i32_1 : i32, i32, i32
  }
  func.func @transform_10(%arg0: i32, %arg1: i32) -> (i32, i32) {
    %c0_i32 = arith.constant 0 : i32
    %c0_i32_0 = arith.constant 0 : i32
    %c0_i32_1 = arith.constant 0 : i32
    return %c0_i32, %c0_i32_0 : i32, i32
  }
  func.func @transform_11(%arg0: i32, %arg1: i32) -> (i32, i32, i32) {
    %c0_i32 = arith.constant 0 : i32
    %c0_i32_0 = arith.constant 0 : i32
    %c0_i32_1 = arith.constant 0 : i32
    %c0_i32_2 = arith.constant 0 : i32
    return %c0_i32, %c0_i32_0, %c0_i32_1 : i32, i32, i32
  }
  func.func @transform_12(%arg0: i32, %arg1: i32) -> (i32, i32) {
    %c0_i32 = arith.constant 0 : i32
    %c0_i32_0 = arith.constant 0 : i32
    %c0_i32_1 = arith.constant 0 : i32
    return %c0_i32, %c0_i32_0 : i32, i32
  }
  func.func @transform_13(%arg0: i32, %arg1: i32) -> (i32, i32) {
    %c0_i32 = arith.constant 0 : i32
    %c0_i32_0 = arith.constant 0 : i32
    %c0_i32_1 = arith.constant 0 : i32
    return %c0_i32, %c0_i32_0 : i32, i32
  }
  func.func @transform_14(%arg0: i32, %arg1: i32) -> (i32, i32) {
    %c0_i32 = arith.constant 0 : i32
    %c0_i32_0 = arith.constant 0 : i32
    %c0_i32_1 = arith.constant 0 : i32
    return %c0_i32, %c0_i32_0 : i32, i32
  }
  func.func @transform_15(%arg0: i32, %arg1: i32) -> (i32, i32, i32) {
    %c0_i32 = arith.constant 0 : i32
    %c0_i32_0 = arith.constant 0 : i32
    %c0_i32_1 = arith.constant 0 : i32
    return %arg1, %c0_i32, %c0_i32_0 : i32, i32, i32
  }
}

</mosaic_0001>

<llo_original>
// kernel: encoder_forward.1
$region0: #{encoder_forward.1}
  #allocation0 [shape = 'u32[]', space=smem, size = 0x4, offset = 0x4, fixed_abs, tag = 'smem constant byte address 0x4 - core index']
  #allocation1 [shape = 'u32[144,128]{1,0:T(1,128)}', space=vmem, size = 0x12000, scoped, tag = 'internal scratch']
  #allocation2 [shape = 'f32[1,16]{1,0:T(1,128)}', space=vmem, size = 0x200, scoped, tag = 'scratch operand']
  #allocation3 [shape = 'f32[1,16]{1,0:T(1,128)}', space=vmem, size = 0x200, scoped, tag = 'scratch operand']
  %s0 = inlined_call_operand.vmem [shape: f32[2,196,9], index: 0, kind: input, shape index: {}]
  %s1 = inlined_call_operand.vmem [shape: f32[9,8], index: 1, kind: input, shape index: {}]
  %s2 = inlined_call_operand.vmem [shape: f32[1,8], index: 2, kind: input, shape index: {}]
  %s3 = inlined_call_operand.vmem [shape: bf16[9,49,196], index: 3, kind: input, shape index: {}]
  %s4 = inlined_call_operand.vmem [shape: f32[9,8,16], index: 4, kind: input, shape index: {}]
  %s5 = inlined_call_operand.vmem [shape: f32[1,16], index: 5, kind: input, shape index: {}]
  %s6 = inlined_call_operand.vmem [shape: f32[1,16], index: 6, kind: input, shape index: {}]
  %s7 = inlined_call_operand.vmem [shape: f32[1,16], index: 7, kind: input, shape index: {}]
  %s8 = inlined_call_operand.vmem [shape: bf16[9,9,49], index: 8, kind: input, shape index: {}]
  %s9 = inlined_call_operand.vmem [shape: f32[9,16,32], index: 9, kind: input, shape index: {}]
  %s10 = inlined_call_operand.vmem [shape: f32[1,32], index: 10, kind: input, shape index: {}]
  %s11 = inlined_call_operand.vmem [shape: f32[9,32,128], index: 11, kind: input, shape index: {}]
  %s12 = inlined_call_operand.vmem [shape: f32[1,128], index: 12, kind: input, shape index: {}]
  %s13 = inlined_call_operand.vmem [shape: f32[128,128], index: 13, kind: input, shape index: {}]
  %s14 = inlined_call_operand.vmem [shape: f32[1,128], index: 14, kind: input, shape index: {}]
  %s15 = inlined_call_operand.hbm [shape: f32[2,1,128], index: 15, kind: output, shape index: {}]
  %s16 = sld [smem:[#allocation0]]
  $region109: #{encoder_forward.1} parent=0
    _
  %s18 = ssub.s32 1, %s16
  %s19 = scalar_select 0, %s18, %s16
  $region1: #{encoder_forward.1} parent=0
    #allocation4 [shape = 'u8[1024]{0}', space=vmem, size = 0x400, scoped, tag = 'output window, operand 0']
    #allocation5 [shape = 's32[2]{0}', space=sflag, size = 0x8, scoped, tag = 'scoped memory for encoder_forward.1']
    %20 = vsyncpa [#allocation5], 0
    %s21 = scalar_lea.sflag [#allocation5], 1
    %22 = vsyncpa %s21, 0
    loop: start=0, step=1, limit=6
    $region2: #{encoder_forward.1} parent=1 // loop_pre_header
      _
    $region3: #{encoder_forward.1} parent=1 // loop_header
      %s24 = sphi 0, %s28
      %p25 = scmp.ge.s32.totalorder %s24, 6
      %s31 = sphi 0, %s43
      %s32 = sphi 0, %s39
      %s33 = sphi 0, %s31
      %s34 = sphi 0, %s32
      %s35 = sphi 0, %s33
      %s36 = sphi 0, %s34
      %s46 = sphi 0, %s48
      %s49 = sphi 0, %s46
      %s50 = sphi 0, %s49
      %s66 = sphi 0, %s50
      %s70 = sphi 0, %s70
      %s72 = sphi 0, %s70
      %s73 = sphi 0, %s72
      %s87 = sphi 0, %s73
      %s91 = sphi 0, %s91
      %s93 = sphi 0, %s91
      %s94 = sphi 0, %s93
      %s108 = sphi 0, %s94
      %s112 = sphi 0, %s112
      %s114 = sphi 0, %s112
      %s115 = sphi 0, %s114
      %s129 = sphi 0, %s115
      %s133 = sphi 0, %s133
      %s135 = sphi 0, %s133
      %s136 = sphi 0, %s135
      %s150 = sphi 0, %s136
      %s154 = sphi 0, %s154
      %s156 = sphi 0, %s154
      %s157 = sphi 0, %s156
      %s171 = sphi 0, %s157
      %s175 = sphi 0, %s175
      %s177 = sphi 0, %s175
      %s178 = sphi 0, %s177
      %s192 = sphi 0, %s178
      %s196 = sphi 0, %s196
      %s198 = sphi 0, %s196
      %s199 = sphi 0, %s198
      %s213 = sphi 0, %s199
      %s217 = sphi 0, %s217
      %s219 = sphi 0, %s217
      %s220 = sphi 0, %s219
      %s234 = sphi 0, %s220
      %s238 = sphi 0, %s238
      %s240 = sphi 0, %s238
      %s241 = sphi 0, %s240
      %s255 = sphi 0, %s241
      %s259 = sphi 0, %s259
      %s261 = sphi 0, %s259
      %s262 = sphi 0, %s261
      %s276 = sphi 0, %s262
      %s280 = sphi 0, %s280
      %s282 = sphi 0, %s280
      %s283 = sphi 0, %s282
      %s297 = sphi 0, %s283
      %s301 = sphi 0, %s301
      %s303 = sphi 0, %s301
      %s304 = sphi 0, %s303
      %s318 = sphi 0, %s304
      %s322 = sphi 0, %s322
      %s324 = sphi 0, %s322
      %s325 = sphi 0, %s324
      %s339 = sphi 0, %s325
      %s343 = sphi 0, %s343
      %s345 = sphi 0, %s343
      %s346 = sphi 0, %s345
      %s360 = sphi 0, %s346
      %s366 = sphi 0, %s368
      %s369 = sphi 0, %s366
      %s370 = sphi 0, %s369
      %s386 = sphi 0, %s370
    $region4: #{encoder_forward.1} parent=1 // loop_header_branch
      %27 = sbr.rel (%p25) target = $region8
    $region5: #{encoder_forward.1} parent=1 // loop_body
      %s29 = ssub.s32 %s24, 1
      %s30 = ssub.s32 %s24, 2
      %s37 = sadd.s32 1, %s32
      %p38 = scmp.ge.s32.totalorder %s37, 2
      %s39 = scalar_select %p38, 0, %s37
      %s40 = sadd.s32 1, %s31
      %s41 = scalar_select %p38, %s40, %s31
      %p42 = scmp.ge.s32.totalorder %s41, 2
      %s43 = scalar_select %p42, 0, %s41
      %s44 = ssub.s32 %s32, %s39
      %p45 = scmp.eq.s32.totalorder %s44, 0
      %s47 = sadd.s32 %s46, 1
      %s48 = scalar_select %p45, %s46, %s47
      %p51 = pneg %p45
      %p52 = scmp.eq.s32.totalorder %s24, 3
      %p53 = por %p51, %p52
      %p54 = scmp.ne.s32.totalorder %s46, %s49
      %p55 = scmp.eq.s32.totalorder %s24, 0
      %p56 = por %p54, %p55
      %p57 = scmp.ne.s32.totalorder %s46, %s49
      %p58 = scmp.eq.s32.totalorder %s29, 3
      %p59 = por %p57, %p58
      %p60 = scmp.ne.s32.totalorder %s49, %s50
      %p61 = scmp.eq.s32.totalorder %s29, 0
      %p62 = por %p60, %p61
      %p63 = scmp.ne.s32.totalorder %s49, %s50
      %p64 = scmp.eq.s32.totalorder %s30, 3
      %p65 = por %p63, %p64
      %p67 = scmp.ne.s32.totalorder %s50, %s66
      %p68 = scmp.eq.s32.totalorder %s30, 0
      %p69 = por %p67, %p68
      %s71 = sadd.s32 %s70, 1
      %p74 = scmp.eq.s32.totalorder %s24, 3
      %p75 = scmp.ne.s32.totalorder %s70, %s72
      %p76 = scmp.eq.s32.totalorder %s24, 0
      %p77 = por %p75, %p76
      %p78 = scmp.ne.s32.totalorder %s70, %s72
      %p79 = scmp.eq.s32.totalorder %s29, 3
      %p80 = por %p78, %p79
      %p81 = scmp.ne.s32.totalorder %s72, %s73
      %p82 = scmp.eq.s32.totalorder %s29, 0
      %p83 = por %p81, %p82
      %p84 = scmp.ne.s32.totalorder %s72, %s73
      %p85 = scmp.eq.s32.totalorder %s30, 3
      %p86 = por %p84, %p85
      %p88 = scmp.ne.s32.totalorder %s73, %s87
      %p89 = scmp.eq.s32.totalorder %s30, 0
      %p90 = por %p88, %p89
      %s92 = sadd.s32 %s91, 1
      %p95 = scmp.eq.s32.totalorder %s24, 3
      %p96 = scmp.ne.s32.totalorder %s91, %s93
      %p97 = scmp.eq.s32.totalorder %s24, 0
      %p98 = por %p96, %p97
      %p99 = scmp.ne.s32.totalorder %s91, %s93
      %p100 = scmp.eq.s32.totalorder %s29, 3
      %p101 = por %p99, %p100
      %p102 = scmp.ne.s32.totalorder %s93, %s94
      %p103 = scmp.eq.s32.totalorder %s29, 0
      %p104 = por %p102, %p103
      %p105 = scmp.ne.s32.totalorder %s93, %s94
      %p106 = scmp.eq.s32.totalorder %s30, 3
      %p107 = por %p105, %p106
      %p109 = scmp.ne.s32.totalorder %s94, %s108
      %p110 = scmp.eq.s32.totalorder %s30, 0
      %p111 = por %p109, %p110
      %s113 = sadd.s32 %s112, 1
      %p116 = scmp.eq.s32.totalorder %s24, 3
      %p117 = scmp.ne.s32.totalorder %s112, %s114
      %p118 = scmp.eq.s32.totalorder %s24, 0
      %p119 = por %p117, %p118
      %p120 = scmp.ne.s32.totalorder %s112, %s114
      %p121 = scmp.eq.s32.totalorder %s29, 3
      %p122 = por %p120, %p121
      %p123 = scmp.ne.s32.totalorder %s114, %s115
      %p124 = scmp.eq.s32.totalorder %s29, 0
      %p125 = por %p123, %p124
      %p126 = scmp.ne.s32.totalorder %s114, %s115
      %p127 = scmp.eq.s32.totalorder %s30, 3
      %p128 = por %p126, %p127
      %p130 = scmp.ne.s32.totalorder %s115, %s129
      %p131 = scmp.eq.s32.totalorder %s30, 0
      %p132 = por %p130, %p131
      %s134 = sadd.s32 %s133, 1
      %p137 = scmp.eq.s32.totalorder %s24, 3
      %p138 = scmp.ne.s32.totalorder %s133, %s135
      %p139 = scmp.eq.s32.totalorder %s24, 0
      %p140 = por %p138, %p139
      %p141 = scmp.ne.s32.totalorder %s133, %s135
      %p142 = scmp.eq.s32.totalorder %s29, 3
      %p143 = por %p141, %p142
      %p144 = scmp.ne.s32.totalorder %s135, %s136
      %p145 = scmp.eq.s32.totalorder %s29, 0
      %p146 = por %p144, %p145
      %p147 = scmp.ne.s32.totalorder %s135, %s136
      %p148 = scmp.eq.s32.totalorder %s30, 3
      %p149 = por %p147, %p148
      %p151 = scmp.ne.s32.totalorder %s136, %s150
      %p152 = scmp.eq.s32.totalorder %s30, 0
      %p153 = por %p151, %p152
      %s155 = sadd.s32 %s154, 1
      %p158 = scmp.eq.s32.totalorder %s24, 3
      %p159 = scmp.ne.s32.totalorder %s154, %s156
      %p160 = scmp.eq.s32.totalorder %s24, 0
      %p161 = por %p159, %p160
      %p162 = scmp.ne.s32.totalorder %s154, %s156
      %p163 = scmp.eq.s32.totalorder %s29, 3
      %p164 = por %p162, %p163
      %p165 = scmp.ne.s32.totalorder %s156, %s157
      %p166 = scmp.eq.s32.totalorder %s29, 0
      %p167 = por %p165, %p166
      %p168 = scmp.ne.s32.totalorder %s156, %s157
      %p169 = scmp.eq.s32.totalorder %s30, 3
      %p170 = por %p168, %p169
      %p172 = scmp.ne.s32.totalorder %s157, %s171
      %p173 = scmp.eq.s32.totalorder %s30, 0
      %p174 = por %p172, %p173
      %s176 = sadd.s32 %s175, 1
      %p179 = scmp.eq.s32.totalorder %s24, 3
      %p180 = scmp.ne.s32.totalorder %s175, %s177
      %p181 = scmp.eq.s32.totalorder %s24, 0
      %p182 = por %p180, %p181
      %p183 = scmp.ne.s32.totalorder %s175, %s177
      %p184 = scmp.eq.s32.totalorder %s29, 3
      %p185 = por %p183, %p184
      %p186 = scmp.ne.s32.totalorder %s177, %s178
      %p187 = scmp.eq.s32.totalorder %s29, 0
      %p188 = por %p186, %p187
      %p189 = scmp.ne.s32.totalorder %s177, %s178
      %p190 = scmp.eq.s32.totalorder %s30, 3
      %p191 = por %p189, %p190
      %p193 = scmp.ne.s32.totalorder %s178, %s192
      %p194 = scmp.eq.s32.totalorder %s30, 0
      %p195 = por %p193, %p194
      %s197 = sadd.s32 %s196, 1
      %p200 = scmp.eq.s32.totalorder %s24, 3
      %p201 = scmp.ne.s32.totalorder %s196, %s198
      %p202 = scmp.eq.s32.totalorder %s24, 0
      %p203 = por %p201, %p202
      %p204 = scmp.ne.s32.totalorder %s196, %s198
      %p205 = scmp.eq.s32.totalorder %s29, 3
      %p206 = por %p204, %p205
      %p207 = scmp.ne.s32.totalorder %s198, %s199
      %p208 = scmp.eq.s32.totalorder %s29, 0
      %p209 = por %p207, %p208
      %p210 = scmp.ne.s32.totalorder %s198, %s199
      %p211 = scmp.eq.s32.totalorder %s30, 3
      %p212 = por %p210, %p211
      %p214 = scmp.ne.s32.totalorder %s199, %s213
      %p215 = scmp.eq.s32.totalorder %s30, 0
      %p216 = por %p214, %p215
      %s218 = sadd.s32 %s217, 1
      %p221 = scmp.eq.s32.totalorder %s24, 3
      %p222 = scmp.ne.s32.totalorder %s217, %s219
      %p223 = scmp.eq.s32.totalorder %s24, 0
      %p224 = por %p222, %p223
      %p225 = scmp.ne.s32.totalorder %s217, %s219
      %p226 = scmp.eq.s32.totalorder %s29, 3
      %p227 = por %p225, %p226
      %p228 = scmp.ne.s32.totalorder %s219, %s220
      %p229 = scmp.eq.s32.totalorder %s29, 0
      %p230 = por %p228, %p229
      %p231 = scmp.ne.s32.totalorder %s219, %s220
      %p232 = scmp.eq.s32.totalorder %s30, 3
      %p233 = por %p231, %p232
      %p235 = scmp.ne.s32.totalorder %s220, %s234
      %p236 = scmp.eq.s32.totalorder %s30, 0
      %p237 = por %p235, %p236
      %s239 = sadd.s32 %s238, 1
      %p242 = scmp.eq.s32.totalorder %s24, 3
      %p243 = scmp.ne.s32.totalorder %s238, %s240
      %p244 = scmp.eq.s32.totalorder %s24, 0
      %p245 = por %p243, %p244
      %p246 = scmp.ne.s32.totalorder %s238, %s240
      %p247 = scmp.eq.s32.totalorder %s29, 3
      %p248 = por %p246, %p247
      %p249 = scmp.ne.s32.totalorder %s240, %s241
      %p250 = scmp.eq.s32.totalorder %s29, 0
      %p251 = por %p249, %p250
      %p252 = scmp.ne.s32.totalorder %s240, %s241
      %p253 = scmp.eq.s32.totalorder %s30, 3
      %p254 = por %p252, %p253
      %p256 = scmp.ne.s32.totalorder %s241, %s255
      %p257 = scmp.eq.s32.totalorder %s30, 0
      %p258 = por %p256, %p257
      %s260 = sadd.s32 %s259, 1
      %p263 = scmp.eq.s32.totalorder %s24, 3
      %p264 = scmp.ne.s32.totalorder %s259, %s261
      %p265 = scmp.eq.s32.totalorder %s24, 0
      %p266 = por %p264, %p265
      %p267 = scmp.ne.s32.totalorder %s259, %s261
      %p268 = scmp.eq.s32.totalorder %s29, 3
      %p269 = por %p267, %p268
      %p270 = scmp.ne.s32.totalorder %s261, %s262
      %p271 = scmp.eq.s32.totalorder %s29, 0
      %p272 = por %p270, %p271
      %p273 = scmp.ne.s32.totalorder %s261, %s262
      %p274 = scmp.eq.s32.totalorder %s30, 3
      %p275 = por %p273, %p274
      %p277 = scmp.ne.s32.totalorder %s262, %s276
      %p278 = scmp.eq.s32.totalorder %s30, 0
      %p279 = por %p277, %p278
      %s281 = sadd.s32 %s280, 1
      %p284 = scmp.eq.s32.totalorder %s24, 3
      %p285 = scmp.ne.s32.totalorder %s280, %s282
      %p286 = scmp.eq.s32.totalorder %s24, 0
      %p287 = por %p285, %p286
      %p288 = scmp.ne.s32.totalorder %s280, %s282
      %p289 = scmp.eq.s32.totalorder %s29, 3
      %p290 = por %p288, %p289
      %p291 = scmp.ne.s32.totalorder %s282, %s283
      %p292 = scmp.eq.s32.totalorder %s29, 0
      %p293 = por %p291, %p292
      %p294 = scmp.ne.s32.totalorder %s282, %s283
      %p295 = scmp.eq.s32.totalorder %s30, 3
      %p296 = por %p294, %p295
      %p298 = scmp.ne.s32.totalorder %s283, %s297
      %p299 = scmp.eq.s32.totalorder %s30, 0
      %p300 = por %p298, %p299
      %s302 = sadd.s32 %s301, 1
      %p305 = scmp.eq.s32.totalorder %s24, 3
      %p306 = scmp.ne.s32.totalorder %s301, %s303
      %p307 = scmp.eq.s32.totalorder %s24, 0
      %p308 = por %p306, %p307
      %p309 = scmp.ne.s32.totalorder %s301, %s303
      %p310 = scmp.eq.s32.totalorder %s29, 3
      %p311 = por %p309, %p310
      %p312 = scmp.ne.s32.totalorder %s303, %s304
      %p313 = scmp.eq.s32.totalorder %s29, 0
      %p314 = por %p312, %p313
      %p315 = scmp.ne.s32.totalorder %s303, %s304
      %p316 = scmp.eq.s32.totalorder %s30, 3
      %p317 = por %p315, %p316
      %p319 = scmp.ne.s32.totalorder %s304, %s318
      %p320 = scmp.eq.s32.totalorder %s30, 0
      %p321 = por %p319, %p320
      %s323 = sadd.s32 %s322, 1
      %p326 = scmp.eq.s32.totalorder %s24, 3
      %p327 = scmp.ne.s32.totalorder %s322, %s324
      %p328 = scmp.eq.s32.totalorder %s24, 0
      %p329 = por %p327, %p328
      %p330 = scmp.ne.s32.totalorder %s322, %s324
      %p331 = scmp.eq.s32.totalorder %s29, 3
      %p332 = por %p330, %p331
      %p333 = scmp.ne.s32.totalorder %s324, %s325
      %p334 = scmp.eq.s32.totalorder %s29, 0
      %p335 = por %p333, %p334
      %p336 = scmp.ne.s32.totalorder %s324, %s325
      %p337 = scmp.eq.s32.totalorder %s30, 3
      %p338 = por %p336, %p337
      %p340 = scmp.ne.s32.totalorder %s325, %s339
      %p341 = scmp.eq.s32.totalorder %s30, 0
      %p342 = por %p340, %p341
      %s344 = sadd.s32 %s343, 1
      %p347 = scmp.eq.s32.totalorder %s24, 3
      %p348 = scmp.ne.s32.totalorder %s343, %s345
      %p349 = scmp.eq.s32.totalorder %s24, 0
      %p350 = por %p348, %p349
      %p351 = scmp.ne.s32.totalorder %s343, %s345
      %p352 = scmp.eq.s32.totalorder %s29, 3
      %p353 = por %p351, %p352
      %p354 = scmp.ne.s32.totalorder %s345, %s346
      %p355 = scmp.eq.s32.totalorder %s29, 0
      %p356 = por %p354, %p355
      %p357 = scmp.ne.s32.totalorder %s345, %s346
      %p358 = scmp.eq.s32.totalorder %s30, 3
      %p359 = por %p357, %p358
      %p361 = scmp.ne.s32.totalorder %s346, %s360
      %p362 = scmp.eq.s32.totalorder %s30, 0
      %p363 = por %p361, %p362
      %s364 = ssub.s32 %s32, %s39
      %p365 = scmp.eq.s32.totalorder %s364, 0
      %s367 = sadd.s32 %s366, 1
      %s368 = scalar_select %p365, %s366, %s367
      %p371 = pneg %p365
      %p372 = scmp.eq.s32.totalorder %s24, 3
      %p373 = por %p371, %p372
      %p374 = scmp.ne.s32.totalorder %s366, %s369
      %p375 = scmp.eq.s32.totalorder %s24, 0
      %p376 = por %p374, %p375
      %p377 = scmp.ne.s32.totalorder %s366, %s369
      %p378 = scmp.eq.s32.totalorder %s29, 3
      %p379 = por %p377, %p378
      %p380 = scmp.ne.s32.totalorder %s369, %s370
      %p381 = scmp.eq.s32.totalorder %s29, 0
      %p382 = por %p380, %p381
      %p383 = scmp.ne.s32.totalorder %s369, %s370
      %p384 = scmp.eq.s32.totalorder %s30, 3
      %p385 = por %p383, %p384
      %p387 = scmp.ne.s32.totalorder %s370, %s386
      %p388 = scmp.eq.s32.totalorder %s30, 0
      %p389 = por %p387, %p388
      %p390 = scmp.le.s32.totalorder 1, %s24
      %p391 = scmp.lt.s32.totalorder %s24, 5
      %p392 = pnand %p390, %p391
      %p393 = pneg %p392
      // Predicated region
      $region9: #{encoder_forward.1} parent=5 // pred_check
        _
      $region10: #{encoder_forward.1} parent=5 // pred_check_branch
        %395 = sbr.rel (%p392) target = $region12
      $region11: #{encoder_forward.1} parent=5 // pred_region
        %s396 = ssub.s32 %s24, 1
        // Predicated region
        $region13: #{encoder_forward.1} parent=11 // pred_check
          %p397 = pneg %p83
        $region14: #{encoder_forward.1} parent=11 // pred_check_branch
          %399 = sbr.rel (%p397) target = $region16
        $region15: #{encoder_forward.1} parent=11 // pred_region
          _
        $region16: #{encoder_forward.1} parent=11 // pred_fallthru
          _
        // Predicated region
        $region17: #{encoder_forward.1} parent=11 // pred_check
          %p400 = pneg %p104
        $region18: #{encoder_forward.1} parent=11 // pred_check_branch
          %402 = sbr.rel (%p400) target = $region20
        $region19: #{encoder_forward.1} parent=11 // pred_region
          _
        $region20: #{encoder_forward.1} parent=11 // pred_fallthru
          _
        // Predicated region
        $region21: #{encoder_forward.1} parent=11 // pred_check
          %p403 = pneg %p125
        $region22: #{encoder_forward.1} parent=11 // pred_check_branch
          %405 = sbr.rel (%p403) target = $region24
        $region23: #{encoder_forward.1} parent=11 // pred_region
          _
        $region24: #{encoder_forward.1} parent=11 // pred_fallthru
          _
        // Predicated region
        $region25: #{encoder_forward.1} parent=11 // pred_check
          %p406 = pneg %p146
        $region26: #{encoder_forward.1} parent=11 // pred_check_branch
          %408 = sbr.rel (%p406) target = $region28
        $region27: #{encoder_forward.1} parent=11 // pred_region
          _
        $region28: #{encoder_forward.1} parent=11 // pred_fallthru
          _
        // Predicated region
        $region29: #{encoder_forward.1} parent=11 // pred_check
          %p409 = pneg %p167
        $region30: #{encoder_forward.1} parent=11 // pred_check_branch
          %411 = sbr.rel (%p409) target = $region32
        $region31: #{encoder_forward.1} parent=11 // pred_region
          _
        $region32: #{encoder_forward.1} parent=11 // pred_fallthru
          _
        // Predicated region
        $region33: #{encoder_forward.1} parent=11 // pred_check
          %p412 = pneg %p188
        $region34: #{encoder_forward.1} parent=11 // pred_check_branch
          %414 = sbr.rel (%p412) target = $region36
        $region35: #{encoder_forward.1} parent=11 // pred_region
          _
        $region36: #{encoder_forward.1} parent=11 // pred_fallthru
          _
        // Predicated region
        $region37: #{encoder_forward.1} parent=11 // pred_check
          %p415 = pneg %p209
        $region38: #{encoder_forward.1} parent=11 // pred_check_branch
          %417 = sbr.rel (%p415) target = $region40
        $region39: #{encoder_forward.1} parent=11 // pred_region
          _
        $region40: #{encoder_forward.1} parent=11 // pred_fallthru
          _
        // Predicated region
        $region41: #{encoder_forward.1} parent=11 // pred_check
          %p418 = pneg %p230
        $region42: #{encoder_forward.1} parent=11 // pred_check_branch
          %420 = sbr.rel (%p418) target = $region44
        $region43: #{encoder_forward.1} parent=11 // pred_region
          _
        $region44: #{encoder_forward.1} parent=11 // pred_fallthru
          _
        // Predicated region
        $region45: #{encoder_forward.1} parent=11 // pred_check
          %p421 = pneg %p251
        $region46: #{encoder_forward.1} parent=11 // pred_check_branch
          %423 = sbr.rel (%p421) target = $region48
        $region47: #{encoder_forward.1} parent=11 // pred_region
          _
        $region48: #{encoder_forward.1} parent=11 // pred_fallthru
          _
        // Predicated region
        $region49: #{encoder_forward.1} parent=11 // pred_check
          %p424 = pneg %p272
        $region50: #{encoder_forward.1} parent=11 // pred_check_branch
          %426 = sbr.rel (%p424) target = $region52
        $region51: #{encoder_forward.1} parent=11 // pred_region
          _
        $region52: #{encoder_forward.1} parent=11 // pred_fallthru
          _
        // Predicated region
        $region53: #{encoder_forward.1} parent=11 // pred_check
          %p427 = pneg %p293
        $region54: #{encoder_forward.1} parent=11 // pred_check_branch
          %429 = sbr.rel (%p427) target = $region56
        $region55: #{encoder_forward.1} parent=11 // pred_region
          _
        $region56: #{encoder_forward.1} parent=11 // pred_fallthru
          _
        // Predicated region
        $region57: #{encoder_forward.1} parent=11 // pred_check
          %p430 = pneg %p314
        $region58: #{encoder_forward.1} parent=11 // pred_check_branch
          %432 = sbr.rel (%p430) target = $region60
        $region59: #{encoder_forward.1} parent=11 // pred_region
          _
        $region60: #{encoder_forward.1} parent=11 // pred_fallthru
          _
        // Predicated region
        $region61: #{encoder_forward.1} parent=11 // pred_check
          %p433 = pneg %p335
        $region62: #{encoder_forward.1} parent=11 // pred_check_branch
          %435 = sbr.rel (%p433) target = $region64
        $region63: #{encoder_forward.1} parent=11 // pred_region
          _
        $region64: #{encoder_forward.1} parent=11 // pred_fallthru
          _
        // Predicated region
        $region65: #{encoder_forward.1} parent=11 // pred_check
          %p436 = pneg %p356
        $region66: #{encoder_forward.1} parent=11 // pred_check_branch
          %438 = sbr.rel (%p436) target = $region68
        $region67: #{encoder_forward.1} parent=11 // pred_region
          _
        $region68: #{encoder_forward.1} parent=11 // pred_fallthru
          _
      $region12: #{encoder_forward.1} parent=5 // pred_fallthru
        _
      %p439 = scmp.lt.s32.totalorder %s24, 4
      // Predicated region
      $region69: #{encoder_forward.1} parent=5 // pred_check
        %p440 = pneg %p439
      $region70: #{encoder_forward.1} parent=5 // pred_check_branch
        %442 = sbr.rel (%p440) target = $region72
      $region71: #{encoder_forward.1} parent=5 // pred_region
        // Predicated region
        $region73: #{encoder_forward.1} parent=71 // pred_check
          %p443 = pneg %p56
        $region74: #{encoder_forward.1} parent=71 // pred_check_branch
          %445 = sbr.rel (%p443) target = $region76
        $region75: #{encoder_forward.1} parent=71 // pred_region
          %p446 = scmp.lt.s32.totalorder %s32, 1
          %s447 = scalar_select %p446, %s32, 1
          %s448 = smul.addr %s447, 25
          %s449 = smul.addr %s448, 8
          %s450 = scalar_lea.vmem %s0, %s449
        $region76: #{encoder_forward.1} parent=71 // pred_fallthru
          _
      $region72: #{encoder_forward.1} parent=5 // pred_fallthru
        _
      %p451 = scmp.le.s32.totalorder 1, %s24
      %p452 = scmp.lt.s32.totalorder %s24, 5
      %p453 = pnand %p451, %p452
      %p454 = pneg %p453
      // Predicated region
      $region77: #{encoder_forward.1} parent=5 // pred_check
        _
      $region78: #{encoder_forward.1} parent=5 // pred_check_branch
        %456 = sbr.rel (%p453) target = $region80
      $region79: #{encoder_forward.1} parent=5 // pred_region
        %s457 = ssub.s32 %s24, 1
        %p458 = scmp.lt.s32.totalorder %s34, 1
        %s459 = scalar_select %p458, %s34, 1
        %s460 = smul.addr %s459, 25
        %s461 = smul.addr %s460, 8
        %s462 = scalar_lea.vmem %s0, %s461
        %p463 = pneg %p62
        %p464 = pneg %p59
        %p465 = pneg %p83
        %p466 = pneg %p80
        %p467 = pneg %p104
        %p468 = pneg %p101
        %p469 = pneg %p125
        %p470 = pneg %p122
        %p471 = pneg %p146
        %p472 = pneg %p143
        %p473 = pneg %p167
        %p474 = pneg %p164
        %p475 = pneg %p188
        %p476 = pneg %p185
        %p477 = pneg %p209
        %p478 = pneg %p206
        %p479 = pneg %p230
        %p480 = pneg %p227
        %p481 = pneg %p251
        %p482 = pneg %p248
        %p483 = pneg %p272
        %p484 = pneg %p269
        %p485 = pneg %p293
        %p486 = pneg %p290
        %p487 = pneg %p314
        %p488 = pneg %p311
        %p489 = pneg %p335
        %p490 = pneg %p332
        %p491 = pneg %p356
        %p492 = pneg %p353
        %p493 = pneg %p382
        %p494 = pneg %p379
        %s495 = sand.u32 %s369, 1
        %s496 = scalar_lea.sflag [#allocation5], %s495
        %s497 = sand.u32 %s369, 1
        %s498 = scalar_lea.vmem [#allocation4], %s497
        %p499 = scmp.lt.s32.totalorder %s34, 1
        %s500 = scalar_select %p499, %s34, 1
        %s501 = smul.addr %s500, 25
        %s502 = smul.addr %s501, 8
        %s503 = scalar_lea.vmem %s0, %s502
        %p505 = scmp.eq.s32.totalorder %s33, 0
        // Predicated region
        $region81: #{encoder_forward.1} parent=79 // pred_check
          %p506 = pneg %p505
        $region82: #{encoder_forward.1} parent=79 // pred_check_branch
          %508 = sbr.rel (%p506) target = $region84
        $region83: #{encoder_forward.1} parent=79 // pred_region
          %p509 = scmp.eq.s32.totalorder %s34, 0
          // Predicated region
          $region85: #{encoder_forward.1} parent=83 // pred_check
            %p510 = pneg %p509
          $region86: #{encoder_forward.1} parent=83 // pred_check_branch
            %512 = sbr.rel (%p510) target = $region88
          $region87: #{encoder_forward.1} parent=83 // pred_region
            %vm513 = vcmask 122880
            %514 = vst.msk [vmem:[#allocation2] sm:$0x1] %vm513, 0.0
            %515 = vst.msk [vmem:[#allocation3] sm:$0x1] %vm513, 0.0
          $region88: #{encoder_forward.1} parent=83 // pred_fallthru
            _
          %v516 = vld [vmem:[%s503] sm:$0xff]
          %v517 = vld [vmem:[%s503 + $0x8] sm:$0xff]
          %v518 = vld [vmem:[%s503 + $0x10] sm:$0xff]
          %v519 = vld [vmem:[%s503 + $0x18] sm:$0xff]
          %v520 = vld [vmem:[%s503 + $0x20] sm:$0xff]
          %v521 = vld [vmem:[%s503 + $0x28] sm:$0xff]
          %v522 = vld [vmem:[%s503 + $0x30] sm:$0xff]
          %v523 = vld [vmem:[%s503 + $0x38] sm:$0xff]
          %v524 = vld [vmem:[%s503 + $0x40] sm:$0xff]
          %v525 = vld [vmem:[%s503 + $0x48] sm:$0xff]
          %v526 = vld [vmem:[%s503 + $0x50] sm:$0xff]
          %v527 = vld [vmem:[%s503 + $0x58] sm:$0xff]
          %v528 = vld [vmem:[%s503 + $0x60] sm:$0xff]
          %v529 = vld [vmem:[%s503 + $0x68] sm:$0xff]
          %v530 = vld [vmem:[%s503 + $0x70] sm:$0xff]
          %v531 = vld [vmem:[%s503 + $0x78] sm:$0xff]
          %v532 = vld [vmem:[%s503 + $0x80] sm:$0xff]
          %v533 = vld [vmem:[%s503 + $0x88] sm:$0xff]
          %v534 = vld [vmem:[%s503 + $0x90] sm:$0xff]
          %v535 = vld [vmem:[%s503 + $0x98] sm:$0xff]
          %v536 = vld [vmem:[%s503 + $0xa0] sm:$0xff]
          %v537 = vld [vmem:[%s503 + $0xa8] sm:$0xff]
          %v538 = vld [vmem:[%s503 + $0xb0] sm:$0xff]
          %v539 = vld [vmem:[%s503 + $0xb8] sm:$0xff]
          %v540 = vld [vmem:[%s503 + $0xc0] sm:$0xf]
          %v541 = vld [vmem:[%s1] sm:$0xff]
          %v542 = vld [vmem:[%s1 + $0x8] sm:$0x1]
          %v543 = vld [vmem:[%s2] sm:$0x1]
          %v545 = vlaneseq
          %v546 = vshrl.u32 %v545, 7
          %v547 = vsub.s32 0, %v546
          %v548 = vrot.slane %v543, %v547
          %vm550 = vcmask 72704
          %v552 = vsel %vm550, %v516, 0
          %v555 = vsel %vm550, %v517, 0
          %v558 = vsel %vm550, %v518, 0
          %v561 = vsel %vm550, %v519, 0
          %v564 = vsel %vm550, %v520, 0
          %v567 = vsel %vm550, %v521, 0
          %v570 = vsel %vm550, %v522, 0
          %v573 = vsel %vm550, %v523, 0
          %v576 = vsel %vm550, %v524, 0
          %v579 = vsel %vm550, %v525, 0
          %v582 = vsel %vm550, %v526, 0
          %v585 = vsel %vm550, %v527, 0
          %v588 = vsel %vm550, %v528, 0
          %v591 = vsel %vm550, %v529, 0
          %v594 = vsel %vm550, %v530, 0
          %v597 = vsel %vm550, %v531, 0
          %v600 = vsel %vm550, %v532, 0
          %v603 = vsel %vm550, %v533, 0
          %v606 = vsel %vm550, %v534, 0
          %v609 = vsel %vm550, %v535, 0
          %v612 = vsel %vm550, %v536, 0
          %v615 = vsel %vm550, %v537, 0
          %v618 = vsel %vm550, %v538, 0
          %v621 = vsel %vm550, %v539, 0
          %v624 = vsel %vm550, %v540, 0
          %vm626 = vcmask 1040384
          %v628 = vsel %vm626, %v542, 0
          %630 = vmatprep.subr.mxu0 0.0
          %631 = vmatpush1.msra.mxu0 %v541
          %632 = vmatprep.subr.mxu0 0.0
          %633 = vmatpush1.msra.mxu0 %v628
          %634 = vmatprep.subr.mxu0 0.0
          %635 = vmatpush1.msra.mxu0 0.0
          %636 = vmatprep.subr.mxu0 0.0
          %637 = vmatpush1.msra.mxu0 0.0
          %638 = vmatprep.subr.mxu0 0.0
          %639 = vmatpush1.msra.mxu0 0.0
          %640 = vmatprep.subr.mxu0 0.0
          %641 = vmatpush1.msra.mxu0 0.0
          %642 = vmatprep.subr.mxu0 0.0
          %643 = vmatpush1.msra.mxu0 0.0
          %644 = vmatprep.subr.mxu0 0.0
          %645 = vmatpush1.msra.mxu0 0.0
          %646 = vmatprep.subr.mxu0 0.0
          %647 = vmatpush1.msra.mxu0 0.0
          %648 = vmatprep.subr.mxu0 0.0
          %649 = vmatpush1.msra.mxu0 0.0
          %650 = vmatprep.subr.mxu0 0.0
          %651 = vmatpush1.msra.mxu0 0.0
          %652 = vmatprep.subr.mxu0 0.0
          %653 = vmatpush1.msra.mxu0 0.0
          %654 = vmatprep.subr.mxu0 0.0
          %655 = vmatpush1.msra.mxu0 0.0
          %656 = vmatprep.subr.mxu0 0.0
          %657 = vmatpush1.msra.mxu0 0.0
          %658 = vmatprep.subr.mxu0 0.0
          %659 = vmatpush1.msra.mxu0 0.0
          %660 = vmatprep.subr.mxu0 0.0
          %661 = vmatpush1.msra.mxu0 0.0
          %662 = vmatprep.subr.mxu0 0.0
          %663 = vmatpush1.msra.mxu0 0.0
          %664 = vmatprep.subr.mxu0 0.0
          %665 = vmatpush1.msra.mxu0 0.0
          %666 = vmatprep.subr.mxu0 0.0
          %667 = vmatpush1.msra.mxu0 0.0
          %668 = vmatprep.subr.mxu0 0.0
          %669 = vmatpush1.msra.mxu0 0.0
          %670 = vmatprep.subr.mxu0 0.0
          %671 = vmatpush1.msra.mxu0 0.0
          %672 = vmatprep.subr.mxu0 0.0
          %673 = vmatpush1.msra.mxu0 0.0
          %674 = vmatprep.subr.mxu0 0.0
          %675 = vmatpush1.msra.mxu0 0.0
          %676 = vmatprep.subr.mxu0 0.0
          %677 = vmatpush1.msra.mxu0 0.0
          %678 = vmatprep.subr.mxu0 0.0
          %679 = vmatpush1.msra.mxu0 0.0
          %680 = vmatprep.subr.mxu0 0.0
          %681 = vmatpush1.msra.mxu0 0.0
          %682 = vmatprep.subr.mxu0 0.0
          %683 = vmatpush1.msra.mxu0 0.0
          %684 = vmatprep.subr.mxu0 0.0
          %685 = vmatpush1.msra.mxu0 0.0
          %686 = vmatprep.subr.mxu0 0.0
          %687 = vmatpush1.msra.mxu0 0.0
          %688 = vmatprep.subr.mxu0 0.0
          %689 = vmatpush1.msra.mxu0 0.0
          %690 = vmatprep.subr.mxu0 0.0
          %691 = vmatpush1.msra.mxu0 0.0
          %692 = vmatprep.subr.mxu0 0.0
          %693 = vmatpush1.msra.mxu0 0.0
          %694 = vmatprep.mubr.f32.mxu0 0.0
          %695 = vmatmul.mubr.f32.gmra.mrb[0].mxu0 %v552
          %v696 = vpop.f32.mrb[0].mxu0
          %v697 = vadd.f32 %v548, %v696
          %v698 = vpop.f32.mrb[0].mxu0
          %699 = vmatprep.mubr.f32.mxu0 0.0
          %700 = vmatmul.mubr.f32.gmra.mrb[0].mxu0 %v555
          %v701 = vpop.f32.mrb[0].mxu0
          %v702 = vadd.f32 %v548, %v701
          %v703 = vpop.f32.mrb[0].mxu0
          %704 = vmatprep.mubr.f32.mxu0 0.0
          %705 = vmatmul.mubr.f32.gmra.mrb[0].mxu0 %v558
          %v706 = vpop.f32.mrb[0].mxu0
          %v707 = vadd.f32 %v548, %v706
          %v708 = vpop.f32.mrb[0].mxu0
          %709 = vmatprep.mubr.f32.mxu0 0.0
          %710 = vmatmul.mubr.f32.gmra.mrb[0].mxu0 %v561
          %v711 = vpop.f32.mrb[0].mxu0
          %v712 = vadd.f32 %v548, %v711
          %v713 = vpop.f32.mrb[0].mxu0
          %714 = vmatprep.mubr.f32.mxu0 0.0
          %715 = vmatmul.mubr.f32.gmra.mrb[0].mxu0 %v564
          %v716 = vpop.f32.mrb[0].mxu0
          %v717 = vadd.f32 %v548, %v716
          %v718 = vpop.f32.mrb[0].mxu0
          %719 = vmatprep.mubr.f32.mxu0 0.0
          %720 = vmatmul.mubr.f32.gmra.mrb[0].mxu0 %v567
          %v721 = vpop.f32.mrb[0].mxu0
          %v722 = vadd.f32 %v548, %v721
          %v723 = vpop.f32.mrb[0].mxu0
          %724 = vmatprep.mubr.f32.mxu0 0.0
          %725 = vmatmul.mubr.f32.gmra.mrb[0].mxu0 %v570
          %v726 = vpop.f32.mrb[0].mxu0
          %v727 = vadd.f32 %v548, %v726
          %v728 = vpop.f32.mrb[0].mxu0
          %729 = vmatprep.mubr.f32.mxu0 0.0
          %730 = vmatmul.mubr.f32.gmra.mrb[0].mxu0 %v573
          %v731 = vpop.f32.mrb[0].mxu0
          %v732 = vadd.f32 %v548, %v731
          %v733 = vpop.f32.mrb[0].mxu0
          %734 = vmatprep.mubr.f32.mxu0 0.0
          %735 = vmatmul.mubr.f32.gmra.mrb[0].mxu0 %v576
          %v736 = vpop.f32.mrb[0].mxu0
          %v737 = vadd.f32 %v548, %v736
          %v738 = vpop.f32.mrb[0].mxu0
          %739 = vmatprep.mubr.f32.mxu0 0.0
          %740 = vmatmul.mubr.f32.gmra.mrb[0].mxu0 %v579
          %v741 = vpop.f32.mrb[0].mxu0
          %v742 = vadd.f32 %v548, %v741
          %v743 = vpop.f32.mrb[0].mxu0
          %744 = vmatprep.mubr.f32.mxu0 0.0
          %745 = vmatmul.mubr.f32.gmra.mrb[0].mxu0 %v582
          %v746 = vpop.f32.mrb[0].mxu0
          %v747 = vadd.f32 %v548, %v746
          %v748 = vpop.f32.mrb[0].mxu0
          %749 = vmatprep.mubr.f32.mxu0 0.0
          %750 = vmatmul.mubr.f32.gmra.mrb[0].mxu0 %v585
          %v751 = vpop.f32.mrb[0].mxu0
          %v752 = vadd.f32 %v548, %v751
          %v753 = vpop.f32.mrb[0].mxu0
          %754 = vmatprep.mubr.f32.mxu0 0.0
          %755 = vmatmul.mubr.f32.gmra.mrb[0].mxu0 %v588
          %v756 = vpop.f32.mrb[0].mxu0
          %v757 = vadd.f32 %v548, %v756
          %v758 = vpop.f32.mrb[0].mxu0
          %759 = vmatprep.mubr.f32.mxu0 0.0
          %760 = vmatmul.mubr.f32.gmra.mrb[0].mxu0 %v591
          %v761 = vpop.f32.mrb[0].mxu0
          %v762 = vadd.f32 %v548, %v761
          %v763 = vpop.f32.mrb[0].mxu0
          %764 = vmatprep.mubr.f32.mxu0 0.0
          %765 = vmatmul.mubr.f32.gmra.mrb[0].mxu0 %v594
          %v766 = vpop.f32.mrb[0].mxu0
          %v767 = vadd.f32 %v548, %v766
          %v768 = vpop.f32.mrb[0].mxu0
          %769 = vmatprep.mubr.f32.mxu0 0.0
          %770 = vmatmul.mubr.f32.gmra.mrb[0].mxu0 %v597
          %v771 = vpop.f32.mrb[0].mxu0
          %v772 = vadd.f32 %v548, %v771
          %v773 = vpop.f32.mrb[0].mxu0
          %774 = vmatprep.mubr.f32.mxu0 0.0
          %775 = vmatmul.mubr.f32.gmra.mrb[0].mxu0 %v600
          %v776 = vpop.f32.mrb[0].mxu0
          %v777 = vadd.f32 %v548, %v776
          %v778 = vpop.f32.mrb[0].mxu0
          %779 = vmatprep.mubr.f32.mxu0 0.0
          %780 = vmatmul.mubr.f32.gmra.mrb[0].mxu0 %v603
          %v781 = vpop.f32.mrb[0].mxu0
          %v782 = vadd.f32 %v548, %v781
          %v783 = vpop.f32.mrb[0].mxu0
          %784 = vmatprep.mubr.f32.mxu0 0.0
          %785 = vmatmul.mubr.f32.gmra.mrb[0].mxu0 %v606
          %v786 = vpop.f32.mrb[0].mxu0
          %v787 = vadd.f32 %v548, %v786
          %v788 = vpop.f32.mrb[0].mxu0
          %789 = vmatprep.mubr.f32.mxu0 0.0
          %790 = vmatmul.mubr.f32.gmra.mrb[0].mxu0 %v609
          %v791 = vpop.f32.mrb[0].mxu0
          %v792 = vadd.f32 %v548, %v791
          %v793 = vpop.f32.mrb[0].mxu0
          %794 = vmatprep.mubr.f32.mxu0 0.0
          %795 = vmatmul.mubr.f32.gmra.mrb[0].mxu0 %v612
          %v796 = vpop.f32.mrb[0].mxu0
          %v797 = vadd.f32 %v548, %v796
          %v798 = vpop.f32.mrb[0].mxu0
          %799 = vmatprep.mubr.f32.mxu0 0.0
          %800 = vmatmul.mubr.f32.gmra.mrb[0].mxu0 %v615
          %v801 = vpop.f32.mrb[0].mxu0
          %v802 = vadd.f32 %v548, %v801
          %v803 = vpop.f32.mrb[0].mxu0
          %804 = vmatprep.mubr.f32.mxu0 0.0
          %805 = vmatmul.mubr.f32.gmra.mrb[0].mxu0 %v618
          %v806 = vpop.f32.mrb[0].mxu0
          %v807 = vadd.f32 %v548, %v806
          %v808 = vpop.f32.mrb[0].mxu0
          %809 = vmatprep.mubr.f32.mxu0 0.0
          %810 = vmatmul.mubr.f32.gmra.mrb[0].mxu0 %v621
          %v811 = vpop.f32.mrb[0].mxu0
          %v812 = vadd.f32 %v548, %v811
          %v813 = vpop.f32.mrb[0].mxu0
          %814 = vmatprep.mubr.f32.mxu0 0.0
          %815 = vmatmul.mubr.f32.gmra.mrb[0].mxu0 %v624
          %v816 = vpop.f32.mrb[0].mxu0
          %v817 = vadd.f32 %v548, %v816
          %v818 = vpop.f32.mrb[0].mxu0
          %819 = vdwg.mxu0
          %v820 = vmax.f32 %v697, 0.0
          %v821 = vmax.f32 %v702, 0.0
          %v822 = vmax.f32 %v707, 0.0
          %v823 = vmax.f32 %v712, 0.0
          %v824 = vmax.f32 %v717, 0.0
          %v825 = vmax.f32 %v722, 0.0
          %v826 = vmax.f32 %v727, 0.0
          %v827 = vmax.f32 %v732, 0.0
          %v828 = vmax.f32 %v737, 0.0
          %v829 = vmax.f32 %v742, 0.0
          %v830 = vmax.f32 %v747, 0.0
          %v831 = vmax.f32 %v752, 0.0
          %v832 = vmax.f32 %v757, 0.0
          %v833 = vmax.f32 %v762, 0.0
          %v834 = vmax.f32 %v767, 0.0
          %v835 = vmax.f32 %v772, 0.0
          %v836 = vmax.f32 %v777, 0.0
          %v837 = vmax.f32 %v782, 0.0
          %v838 = vmax.f32 %v787, 0.0
          %v839 = vmax.f32 %v792, 0.0
          %v840 = vmax.f32 %v797, 0.0
          %v841 = vmax.f32 %v802, 0.0
          %v842 = vmax.f32 %v807, 0.0
          %v843 = vmax.f32 %v812, 0.0
          %v844 = vmax.f32 %v817, 0.0
          %v845 = vpack.c.bf16 %v821, %v820
          %v846 = vpack.c.bf16 %v823, %v822
          %v847 = vpack.c.bf16 %v825, %v824
          %v848 = vpack.c.bf16 %v827, %v826
          %v849 = vpack.c.bf16 %v829, %v828
          %v850 = vpack.c.bf16 %v831, %v830
          %v851 = vpack.c.bf16 %v833, %v832
          %v852 = vpack.c.bf16 %v835, %v834
          %v853 = vpack.c.bf16 %v837, %v836
          %v854 = vpack.c.bf16 %v839, %v838
          %v855 = vpack.c.bf16 %v841, %v840
          %v856 = vpack.c.bf16 %v843, %v842
          %v857 = vpack.c.bf16 %v844, %v844
          %v858 = vld [vmem:[%s3] sm:$0xff]
          %v859 = vld [vmem:[%s3 + $0x8] sm:$0xff]
          %v860 = vld [vmem:[%s3 + $0x10] sm:$0xff]
          %v861 = vld [vmem:[%s3 + $0x18] sm:$0xff]
          %v862 = vld [vmem:[%s3 + $0x20] sm:$0xff]
          %v863 = vld [vmem:[%s3 + $0x28] sm:$0xff]
          %v864 = vld [vmem:[%s3 + $0x30] sm:$0x11]
          %v872 = vunpack.c.l.b16 %v858
          %v873 = vunpack.c.h.b16 %v858
          %v874 = vunpack.c.l.b16 %v859
          %v875 = vunpack.c.h.b16 %v859
          %v876 = vunpack.c.l.b16 %v860
          %v877 = vunpack.c.h.b16 %v860
          %v878 = vunpack.c.l.b16 %v861
          %v879 = vunpack.c.h.b16 %v861
          %v880 = vunpack.c.l.b16 %v862
          %v881 = vunpack.c.h.b16 %v862
          %v882 = vunpack.c.l.b16 %v863
          %v883 = vunpack.c.h.b16 %v863
          %v884 = vunpack.c.l.b16 %v864
          %v885 = vunpack.c.h.b16 %v864
          %v886 = vpack.c.b16 %v874, %v872
          %v887 = vpack.c.b16 %v875, %v873
          %v888 = vpack.c.b16 %v878, %v876
          %v889 = vpack.c.b16 %v879, %v877
          %v890 = vpack.c.b16 %v882, %v880
          %v891 = vpack.c.b16 %v883, %v881
          %v892 = vpack.c.b16 %v884, %v884
          %v893 = vpack.c.b16 %v885, %v885
          %vm898 = vcmask 556032
          %v900 = vsel %vm898, %v887, 0
          %v903 = vsel %vm898, %v889, 0
          %v906 = vsel %vm898, %v891, 0
          %v909 = vsel %vm898, %v893, 0
          %vm911 = vcmask 1041408
          %v913 = vsel %vm911, %v857, 0
          %915 = vmatprep.subr.bf16.mxu0 0
          %916 = vmatpush1.bf16.msra.mxu0 %v845
          %917 = vmatprep.subr.bf16.mxu0 0
          %918 = vmatpush1.bf16.msra.mxu0 %v846
          %919 = vmatprep.subr.bf16.mxu0 0
          %920 = vmatpush1.bf16.msra.mxu0 %v847
          %921 = vmatprep.subr.bf16.mxu0 0
          %922 = vmatpush1.bf16.msra.mxu0 %v848
          %923 = vmatprep.subr.bf16.mxu0 0
          %924 = vmatpush1.bf16.msra.mxu0 %v849
          %925 = vmatprep.subr.bf16.mxu0 0
          %926 = vmatpush1.bf16.msra.mxu0 %v850
          %927 = vmatprep.subr.bf16.mxu0 0
          %928 = vmatpush1.bf16.msra.mxu0 %v851
          %929 = vmatprep.subr.bf16.mxu0 0
          %930 = vmatpush1.bf16.msra.mxu0 %v852
          %931 = vmatprep.subr.bf16.mxu0 0
          %932 = vmatpush1.bf16.msra.mxu0 %v853
          %933 = vmatprep.subr.bf16.mxu0 0
          %934 = vmatpush1.bf16.msra.mxu0 %v854
          %935 = vmatprep.subr.bf16.mxu0 0
          %936 = vmatpush1.bf16.msra.mxu0 %v855
          %937 = vmatprep.subr.bf16.mxu0 0
          %938 = vmatpush1.bf16.msra.mxu0 %v856
          %939 = vmatprep.subr.bf16.mxu0 0
          %940 = vmatpush1.bf16.msra.mxu0 %v913
          %941 = vmatprep.subr.bf16.mxu0 0
          %942 = vmatpush1.bf16.msra.mxu0 0
          %943 = vmatprep.subr.bf16.mxu0 0
          %944 = vmatpush1.bf16.msra.mxu0 0
          %945 = vmatprep.subr.bf16.mxu0 0
          %946 = vmatpush1.bf16.msra.mxu0 0
          %947 = vmatprep.mubr.bf16.mxu0 %v900
          %948 = vmatmul.mubr.bf16.gmra.mrb[0].mxu0 %v886
          %v949 = vpop.f32.mrb[0].mxu0
          %v950 = vadd.f32 0.0, %v949
          %v951 = vpop.f32.mrb[0].mxu0
          %v952 = vpop.f32.mrb[0].mxu0
          %v953 = vadd.f32 0.0, %v952
          %v954 = vpop.f32.mrb[0].mxu0
          %955 = vmatprep.mubr.bf16.mxu0 %v903
          %956 = vmatmul.mubr.bf16.gmra.mrb[0].mxu0 %v888
          %v957 = vpop.f32.mrb[0].mxu0
          %v958 = vadd.f32 0.0, %v957
          %v959 = vpop.f32.mrb[0].mxu0
          %v960 = vpop.f32.mrb[0].mxu0
          %v961 = vadd.f32 0.0, %v960
          %v962 = vpop.f32.mrb[0].mxu0
          %963 = vmatprep.mubr.bf16.mxu0 %v906
          %964 = vmatmul.mubr.bf16.gmra.mrb[0].mxu0 %v890
          %v965 = vpop.f32.mrb[0].mxu0
          %v966 = vadd.f32 0.0, %v965
          %v967 = vpop.f32.mrb[0].mxu0
          %v968 = vpop.f32.mrb[0].mxu0
          %v969 = vadd.f32 0.0, %v968
          %v970 = vpop.f32.mrb[0].mxu0
          %971 = vmatprep.mubr.bf16.mxu0 %v909
          %972 = vmatmul.mubr.bf16.gmra.mrb[0].mxu0 %v892
          %v973 = vpop.f32.mrb[0].mxu0
          %v974 = vadd.f32 0.0, %v973
          %v975 = vpop.f32.mrb[0].mxu0
          %v976 = vpop.f32.mrb[0].mxu0
          %v977 = vpop.f32.mrb[0].mxu0
          %978 = vdwg.mxu0
          %v979 = vld [vmem:[%s4] sm:$0xff]
          %s980 = scalar_lea.vmem %s3, 56
          %v981 = vld [vmem:[%s980] sm:$0xff]
          %v982 = vld [vmem:[%s980 + $0x8] sm:$0xff]
          %v983 = vld [vmem:[%s980 + $0x10] sm:$0xff]
          %v984 = vld [vmem:[%s980 + $0x18] sm:$0xff]
          %v985 = vld [vmem:[%s980 + $0x20] sm:$0xff]
          %v986 = vld [vmem:[%s980 + $0x28] sm:$0xff]
          %v987 = vld [vmem:[%s980 + $0x30] sm:$0x11]
          %v995 = vunpack.c.l.b16 %v981
          %v996 = vunpack.c.h.b16 %v981
          %v997 = vunpack.c.l.b16 %v982
          %v998 = vunpack.c.h.b16 %v982
          %v999 = vunpack.c.l.b16 %v983
          %v1000 = vunpack.c.h.b16 %v983
          %v1001 = vunpack.c.l.b16 %v984
          %v1002 = vunpack.c.h.b16 %v984
          %v1003 = vunpack.c.l.b16 %v985
          %v1004 = vunpack.c.h.b16 %v985
          %v1005 = vunpack.c.l.b16 %v986
          %v1006 = vunpack.c.h.b16 %v986
          %v1007 = vunpack.c.l.b16 %v987
          %v1008 = vunpack.c.h.b16 %v987
          %v1009 = vpack.c.b16 %v997, %v995
          %v1010 = vpack.c.b16 %v998, %v996
          %v1011 = vpack.c.b16 %v1001, %v999
          %v1012 = vpack.c.b16 %v1002, %v1000
          %v1013 = vpack.c.b16 %v1005, %v1003
          %v1014 = vpack.c.b16 %v1006, %v1004
          %v1015 = vpack.c.b16 %v1007, %v1007
          %v1016 = vpack.c.b16 %v1008, %v1008
          %v1022 = vsel %vm898, %v1010, 0
          %v1025 = vsel %vm898, %v1012, 0
          %v1028 = vsel %vm898, %v1014, 0
          %v1031 = vsel %vm898, %v1016, 0
          %1033 = vmatprep.subr.bf16.mxu0 0
          %1034 = vmatpush1.bf16.msra.mxu0 %v845
          %1035 = vmatprep.subr.bf16.mxu0 0
          %1036 = vmatpush1.bf16.msra.mxu0 %v846
          %1037 = vmatprep.subr.bf16.mxu0 0
          %1038 = vmatpush1.bf16.msra.mxu0 %v847
          %1039 = vmatprep.subr.bf16.mxu0 0
          %1040 = vmatpush1.bf16.msra.mxu0 %v848
          %1041 = vmatprep.subr.bf16.mxu0 0
          %1042 = vmatpush1.bf16.msra.mxu0 %v849
          %1043 = vmatprep.subr.bf16.mxu0 0
          %1044 = vmatpush1.bf16.msra.mxu0 %v850
          %1045 = vmatprep.subr.bf16.mxu0 0
          %1046 = vmatpush1.bf16.msra.mxu0 %v851
          %1047 = vmatprep.subr.bf16.mxu0 0
          %1048 = vmatpush1.bf16.msra.mxu0 %v852
          %1049 = vmatprep.subr.bf16.mxu0 0
          %1050 = vmatpush1.bf16.msra.mxu0 %v853
          %1051 = vmatprep.subr.bf16.mxu0 0
          %1052 = vmatpush1.bf16.msra.mxu0 %v854
          %1053 = vmatprep.subr.bf16.mxu0 0
          %1054 = vmatpush1.bf16.msra.mxu0 %v855
          %1055 = vmatprep.subr.bf16.mxu0 0
          %1056 = vmatpush1.bf16.msra.mxu0 %v856
          %1057 = vmatprep.subr.bf16.mxu0 0
          %1058 = vmatpush1.bf16.msra.mxu0 %v913
          %1059 = vmatprep.subr.bf16.mxu0 0
          %1060 = vmatpush1.bf16.msra.mxu0 0
          %1061 = vmatprep.subr.bf16.mxu0 0
          %1062 = vmatpush1.bf16.msra.mxu0 0
          %1063 = vmatprep.subr.bf16.mxu0 0
          %1064 = vmatpush1.bf16.msra.mxu0 0
          %1065 = vmatprep.mubr.bf16.mxu0 %v1022
          %1066 = vmatmul.mubr.bf16.gmra.mrb[0].mxu0 %v1009
          %v1067 = vpop.f32.mrb[0].mxu0
          %v1068 = vadd.f32 0.0, %v1067
          %v1069 = vpop.f32.mrb[0].mxu0
          %v1070 = vpop.f32.mrb[0].mxu0
          %v1071 = vadd.f32 0.0, %v1070
          %v1072 = vpop.f32.mrb[0].mxu0
          %1073 = vmatprep.mubr.bf16.mxu0 %v1025
          %1074 = vmatmul.mubr.bf16.gmra.mrb[0].mxu0 %v1011
          %v1075 = vpop.f32.mrb[0].mxu0
          %v1076 = vadd.f32 0.0, %v1075
          %v1077 = vpop.f32.mrb[0].mxu0
          %v1078 = vpop.f32.mrb[0].mxu0
          %v1079 = vadd.f32 0.0, %v1078
          %v1080 = vpop.f32.mrb[0].mxu0
          %1081 = vmatprep.mubr.bf16.mxu0 %v1028
          %1082 = vmatmul.mubr.bf16.gmra.mrb[0].mxu0 %v1013
          %v1083 = vpop.f32.mrb[0].mxu0
          %v1084 = vadd.f32 0.0, %v1083
          %v1085 = vpop.f32.mrb[0].mxu0
          %v1086 = vpop.f32.mrb[0].mxu0
          %v1087 = vadd.f32 0.0, %v1086
          %v1088 = vpop.f32.mrb[0].mxu0
          %1089 = vmatprep.mubr.bf16.mxu0 %v1031
          %1090 = vmatmul.mubr.bf16.gmra.mrb[0].mxu0 %v1015
          %v1091 = vpop.f32.mrb[0].mxu0
          %v1092 = vadd.f32 0.0, %v1091
          %v1093 = vpop.f32.mrb[0].mxu0
          %v1094 = vpop.f32.mrb[0].mxu0
          %v1095 = vpop.f32.mrb[0].mxu0
          %1096 = vdwg.mxu0
          %s1097 = scalar_lea.vmem %s4, 8
          %v1098 = vld [vmem:[%s1097] sm:$0xff]
          %vm1099 = vcmask 64512
          %v1101 = vsel %vm1099, %v1068, 0
          %v1104 = vsel %vm1099, %v1071, 0
          %v1107 = vsel %vm1099, %v1076, 0
          %v1110 = vsel %vm1099, %v1079, 0
          %v1113 = vsel %vm1099, %v1084, 0
          %v1116 = vsel %vm1099, %v1087, 0
          %v1119 = vsel %vm1099, %v1092, 0
          %1121 = vmatprep.subr.mxu0 0.0
          %1122 = vmatpush1.msra.mxu0 %v1098
          %1123 = vmatprep.subr.mxu0 0.0
          %1124 = vmatpush1.msra.mxu0 0.0
          %1125 = vmatprep.subr.mxu0 0.0
          %1126 = vmatpush1.msra.mxu0 0.0
          %1127 = vmatprep.subr.mxu0 0.0
          %1128 = vmatpush1.msra.mxu0 0.0
          %1129 = vmatprep.subr.mxu0 0.0
          %1130 = vmatpush1.msra.mxu0 0.0
          %1131 = vmatprep.subr.mxu0 0.0
          %1132 = vmatpush1.msra.mxu0 0.0
          %1133 = vmatprep.subr.mxu0 0.0
          %1134 = vmatpush1.msra.mxu0 0.0
          %1135 = vmatprep.subr.mxu0 0.0
          %1136 = vmatpush1.msra.mxu0 0.0
          %1137 = vmatprep.subr.mxu0 0.0
          %1138 = vmatpush1.msra.mxu0 0.0
          %1139 = vmatprep.subr.mxu0 0.0
          %1140 = vmatpush1.msra.mxu0 0.0
          %1141 = vmatprep.subr.mxu0 0.0
          %1142 = vmatpush1.msra.mxu0 0.0
          %1143 = vmatprep.subr.mxu0 0.0
          %1144 = vmatpush1.msra.mxu0 0.0
          %1145 = vmatprep.subr.mxu0 0.0
          %1146 = vmatpush1.msra.mxu0 0.0
          %1147 = vmatprep.subr.mxu0 0.0
          %1148 = vmatpush1.msra.mxu0 0.0
          %1149 = vmatprep.subr.mxu0 0.0
          %1150 = vmatpush1.msra.mxu0 0.0
          %1151 = vmatprep.subr.mxu0 0.0
          %1152 = vmatpush1.msra.mxu0 0.0
          %1153 = vmatprep.subr.mxu0 0.0
          %1154 = vmatpush1.msra.mxu0 0.0
          %1155 = vmatprep.subr.mxu0 0.0
          %1156 = vmatpush1.msra.mxu0 0.0
          %1157 = vmatprep.subr.mxu0 0.0
          %1158 = vmatpush1.msra.mxu0 0.0
          %1159 = vmatprep.subr.mxu0 0.0
          %1160 = vmatpush1.msra.mxu0 0.0
          %1161 = vmatprep.subr.mxu0 0.0
          %1162 = vmatpush1.msra.mxu0 0.0
          %1163 = vmatprep.subr.mxu0 0.0
          %1164 = vmatpush1.msra.mxu0 0.0
          %1165 = vmatprep.subr.mxu0 0.0
          %1166 = vmatpush1.msra.mxu0 0.0
          %1167 = vmatprep.subr.mxu0 0.0
          %1168 = vmatpush1.msra.mxu0 0.0
          %1169 = vmatprep.subr.mxu0 0.0
          %1170 = vmatpush1.msra.mxu0 0.0
          %1171 = vmatprep.subr.mxu0 0.0
          %1172 = vmatpush1.msra.mxu0 0.0
          %1173 = vmatprep.subr.mxu0 0.0
          %1174 = vmatpush1.msra.mxu0 0.0
          %1175 = vmatprep.subr.mxu0 0.0
          %1176 = vmatpush1.msra.mxu0 0.0
          %1177 = vmatprep.subr.mxu0 0.0
          %1178 = vmatpush1.msra.mxu0 0.0
          %1179 = vmatprep.subr.mxu0 0.0
          %1180 = vmatpush1.msra.mxu0 0.0
          %1181 = vmatprep.subr.mxu0 0.0
          %1182 = vmatpush1.msra.mxu0 0.0
          %1183 = vmatprep.subr.mxu0 0.0
          %1184 = vmatpush1.msra.mxu0 0.0
          %1185 = vmatprep.mubr.f32.mxu0 0.0
          %1186 = vmatmul.mubr.f32.gmra.mrb[0].mxu0 %v1101
          %v1187 = vpop.f32.mrb[0].mxu0
          %v1188 = vadd.f32 0.0, %v1187
          %v1189 = vpop.f32.mrb[0].mxu0
          %1190 = vmatprep.mubr.f32.mxu0 0.0
          %1191 = vmatmul.mubr.f32.gmra.mrb[0].mxu0 %v1104
          %v1192 = vpop.f32.mrb[0].mxu0
          %v1193 = vadd.f32 0.0, %v1192
          %v1194 = vpop.f32.mrb[0].mxu0
          %1195 = vmatprep.mubr.f32.mxu0 0.0
          %1196 = vmatmul.mubr.f32.gmra.mrb[0].mxu0 %v1107
          %v1197 = vpop.f32.mrb[0].mxu0
          %v1198 = vadd.f32 0.0, %v1197
          %v1199 = vpop.f32.mrb[0].mxu0
          %1200 = vmatprep.mubr.f32.mxu0 0.0
          %1201 = vmatmul.mubr.f32.gmra.mrb[0].mxu0 %v1110
          %v1202 = vpop.f32.mrb[0].mxu0
          %v1203 = vadd.f32 0.0, %v1202
          %v1204 = vpop.f32.mrb[0].mxu0
          %1205 = vmatprep.mubr.f32.mxu0 0.0
          %1206 = vmatmul.mubr.f32.gmra.mrb[0].mxu0 %v1113
          %v1207 = vpop.f32.mrb[0].mxu0
          %v1208 = vadd.f32 0.0, %v1207
          %v1209 = vpop.f32.mrb[0].mxu0
          %1210 = vmatprep.mubr.f32.mxu0 0.0
          %1211 = vmatmul.mubr.f32.gmra.mrb[0].mxu0 %v1116
          %v1212 = vpop.f32.mrb[0].mxu0
          %v1213 = vadd.f32 0.0, %v1212
          %v1214 = vpop.f32.mrb[0].mxu0
          %1215 = vmatprep.mubr.f32.mxu0 0.0
          %1216 = vmatmul.mubr.f32.gmra.mrb[0].mxu0 %v1119
          %v1217 = vpop.f32.mrb[0].mxu0
          %v1218 = vadd.f32 0.0, %v1217
          %v1219 = vpop.f32.mrb[0].mxu0
          %1220 = vdwg.mxu0
          %v1222 = vsel %vm1099, %v950, 0
          %v1225 = vsel %vm1099, %v953, 0
          %v1228 = vsel %vm1099, %v958, 0
          %v1231 = vsel %vm1099, %v961, 0
          %v1234 = vsel %vm1099, %v966, 0
          %v1237 = vsel %vm1099, %v969, 0
          %v1240 = vsel %vm1099, %v974, 0
          %1242 = vmatprep.subr.mxu0 0.0
          %1243 = vmatpush1.msra.mxu0 %v979
          %1244 = vmatprep.subr.mxu0 0.0
          %1245 = vmatpush1.msra.mxu0 0.0
          %1246 = vmatprep.subr.mxu0 0.0
          %1247 = vmatpush1.msra.mxu0 0.0
          %1248 = vmatprep.subr.mxu0 0.0
          %1249 = vmatpush1.msra.mxu0 0.0
          %1250 = vmatprep.subr.mxu0 0.0
          %1251 = vmatpush1.msra.mxu0 0.0
          %1252 = vmatprep.subr.mxu0 0.0
          %1253 = vmatpush1.msra.mxu0 0.0
          %1254 = vmatprep.subr.mxu0 0.0
          %1255 = vmatpush1.msra.mxu0 0.0
          %1256 = vmatprep.subr.mxu0 0.0
          %1257 = vmatpush1.msra.mxu0 0.0
          %1258 = vmatprep.subr.mxu0 0.0
          %1259 = vmatpush1.msra.mxu0 0.0
          %1260 = vmatprep.subr.mxu0 0.0
          %1261 = vmatpush1.msra.mxu0 0.0
          %1262 = vmatprep.subr.mxu0 0.0
          %1263 = vmatpush1.msra.mxu0 0.0
          %1264 = vmatprep.subr.mxu0 0.0
          %1265 = vmatpush1.msra.mxu0 0.0
          %1266 = vmatprep.subr.mxu0 0.0
          %1267 = vmatpush1.msra.mxu0 0.0
          %1268 = vmatprep.subr.mxu0 0.0
          %1269 = vmatpush1.msra.mxu0 0.0
          %1270 = vmatprep.subr.mxu0 0.0
          %1271 = vmatpush1.msra.mxu0 0.0
          %1272 = vmatprep.subr.mxu0 0.0
          %1273 = vmatpush1.msra.mxu0 0.0
          %1274 = vmatprep.subr.mxu0 0.0
          %1275 = vmatpush1.msra.mxu0 0.0
          %1276 = vmatprep.subr.mxu0 0.0
          %1277 = vmatpush1.msra.mxu0 0.0
          %1278 = vmatprep.subr.mxu0 0.0
          %1279 = vmatpush1.msra.mxu0 0.0
          %1280 = vmatprep.subr.mxu0 0.0
          %1281 = vmatpush1.msra.mxu0 0.0
          %1282 = vmatprep.subr.mxu0 0.0
          %1283 = vmatpush1.msra.mxu0 0.0
          %1284 = vmatprep.subr.mxu0 0.0
          %1285 = vmatpush1.msra.mxu0 0.0
          %1286 = vmatprep.subr.mxu0 0.0
          %1287 = vmatpush1.msra.mxu0 0.0
          %1288 = vmatprep.subr.mxu0 0.0
          %1289 = vmatpush1.msra.mxu0 0.0
          %1290 = vmatprep.subr.mxu0 0.0
          %1291 = vmatpush1.msra.mxu0 0.0
          %1292 = vmatprep.subr.mxu0 0.0
          %1293 = vmatpush1.msra.mxu0 0.0
          %1294 = vmatprep.subr.mxu0 0.0
          %1295 = vmatpush1.msra.mxu0 0.0
          %1296 = vmatprep.subr.mxu0 0.0
          %1297 = vmatpush1.msra.mxu0 0.0
          %1298 = vmatprep.subr.mxu0 0.0
          %1299 = vmatpush1.msra.mxu0 0.0
          %1300 = vmatprep.subr.mxu0 0.0
          %1301 = vmatpush1.msra.mxu0 0.0
          %1302 = vmatprep.subr.mxu0 0.0
          %1303 = vmatpush1.msra.mxu0 0.0
          %1304 = vmatprep.subr.mxu0 0.0
          %1305 = vmatpush1.msra.mxu0 0.0
          %1306 = vmatprep.mubr.f32.mxu0 0.0
          %1307 = vmatmul.mubr.f32.gmra.mrb[0].mxu0 %v1222
          %v1308 = vpop.f32.mrb[0].mxu0
          %v1309 = vadd.f32 %v1188, %v1308
          %v1310 = vpop.f32.mrb[0].mxu0
          %1311 = vmatprep.mubr.f32.mxu0 0.0
          %1312 = vmatmul.mubr.f32.gmra.mrb[0].mxu0 %v1225
          %v1313 = vpop.f32.mrb[0].mxu0
          %v1314 = vadd.f32 %v1193, %v1313
          %v1315 = vpop.f32.mrb[0].mxu0
          %1316 = vmatprep.mubr.f32.mxu0 0.0
          %1317 = vmatmul.mubr.f32.gmra.mrb[0].mxu0 %v1228
          %v1318 = vpop.f32.mrb[0].mxu0
          %v1319 = vadd.f32 %v1198, %v1318
          %v1320 = vpop.f32.mrb[0].mxu0
          %1321 = vmatprep.mubr.f32.mxu0 0.0
          %1322 = vmatmul.mubr.f32.gmra.mrb[0].mxu0 %v1231
          %v1323 = vpop.f32.mrb[0].mxu0
          %v1324 = vadd.f32 %v1203, %v1323
          %v1325 = vpop.f32.mrb[0].mxu0
          %1326 = vmatprep.mubr.f32.mxu0 0.0
          %1327 = vmatmul.mubr.f32.gmra.mrb[0].mxu0 %v1234
          %v1328 = vpop.f32.mrb[0].mxu0
          %v1329 = vadd.f32 %v1208, %v1328
          %v1330 = vpop.f32.mrb[0].mxu0
          %1331 = vmatprep.mubr.f32.mxu0 0.0
          %1332 = vmatmul.mubr.f32.gmra.mrb[0].mxu0 %v1237
          %v1333 = vpop.f32.mrb[0].mxu0
          %v1334 = vadd.f32 %v1213, %v1333
          %v1335 = vpop.f32.mrb[0].mxu0
          %1336 = vmatprep.mubr.f32.mxu0 0.0
          %1337 = vmatmul.mubr.f32.gmra.mrb[0].mxu0 %v1240
          %v1338 = vpop.f32.mrb[0].mxu0
          %v1339 = vadd.f32 %v1218, %v1338
          %v1340 = vpop.f32.mrb[0].mxu0
          %1341 = vdwg.mxu0
          %s1342 = scalar_lea.vmem %s3, 112
          %v1343 = vld [vmem:[%s1342] sm:$0xff]
          %v1344 = vld [vmem:[%s1342 + $0x8] sm:$0xff]
          %v1345 = vld [vmem:[%s1342 + $0x10] sm:$0xff]
          %v1346 = vld [vmem:[%s1342 + $0x18] sm:$0xff]
          %v1347 = vld [vmem:[%s1342 + $0x20] sm:$0xff]
          %v1348 = vld [vmem:[%s1342 + $0x28] sm:$0xff]
          %v1349 = vld [vmem:[%s1342 + $0x30] sm:$0x11]
          %v1357 = vunpack.c.l.b16 %v1343
          %v1358 = vunpack.c.h.b16 %v1343
          %v1359 = vunpack.c.l.b16 %v1344
          %v1360 = vunpack.c.h.b16 %v1344
          %v1361 = vunpack.c.l.b16 %v1345
          %v1362 = vunpack.c.h.b16 %v1345
          %v1363 = vunpack.c.l.b16 %v1346
          %v1364 = vunpack.c.h.b16 %v1346
          %v1365 = vunpack.c.l.b16 %v1347
          %v1366 = vunpack.c.h.b16 %v1347
          %v1367 = vunpack.c.l.b16 %v1348
          %v1368 = vunpack.c.h.b16 %v1348
          %v1369 = vunpack.c.l.b16 %v1349
          %v1370 = vunpack.c.h.b16 %v1349
          %v1371 = vpack.c.b16 %v1359, %v1357
          %v1372 = vpack.c.b16 %v1360, %v1358
          %v1373 = vpack.c.b16 %v1363, %v1361
          %v1374 = vpack.c.b16 %v1364, %v1362
          %v1375 = vpack.c.b16 %v1367, %v1365
          %v1376 = vpack.c.b16 %v1368, %v1366
          %v1377 = vpack.c.b16 %v1369, %v1369
          %v1378 = vpack.c.b16 %v1370, %v1370
          %v1384 = vsel %vm898, %v1372, 0
          %v1387 = vsel %vm898, %v1374, 0
          %v1390 = vsel %vm898, %v1376, 0
          %v1393 = vsel %vm898, %v1378, 0
          %1395 = vmatprep.subr.bf16.mxu0 0
          %1396 = vmatpush1.bf16.msra.mxu0 %v845
          %1397 = vmatprep.subr.bf16.mxu0 0
          %1398 = vmatpush1.bf16.msra.mxu0 %v846
          %1399 = vmatprep.subr.bf16.mxu0 0
          %1400 = vmatpush1.bf16.msra.mxu0 %v847
          %1401 = vmatprep.subr.bf16.mxu0 0
          %1402 = vmatpush1.bf16.msra.mxu0 %v848
          %1403 = vmatprep.subr.bf16.mxu0 0
          %1404 = vmatpush1.bf16.msra.mxu0 %v849
          %1405 = vmatprep.subr.bf16.mxu0 0
          %1406 = vmatpush1.bf16.msra.mxu0 %v850
          %1407 = vmatprep.subr.bf16.mxu0 0
          %1408 = vmatpush1.bf16.msra.mxu0 %v851
          %1409 = vmatprep.subr.bf16.mxu0 0
          %1410 = vmatpush1.bf16.msra.mxu0 %v852
          %1411 = vmatprep.subr.bf16.mxu0 0
          %1412 = vmatpush1.bf16.msra.mxu0 %v853
          %1413 = vmatprep.subr.bf16.mxu0 0
          %1414 = vmatpush1.bf16.msra.mxu0 %v854
          %1415 = vmatprep.subr.bf16.mxu0 0
          %1416 = vmatpush1.bf16.msra.mxu0 %v855
          %1417 = vmatprep.subr.bf16.mxu0 0
          %1418 = vmatpush1.bf16.msra.mxu0 %v856
          %1419 = vmatprep.subr.bf16.mxu0 0
          %1420 = vmatpush1.bf16.msra.mxu0 %v913
          %1421 = vmatprep.subr.bf16.mxu0 0
          %1422 = vmatpush1.bf16.msra.mxu0 0
          %1423 = vmatprep.subr.bf16.mxu0 0
          %1424 = vmatpush1.bf16.msra.mxu0 0
          %1425 = vmatprep.subr.bf16.mxu0 0
          %1426 = vmatpush1.bf16.msra.mxu0 0
          %1427 = vmatprep.mubr.bf16.mxu0 %v1384
          %1428 = vmatmul.mubr.bf16.gmra.mrb[0].mxu0 %v1371
          %v1429 = vpop.f32.mrb[0].mxu0
          %v1430 = vadd.f32 0.0, %v1429
          %v1431 = vpop.f32.mrb[0].mxu0
          %v1432 = vpop.f32.mrb[0].mxu0
          %v1433 = vadd.f32 0.0, %v1432
          %v1434 = vpop.f32.mrb[0].mxu0
          %1435 = vmatprep.mubr.bf16.mxu0 %v1387
          %1436 = vmatmul.mubr.bf16.gmra.mrb[0].mxu0 %v1373
          %v1437 = vpop.f32.mrb[0].mxu0
          %v1438 = vadd.f32 0.0, %v1437
          %v1439 = vpop.f32.mrb[0].mxu0
          %v1440 = vpop.f32.mrb[0].mxu0
          %v1441 = vadd.f32 0.0, %v1440
          %v1442 = vpop.f32.mrb[0].mxu0
          %1443 = vmatprep.mubr.bf16.mxu0 %v1390
          %1444 = vmatmul.mubr.bf16.gmra.mrb[0].mxu0 %v1375
          %v1445 = vpop.f32.mrb[0].mxu0
          %v1446 = vadd.f32 0.0, %v1445
          %v1447 = vpop.f32.mrb[0].mxu0
          %v1448 = vpop.f32.mrb[0].mxu0
          %v1449 = vadd.f32 0.0, %v1448
          %v1450 = vpop.f32.mrb[0].mxu0
          %1451 = vmatprep.mubr.bf16.mxu0 %v1393
          %1452 = vmatmul.mubr.bf16.gmra.mrb[0].mxu0 %v1377
          %v1453 = vpop.f32.mrb[0].mxu0
          %v1454 = vadd.f32 0.0, %v1453
          %v1455 = vpop.f32.mrb[0].mxu0
          %v1456 = vpop.f32.mrb[0].mxu0
          %v1457 = vpop.f32.mrb[0].mxu0
          %1458 = vdwg.mxu0
          %s1459 = scalar_lea.vmem %s4, 16
          %v1460 = vld [vmem:[%s1459] sm:$0xff]
          %v1462 = vsel %vm1099, %v1430, 0
          %v1465 = vsel %vm1099, %v1433, 0
          %v1468 = vsel %vm1099, %v1438, 0
          %v1471 = vsel %vm1099, %v1441, 0
          %v1474 = vsel %vm1099, %v1446, 0
          %v1477 = vsel %vm1099, %v1449, 0
          %v1480 = vsel %vm1099, %v1454, 0
          %1482 = vmatprep.subr.mxu0 0.0
          %1483 = vmatpush1.msra.mxu0 %v1460
          %1484 = vmatprep.subr.mxu0 0.0
          %1485 = vmatpush1.msra.mxu0 0.0
          %1486 = vmatprep.subr.mxu0 0.0
          %1487 = vmatpush1.msra.mxu0 0.0
          %1488 = vmatprep.subr.mxu0 0.0
          %1489 = vmatpush1.msra.mxu0 0.0
          %1490 = vmatprep.subr.mxu0 0.0
          %1491 = vmatpush1.msra.mxu0 0.0
          %1492 = vmatprep.subr.mxu0 0.0
          %1493 = vmatpush1.msra.mxu0 0.0
          %1494 = vmatprep.subr.mxu0 0.0
          %1495 = vmatpush1.msra.mxu0 0.0
          %1496 = vmatprep.subr.mxu0 0.0
          %1497 = vmatpush1.msra.mxu0 0.0
          %1498 = vmatprep.subr.mxu0 0.0
          %1499 = vmatpush1.msra.mxu0 0.0
          %1500 = vmatprep.subr.mxu0 0.0
          %1501 = vmatpush1.msra.mxu0 0.0
          %1502 = vmatprep.subr.mxu0 0.0
          %1503 = vmatpush1.msra.mxu0 0.0
          %1504 = vmatprep.subr.mxu0 0.0
          %1505 = vmatpush1.msra.mxu0 0.0
          %1506 = vmatprep.subr.mxu0 0.0
          %1507 = vmatpush1.msra.mxu0 0.0
          %1508 = vmatprep.subr.mxu0 0.0
          %1509 = vmatpush1.msra.mxu0 0.0
          %1510 = vmatprep.subr.mxu0 0.0
          %1511 = vmatpush1.msra.mxu0 0.0
          %1512 = vmatprep.subr.mxu0 0.0
          %1513 = vmatpush1.msra.mxu0 0.0
          %1514 = vmatprep.subr.mxu0 0.0
          %1515 = vmatpush1.msra.mxu0 0.0
          %1516 = vmatprep.subr.mxu0 0.0
          %1517 = vmatpush1.msra.mxu0 0.0
          %1518 = vmatprep.subr.mxu0 0.0
          %1519 = vmatpush1.msra.mxu0 0.0
          %1520 = vmatprep.subr.mxu0 0.0
          %1521 = vmatpush1.msra.mxu0 0.0
          %1522 = vmatprep.subr.mxu0 0.0
          %1523 = vmatpush1.msra.mxu0 0.0
          %1524 = vmatprep.subr.mxu0 0.0
          %1525 = vmatpush1.msra.mxu0 0.0
          %1526 = vmatprep.subr.mxu0 0.0
          %1527 = vmatpush1.msra.mxu0 0.0
          %1528 = vmatprep.subr.mxu0 0.0
          %1529 = vmatpush1.msra.mxu0 0.0
          %1530 = vmatprep.subr.mxu0 0.0
          %1531 = vmatpush1.msra.mxu0 0.0
          %1532 = vmatprep.subr.mxu0 0.0
          %1533 = vmatpush1.msra.mxu0 0.0
          %1534 = vmatprep.subr.mxu0 0.0
          %1535 = vmatpush1.msra.mxu0 0.0
          %1536 = vmatprep.subr.mxu0 0.0
          %1537 = vmatpush1.msra.mxu0 0.0
          %1538 = vmatprep.subr.mxu0 0.0
          %1539 = vmatpush1.msra.mxu0 0.0
          %1540 = vmatprep.subr.mxu0 0.0
          %1541 = vmatpush1.msra.mxu0 0.0
          %1542 = vmatprep.subr.mxu0 0.0
          %1543 = vmatpush1.msra.mxu0 0.0
          %1544 = vmatprep.subr.mxu0 0.0
          %1545 = vmatpush1.msra.mxu0 0.0
          %1546 = vmatprep.mubr.f32.mxu0 0.0
          %1547 = vmatmul.mubr.f32.gmra.mrb[0].mxu0 %v1462
          %v1548 = vpop.f32.mrb[0].mxu0
          %v1549 = vadd.f32 0.0, %v1548
          %v1550 = vpop.f32.mrb[0].mxu0
          %1551 = vmatprep.mubr.f32.mxu0 0.0
          %1552 = vmatmul.mubr.f32.gmra.mrb[0].mxu0 %v1465
          %v1553 = vpop.f32.mrb[0].mxu0
          %v1554 = vadd.f32 0.0, %v1553
          %v1555 = vpop.f32.mrb[0].mxu0
          %1556 = vmatprep.mubr.f32.mxu0 0.0
          %1557 = vmatmul.mubr.f32.gmra.mrb[0].mxu0 %v1468
          %v1558 = vpop.f32.mrb[0].mxu0
          %v1559 = vadd.f32 0.0, %v1558
          %v1560 = vpop.f32.mrb[0].mxu0
          %1561 = vmatprep.mubr.f32.mxu0 0.0
          %1562 = vmatmul.mubr.f32.gmra.mrb[0].mxu0 %v1471
          %v1563 = vpop.f32.mrb[0].mxu0
          %v1564 = vadd.f32 0.0, %v1563
          %v1565 = vpop.f32.mrb[0].mxu0
          %1566 = vmatprep.mubr.f32.mxu0 0.0
          %1567 = vmatmul.mubr.f32.gmra.mrb[0].mxu0 %v1474
          %v1568 = vpop.f32.mrb[0].mxu0
          %v1569 = vadd.f32 0.0, %v1568
          %v1570 = vpop.f32.mrb[0].mxu0
          %1571 = vmatprep.mubr.f32.mxu0 0.0
          %1572 = vmatmul.mubr.f32.gmra.mrb[0].mxu0 %v1477
          %v1573 = vpop.f32.mrb[0].mxu0
          %v1574 = vadd.f32 0.0, %v1573
          %v1575 = vpop.f32.mrb[0].mxu0
          %1576 = vmatprep.mubr.f32.mxu0 0.0
          %1577 = vmatmul.mubr.f32.gmra.mrb[0].mxu0 %v1480
          %v1578 = vpop.f32.mrb[0].mxu0
          %v1579 = vadd.f32 0.0, %v1578
          %v1580 = vpop.f32.mrb[0].mxu0
          %1581 = vdwg.mxu0
          %v1582 = vadd.f32 %v1309, %v1549
          %v1583 = vadd.f32 %v1314, %v1554
          %v1584 = vadd.f32 %v1319, %v1559
          %v1585 = vadd.f32 %v1324, %v1564
          %v1586 = vadd.f32 %v1329, %v1569
          %v1587 = vadd.f32 %v1334, %v1574
          %v1588 = vadd.f32 %v1339, %v1579
          %s1589 = scalar_lea.vmem %s3, 168
          %v1590 = vld [vmem:[%s1589] sm:$0xff]
          %v1591 = vld [vmem:[%s1589 + $0x8] sm:$0xff]
          %v1592 = vld [vmem:[%s1589 + $0x10] sm:$0xff]
          %v1593 = vld [vmem:[%s1589 + $0x18] sm:$0xff]
          %v1594 = vld [vmem:[%s1589 + $0x20] sm:$0xff]
          %v1595 = vld [vmem:[%s1589 + $0x28] sm:$0xff]
          %v1596 = vld [vmem:[%s1589 + $0x30] sm:$0x11]
          %v1604 = vunpack.c.l.b16 %v1590
          %v1605 = vunpack.c.h.b16 %v1590
          %v1606 = vunpack.c.l.b16 %v1591
          %v1607 = vunpack.c.h.b16 %v1591
          %v1608 = vunpack.c.l.b16 %v1592
          %v1609 = vunpack.c.h.b16 %v1592
          %v1610 = vunpack.c.l.b16 %v1593
          %v1611 = vunpack.c.h.b16 %v1593
          %v1612 = vunpack.c.l.b16 %v1594
          %v1613 = vunpack.c.h.b16 %v1594
          %v1614 = vunpack.c.l.b16 %v1595
          %v1615 = vunpack.c.h.b16 %v1595
          %v1616 = vunpack.c.l.b16 %v1596
          %v1617 = vunpack.c.h.b16 %v1596
          %v1618 = vpack.c.b16 %v1606, %v1604
          %v1619 = vpack.c.b16 %v1607, %v1605
          %v1620 = vpack.c.b16 %v1610, %v1608
          %v1621 = vpack.c.b16 %v1611, %v1609
          %v1622 = vpack.c.b16 %v1614, %v1612
          %v1623 = vpack.c.b16 %v1615, %v1613
          %v1624 = vpack.c.b16 %v1616, %v1616
          %v1625 = vpack.c.b16 %v1617, %v1617
          %v1631 = vsel %vm898, %v1619, 0
          %v1634 = vsel %vm898, %v1621, 0
          %v1637 = vsel %vm898, %v1623, 0
          %v1640 = vsel %vm898, %v1625, 0
          %1642 = vmatprep.subr.bf16.mxu0 0
          %1643 = vmatpush1.bf16.msra.mxu0 %v845
          %1644 = vmatprep.subr.bf16.mxu0 0
          %1645 = vmatpush1.bf16.msra.mxu0 %v846
          %1646 = vmatprep.subr.bf16.mxu0 0
          %1647 = vmatpush1.bf16.msra.mxu0 %v847
          %1648 = vmatprep.subr.bf16.mxu0 0
          %1649 = vmatpush1.bf16.msra.mxu0 %v848
          %1650 = vmatprep.subr.bf16.mxu0 0
          %1651 = vmatpush1.bf16.msra.mxu0 %v849
          %1652 = vmatprep.subr.bf16.mxu0 0
          %1653 = vmatpush1.bf16.msra.mxu0 %v850
          %1654 = vmatprep.subr.bf16.mxu0 0
          %1655 = vmatpush1.bf16.msra.mxu0 %v851
          %1656 = vmatprep.subr.bf16.mxu0 0
          %1657 = vmatpush1.bf16.msra.mxu0 %v852
          %1658 = vmatprep.subr.bf16.mxu0 0
          %1659 = vmatpush1.bf16.msra.mxu0 %v853
          %1660 = vmatprep.subr.bf16.mxu0 0
          %1661 = vmatpush1.bf16.msra.mxu0 %v854
          %1662 = vmatprep.subr.bf16.mxu0 0
          %1663 = vmatpush1.bf16.msra.mxu0 %v855
          %1664 = vmatprep.subr.bf16.mxu0 0
          %1665 = vmatpush1.bf16.msra.mxu0 %v856
          %1666 = vmatprep.subr.bf16.mxu0 0
          %1667 = vmatpush1.bf16.msra.mxu0 %v913
          %1668 = vmatprep.subr.bf16.mxu0 0
          %1669 = vmatpush1.bf16.msra.mxu0 0
          %1670 = vmatprep.subr.bf16.mxu0 0
          %1671 = vmatpush1.bf16.msra.mxu0 0
          %1672 = vmatprep.subr.bf16.mxu0 0
          %1673 = vmatpush1.bf16.msra.mxu0 0
          %1674 = vmatprep.mubr.bf16.mxu0 %v1631
          %1675 = vmatmul.mubr.bf16.gmra.mrb[0].mxu0 %v1618
          %v1676 = vpop.f32.mrb[0].mxu0
          %v1677 = vadd.f32 0.0, %v1676
          %v1678 = vpop.f32.mrb[0].mxu0
          %v1679 = vpop.f32.mrb[0].mxu0
          %v1680 = vadd.f32 0.0, %v1679
          %v1681 = vpop.f32.mrb[0].mxu0
          %1682 = vmatprep.mubr.bf16.mxu0 %v1634
          %1683 = vmatmul.mubr.bf16.gmra.mrb[0].mxu0 %v1620
          %v1684 = vpop.f32.mrb[0].mxu0
          %v1685 = vadd.f32 0.0, %v1684
          %v1686 = vpop.f32.mrb[0].mxu0
          %v1687 = vpop.f32.mrb[0].mxu0
          %v1688 = vadd.f32 0.0, %v1687
          %v1689 = vpop.f32.mrb[0].mxu0
          %1690 = vmatprep.mubr.bf16.mxu0 %v1637
          %1691 = vmatmul.mubr.bf16.gmra.mrb[0].mxu0 %v1622
          %v1692 = vpop.f32.mrb[0].mxu0
          %v1693 = vadd.f32 0.0, %v1692
          %v1694 = vpop.f32.mrb[0].mxu0
          %v1695 = vpop.f32.mrb[0].mxu0
          %v1696 = vadd.f32 0.0, %v1695
          %v1697 = vpop.f32.mrb[0].mxu0
          %1698 = vmatprep.mubr.bf16.mxu0 %v1640
          %1699 = vmatmul.mubr.bf16.gmra.mrb[0].mxu0 %v1624
          %v1700 = vpop.f32.mrb[0].mxu0
          %v1701 = vadd.f32 0.0, %v1700
          %v1702 = vpop.f32.mrb[0].mxu0
          %v1703 = vpop.f32.mrb[0].mxu0
          %v1704 = vpop.f32.mrb[0].mxu0
          %1705 = vdwg.mxu0
          %s1706 = scalar_lea.vmem %s4, 24
          %v1707 = vld [vmem:[%s1706] sm:$0xff]
          %v1709 = vsel %vm1099, %v1677, 0
          %v1712 = vsel %vm1099, %v1680, 0
          %v1715 = vsel %vm1099, %v1685, 0
          %v1718 = vsel %vm1099, %v1688, 0
          %v1721 = vsel %vm1099, %v1693, 0
          %v1724 = vsel %vm1099, %v1696, 0
          %v1727 = vsel %vm1099, %v1701, 0
          %1729 = vmatprep.subr.mxu0 0.0
          %1730 = vmatpush1.msra.mxu0 %v1707
          %1731 = vmatprep.subr.mxu0 0.0
          %1732 = vmatpush1.msra.mxu0 0.0
          %1733 = vmatprep.subr.mxu0 0.0
          %1734 = vmatpush1.msra.mxu0 0.0
          %1735 = vmatprep.subr.mxu0 0.0
          %1736 = vmatpush1.msra.mxu0 0.0
          %1737 = vmatprep.subr.mxu0 0.0
          %1738 = vmatpush1.msra.mxu0 0.0
          %1739 = vmatprep.subr.mxu0 0.0
          %1740 = vmatpush1.msra.mxu0 0.0
          %1741 = vmatprep.subr.mxu0 0.0
          %1742 = vmatpush1.msra.mxu0 0.0
          %1743 = vmatprep.subr.mxu0 0.0
          %1744 = vmatpush1.msra.mxu0 0.0
          %1745 = vmatprep.subr.mxu0 0.0
          %1746 = vmatpush1.msra.mxu0 0.0
          %1747 = vmatprep.subr.mxu0 0.0
          %1748 = vmatpush1.msra.mxu0 0.0
          %1749 = vmatprep.subr.mxu0 0.0
          %1750 = vmatpush1.msra.mxu0 0.0
          %1751 = vmatprep.subr.mxu0 0.0
          %1752 = vmatpush1.msra.mxu0 0.0
          %1753 = vmatprep.subr.mxu0 0.0
          %1754 = vmatpush1.msra.mxu0 0.0
          %1755 = vmatprep.subr.mxu0 0.0
          %1756 = vmatpush1.msra.mxu0 0.0
          %1757 = vmatprep.subr.mxu0 0.0
          %1758 = vmatpush1.msra.mxu0 0.0
          %1759 = vmatprep.subr.mxu0 0.0
          %1760 = vmatpush1.msra.mxu0 0.0
          %1761 = vmatprep.subr.mxu0 0.0
          %1762 = vmatpush1.msra.mxu0 0.0
          %1763 = vmatprep.subr.mxu0 0.0
          %1764 = vmatpush1.msra.mxu0 0.0
          %1765 = vmatprep.subr.mxu0 0.0
          %1766 = vmatpush1.msra.mxu0 0.0
          %1767 = vmatprep.subr.mxu0 0.0
          %1768 = vmatpush1.msra.mxu0 0.0
          %1769 = vmatprep.subr.mxu0 0.0
          %1770 = vmatpush1.msra.mxu0 0.0
          %1771 = vmatprep.subr.mxu0 0.0
          %1772 = vmatpush1.msra.mxu0 0.0
          %1773 = vmatprep.subr.mxu0 0.0
          %1774 = vmatpush1.msra.mxu0 0.0
          %1775 = vmatprep.subr.mxu0 0.0
          %1776 = vmatpush1.msra.mxu0 0.0
          %1777 = vmatprep.subr.mxu0 0.0
          %1778 = vmatpush1.msra.mxu0 0.0
          %1779 = vmatprep.subr.mxu0 0.0
          %1780 = vmatpush1.msra.mxu0 0.0
          %1781 = vmatprep.subr.mxu0 0.0
          %1782 = vmatpush1.msra.mxu0 0.0
          %1783 = vmatprep.subr.mxu0 0.0
          %1784 = vmatpush1.msra.mxu0 0.0
          %1785 = vmatprep.subr.mxu0 0.0
          %1786 = vmatpush1.msra.mxu0 0.0
          %1787 = vmatprep.subr.mxu0 0.0
          %1788 = vmatpush1.msra.mxu0 0.0
          %1789 = vmatprep.subr.mxu0 0.0
          %1790 = vmatpush1.msra.mxu0 0.0
          %1791 = vmatprep.subr.mxu0 0.0
          %1792 = vmatpush1.msra.mxu0 0.0
          %1793 = vmatprep.mubr.f32.mxu0 0.0
          %1794 = vmatmul.mubr.f32.gmra.mrb[0].mxu0 %v1709
          %v1795 = vpop.f32.mrb[0].mxu0
          %v1796 = vadd.f32 0.0, %v1795
          %v1797 = vpop.f32.mrb[0].mxu0
          %1798 = vmatprep.mubr.f32.mxu0 0.0
          %1799 = vmatmul.mubr.f32.gmra.mrb[0].mxu0 %v1712
          %v1800 = vpop.f32.mrb[0].mxu0
          %v1801 = vadd.f32 0.0, %v1800
          %v1802 = vpop.f32.mrb[0].mxu0
          %1803 = vmatprep.mubr.f32.mxu0 0.0
          %1804 = vmatmul.mubr.f32.gmra.mrb[0].mxu0 %v1715
          %v1805 = vpop.f32.mrb[0].mxu0
          %v1806 = vadd.f32 0.0, %v1805
          %v1807 = vpop.f32.mrb[0].mxu0
          %1808 = vmatprep.mubr.f32.mxu0 0.0
          %1809 = vmatmul.mubr.f32.gmra.mrb[0].mxu0 %v1718
          %v1810 = vpop.f32.mrb[0].mxu0
          %v1811 = vadd.f32 0.0, %v1810
          %v1812 = vpop.f32.mrb[0].mxu0
          %1813 = vmatprep.mubr.f32.mxu0 0.0
          %1814 = vmatmul.mubr.f32.gmra.mrb[0].mxu0 %v1721
          %v1815 = vpop.f32.mrb[0].mxu0
          %v1816 = vadd.f32 0.0, %v1815
          %v1817 = vpop.f32.mrb[0].mxu0
          %1818 = vmatprep.mubr.f32.mxu0 0.0
          %1819 = vmatmul.mubr.f32.gmra.mrb[0].mxu0 %v1724
          %v1820 = vpop.f32.mrb[0].mxu0
          %v1821 = vadd.f32 0.0, %v1820
          %v1822 = vpop.f32.mrb[0].mxu0
          %1823 = vmatprep.mubr.f32.mxu0 0.0
          %1824 = vmatmul.mubr.f32.gmra.mrb[0].mxu0 %v1727
          %v1825 = vpop.f32.mrb[0].mxu0
          %v1826 = vadd.f32 0.0, %v1825
          %v1827 = vpop.f32.mrb[0].mxu0
          %1828 = vdwg.mxu0
          %v1829 = vadd.f32 %v1582, %v1796
          %v1830 = vadd.f32 %v1583, %v1801
          %v1831 = vadd.f32 %v1584, %v1806
          %v1832 = vadd.f32 %v1585, %v1811
          %v1833 = vadd.f32 %v1586, %v1816
          %v1834 = vadd.f32 %v1587, %v1821
          %v1835 = vadd.f32 %v1588, %v1826
          %s1836 = scalar_lea.vmem %s3, 224
          %v1837 = vld [vmem:[%s1836] sm:$0xff]
          %v1838 = vld [vmem:[%s1836 + $0x8] sm:$0xff]
          %v1839 = vld [vmem:[%s1836 + $0x10] sm:$0xff]
          %v1840 = vld [vmem:[%s1836 + $0x18] sm:$0xff]
          %v1841 = vld [vmem:[%s1836 + $0x20] sm:$0xff]
          %v1842 = vld [vmem:[%s1836 + $0x28] sm:$0xff]
          %v1843 = vld [vmem:[%s1836 + $0x30] sm:$0x11]
          %v1851 = vunpack.c.l.b16 %v1837
          %v1852 = vunpack.c.h.b16 %v1837
          %v1853 = vunpack.c.l.b16 %v1838
          %v1854 = vunpack.c.h.b16 %v1838
          %v1855 = vunpack.c.l.b16 %v1839
          %v1856 = vunpack.c.h.b16 %v1839
          %v1857 = vunpack.c.l.b16 %v1840
          %v1858 = vunpack.c.h.b16 %v1840
          %v1859 = vunpack.c.l.b16 %v1841
          %v1860 = vunpack.c.h.b16 %v1841
          %v1861 = vunpack.c.l.b16 %v1842
          %v1862 = vunpack.c.h.b16 %v1842
          %v1863 = vunpack.c.l.b16 %v1843
          %v1864 = vunpack.c.h.b16 %v1843
          %v1865 = vpack.c.b16 %v1853, %v1851
          %v1866 = vpack.c.b16 %v1854, %v1852
          %v1867 = vpack.c.b16 %v1857, %v1855
          %v1868 = vpack.c.b16 %v1858, %v1856
          %v1869 = vpack.c.b16 %v1861, %v1859
          %v1870 = vpack.c.b16 %v1862, %v1860
          %v1871 = vpack.c.b16 %v1863, %v1863
          %v1872 = vpack.c.b16 %v1864, %v1864
          %v1878 = vsel %vm898, %v1866, 0
          %v1881 = vsel %vm898, %v1868, 0
          %v1884 = vsel %vm898, %v1870, 0
          %v1887 = vsel %vm898, %v1872, 0
          %1889 = vmatprep.subr.bf16.mxu0 0
          %1890 = vmatpush1.bf16.msra.mxu0 %v845
          %1891 = vmatprep.subr.bf16.mxu0 0
          %1892 = vmatpush1.bf16.msra.mxu0 %v846
          %1893 = vmatprep.subr.bf16.mxu0 0
          %1894 = vmatpush1.bf16.msra.mxu0 %v847
          %1895 = vmatprep.subr.bf16.mxu0 0
          %1896 = vmatpush1.bf16.msra.mxu0 %v848
          %1897 = vmatprep.subr.bf16.mxu0 0
          %1898 = vmatpush1.bf16.msra.mxu0 %v849
          %1899 = vmatprep.subr.bf16.mxu0 0
          %1900 = vmatpush1.bf16.msra.mxu0 %v850
          %1901 = vmatprep.subr.bf16.mxu0 0
          %1902 = vmatpush1.bf16.msra.mxu0 %v851
          %1903 = vmatprep.subr.bf16.mxu0 0
          %1904 = vmatpush1.bf16.msra.mxu0 %v852
          %1905 = vmatprep.subr.bf16.mxu0 0
          %1906 = vmatpush1.bf16.msra.mxu0 %v853
          %1907 = vmatprep.subr.bf16.mxu0 0
          %1908 = vmatpush1.bf16.msra.mxu0 %v854
          %1909 = vmatprep.subr.bf16.mxu0 0
          %1910 = vmatpush1.bf16.msra.mxu0 %v855
          %1911 = vmatprep.subr.bf16.mxu0 0
          %1912 = vmatpush1.bf16.msra.mxu0 %v856
          %1913 = vmatprep.subr.bf16.mxu0 0
          %1914 = vmatpush1.bf16.msra.mxu0 %v913
          %1915 = vmatprep.subr.bf16.mxu0 0
          %1916 = vmatpush1.bf16.msra.mxu0 0
          %1917 = vmatprep.subr.bf16.mxu0 0
          %1918 = vmatpush1.bf16.msra.mxu0 0
          %1919 = vmatprep.subr.bf16.mxu0 0
          %1920 = vmatpush1.bf16.msra.mxu0 0
          %1921 = vmatprep.mubr.bf16.mxu0 %v1878
          %1922 = vmatmul.mubr.bf16.gmra.mrb[0].mxu0 %v1865
          %v1923 = vpop.f32.mrb[0].mxu0
          %v1924 = vadd.f32 0.0, %v1923
          %v1925 = vpop.f32.mrb[0].mxu0
          %v1926 = vpop.f32.mrb[0].mxu0
          %v1927 = vadd.f32 0.0, %v1926
          %v1928 = vpop.f32.mrb[0].mxu0
          %1929 = vmatprep.mubr.bf16.mxu0 %v1881
          %1930 = vmatmul.mubr.bf16.gmra.mrb[0].mxu0 %v1867
          %v1931 = vpop.f32.mrb[0].mxu0
          %v1932 = vadd.f32 0.0, %v1931
          %v1933 = vpop.f32.mrb[0].mxu0
          %v1934 = vpop.f32.mrb[0].mxu0
          %v1935 = vadd.f32 0.0, %v1934
          %v1936 = vpop.f32.mrb[0].mxu0
          %1937 = vmatprep.mubr.bf16.mxu0 %v1884
          %1938 = vmatmul.mubr.bf16.gmra.mrb[0].mxu0 %v1869
          %v1939 = vpop.f32.mrb[0].mxu0
          %v1940 = vadd.f32 0.0, %v1939
          %v1941 = vpop.f32.mrb[0].mxu0
          %v1942 = vpop.f32.mrb[0].mxu0
          %v1943 = vadd.f32 0.0, %v1942
          %v1944 = vpop.f32.mrb[0].mxu0
          %1945 = vmatprep.mubr.bf16.mxu0 %v1887
          %1946 = vmatmul.mubr.bf16.gmra.mrb[0].mxu0 %v1871
          %v1947 = vpop.f32.mrb[0].mxu0
          %v1948 = vadd.f32 0.0, %v1947
          %v1949 = vpop.f32.mrb[0].mxu0
          %v1950 = vpop.f32.mrb[0].mxu0
          %v1951 = vpop.f32.mrb[0].mxu0
          %1952 = vdwg.mxu0
          %s1953 = scalar_lea.vmem %s4, 32
          %v1954 = vld [vmem:[%s1953] sm:$0xff]
          %v1956 = vsel %vm1099, %v1924, 0
          %v1959 = vsel %vm1099, %v1927, 0
          %v1962 = vsel %vm1099, %v1932, 0
          %v1965 = vsel %vm1099, %v1935, 0
          %v1968 = vsel %vm1099, %v1940, 0
          %v1971 = vsel %vm1099, %v1943, 0
          %v1974 = vsel %vm1099, %v1948, 0
          %1976 = vmatprep.subr.mxu0 0.0
          %1977 = vmatpush1.msra.mxu0 %v1954
          %1978 = vmatprep.subr.mxu0 0.0
          %1979 = vmatpush1.msra.mxu0 0.0
          %1980 = vmatprep.subr.mxu0 0.0
          %1981 = vmatpush1.msra.mxu0 0.0
          %1982 = vmatprep.subr.mxu0 0.0
          %1983 = vmatpush1.msra.mxu0 0.0
          %1984 = vmatprep.subr.mxu0 0.0
          %1985 = vmatpush1.msra.mxu0 0.0
          %1986 = vmatprep.subr.mxu0 0.0
          %1987 = vmatpush1.msra.mxu0 0.0
          %1988 = vmatprep.subr.mxu0 0.0
          %1989 = vmatpush1.msra.mxu0 0.0
          %1990 = vmatprep.subr.mxu0 0.0
          %1991 = vmatpush1.msra.mxu0 0.0
          %1992 = vmatprep.subr.mxu0 0.0
          %1993 = vmatpush1.msra.mxu0 0.0
          %1994 = vmatprep.subr.mxu0 0.0
          %1995 = vmatpush1.msra.mxu0 0.0
          %1996 = vmatprep.subr.mxu0 0.0
          %1997 = vmatpush1.msra.mxu0 0.0
          %1998 = vmatprep.subr.mxu0 0.0
          %1999 = vmatpush1.msra.mxu0 0.0
          %2000 = vmatprep.subr.mxu0 0.0
          %2001 = vmatpush1.msra.mxu0 0.0
          %2002 = vmatprep.subr.mxu0 0.0
          %2003 = vmatpush1.msra.mxu0 0.0
          %2004 = vmatprep.subr.mxu0 0.0
          %2005 = vmatpush1.msra.mxu0 0.0
          %2006 = vmatprep.subr.mxu0 0.0
          %2007 = vmatpush1.msra.mxu0 0.0
          %2008 = vmatprep.subr.mxu0 0.0
          %2009 = vmatpush1.msra.mxu0 0.0
          %2010 = vmatprep.subr.mxu0 0.0
          %2011 = vmatpush1.msra.mxu0 0.0
          %2012 = vmatprep.subr.mxu0 0.0
          %2013 = vmatpush1.msra.mxu0 0.0
          %2014 = vmatprep.subr.mxu0 0.0
          %2015 = vmatpush1.msra.mxu0 0.0
          %2016 = vmatprep.subr.mxu0 0.0
          %2017 = vmatpush1.msra.mxu0 0.0
          %2018 = vmatprep.subr.mxu0 0.0
          %2019 = vmatpush1.msra.mxu0 0.0
          %2020 = vmatprep.subr.mxu0 0.0
          %2021 = vmatpush1.msra.mxu0 0.0
          %2022 = vmatprep.subr.mxu0 0.0
          %2023 = vmatpush1.msra.mxu0 0.0
          %2024 = vmatprep.subr.mxu0 0.0
          %2025 = vmatpush1.msra.mxu0 0.0
          %2026 = vmatprep.subr.mxu0 0.0
          %2027 = vmatpush1.msra.mxu0 0.0
          %2028 = vmatprep.subr.mxu0 0.0
          %2029 = vmatpush1.msra.mxu0 0.0
          %2030 = vmatprep.subr.mxu0 0.0
          %2031 = vmatpush1.msra.mxu0 0.0
          %2032 = vmatprep.subr.mxu0 0.0
          %2033 = vmatpush1.msra.mxu0 0.0
          %2034 = vmatprep.subr.mxu0 0.0
          %2035 = vmatpush1.msra.mxu0 0.0
          %2036 = vmatprep.subr.mxu0 0.0
          %2037 = vmatpush1.msra.mxu0 0.0
          %2038 = vmatprep.subr.mxu0 0.0
          %2039 = vmatpush1.msra.mxu0 0.0
          %2040 = vmatprep.mubr.f32.mxu0 0.0
          %2041 = vmatmul.mubr.f32.gmra.mrb[0].mxu0 %v1956
          %v2042 = vpop.f32.mrb[0].mxu0
          %v2043 = vadd.f32 0.0, %v2042
          %v2044 = vpop.f32.mrb[0].mxu0
          %2045 = vmatprep.mubr.f32.mxu0 0.0
          %2046 = vmatmul.mubr.f32.gmra.mrb[0].mxu0 %v1959
          %v2047 = vpop.f32.mrb[0].mxu0
          %v2048 = vadd.f32 0.0, %v2047
          %v2049 = vpop.f32.mrb[0].mxu0
          %2050 = vmatprep.mubr.f32.mxu0 0.0
          %2051 = vmatmul.mubr.f32.gmra.mrb[0].mxu0 %v1962
          %v2052 = vpop.f32.mrb[0].mxu0
          %v2053 = vadd.f32 0.0, %v2052
          %v2054 = vpop.f32.mrb[0].mxu0
          %2055 = vmatprep.mubr.f32.mxu0 0.0
          %2056 = vmatmul.mubr.f32.gmra.mrb[0].mxu0 %v1965
          %v2057 = vpop.f32.mrb[0].mxu0
          %v2058 = vadd.f32 0.0, %v2057
          %v2059 = vpop.f32.mrb[0].mxu0
          %2060 = vmatprep.mubr.f32.mxu0 0.0
          %2061 = vmatmul.mubr.f32.gmra.mrb[0].mxu0 %v1968
          %v2062 = vpop.f32.mrb[0].mxu0
          %v2063 = vadd.f32 0.0, %v2062
          %v2064 = vpop.f32.mrb[0].mxu0
          %2065 = vmatprep.mubr.f32.mxu0 0.0
          %2066 = vmatmul.mubr.f32.gmra.mrb[0].mxu0 %v1971
          %v2067 = vpop.f32.mrb[0].mxu0
          %v2068 = vadd.f32 0.0, %v2067
          %v2069 = vpop.f32.mrb[0].mxu0
          %2070 = vmatprep.mubr.f32.mxu0 0.0
          %2071 = vmatmul.mubr.f32.gmra.mrb[0].mxu0 %v1974
          %v2072 = vpop.f32.mrb[0].mxu0
          %v2073 = vadd.f32 0.0, %v2072
          %v2074 = vpop.f32.mrb[0].mxu0
          %2075 = vdwg.mxu0
          %v2076 = vadd.f32 %v1829, %v2043
          %v2077 = vadd.f32 %v1830, %v2048
          %v2078 = vadd.f32 %v1831, %v2053
          %v2079 = vadd.f32 %v1832, %v2058
          %v2080 = vadd.f32 %v1833, %v2063
          %v2081 = vadd.f32 %v1834, %v2068
          %v2082 = vadd.f32 %v1835, %v2073
          %s2083 = scalar_lea.vmem %s3, 280
          %v2084 = vld [vmem:[%s2083] sm:$0xff]
          %v2085 = vld [vmem:[%s2083 + $0x8] sm:$0xff]
          %v2086 = vld [vmem:[%s2083 + $0x10] sm:$0xff]
          %v2087 = vld [vmem:[%s2083 + $0x18] sm:$0xff]
          %v2088 = vld [vmem:[%s2083 + $0x20] sm:$0xff]
          %v2089 = vld [vmem:[%s2083 + $0x28] sm:$0xff]
          %v2090 = vld [vmem:[%s2083 + $0x30] sm:$0x11]
          %v2098 = vunpack.c.l.b16 %v2084
          %v2099 = vunpack.c.h.b16 %v2084
          %v2100 = vunpack.c.l.b16 %v2085
          %v2101 = vunpack.c.h.b16 %v2085
          %v2102 = vunpack.c.l.b16 %v2086
          %v2103 = vunpack.c.h.b16 %v2086
          %v2104 = vunpack.c.l.b16 %v2087
          %v2105 = vunpack.c.h.b16 %v2087
          %v2106 = vunpack.c.l.b16 %v2088
          %v2107 = vunpack.c.h.b16 %v2088
          %v2108 = vunpack.c.l.b16 %v2089
          %v2109 = vunpack.c.h.b16 %v2089
          %v2110 = vunpack.c.l.b16 %v2090
          %v2111 = vunpack.c.h.b16 %v2090
          %v2112 = vpack.c.b16 %v2100, %v2098
          %v2113 = vpack.c.b16 %v2101, %v2099
          %v2114 = vpack.c.b16 %v2104, %v2102
          %v2115 = vpack.c.b16 %v2105, %v2103
          %v2116 = vpack.c.b16 %v2108, %v2106
          %v2117 = vpack.c.b16 %v2109, %v2107
          %v2118 = vpack.c.b16 %v2110, %v2110
          %v2119 = vpack.c.b16 %v2111, %v2111
          %v2125 = vsel %vm898, %v2113, 0
          %v2128 = vsel %vm898, %v2115, 0
          %v2131 = vsel %vm898, %v2117, 0
          %v2134 = vsel %vm898, %v2119, 0
          %2136 = vmatprep.subr.bf16.mxu0 0
          %2137 = vmatpush1.bf16.msra.mxu0 %v845
          %2138 = vmatprep.subr.bf16.mxu0 0
          %2139 = vmatpush1.bf16.msra.mxu0 %v846
          %2140 = vmatprep.subr.bf16.mxu0 0
          %2141 = vmatpush1.bf16.msra.mxu0 %v847
          %2142 = vmatprep.subr.bf16.mxu0 0
          %2143 = vmatpush1.bf16.msra.mxu0 %v848
          %2144 = vmatprep.subr.bf16.mxu0 0
          %2145 = vmatpush1.bf16.msra.mxu0 %v849
          %2146 = vmatprep.subr.bf16.mxu0 0
          %2147 = vmatpush1.bf16.msra.mxu0 %v850
          %2148 = vmatprep.subr.bf16.mxu0 0
          %2149 = vmatpush1.bf16.msra.mxu0 %v851
          %2150 = vmatprep.subr.bf16.mxu0 0
          %2151 = vmatpush1.bf16.msra.mxu0 %v852
          %2152 = vmatprep.subr.bf16.mxu0 0
          %2153 = vmatpush1.bf16.msra.mxu0 %v853
          %2154 = vmatprep.subr.bf16.mxu0 0
          %2155 = vmatpush1.bf16.msra.mxu0 %v854
          %2156 = vmatprep.subr.bf16.mxu0 0
          %2157 = vmatpush1.bf16.msra.mxu0 %v855
          %2158 = vmatprep.subr.bf16.mxu0 0
          %2159 = vmatpush1.bf16.msra.mxu0 %v856
          %2160 = vmatprep.subr.bf16.mxu0 0
          %2161 = vmatpush1.bf16.msra.mxu0 %v913
          %2162 = vmatprep.subr.bf16.mxu0 0
          %2163 = vmatpush1.bf16.msra.mxu0 0
          %2164 = vmatprep.subr.bf16.mxu0 0
          %2165 = vmatpush1.bf16.msra.mxu0 0
          %2166 = vmatprep.subr.bf16.mxu0 0
          %2167 = vmatpush1.bf16.msra.mxu0 0
          %2168 = vmatprep.mubr.bf16.mxu0 %v2125
          %2169 = vmatmul.mubr.bf16.gmra.mrb[0].mxu0 %v2112
          %v2170 = vpop.f32.mrb[0].mxu0
          %v2171 = vadd.f32 0.0, %v2170
          %v2172 = vpop.f32.mrb[0].mxu0
          %v2173 = vpop.f32.mrb[0].mxu0
          %v2174 = vadd.f32 0.0, %v2173
          %v2175 = vpop.f32.mrb[0].mxu0
          %2176 = vmatprep.mubr.bf16.mxu0 %v2128
          %2177 = vmatmul.mubr.bf16.gmra.mrb[0].mxu0 %v2114
          %v2178 = vpop.f32.mrb[0].mxu0
          %v2179 = vadd.f32 0.0, %v2178
          %v2180 = vpop.f32.mrb[0].mxu0
          %v2181 = vpop.f32.mrb[0].mxu0
          %v2182 = vadd.f32 0.0, %v2181
          %v2183 = vpop.f32.mrb[0].mxu0
          %2184 = vmatprep.mubr.bf16.mxu0 %v2131
          %2185 = vmatmul.mubr.bf16.gmra.mrb[0].mxu0 %v2116
          %v2186 = vpop.f32.mrb[0].mxu0
          %v2187 = vadd.f32 0.0, %v2186
          %v2188 = vpop.f32.mrb[0].mxu0
          %v2189 = vpop.f32.mrb[0].mxu0
          %v2190 = vadd.f32 0.0, %v2189
          %v2191 = vpop.f32.mrb[0].mxu0
          %2192 = vmatprep.mubr.bf16.mxu0 %v2134
          %2193 = vmatmul.mubr.bf16.gmra.mrb[0].mxu0 %v2118
          %v2194 = vpop.f32.mrb[0].mxu0
          %v2195 = vadd.f32 0.0, %v2194
          %v2196 = vpop.f32.mrb[0].mxu0
          %v2197 = vpop.f32.mrb[0].mxu0
          %v2198 = vpop.f32.mrb[0].mxu0
          %2199 = vdwg.mxu0
          %s2200 = scalar_lea.vmem %s4, 40
          %v2201 = vld [vmem:[%s2200] sm:$0xff]
          %v2203 = vsel %vm1099, %v2171, 0
          %v2206 = vsel %vm1099, %v2174, 0
          %v2209 = vsel %vm1099, %v2179, 0
          %v2212 = vsel %vm1099, %v2182, 0
          %v2215 = vsel %vm1099, %v2187, 0
          %v2218 = vsel %vm1099, %v2190, 0
          %v2221 = vsel %vm1099, %v2195, 0
          %2223 = vmatprep.subr.mxu0 0.0
          %2224 = vmatpush1.msra.mxu0 %v2201
          %2225 = vmatprep.subr.mxu0 0.0
          %2226 = vmatpush1.msra.mxu0 0.0
          %2227 = vmatprep.subr.mxu0 0.0
          %2228 = vmatpush1.msra.mxu0 0.0
          %2229 = vmatprep.subr.mxu0 0.0
          %2230 = vmatpush1.msra.mxu0 0.0
          %2231 = vmatprep.subr.mxu0 0.0
          %2232 = vmatpush1.msra.mxu0 0.0
          %2233 = vmatprep.subr.mxu0 0.0
          %2234 = vmatpush1.msra.mxu0 0.0
          %2235 = vmatprep.subr.mxu0 0.0
          %2236 = vmatpush1.msra.mxu0 0.0
          %2237 = vmatprep.subr.mxu0 0.0
          %2238 = vmatpush1.msra.mxu0 0.0
          %2239 = vmatprep.subr.mxu0 0.0
          %2240 = vmatpush1.msra.mxu0 0.0
          %2241 = vmatprep.subr.mxu0 0.0
          %2242 = vmatpush1.msra.mxu0 0.0
          %2243 = vmatprep.subr.mxu0 0.0
          %2244 = vmatpush1.msra.mxu0 0.0
          %2245 = vmatprep.subr.mxu0 0.0
          %2246 = vmatpush1.msra.mxu0 0.0
          %2247 = vmatprep.subr.mxu0 0.0
          %2248 = vmatpush1.msra.mxu0 0.0
          %2249 = vmatprep.subr.mxu0 0.0
          %2250 = vmatpush1.msra.mxu0 0.0
          %2251 = vmatprep.subr.mxu0 0.0
          %2252 = vmatpush1.msra.mxu0 0.0
          %2253 = vmatprep.subr.mxu0 0.0
          %2254 = vmatpush1.msra.mxu0 0.0
          %2255 = vmatprep.subr.mxu0 0.0
          %2256 = vmatpush1.msra.mxu0 0.0
          %2257 = vmatprep.subr.mxu0 0.0
          %2258 = vmatpush1.msra.mxu0 0.0
          %2259 = vmatprep.subr.mxu0 0.0
          %2260 = vmatpush1.msra.mxu0 0.0
          %2261 = vmatprep.subr.mxu0 0.0
          %2262 = vmatpush1.msra.mxu0 0.0
          %2263 = vmatprep.subr.mxu0 0.0
          %2264 = vmatpush1.msra.mxu0 0.0
          %2265 = vmatprep.subr.mxu0 0.0
          %2266 = vmatpush1.msra.mxu0 0.0
          %2267 = vmatprep.subr.mxu0 0.0
          %2268 = vmatpush1.msra.mxu0 0.0
          %2269 = vmatprep.subr.mxu0 0.0
          %2270 = vmatpush1.msra.mxu0 0.0
          %2271 = vmatprep.subr.mxu0 0.0
          %2272 = vmatpush1.msra.mxu0 0.0
          %2273 = vmatprep.subr.mxu0 0.0
          %2274 = vmatpush1.msra.mxu0 0.0
          %2275 = vmatprep.subr.mxu0 0.0
          %2276 = vmatpush1.msra.mxu0 0.0
          %2277 = vmatprep.subr.mxu0 0.0
          %2278 = vmatpush1.msra.mxu0 0.0
          %2279 = vmatprep.subr.mxu0 0.0
          %2280 = vmatpush1.msra.mxu0 0.0
          %2281 = vmatprep.subr.mxu0 0.0
          %2282 = vmatpush1.msra.mxu0 0.0
          %2283 = vmatprep.subr.mxu0 0.0
          %2284 = vmatpush1.msra.mxu0 0.0
          %2285 = vmatprep.subr.mxu0 0.0
          %2286 = vmatpush1.msra.mxu0 0.0
          %2287 = vmatprep.mubr.f32.mxu0 0.0
          %2288 = vmatmul.mubr.f32.gmra.mrb[0].mxu0 %v2203
          %v2289 = vpop.f32.mrb[0].mxu0
          %v2290 = vadd.f32 0.0, %v2289
          %v2291 = vpop.f32.mrb[0].mxu0
          %2292 = vmatprep.mubr.f32.mxu0 0.0
          %2293 = vmatmul.mubr.f32.gmra.mrb[0].mxu0 %v2206
          %v2294 = vpop.f32.mrb[0].mxu0
          %v2295 = vadd.f32 0.0, %v2294
          %v2296 = vpop.f32.mrb[0].mxu0
          %2297 = vmatprep.mubr.f32.mxu0 0.0
          %2298 = vmatmul.mubr.f32.gmra.mrb[0].mxu0 %v2209
          %v2299 = vpop.f32.mrb[0].mxu0
          %v2300 = vadd.f32 0.0, %v2299
          %v2301 = vpop.f32.mrb[0].mxu0
          %2302 = vmatprep.mubr.f32.mxu0 0.0
          %2303 = vmatmul.mubr.f32.gmra.mrb[0].mxu0 %v2212
          %v2304 = vpop.f32.mrb[0].mxu0
          %v2305 = vadd.f32 0.0, %v2304
          %v2306 = vpop.f32.mrb[0].mxu0
          %2307 = vmatprep.mubr.f32.mxu0 0.0
          %2308 = vmatmul.mubr.f32.gmra.mrb[0].mxu0 %v2215
          %v2309 = vpop.f32.mrb[0].mxu0
          %v2310 = vadd.f32 0.0, %v2309
          %v2311 = vpop.f32.mrb[0].mxu0
          %2312 = vmatprep.mubr.f32.mxu0 0.0
          %2313 = vmatmul.mubr.f32.gmra.mrb[0].mxu0 %v2218
          %v2314 = vpop.f32.mrb[0].mxu0
          %v2315 = vadd.f32 0.0, %v2314
          %v2316 = vpop.f32.mrb[0].mxu0
          %2317 = vmatprep.mubr.f32.mxu0 0.0
          %2318 = vmatmul.mubr.f32.gmra.mrb[0].mxu0 %v2221
          %v2319 = vpop.f32.mrb[0].mxu0
          %v2320 = vadd.f32 0.0, %v2319
          %v2321 = vpop.f32.mrb[0].mxu0
          %2322 = vdwg.mxu0
          %v2323 = vadd.f32 %v2076, %v2290
          %v2324 = vadd.f32 %v2077, %v2295
          %v2325 = vadd.f32 %v2078, %v2300
          %v2326 = vadd.f32 %v2079, %v2305
          %v2327 = vadd.f32 %v2080, %v2310
          %v2328 = vadd.f32 %v2081, %v2315
          %v2329 = vadd.f32 %v2082, %v2320
          %s2330 = scalar_lea.vmem %s3, 336
          %v2331 = vld [vmem:[%s2330] sm:$0xff]
          %v2332 = vld [vmem:[%s2330 + $0x8] sm:$0xff]
          %v2333 = vld [vmem:[%s2330 + $0x10] sm:$0xff]
          %v2334 = vld [vmem:[%s2330 + $0x18] sm:$0xff]
          %v2335 = vld [vmem:[%s2330 + $0x20] sm:$0xff]
          %v2336 = vld [vmem:[%s2330 + $0x28] sm:$0xff]
          %v2337 = vld [vmem:[%s2330 + $0x30] sm:$0x11]
          %v2345 = vunpack.c.l.b16 %v2331
          %v2346 = vunpack.c.h.b16 %v2331
          %v2347 = vunpack.c.l.b16 %v2332
          %v2348 = vunpack.c.h.b16 %v2332
          %v2349 = vunpack.c.l.b16 %v2333
          %v2350 = vunpack.c.h.b16 %v2333
          %v2351 = vunpack.c.l.b16 %v2334
          %v2352 = vunpack.c.h.b16 %v2334
          %v2353 = vunpack.c.l.b16 %v2335
          %v2354 = vunpack.c.h.b16 %v2335
          %v2355 = vunpack.c.l.b16 %v2336
          %v2356 = vunpack.c.h.b16 %v2336
          %v2357 = vunpack.c.l.b16 %v2337
          %v2358 = vunpack.c.h.b16 %v2337
          %v2359 = vpack.c.b16 %v2347, %v2345
          %v2360 = vpack.c.b16 %v2348, %v2346
          %v2361 = vpack.c.b16 %v2351, %v2349
          %v2362 = vpack.c.b16 %v2352, %v2350
          %v2363 = vpack.c.b16 %v2355, %v2353
          %v2364 = vpack.c.b16 %v2356, %v2354
          %v2365 = vpack.c.b16 %v2357, %v2357
          %v2366 = vpack.c.b16 %v2358, %v2358
          %v2372 = vsel %vm898, %v2360, 0
          %v2375 = vsel %vm898, %v2362, 0
          %v2378 = vsel %vm898, %v2364, 0
          %v2381 = vsel %vm898, %v2366, 0
          %2383 = vmatprep.subr.bf16.mxu0 0
          %2384 = vmatpush1.bf16.msra.mxu0 %v845
          %2385 = vmatprep.subr.bf16.mxu0 0
          %2386 = vmatpush1.bf16.msra.mxu0 %v846
          %2387 = vmatprep.subr.bf16.mxu0 0
          %2388 = vmatpush1.bf16.msra.mxu0 %v847
          %2389 = vmatprep.subr.bf16.mxu0 0
          %2390 = vmatpush1.bf16.msra.mxu0 %v848
          %2391 = vmatprep.subr.bf16.mxu0 0
          %2392 = vmatpush1.bf16.msra.mxu0 %v849
          %2393 = vmatprep.subr.bf16.mxu0 0
          %2394 = vmatpush1.bf16.msra.mxu0 %v850
          %2395 = vmatprep.subr.bf16.mxu0 0
          %2396 = vmatpush1.bf16.msra.mxu0 %v851
          %2397 = vmatprep.subr.bf16.mxu0 0
          %2398 = vmatpush1.bf16.msra.mxu0 %v852
          %2399 = vmatprep.subr.bf16.mxu0 0
          %2400 = vmatpush1.bf16.msra.mxu0 %v853
          %2401 = vmatprep.subr.bf16.mxu0 0
          %2402 = vmatpush1.bf16.msra.mxu0 %v854
          %2403 = vmatprep.subr.bf16.mxu0 0
          %2404 = vmatpush1.bf16.msra.mxu0 %v855
          %2405 = vmatprep.subr.bf16.mxu0 0
          %2406 = vmatpush1.bf16.msra.mxu0 %v856
          %2407 = vmatprep.subr.bf16.mxu0 0
          %2408 = vmatpush1.bf16.msra.mxu0 %v913
          %2409 = vmatprep.subr.bf16.mxu0 0
          %2410 = vmatpush1.bf16.msra.mxu0 0
          %2411 = vmatprep.subr.bf16.mxu0 0
          %2412 = vmatpush1.bf16.msra.mxu0 0
          %2413 = vmatprep.subr.bf16.mxu0 0
          %2414 = vmatpush1.bf16.msra.mxu0 0
          %2415 = vmatprep.mubr.bf16.mxu0 %v2372
          %2416 = vmatmul.mubr.bf16.gmra.mrb[0].mxu0 %v2359
          %v2417 = vpop.f32.mrb[0].mxu0
          %v2418 = vadd.f32 0.0, %v2417
          %v2419 = vpop.f32.mrb[0].mxu0
          %v2420 = vpop.f32.mrb[0].mxu0
          %v2421 = vadd.f32 0.0, %v2420
          %v2422 = vpop.f32.mrb[0].mxu0
          %2423 = vmatprep.mubr.bf16.mxu0 %v2375
          %2424 = vmatmul.mubr.bf16.gmra.mrb[0].mxu0 %v2361
          %v2425 = vpop.f32.mrb[0].mxu0
          %v2426 = vadd.f32 0.0, %v2425
          %v2427 = vpop.f32.mrb[0].mxu0
          %v2428 = vpop.f32.mrb[0].mxu0
          %v2429 = vadd.f32 0.0, %v2428
          %v2430 = vpop.f32.mrb[0].mxu0
          %2431 = vmatprep.mubr.bf16.mxu0 %v2378
          %2432 = vmatmul.mubr.bf16.gmra.mrb[0].mxu0 %v2363
          %v2433 = vpop.f32.mrb[0].mxu0
          %v2434 = vadd.f32 0.0, %v2433
          %v2435 = vpop.f32.mrb[0].mxu0
          %v2436 = vpop.f32.mrb[0].mxu0
          %v2437 = vadd.f32 0.0, %v2436
          %v2438 = vpop.f32.mrb[0].mxu0
          %2439 = vmatprep.mubr.bf16.mxu0 %v2381
          %2440 = vmatmul.mubr.bf16.gmra.mrb[0].mxu0 %v2365
          %v2441 = vpop.f32.mrb[0].mxu0
          %v2442 = vadd.f32 0.0, %v2441
          %v2443 = vpop.f32.mrb[0].mxu0
          %v2444 = vpop.f32.mrb[0].mxu0
          %v2445 = vpop.f32.mrb[0].mxu0
          %2446 = vdwg.mxu0
          %s2447 = scalar_lea.vmem %s4, 48
          %v2448 = vld [vmem:[%s2447] sm:$0xff]
          %v2450 = vsel %vm1099, %v2418, 0
          %v2453 = vsel %vm1099, %v2421, 0
          %v2456 = vsel %vm1099, %v2426, 0
          %v2459 = vsel %vm1099, %v2429, 0
          %v2462 = vsel %vm1099, %v2434, 0
          %v2465 = vsel %vm1099, %v2437, 0
          %v2468 = vsel %vm1099, %v2442, 0
          %2470 = vmatprep.subr.mxu0 0.0
          %2471 = vmatpush1.msra.mxu0 %v2448
          %2472 = vmatprep.subr.mxu0 0.0
          %2473 = vmatpush1.msra.mxu0 0.0
          %2474 = vmatprep.subr.mxu0 0.0
          %2475 = vmatpush1.msra.mxu0 0.0
          %2476 = vmatprep.subr.mxu0 0.0
          %2477 = vmatpush1.msra.mxu0 0.0
          %2478 = vmatprep.subr.mxu0 0.0
          %2479 = vmatpush1.msra.mxu0 0.0
          %2480 = vmatprep.subr.mxu0 0.0
          %2481 = vmatpush1.msra.mxu0 0.0
          %2482 = vmatprep.subr.mxu0 0.0
          %2483 = vmatpush1.msra.mxu0 0.0
          %2484 = vmatprep.subr.mxu0 0.0
          %2485 = vmatpush1.msra.mxu0 0.0
          %2486 = vmatprep.subr.mxu0 0.0
          %2487 = vmatpush1.msra.mxu0 0.0
          %2488 = vmatprep.subr.mxu0 0.0
          %2489 = vmatpush1.msra.mxu0 0.0
          %2490 = vmatprep.subr.mxu0 0.0
          %2491 = vmatpush1.msra.mxu0 0.0
          %2492 = vmatprep.subr.mxu0 0.0
          %2493 = vmatpush1.msra.mxu0 0.0
          %2494 = vmatprep.subr.mxu0 0.0
          %2495 = vmatpush1.msra.mxu0 0.0
          %2496 = vmatprep.subr.mxu0 0.0
          %2497 = vmatpush1.msra.mxu0 0.0
          %2498 = vmatprep.subr.mxu0 0.0
          %2499 = vmatpush1.msra.mxu0 0.0
          %2500 = vmatprep.subr.mxu0 0.0
          %2501 = vmatpush1.msra.mxu0 0.0
          %2502 = vmatprep.subr.mxu0 0.0
          %2503 = vmatpush1.msra.mxu0 0.0
          %2504 = vmatprep.subr.mxu0 0.0
          %2505 = vmatpush1.msra.mxu0 0.0
          %2506 = vmatprep.subr.mxu0 0.0
          %2507 = vmatpush1.msra.mxu0 0.0
          %2508 = vmatprep.subr.mxu0 0.0
          %2509 = vmatpush1.msra.mxu0 0.0
          %2510 = vmatprep.subr.mxu0 0.0
          %2511 = vmatpush1.msra.mxu0 0.0
          %2512 = vmatprep.subr.mxu0 0.0
          %2513 = vmatpush1.msra.mxu0 0.0
          %2514 = vmatprep.subr.mxu0 0.0
          %2515 = vmatpush1.msra.mxu0 0.0
          %2516 = vmatprep.subr.mxu0 0.0
          %2517 = vmatpush1.msra.mxu0 0.0
          %2518 = vmatprep.subr.mxu0 0.0
          %2519 = vmatpush1.msra.mxu0 0.0
          %2520 = vmatprep.subr.mxu0 0.0
          %2521 = vmatpush1.msra.mxu0 0.0
          %2522 = vmatprep.subr.mxu0 0.0
          %2523 = vmatpush1.msra.mxu0 0.0
          %2524 = vmatprep.subr.mxu0 0.0
          %2525 = vmatpush1.msra.mxu0 0.0
          %2526 = vmatprep.subr.mxu0 0.0
          %2527 = vmatpush1.msra.mxu0 0.0
          %2528 = vmatprep.subr.mxu0 0.0
          %2529 = vmatpush1.msra.mxu0 0.0
          %2530 = vmatprep.subr.mxu0 0.0
          %2531 = vmatpush1.msra.mxu0 0.0
          %2532 = vmatprep.subr.mxu0 0.0
          %2533 = vmatpush1.msra.mxu0 0.0
          %2534 = vmatprep.mubr.f32.mxu0 0.0
          %2535 = vmatmul.mubr.f32.gmra.mrb[0].mxu0 %v2450
          %v2536 = vpop.f32.mrb[0].mxu0
          %v2537 = vadd.f32 0.0, %v2536
          %v2538 = vpop.f32.mrb[0].mxu0
          %2539 = vmatprep.mubr.f32.mxu0 0.0
          %2540 = vmatmul.mubr.f32.gmra.mrb[0].mxu0 %v2453
          %v2541 = vpop.f32.mrb[0].mxu0
          %v2542 = vadd.f32 0.0, %v2541
          %v2543 = vpop.f32.mrb[0].mxu0
          %2544 = vmatprep.mubr.f32.mxu0 0.0
          %2545 = vmatmul.mubr.f32.gmra.mrb[0].mxu0 %v2456
          %v2546 = vpop.f32.mrb[0].mxu0
          %v2547 = vadd.f32 0.0, %v2546
          %v2548 = vpop.f32.mrb[0].mxu0
          %2549 = vmatprep.mubr.f32.mxu0 0.0
          %2550 = vmatmul.mubr.f32.gmra.mrb[0].mxu0 %v2459
          %v2551 = vpop.f32.mrb[0].mxu0
          %v2552 = vadd.f32 0.0, %v2551
          %v2553 = vpop.f32.mrb[0].mxu0
          %2554 = vmatprep.mubr.f32.mxu0 0.0
          %2555 = vmatmul.mubr.f32.gmra.mrb[0].mxu0 %v2462
          %v2556 = vpop.f32.mrb[0].mxu0
          %v2557 = vadd.f32 0.0, %v2556
          %v2558 = vpop.f32.mrb[0].mxu0
          %2559 = vmatprep.mubr.f32.mxu0 0.0
          %2560 = vmatmul.mubr.f32.gmra.mrb[0].mxu0 %v2465
          %v2561 = vpop.f32.mrb[0].mxu0
          %v2562 = vadd.f32 0.0, %v2561
          %v2563 = vpop.f32.mrb[0].mxu0
          %2564 = vmatprep.mubr.f32.mxu0 0.0
          %2565 = vmatmul.mubr.f32.gmra.mrb[0].mxu0 %v2468
          %v2566 = vpop.f32.mrb[0].mxu0
          %v2567 = vadd.f32 0.0, %v2566
          %v2568 = vpop.f32.mrb[0].mxu0
          %2569 = vdwg.mxu0
          %v2570 = vadd.f32 %v2323, %v2537
          %v2571 = vadd.f32 %v2324, %v2542
          %v2572 = vadd.f32 %v2325, %v2547
          %v2573 = vadd.f32 %v2326, %v2552
          %v2574 = vadd.f32 %v2327, %v2557
          %v2575 = vadd.f32 %v2328, %v2562
          %v2576 = vadd.f32 %v2329, %v2567
          %s2577 = scalar_lea.vmem %s3, 392
          %v2578 = vld [vmem:[%s2577] sm:$0xff]
          %v2579 = vld [vmem:[%s2577 + $0x8] sm:$0xff]
          %v2580 = vld [vmem:[%s2577 + $0x10] sm:$0xff]
          %v2581 = vld [vmem:[%s2577 + $0x18] sm:$0xff]
          %v2582 = vld [vmem:[%s2577 + $0x20] sm:$0xff]
          %v2583 = vld [vmem:[%s2577 + $0x28] sm:$0xff]
          %v2584 = vld [vmem:[%s2577 + $0x30] sm:$0x11]
          %v2592 = vunpack.c.l.b16 %v2578
          %v2593 = vunpack.c.h.b16 %v2578
          %v2594 = vunpack.c.l.b16 %v2579
          %v2595 = vunpack.c.h.b16 %v2579
          %v2596 = vunpack.c.l.b16 %v2580
          %v2597 = vunpack.c.h.b16 %v2580
          %v2598 = vunpack.c.l.b16 %v2581
          %v2599 = vunpack.c.h.b16 %v2581
          %v2600 = vunpack.c.l.b16 %v2582
          %v2601 = vunpack.c.h.b16 %v2582
          %v2602 = vunpack.c.l.b16 %v2583
          %v2603 = vunpack.c.h.b16 %v2583
          %v2604 = vunpack.c.l.b16 %v2584
          %v2605 = vunpack.c.h.b16 %v2584
          %v2606 = vpack.c.b16 %v2594, %v2592
          %v2607 = vpack.c.b16 %v2595, %v2593
          %v2608 = vpack.c.b16 %v2598, %v2596
          %v2609 = vpack.c.b16 %v2599, %v2597
          %v2610 = vpack.c.b16 %v2602, %v2600
          %v2611 = vpack.c.b16 %v2603, %v2601
          %v2612 = vpack.c.b16 %v2604, %v2604
          %v2613 = vpack.c.b16 %v2605, %v2605
          %v2619 = vsel %vm898, %v2607, 0
          %v2622 = vsel %vm898, %v2609, 0
          %v2625 = vsel %vm898, %v2611, 0
          %v2628 = vsel %vm898, %v2613, 0
          %2630 = vmatprep.subr.bf16.mxu0 0
          %2631 = vmatpush1.bf16.msra.mxu0 %v845
          %2632 = vmatprep.subr.bf16.mxu0 0
          %2633 = vmatpush1.bf16.msra.mxu0 %v846
          %2634 = vmatprep.subr.bf16.mxu0 0
          %2635 = vmatpush1.bf16.msra.mxu0 %v847
          %2636 = vmatprep.subr.bf16.mxu0 0
          %2637 = vmatpush1.bf16.msra.mxu0 %v848
          %2638 = vmatprep.subr.bf16.mxu0 0
          %2639 = vmatpush1.bf16.msra.mxu0 %v849
          %2640 = vmatprep.subr.bf16.mxu0 0
          %2641 = vmatpush1.bf16.msra.mxu0 %v850
          %2642 = vmatprep.subr.bf16.mxu0 0
          %2643 = vmatpush1.bf16.msra.mxu0 %v851
          %2644 = vmatprep.subr.bf16.mxu0 0
          %2645 = vmatpush1.bf16.msra.mxu0 %v852
          %2646 = vmatprep.subr.bf16.mxu0 0
          %2647 = vmatpush1.bf16.msra.mxu0 %v853
          %2648 = vmatprep.subr.bf16.mxu0 0
          %2649 = vmatpush1.bf16.msra.mxu0 %v854
          %2650 = vmatprep.subr.bf16.mxu0 0
          %2651 = vmatpush1.bf16.msra.mxu0 %v855
          %2652 = vmatprep.subr.bf16.mxu0 0
          %2653 = vmatpush1.bf16.msra.mxu0 %v856
          %2654 = vmatprep.subr.bf16.mxu0 0
          %2655 = vmatpush1.bf16.msra.mxu0 %v913
          %2656 = vmatprep.subr.bf16.mxu0 0
          %2657 = vmatpush1.bf16.msra.mxu0 0
          %2658 = vmatprep.subr.bf16.mxu0 0
          %2659 = vmatpush1.bf16.msra.mxu0 0
          %2660 = vmatprep.subr.bf16.mxu0 0
          %2661 = vmatpush1.bf16.msra.mxu0 0
          %2662 = vmatprep.mubr.bf16.mxu0 %v2619
          %2663 = vmatmul.mubr.bf16.gmra.mrb[0].mxu0 %v2606
          %v2664 = vpop.f32.mrb[0].mxu0
          %v2665 = vadd.f32 0.0, %v2664
          %v2666 = vpop.f32.mrb[0].mxu0
          %v2667 = vpop.f32.mrb[0].mxu0
          %v2668 = vadd.f32 0.0, %v2667
          %v2669 = vpop.f32.mrb[0].mxu0
          %2670 = vmatprep.mubr.bf16.mxu0 %v2622
          %2671 = vmatmul.mubr.bf16.gmra.mrb[0].mxu0 %v2608
          %v2672 = vpop.f32.mrb[0].mxu0
          %v2673 = vadd.f32 0.0, %v2672
          %v2674 = vpop.f32.mrb[0].mxu0
          %v2675 = vpop.f32.mrb[0].mxu0
          %v2676 = vadd.f32 0.0, %v2675
          %v2677 = vpop.f32.mrb[0].mxu0
          %2678 = vmatprep.mubr.bf16.mxu0 %v2625
          %2679 = vmatmul.mubr.bf16.gmra.mrb[0].mxu0 %v2610
          %v2680 = vpop.f32.mrb[0].mxu0
          %v2681 = vadd.f32 0.0, %v2680
          %v2682 = vpop.f32.mrb[0].mxu0
          %v2683 = vpop.f32.mrb[0].mxu0
          %v2684 = vadd.f32 0.0, %v2683
          %v2685 = vpop.f32.mrb[0].mxu0
          %2686 = vmatprep.mubr.bf16.mxu0 %v2628
          %2687 = vmatmul.mubr.bf16.gmra.mrb[0].mxu0 %v2612
          %v2688 = vpop.f32.mrb[0].mxu0
          %v2689 = vadd.f32 0.0, %v2688
          %v2690 = vpop.f32.mrb[0].mxu0
          %v2691 = vpop.f32.mrb[0].mxu0
          %v2692 = vpop.f32.mrb[0].mxu0
          %2693 = vdwg.mxu0
          %s2694 = scalar_lea.vmem %s4, 56
          %v2695 = vld [vmem:[%s2694] sm:$0xff]
          %v2697 = vsel %vm1099, %v2665, 0
          %v2700 = vsel %vm1099, %v2668, 0
          %v2703 = vsel %vm1099, %v2673, 0
          %v2706 = vsel %vm1099, %v2676, 0
          %v2709 = vsel %vm1099, %v2681, 0
          %v2712 = vsel %vm1099, %v2684, 0
          %v2715 = vsel %vm1099, %v2689, 0
          %2717 = vmatprep.subr.mxu0 0.0
          %2718 = vmatpush1.msra.mxu0 %v2695
          %2719 = vmatprep.subr.mxu0 0.0
          %2720 = vmatpush1.msra.mxu0 0.0
          %2721 = vmatprep.subr.mxu0 0.0
          %2722 = vmatpush1.msra.mxu0 0.0
          %2723 = vmatprep.subr.mxu0 0.0
          %2724 = vmatpush1.msra.mxu0 0.0
          %2725 = vmatprep.subr.mxu0 0.0
          %2726 = vmatpush1.msra.mxu0 0.0
          %2727 = vmatprep.subr.mxu0 0.0
          %2728 = vmatpush1.msra.mxu0 0.0
          %2729 = vmatprep.subr.mxu0 0.0
          %2730 = vmatpush1.msra.mxu0 0.0
          %2731 = vmatprep.subr.mxu0 0.0
          %2732 = vmatpush1.msra.mxu0 0.0
          %2733 = vmatprep.subr.mxu0 0.0
          %2734 = vmatpush1.msra.mxu0 0.0
          %2735 = vmatprep.subr.mxu0 0.0
          %2736 = vmatpush1.msra.mxu0 0.0
          %2737 = vmatprep.subr.mxu0 0.0
          %2738 = vmatpush1.msra.mxu0 0.0
          %2739 = vmatprep.subr.mxu0 0.0
          %2740 = vmatpush1.msra.mxu0 0.0
          %2741 = vmatprep.subr.mxu0 0.0
          %2742 = vmatpush1.msra.mxu0 0.0
          %2743 = vmatprep.subr.mxu0 0.0
          %2744 = vmatpush1.msra.mxu0 0.0
          %2745 = vmatprep.subr.mxu0 0.0
          %2746 = vmatpush1.msra.mxu0 0.0
          %2747 = vmatprep.subr.mxu0 0.0
          %2748 = vmatpush1.msra.mxu0 0.0
          %2749 = vmatprep.subr.mxu0 0.0
          %2750 = vmatpush1.msra.mxu0 0.0
          %2751 = vmatprep.subr.mxu0 0.0
          %2752 = vmatpush1.msra.mxu0 0.0
          %2753 = vmatprep.subr.mxu0 0.0
          %2754 = vmatpush1.msra.mxu0 0.0
          %2755 = vmatprep.subr.mxu0 0.0
          %2756 = vmatpush1.msra.mxu0 0.0
          %2757 = vmatprep.subr.mxu0 0.0
          %2758 = vmatpush1.msra.mxu0 0.0
          %2759 = vmatprep.subr.mxu0 0.0
          %2760 = vmatpush1.msra.mxu0 0.0
          %2761 = vmatprep.subr.mxu0 0.0
          %2762 = vmatpush1.msra.mxu0 0.0
          %2763 = vmatprep.subr.mxu0 0.0
          %2764 = vmatpush1.msra.mxu0 0.0
          %2765 = vmatprep.subr.mxu0 0.0
          %2766 = vmatpush1.msra.mxu0 0.0
          %2767 = vmatprep.subr.mxu0 0.0
          %2768 = vmatpush1.msra.mxu0 0.0
          %2769 = vmatprep.subr.mxu0 0.0
          %2770 = vmatpush1.msra.mxu0 0.0
          %2771 = vmatprep.subr.mxu0 0.0
          %2772 = vmatpush1.msra.mxu0 0.0
          %2773 = vmatprep.subr.mxu0 0.0
          %2774 = vmatpush1.msra.mxu0 0.0
          %2775 = vmatprep.subr.mxu0 0.0
          %2776 = vmatpush1.msra.mxu0 0.0
          %2777 = vmatprep.subr.mxu0 0.0
          %2778 = vmatpush1.msra.mxu0 0.0
          %2779 = vmatprep.subr.mxu0 0.0
          %2780 = vmatpush1.msra.mxu0 0.0
          %2781 = vmatprep.mubr.f32.mxu0 0.0
          %2782 = vmatmul.mubr.f32.gmra.mrb[0].mxu0 %v2697
          %v2783 = vpop.f32.mrb[0].mxu0
          %v2784 = vadd.f32 0.0, %v2783
          %v2785 = vpop.f32.mrb[0].mxu0
          %2786 = vmatprep.mubr.f32.mxu0 0.0
          %2787 = vmatmul.mubr.f32.gmra.mrb[0].mxu0 %v2700
          %v2788 = vpop.f32.mrb[0].mxu0
          %v2789 = vadd.f32 0.0, %v2788
          %v2790 = vpop.f32.mrb[0].mxu0
          %2791 = vmatprep.mubr.f32.mxu0 0.0
          %2792 = vmatmul.mubr.f32.gmra.mrb[0].mxu0 %v2703
          %v2793 = vpop.f32.mrb[0].mxu0
          %v2794 = vadd.f32 0.0, %v2793
          %v2795 = vpop.f32.mrb[0].mxu0
          %2796 = vmatprep.mubr.f32.mxu0 0.0
          %2797 = vmatmul.mubr.f32.gmra.mrb[0].mxu0 %v2706
          %v2798 = vpop.f32.mrb[0].mxu0
          %v2799 = vadd.f32 0.0, %v2798
          %v2800 = vpop.f32.mrb[0].mxu0
          %2801 = vmatprep.mubr.f32.mxu0 0.0
          %2802 = vmatmul.mubr.f32.gmra.mrb[0].mxu0 %v2709
          %v2803 = vpop.f32.mrb[0].mxu0
          %v2804 = vadd.f32 0.0, %v2803
          %v2805 = vpop.f32.mrb[0].mxu0
          %2806 = vmatprep.mubr.f32.mxu0 0.0
          %2807 = vmatmul.mubr.f32.gmra.mrb[0].mxu0 %v2712
          %v2808 = vpop.f32.mrb[0].mxu0
          %v2809 = vadd.f32 0.0, %v2808
          %v2810 = vpop.f32.mrb[0].mxu0
          %2811 = vmatprep.mubr.f32.mxu0 0.0
          %2812 = vmatmul.mubr.f32.gmra.mrb[0].mxu0 %v2715
          %v2813 = vpop.f32.mrb[0].mxu0
          %v2814 = vadd.f32 0.0, %v2813
          %v2815 = vpop.f32.mrb[0].mxu0
          %2816 = vdwg.mxu0
          %v2817 = vadd.f32 %v2570, %v2784
          %v2818 = vadd.f32 %v2571, %v2789
          %v2819 = vadd.f32 %v2572, %v2794
          %v2820 = vadd.f32 %v2573, %v2799
          %v2821 = vadd.f32 %v2574, %v2804
          %v2822 = vadd.f32 %v2575, %v2809
          %v2823 = vadd.f32 %v2576, %v2814
          %s2824 = scalar_lea.vmem %s3, 448
          %v2825 = vld [vmem:[%s2824] sm:$0xff]
          %v2826 = vld [vmem:[%s2824 + $0x8] sm:$0xff]
          %v2827 = vld [vmem:[%s2824 + $0x10] sm:$0xff]
          %v2828 = vld [vmem:[%s2824 + $0x18] sm:$0xff]
          %v2829 = vld [vmem:[%s2824 + $0x20] sm:$0xff]
          %v2830 = vld [vmem:[%s2824 + $0x28] sm:$0xff]
          %v2831 = vld [vmem:[%s2824 + $0x30] sm:$0x11]
          %v2839 = vunpack.c.l.b16 %v2825
          %v2840 = vunpack.c.h.b16 %v2825
          %v2841 = vunpack.c.l.b16 %v2826
          %v2842 = vunpack.c.h.b16 %v2826
          %v2843 = vunpack.c.l.b16 %v2827
          %v2844 = vunpack.c.h.b16 %v2827
          %v2845 = vunpack.c.l.b16 %v2828
          %v2846 = vunpack.c.h.b16 %v2828
          %v2847 = vunpack.c.l.b16 %v2829
          %v2848 = vunpack.c.h.b16 %v2829
          %v2849 = vunpack.c.l.b16 %v2830
          %v2850 = vunpack.c.h.b16 %v2830
          %v2851 = vunpack.c.l.b16 %v2831
          %v2852 = vunpack.c.h.b16 %v2831
          %v2853 = vpack.c.b16 %v2841, %v2839
          %v2854 = vpack.c.b16 %v2842, %v2840
          %v2855 = vpack.c.b16 %v2845, %v2843
          %v2856 = vpack.c.b16 %v2846, %v2844
          %v2857 = vpack.c.b16 %v2849, %v2847
          %v2858 = vpack.c.b16 %v2850, %v2848
          %v2859 = vpack.c.b16 %v2851, %v2851
          %v2860 = vpack.c.b16 %v2852, %v2852
          %v2866 = vsel %vm898, %v2854, 0
          %v2869 = vsel %vm898, %v2856, 0
          %v2872 = vsel %vm898, %v2858, 0
          %v2875 = vsel %vm898, %v2860, 0
          %2877 = vmatprep.subr.bf16.mxu0 0
          %2878 = vmatpush1.bf16.msra.mxu0 %v845
          %2879 = vmatprep.subr.bf16.mxu0 0
          %2880 = vmatpush1.bf16.msra.mxu0 %v846
          %2881 = vmatprep.subr.bf16.mxu0 0
          %2882 = vmatpush1.bf16.msra.mxu0 %v847
          %2883 = vmatprep.subr.bf16.mxu0 0
          %2884 = vmatpush1.bf16.msra.mxu0 %v848
          %2885 = vmatprep.subr.bf16.mxu0 0
          %2886 = vmatpush1.bf16.msra.mxu0 %v849
          %2887 = vmatprep.subr.bf16.mxu0 0
          %2888 = vmatpush1.bf16.msra.mxu0 %v850
          %2889 = vmatprep.subr.bf16.mxu0 0
          %2890 = vmatpush1.bf16.msra.mxu0 %v851
          %2891 = vmatprep.subr.bf16.mxu0 0
          %2892 = vmatpush1.bf16.msra.mxu0 %v852
          %2893 = vmatprep.subr.bf16.mxu0 0
          %2894 = vmatpush1.bf16.msra.mxu0 %v853
          %2895 = vmatprep.subr.bf16.mxu0 0
          %2896 = vmatpush1.bf16.msra.mxu0 %v854
          %2897 = vmatprep.subr.bf16.mxu0 0
          %2898 = vmatpush1.bf16.msra.mxu0 %v855
          %2899 = vmatprep.subr.bf16.mxu0 0
          %2900 = vmatpush1.bf16.msra.mxu0 %v856
          %2901 = vmatprep.subr.bf16.mxu0 0
          %2902 = vmatpush1.bf16.msra.mxu0 %v913
          %2903 = vmatprep.subr.bf16.mxu0 0
          %2904 = vmatpush1.bf16.msra.mxu0 0
          %2905 = vmatprep.subr.bf16.mxu0 0
          %2906 = vmatpush1.bf16.msra.mxu0 0
          %2907 = vmatprep.subr.bf16.mxu0 0
          %2908 = vmatpush1.bf16.msra.mxu0 0
          %2909 = vmatprep.mubr.bf16.mxu0 %v2866
          %2910 = vmatmul.mubr.bf16.gmra.mrb[0].mxu0 %v2853
          %v2911 = vpop.f32.mrb[0].mxu0
          %v2912 = vadd.f32 0.0, %v2911
          %v2913 = vpop.f32.mrb[0].mxu0
          %v2914 = vpop.f32.mrb[0].mxu0
          %v2915 = vadd.f32 0.0, %v2914
          %v2916 = vpop.f32.mrb[0].mxu0
          %2917 = vmatprep.mubr.bf16.mxu0 %v2869
          %2918 = vmatmul.mubr.bf16.gmra.mrb[0].mxu0 %v2855
          %v2919 = vpop.f32.mrb[0].mxu0
          %v2920 = vadd.f32 0.0, %v2919
          %v2921 = vpop.f32.mrb[0].mxu0
          %v2922 = vpop.f32.mrb[0].mxu0
          %v2923 = vadd.f32 0.0, %v2922
          %v2924 = vpop.f32.mrb[0].mxu0
          %2925 = vmatprep.mubr.bf16.mxu0 %v2872
          %2926 = vmatmul.mubr.bf16.gmra.mrb[0].mxu0 %v2857
          %v2927 = vpop.f32.mrb[0].mxu0
          %v2928 = vadd.f32 0.0, %v2927
          %v2929 = vpop.f32.mrb[0].mxu0
          %v2930 = vpop.f32.mrb[0].mxu0
          %v2931 = vadd.f32 0.0, %v2930
          %v2932 = vpop.f32.mrb[0].mxu0
          %2933 = vmatprep.mubr.bf16.mxu0 %v2875
          %2934 = vmatmul.mubr.bf16.gmra.mrb[0].mxu0 %v2859
          %v2935 = vpop.f32.mrb[0].mxu0
          %v2936 = vadd.f32 0.0, %v2935
          %v2937 = vpop.f32.mrb[0].mxu0
          %v2938 = vpop.f32.mrb[0].mxu0
          %v2939 = vpop.f32.mrb[0].mxu0
          %2940 = vdwg.mxu0
          %s2941 = scalar_lea.vmem %s4, 64
          %v2942 = vld [vmem:[%s2941] sm:$0xff]
          %v2944 = vsel %vm1099, %v2912, 0
          %v2947 = vsel %vm1099, %v2915, 0
          %v2950 = vsel %vm1099, %v2920, 0
          %v2953 = vsel %vm1099, %v2923, 0
          %v2956 = vsel %vm1099, %v2928, 0
          %v2959 = vsel %vm1099, %v2931, 0
          %v2962 = vsel %vm1099, %v2936, 0
          %2964 = vmatprep.subr.mxu0 0.0
          %2965 = vmatpush1.msra.mxu0 %v2942
          %2966 = vmatprep.subr.mxu0 0.0
          %2967 = vmatpush1.msra.mxu0 0.0
          %2968 = vmatprep.subr.mxu0 0.0
          %2969 = vmatpush1.msra.mxu0 0.0
          %2970 = vmatprep.subr.mxu0 0.0
          %2971 = vmatpush1.msra.mxu0 0.0
          %2972 = vmatprep.subr.mxu0 0.0
          %2973 = vmatpush1.msra.mxu0 0.0
          %2974 = vmatprep.subr.mxu0 0.0
          %2975 = vmatpush1.msra.mxu0 0.0
          %2976 = vmatprep.subr.mxu0 0.0
          %2977 = vmatpush1.msra.mxu0 0.0
          %2978 = vmatprep.subr.mxu0 0.0
          %2979 = vmatpush1.msra.mxu0 0.0
          %2980 = vmatprep.subr.mxu0 0.0
          %2981 = vmatpush1.msra.mxu0 0.0
          %2982 = vmatprep.subr.mxu0 0.0
          %2983 = vmatpush1.msra.mxu0 0.0
          %2984 = vmatprep.subr.mxu0 0.0
          %2985 = vmatpush1.msra.mxu0 0.0
          %2986 = vmatprep.subr.mxu0 0.0
          %2987 = vmatpush1.msra.mxu0 0.0
          %2988 = vmatprep.subr.mxu0 0.0
          %2989 = vmatpush1.msra.mxu0 0.0
          %2990 = vmatprep.subr.mxu0 0.0
          %2991 = vmatpush1.msra.mxu0 0.0
          %2992 = vmatprep.subr.mxu0 0.0
          %2993 = vmatpush1.msra.mxu0 0.0
          %2994 = vmatprep.subr.mxu0 0.0
          %2995 = vmatpush1.msra.mxu0 0.0
          %2996 = vmatprep.subr.mxu0 0.0
          %2997 = vmatpush1.msra.mxu0 0.0
          %2998 = vmatprep.subr.mxu0 0.0
          %2999 = vmatpush1.msra.mxu0 0.0
          %3000 = vmatprep.subr.mxu0 0.0
          %3001 = vmatpush1.msra.mxu0 0.0
          %3002 = vmatprep.subr.mxu0 0.0
          %3003 = vmatpush1.msra.mxu0 0.0
          %3004 = vmatprep.subr.mxu0 0.0
          %3005 = vmatpush1.msra.mxu0 0.0
          %3006 = vmatprep.subr.mxu0 0.0
          %3007 = vmatpush1.msra.mxu0 0.0
          %3008 = vmatprep.subr.mxu0 0.0
          %3009 = vmatpush1.msra.mxu0 0.0
          %3010 = vmatprep.subr.mxu0 0.0
          %3011 = vmatpush1.msra.mxu0 0.0
          %3012 = vmatprep.subr.mxu0 0.0
          %3013 = vmatpush1.msra.mxu0 0.0
          %3014 = vmatprep.subr.mxu0 0.0
          %3015 = vmatpush1.msra.mxu0 0.0
          %3016 = vmatprep.subr.mxu0 0.0
          %3017 = vmatpush1.msra.mxu0 0.0
          %3018 = vmatprep.subr.mxu0 0.0
          %3019 = vmatpush1.msra.mxu0 0.0
          %3020 = vmatprep.subr.mxu0 0.0
          %3021 = vmatpush1.msra.mxu0 0.0
          %3022 = vmatprep.subr.mxu0 0.0
          %3023 = vmatpush1.msra.mxu0 0.0
          %3024 = vmatprep.subr.mxu0 0.0
          %3025 = vmatpush1.msra.mxu0 0.0
          %3026 = vmatprep.subr.mxu0 0.0
          %3027 = vmatpush1.msra.mxu0 0.0
          %3028 = vmatprep.mubr.f32.mxu0 0.0
          %3029 = vmatmul.mubr.f32.gmra.mrb[0].mxu0 %v2944
          %v3030 = vpop.f32.mrb[0].mxu0
          %v3031 = vadd.f32 0.0, %v3030
          %v3032 = vpop.f32.mrb[0].mxu0
          %3033 = vmatprep.mubr.f32.mxu0 0.0
          %3034 = vmatmul.mubr.f32.gmra.mrb[0].mxu0 %v2947
          %v3035 = vpop.f32.mrb[0].mxu0
          %v3036 = vadd.f32 0.0, %v3035
          %v3037 = vpop.f32.mrb[0].mxu0
          %3038 = vmatprep.mubr.f32.mxu0 0.0
          %3039 = vmatmul.mubr.f32.gmra.mrb[0].mxu0 %v2950
          %v3040 = vpop.f32.mrb[0].mxu0
          %v3041 = vadd.f32 0.0, %v3040
          %v3042 = vpop.f32.mrb[0].mxu0
          %3043 = vmatprep.mubr.f32.mxu0 0.0
          %3044 = vmatmul.mubr.f32.gmra.mrb[0].mxu0 %v2953
          %v3045 = vpop.f32.mrb[0].mxu0
          %v3046 = vadd.f32 0.0, %v3045
          %v3047 = vpop.f32.mrb[0].mxu0
          %3048 = vmatprep.mubr.f32.mxu0 0.0
          %3049 = vmatmul.mubr.f32.gmra.mrb[0].mxu0 %v2956
          %v3050 = vpop.f32.mrb[0].mxu0
          %v3051 = vadd.f32 0.0, %v3050
          %v3052 = vpop.f32.mrb[0].mxu0
          %3053 = vmatprep.mubr.f32.mxu0 0.0
          %3054 = vmatmul.mubr.f32.gmra.mrb[0].mxu0 %v2959
          %v3055 = vpop.f32.mrb[0].mxu0
          %v3056 = vadd.f32 0.0, %v3055
          %v3057 = vpop.f32.mrb[0].mxu0
          %3058 = vmatprep.mubr.f32.mxu0 0.0
          %3059 = vmatmul.mubr.f32.gmra.mrb[0].mxu0 %v2962
          %v3060 = vpop.f32.mrb[0].mxu0
          %v3061 = vadd.f32 0.0, %v3060
          %v3062 = vpop.f32.mrb[0].mxu0
          %3063 = vdwg.mxu0
          %v3064 = vadd.f32 %v2817, %v3031
          %v3065 = vadd.f32 %v2818, %v3036
          %v3066 = vadd.f32 %v2819, %v3041
          %v3067 = vadd.f32 %v2820, %v3046
          %v3068 = vadd.f32 %v2821, %v3051
          %v3069 = vadd.f32 %v2822, %v3056
          %v3070 = vadd.f32 %v2823, %v3061
          %v3071 = vld [vmem:[%s5] sm:$0x1]
          %v3073 = vlaneseq
          %v3074 = vshrl.u32 %v3073, 7
          %v3075 = vsub.s32 0, %v3074
          %v3076 = vrot.slane %v3071, %v3075
          %v3078 = vadd.f32 %v3064, %v3076
          %v3079 = vadd.f32 %v3065, %v3076
          %v3080 = vadd.f32 %v3066, %v3076
          %v3081 = vadd.f32 %v3067, %v3076
          %v3082 = vadd.f32 %v3068, %v3076
          %v3083 = vadd.f32 %v3069, %v3076
          %v3084 = vadd.f32 %v3070, %v3076
          %v3085 = vld [vmem:[#allocation2] sm:$0x1]
          %vm3086 = vcmask 130048
          %v3087 = vsel %vm3086, %v3078, 0.0
          %v3088 = vsel %vm3086, %v3079, 0.0
          %v3089 = vadd.f32 %v3087, %v3088
          %v3090 = vsel %vm3086, %v3080, 0.0
          %v3091 = vadd.f32 %v3089, %v3090
          %v3092 = vsel %vm3086, %v3081, 0.0
          %v3093 = vadd.f32 %v3091, %v3092
          %v3094 = vsel %vm3086, %v3082, 0.0
          %v3095 = vadd.f32 %v3093, %v3094
          %v3096 = vsel %vm3086, %v3083, 0.0
          %v3097 = vadd.f32 %v3095, %v3096
          %vm3098 = vcmask 122880
          %v3099 = vsel %vm3098, %v3084, 0.0
          %v3100 = vadd.f32 %v3097, %v3099
          %v3101 = vrot.slane %v3100, 4
          %v3102 = vadd.f32 %v3100, %v3101
          %v3103 = vrot.slane %v3102, 2
          %v3104 = vadd.f32 %v3102, %v3103
          %v3105 = vrot.slane %v3104, 1
          %v3106 = vadd.f32 %v3104, %v3105
          %v3107 = vadd.f32 %v3085, %v3106
          %3108 = vst.msk [vmem:[#allocation2] sm:$0x1] %vm3098, %v3107
          %v3109 = vld [vmem:[#allocation3] sm:$0x1]
          %v3110 = vmul.f32 %v3078, %v3078
          %v3111 = vmul.f32 %v3079, %v3079
          %v3112 = vmul.f32 %v3080, %v3080
          %v3113 = vmul.f32 %v3081, %v3081
          %v3114 = vmul.f32 %v3082, %v3082
          %v3115 = vmul.f32 %v3083, %v3083
          %v3116 = vmul.f32 %v3084, %v3084
          %v3117 = vsel %vm3086, %v3110, 0.0
          %v3118 = vsel %vm3086, %v3111, 0.0
          %v3119 = vadd.f32 %v3117, %v3118
          %v3120 = vsel %vm3086, %v3112, 0.0
          %v3121 = vadd.f32 %v3119, %v3120
          %v3122 = vsel %vm3086, %v3113, 0.0
          %v3123 = vadd.f32 %v3121, %v3122
          %v3124 = vsel %vm3086, %v3114, 0.0
          %v3125 = vadd.f32 %v3123, %v3124
          %v3126 = vsel %vm3086, %v3115, 0.0
          %v3127 = vadd.f32 %v3125, %v3126
          %v3128 = vsel %vm3098, %v3116, 0.0
          %v3129 = vadd.f32 %v3127, %v3128
          %v3130 = vrot.slane %v3129, 4
          %v3131 = vadd.f32 %v3129, %v3130
          %v3132 = vrot.slane %v3131, 2
          %v3133 = vadd.f32 %v3131, %v3132
          %v3134 = vrot.slane %v3133, 1
          %v3135 = vadd.f32 %v3133, %v3134
          %v3136 = vadd.f32 %v3109, %v3135
          %3137 = vst.msk [vmem:[#allocation3] sm:$0x1] %vm3098, %v3136
          %3138 = vst [vmem:[%s498] sm:$0x1] 0.0
        $region84: #{encoder_forward.1} parent=79 // pred_fallthru
          _
        %p3139 = scmp.eq.s32.totalorder %s33, 1
        // Predicated region
        $region89: #{encoder_forward.1} parent=79 // pred_check
          %p3140 = pneg %p3139
        $region90: #{encoder_forward.1} parent=79 // pred_check_branch
          %3142 = sbr.rel (%p3140) target = $region92
        $region91: #{encoder_forward.1} parent=79 // pred_region
          %p3143 = scmp.eq.s32.totalorder %s34, 0
          // Predicated region
          $region93: #{encoder_forward.1} parent=91 // pred_check
            %p3144 = pneg %p3143
          $region94: #{encoder_forward.1} parent=91 // pred_check_branch
            %3146 = sbr.rel (%p3144) target = $region96
          $region95: #{encoder_forward.1} parent=91 // pred_region
            %v3147 = vld [vmem:[#allocation2] sm:$0x1]
            %v3148 = vrcp.pop 98.0
            %v3149 = vmul.f32 %v3147, %v3148
            %v3150 = vld [vmem:[#allocation3] sm:$0x1]
            %v3151 = vmul.f32 %v3150, %v3148
            %v3152 = vmul.f32 %v3149, %v3149
            %v3153 = vsub.f32 %v3151, %v3152
            %v3154 = vmax.f32 %v3153, 0.0
            %vm3155 = vcmask 122880
            %3156 = vst.msk [vmem:[#allocation2] sm:$0x1] %vm3155, %v3149
            %v3157 = vadd.f32 %v3154, 1e-05
            %v3158 = vrsqrt.pop %v3157
            %3159 = vst.msk [vmem:[#allocation3] sm:$0x1] %vm3155, %v3158
          $region96: #{encoder_forward.1} parent=91 // pred_fallthru
            _
          %v3160 = vld [vmem:[%s503] sm:$0xff]
          %v3161 = vld [vmem:[%s503 + $0x8] sm:$0xff]
          %v3162 = vld [vmem:[%s503 + $0x10] sm:$0xff]
          %v3163 = vld [vmem:[%s503 + $0x18] sm:$0xff]
          %v3164 = vld [vmem:[%s503 + $0x20] sm:$0xff]
          %v3165 = vld [vmem:[%s503 + $0x28] sm:$0xff]
          %v3166 = vld [vmem:[%s503 + $0x30] sm:$0xff]
          %v3167 = vld [vmem:[%s503 + $0x38] sm:$0xff]
          %v3168 = vld [vmem:[%s503 + $0x40] sm:$0xff]
          %v3169 = vld [vmem:[%s503 + $0x48] sm:$0xff]
          %v3170 = vld [vmem:[%s503 + $0x50] sm:$0xff]
          %v3171 = vld [vmem:[%s503 + $0x58] sm:$0xff]
          %v3172 = vld [vmem:[%s503 + $0x60] sm:$0xff]
          %v3173 = vld [vmem:[%s503 + $0x68] sm:$0xff]
          %v3174 = vld [vmem:[%s503 + $0x70] sm:$0xff]
          %v3175 = vld [vmem:[%s503 + $0x78] sm:$0xff]
          %v3176 = vld [vmem:[%s503 + $0x80] sm:$0xff]
          %v3177 = vld [vmem:[%s503 + $0x88] sm:$0xff]
          %v3178 = vld [vmem:[%s503 + $0x90] sm:$0xff]
          %v3179 = vld [vmem:[%s503 + $0x98] sm:$0xff]
          %v3180 = vld [vmem:[%s503 + $0xa0] sm:$0xff]
          %v3181 = vld [vmem:[%s503 + $0xa8] sm:$0xff]
          %v3182 = vld [vmem:[%s503 + $0xb0] sm:$0xff]
          %v3183 = vld [vmem:[%s503 + $0xb8] sm:$0xff]
          %v3184 = vld [vmem:[%s503 + $0xc0] sm:$0xf]
          %v3185 = vld [vmem:[%s1] sm:$0xff]
          %v3186 = vld [vmem:[%s1 + $0x8] sm:$0x1]
          %v3187 = vld [vmem:[%s2] sm:$0x1]
          %v3189 = vlaneseq
          %v3190 = vshrl.u32 %v3189, 7
          %v3191 = vsub.s32 0, %v3190
          %v3192 = vrot.slane %v3187, %v3191
          %vm3194 = vcmask 72704
          %v3196 = vsel %vm3194, %v3160, 0
          %v3199 = vsel %vm3194, %v3161, 0
          %v3202 = vsel %vm3194, %v3162, 0
          %v3205 = vsel %vm3194, %v3163, 0
          %v3208 = vsel %vm3194, %v3164, 0
          %v3211 = vsel %vm3194, %v3165, 0
          %v3214 = vsel %vm3194, %v3166, 0
          %v3217 = vsel %vm3194, %v3167, 0
          %v3220 = vsel %vm3194, %v3168, 0
          %v3223 = vsel %vm3194, %v3169, 0
          %v3226 = vsel %vm3194, %v3170, 0
          %v3229 = vsel %vm3194, %v3171, 0
          %v3232 = vsel %vm3194, %v3172, 0
          %v3235 = vsel %vm3194, %v3173, 0
          %v3238 = vsel %vm3194, %v3174, 0
          %v3241 = vsel %vm3194, %v3175, 0
          %v3244 = vsel %vm3194, %v3176, 0
          %v3247 = vsel %vm3194, %v3177, 0
          %v3250 = vsel %vm3194, %v3178, 0
          %v3253 = vsel %vm3194, %v3179, 0
          %v3256 = vsel %vm3194, %v3180, 0
          %v3259 = vsel %vm3194, %v3181, 0
          %v3262 = vsel %vm3194, %v3182, 0
          %v3265 = vsel %vm3194, %v3183, 0
          %v3268 = vsel %vm3194, %v3184, 0
          %vm3270 = vcmask 1040384
          %v3272 = vsel %vm3270, %v3186, 0
          %3274 = vmatprep.subr.mxu0 0.0
          %3275 = vmatpush1.msra.mxu0 %v3185
          %3276 = vmatprep.subr.mxu0 0.0
          %3277 = vmatpush1.msra.mxu0 %v3272
          %3278 = vmatprep.subr.mxu0 0.0
          %3279 = vmatpush1.msra.mxu0 0.0
          %3280 = vmatprep.subr.mxu0 0.0
          %3281 = vmatpush1.msra.mxu0 0.0
          %3282 = vmatprep.subr.mxu0 0.0
          %3283 = vmatpush1.msra.mxu0 0.0
          %3284 = vmatprep.subr.mxu0 0.0
          %3285 = vmatpush1.msra.mxu0 0.0
          %3286 = vmatprep.subr.mxu0 0.0
          %3287 = vmatpush1.msra.mxu0 0.0
          %3288 = vmatprep.subr.mxu0 0.0
          %3289 = vmatpush1.msra.mxu0 0.0
          %3290 = vmatprep.subr.mxu0 0.0
          %3291 = vmatpush1.msra.mxu0 0.0
          %3292 = vmatprep.subr.mxu0 0.0
          %3293 = vmatpush1.msra.mxu0 0.0
          %3294 = vmatprep.subr.mxu0 0.0
          %3295 = vmatpush1.msra.mxu0 0.0
          %3296 = vmatprep.subr.mxu0 0.0
          %3297 = vmatpush1.msra.mxu0 0.0
          %3298 = vmatprep.subr.mxu0 0.0
          %3299 = vmatpush1.msra.mxu0 0.0
          %3300 = vmatprep.subr.mxu0 0.0
          %3301 = vmatpush1.msra.mxu0 0.0
          %3302 = vmatprep.subr.mxu0 0.0
          %3303 = vmatpush1.msra.mxu0 0.0
          %3304 = vmatprep.subr.mxu0 0.0
          %3305 = vmatpush1.msra.mxu0 0.0
          %3306 = vmatprep.subr.mxu0 0.0
          %3307 = vmatpush1.msra.mxu0 0.0
          %3308 = vmatprep.subr.mxu0 0.0
          %3309 = vmatpush1.msra.mxu0 0.0
          %3310 = vmatprep.subr.mxu0 0.0
          %3311 = vmatpush1.msra.mxu0 0.0
          %3312 = vmatprep.subr.mxu0 0.0
          %3313 = vmatpush1.msra.mxu0 0.0
          %3314 = vmatprep.subr.mxu0 0.0
          %3315 = vmatpush1.msra.mxu0 0.0
          %3316 = vmatprep.subr.mxu0 0.0
          %3317 = vmatpush1.msra.mxu0 0.0
          %3318 = vmatprep.subr.mxu0 0.0
          %3319 = vmatpush1.msra.mxu0 0.0
          %3320 = vmatprep.subr.mxu0 0.0
          %3321 = vmatpush1.msra.mxu0 0.0
          %3322 = vmatprep.subr.mxu0 0.0
          %3323 = vmatpush1.msra.mxu0 0.0
          %3324 = vmatprep.subr.mxu0 0.0
          %3325 = vmatpush1.msra.mxu0 0.0
          %3326 = vmatprep.subr.mxu0 0.0
          %3327 = vmatpush1.msra.mxu0 0.0
          %3328 = vmatprep.subr.mxu0 0.0
          %3329 = vmatpush1.msra.mxu0 0.0
          %3330 = vmatprep.subr.mxu0 0.0
          %3331 = vmatpush1.msra.mxu0 0.0
          %3332 = vmatprep.subr.mxu0 0.0
          %3333 = vmatpush1.msra.mxu0 0.0
          %3334 = vmatprep.subr.mxu0 0.0
          %3335 = vmatpush1.msra.mxu0 0.0
          %3336 = vmatprep.subr.mxu0 0.0
          %3337 = vmatpush1.msra.mxu0 0.0
          %3338 = vmatprep.mubr.f32.mxu0 0.0
          %3339 = vmatmul.mubr.f32.gmra.mrb[0].mxu0 %v3196
          %v3340 = vpop.f32.mrb[0].mxu0
          %v3341 = vadd.f32 %v3192, %v3340
          %v3342 = vpop.f32.mrb[0].mxu0
          %3343 = vmatprep.mubr.f32.mxu0 0.0
          %3344 = vmatmul.mubr.f32.gmra.mrb[0].mxu0 %v3199
          %v3345 = vpop.f32.mrb[0].mxu0
          %v3346 = vadd.f32 %v3192, %v3345
          %v3347 = vpop.f32.mrb[0].mxu0
          %3348 = vmatprep.mubr.f32.mxu0 0.0
          %3349 = vmatmul.mubr.f32.gmra.mrb[0].mxu0 %v3202
          %v3350 = vpop.f32.mrb[0].mxu0
          %v3351 = vadd.f32 %v3192, %v3350
          %v3352 = vpop.f32.mrb[0].mxu0
          %3353 = vmatprep.mubr.f32.mxu0 0.0
          %3354 = vmatmul.mubr.f32.gmra.mrb[0].mxu0 %v3205
          %v3355 = vpop.f32.mrb[0].mxu0
          %v3356 = vadd.f32 %v3192, %v3355
          %v3357 = vpop.f32.mrb[0].mxu0
          %3358 = vmatprep.mubr.f32.mxu0 0.0
          %3359 = vmatmul.mubr.f32.gmra.mrb[0].mxu0 %v3208
          %v3360 = vpop.f32.mrb[0].mxu0
          %v3361 = vadd.f32 %v3192, %v3360
          %v3362 = vpop.f32.mrb[0].mxu0
          %3363 = vmatprep.mubr.f32.mxu0 0.0
          %3364 = vmatmul.mubr.f32.gmra.mrb[0].mxu0 %v3211
          %v3365 = vpop.f32.mrb[0].mxu0
          %v3366 = vadd.f32 %v3192, %v3365
          %v3367 = vpop.f32.mrb[0].mxu0
          %3368 = vmatprep.mubr.f32.mxu0 0.0
          %3369 = vmatmul.mubr.f32.gmra.mrb[0].mxu0 %v3214
          %v3370 = vpop.f32.mrb[0].mxu0
          %v3371 = vadd.f32 %v3192, %v3370
          %v3372 = vpop.f32.mrb[0].mxu0
          %3373 = vmatprep.mubr.f32.mxu0 0.0
          %3374 = vmatmul.mubr.f32.gmra.mrb[0].mxu0 %v3217
          %v3375 = vpop.f32.mrb[0].mxu0
          %v3376 = vadd.f32 %v3192, %v3375
          %v3377 = vpop.f32.mrb[0].mxu0
          %3378 = vmatprep.mubr.f32.mxu0 0.0
          %3379 = vmatmul.mubr.f32.gmra.mrb[0].mxu0 %v3220
          %v3380 = vpop.f32.mrb[0].mxu0
          %v3381 = vadd.f32 %v3192, %v3380
          %v3382 = vpop.f32.mrb[0].mxu0
          %3383 = vmatprep.mubr.f32.mxu0 0.0
          %3384 = vmatmul.mubr.f32.gmra.mrb[0].mxu0 %v3223
          %v3385 = vpop.f32.mrb[0].mxu0
          %v3386 = vadd.f32 %v3192, %v3385
          %v3387 = vpop.f32.mrb[0].mxu0
          %3388 = vmatprep.mubr.f32.mxu0 0.0
          %3389 = vmatmul.mubr.f32.gmra.mrb[0].mxu0 %v3226
          %v3390 = vpop.f32.mrb[0].mxu0
          %v3391 = vadd.f32 %v3192, %v3390
          %v3392 = vpop.f32.mrb[0].mxu0
          %3393 = vmatprep.mubr.f32.mxu0 0.0
          %3394 = vmatmul.mubr.f32.gmra.mrb[0].mxu0 %v3229
          %v3395 = vpop.f32.mrb[0].mxu0
          %v3396 = vadd.f32 %v3192, %v3395
          %v3397 = vpop.f32.mrb[0].mxu0
          %3398 = vmatprep.mubr.f32.mxu0 0.0
          %3399 = vmatmul.mubr.f32.gmra.mrb[0].mxu0 %v3232
          %v3400 = vpop.f32.mrb[0].mxu0
          %v3401 = vadd.f32 %v3192, %v3400
          %v3402 = vpop.f32.mrb[0].mxu0
          %3403 = vmatprep.mubr.f32.mxu0 0.0
          %3404 = vmatmul.mubr.f32.gmra.mrb[0].mxu0 %v3235
          %v3405 = vpop.f32.mrb[0].mxu0
          %v3406 = vadd.f32 %v3192, %v3405
          %v3407 = vpop.f32.mrb[0].mxu0
          %3408 = vmatprep.mubr.f32.mxu0 0.0
          %3409 = vmatmul.mubr.f32.gmra.mrb[0].mxu0 %v3238
          %v3410 = vpop.f32.mrb[0].mxu0
          %v3411 = vadd.f32 %v3192, %v3410
          %v3412 = vpop.f32.mrb[0].mxu0
          %3413 = vmatprep.mubr.f32.mxu0 0.0
          %3414 = vmatmul.mubr.f32.gmra.mrb[0].mxu0 %v3241
          %v3415 = vpop.f32.mrb[0].mxu0
          %v3416 = vadd.f32 %v3192, %v3415
          %v3417 = vpop.f32.mrb[0].mxu0
          %3418 = vmatprep.mubr.f32.mxu0 0.0
          %3419 = vmatmul.mubr.f32.gmra.mrb[0].mxu0 %v3244
          %v3420 = vpop.f32.mrb[0].mxu0
          %v3421 = vadd.f32 %v3192, %v3420
          %v3422 = vpop.f32.mrb[0].mxu0
          %3423 = vmatprep.mubr.f32.mxu0 0.0
          %3424 = vmatmul.mubr.f32.gmra.mrb[0].mxu0 %v3247
          %v3425 = vpop.f32.mrb[0].mxu0
          %v3426 = vadd.f32 %v3192, %v3425
          %v3427 = vpop.f32.mrb[0].mxu0
          %3428 = vmatprep.mubr.f32.mxu0 0.0
          %3429 = vmatmul.mubr.f32.gmra.mrb[0].mxu0 %v3250
          %v3430 = vpop.f32.mrb[0].mxu0
          %v3431 = vadd.f32 %v3192, %v3430
          %v3432 = vpop.f32.mrb[0].mxu0
          %3433 = vmatprep.mubr.f32.mxu0 0.0
          %3434 = vmatmul.mubr.f32.gmra.mrb[0].mxu0 %v3253
          %v3435 = vpop.f32.mrb[0].mxu0
          %v3436 = vadd.f32 %v3192, %v3435
          %v3437 = vpop.f32.mrb[0].mxu0
          %3438 = vmatprep.mubr.f32.mxu0 0.0
          %3439 = vmatmul.mubr.f32.gmra.mrb[0].mxu0 %v3256
          %v3440 = vpop.f32.mrb[0].mxu0
          %v3441 = vadd.f32 %v3192, %v3440
          %v3442 = vpop.f32.mrb[0].mxu0
          %3443 = vmatprep.mubr.f32.mxu0 0.0
          %3444 = vmatmul.mubr.f32.gmra.mrb[0].mxu0 %v3259
          %v3445 = vpop.f32.mrb[0].mxu0
          %v3446 = vadd.f32 %v3192, %v3445
          %v3447 = vpop.f32.mrb[0].mxu0
          %3448 = vmatprep.mubr.f32.mxu0 0.0
          %3449 = vmatmul.mubr.f32.gmra.mrb[0].mxu0 %v3262
          %v3450 = vpop.f32.mrb[0].mxu0
          %v3451 = vadd.f32 %v3192, %v3450
          %v3452 = vpop.f32.mrb[0].mxu0
          %3453 = vmatprep.mubr.f32.mxu0 0.0
          %3454 = vmatmul.mubr.f32.gmra.mrb[0].mxu0 %v3265
          %v3455 = vpop.f32.mrb[0].mxu0
          %v3456 = vadd.f32 %v3192, %v3455
          %v3457 = vpop.f32.mrb[0].mxu0
          %3458 = vmatprep.mubr.f32.mxu0 0.0
          %3459 = vmatmul.mubr.f32.gmra.mrb[0].mxu0 %v3268
          %v3460 = vpop.f32.mrb[0].mxu0
          %v3461 = vadd.f32 %v3192, %v3460
          %v3462 = vpop.f32.mrb[0].mxu0
          %3463 = vdwg.mxu0
          %v3464 = vmax.f32 %v3341, 0.0
          %v3465 = vmax.f32 %v3346, 0.0
          %v3466 = vmax.f32 %v3351, 0.0
          %v3467 = vmax.f32 %v3356, 0.0
          %v3468 = vmax.f32 %v3361, 0.0
          %v3469 = vmax.f32 %v3366, 0.0
          %v3470 = vmax.f32 %v3371, 0.0
          %v3471 = vmax.f32 %v3376, 0.0
          %v3472 = vmax.f32 %v3381, 0.0
          %v3473 = vmax.f32 %v3386, 0.0
          %v3474 = vmax.f32 %v3391, 0.0
          %v3475 = vmax.f32 %v3396, 0.0
          %v3476 = vmax.f32 %v3401, 0.0
          %v3477 = vmax.f32 %v3406, 0.0
          %v3478 = vmax.f32 %v3411, 0.0
          %v3479 = vmax.f32 %v3416, 0.0
          %v3480 = vmax.f32 %v3421, 0.0
          %v3481 = vmax.f32 %v3426, 0.0
          %v3482 = vmax.f32 %v3431, 0.0
          %v3483 = vmax.f32 %v3436, 0.0
          %v3484 = vmax.f32 %v3441, 0.0
          %v3485 = vmax.f32 %v3446, 0.0
          %v3486 = vmax.f32 %v3451, 0.0
          %v3487 = vmax.f32 %v3456, 0.0
          %v3488 = vmax.f32 %v3461, 0.0
          %v3489 = vpack.c.bf16 %v3465, %v3464
          %v3490 = vpack.c.bf16 %v3467, %v3466
          %v3491 = vpack.c.bf16 %v3469, %v3468
          %v3492 = vpack.c.bf16 %v3471, %v3470
          %v3493 = vpack.c.bf16 %v3473, %v3472
          %v3494 = vpack.c.bf16 %v3475, %v3474
          %v3495 = vpack.c.bf16 %v3477, %v3476
          %v3496 = vpack.c.bf16 %v3479, %v3478
          %v3497 = vpack.c.bf16 %v3481, %v3480
          %v3498 = vpack.c.bf16 %v3483, %v3482
          %v3499 = vpack.c.bf16 %v3485, %v3484
          %v3500 = vpack.c.bf16 %v3487, %v3486
          %v3501 = vpack.c.bf16 %v3488, %v3488
          %v3502 = vld [vmem:[%s3] sm:$0xff]
          %v3503 = vld [vmem:[%s3 + $0x8] sm:$0xff]
          %v3504 = vld [vmem:[%s3 + $0x10] sm:$0xff]
          %v3505 = vld [vmem:[%s3 + $0x18] sm:$0xff]
          %v3506 = vld [vmem:[%s3 + $0x20] sm:$0xff]
          %v3507 = vld [vmem:[%s3 + $0x28] sm:$0xff]
          %v3508 = vld [vmem:[%s3 + $0x30] sm:$0x11]
          %v3516 = vunpack.c.l.b16 %v3502
          %v3517 = vunpack.c.h.b16 %v3502
          %v3518 = vunpack.c.l.b16 %v3503
          %v3519 = vunpack.c.h.b16 %v3503
          %v3520 = vunpack.c.l.b16 %v3504
          %v3521 = vunpack.c.h.b16 %v3504
          %v3522 = vunpack.c.l.b16 %v3505
          %v3523 = vunpack.c.h.b16 %v3505
          %v3524 = vunpack.c.l.b16 %v3506
          %v3525 = vunpack.c.h.b16 %v3506
          %v3526 = vunpack.c.l.b16 %v3507
          %v3527 = vunpack.c.h.b16 %v3507
          %v3528 = vunpack.c.l.b16 %v3508
          %v3529 = vunpack.c.h.b16 %v3508
          %v3530 = vpack.c.b16 %v3518, %v3516
          %v3531 = vpack.c.b16 %v3519, %v3517
          %v3532 = vpack.c.b16 %v3522, %v3520
          %v3533 = vpack.c.b16 %v3523, %v3521
          %v3534 = vpack.c.b16 %v3526, %v3524
          %v3535 = vpack.c.b16 %v3527, %v3525
          %v3536 = vpack.c.b16 %v3528, %v3528
          %v3537 = vpack.c.b16 %v3529, %v3529
          %vm3542 = vcmask 556032
          %v3544 = vsel %vm3542, %v3531, 0
          %v3547 = vsel %vm3542, %v3533, 0
          %v3550 = vsel %vm3542, %v3535, 0
          %v3553 = vsel %vm3542, %v3537, 0
          %vm3555 = vcmask 1041408
          %v3557 = vsel %vm3555, %v3501, 0
          %3559 = vmatprep.subr.bf16.mxu0 0
          %3560 = vmatpush1.bf16.msra.mxu0 %v3489
          %3561 = vmatprep.subr.bf16.mxu0 0
          %3562 = vmatpush1.bf16.msra.mxu0 %v3490
          %3563 = vmatprep.subr.bf16.mxu0 0
          %3564 = vmatpush1.bf16.msra.mxu0 %v3491
          %3565 = vmatprep.subr.bf16.mxu0 0
          %3566 = vmatpush1.bf16.msra.mxu0 %v3492
          %3567 = vmatprep.subr.bf16.mxu0 0
          %3568 = vmatpush1.bf16.msra.mxu0 %v3493
          %3569 = vmatprep.subr.bf16.mxu0 0
          %3570 = vmatpush1.bf16.msra.mxu0 %v3494
          %3571 = vmatprep.subr.bf16.mxu0 0
          %3572 = vmatpush1.bf16.msra.mxu0 %v3495
          %3573 = vmatprep.subr.bf16.mxu0 0
          %3574 = vmatpush1.bf16.msra.mxu0 %v3496
          %3575 = vmatprep.subr.bf16.mxu0 0
          %3576 = vmatpush1.bf16.msra.mxu0 %v3497
          %3577 = vmatprep.subr.bf16.mxu0 0
          %3578 = vmatpush1.bf16.msra.mxu0 %v3498
          %3579 = vmatprep.subr.bf16.mxu0 0
          %3580 = vmatpush1.bf16.msra.mxu0 %v3499
          %3581 = vmatprep.subr.bf16.mxu0 0
          %3582 = vmatpush1.bf16.msra.mxu0 %v3500
          %3583 = vmatprep.subr.bf16.mxu0 0
          %3584 = vmatpush1.bf16.msra.mxu0 %v3557
          %3585 = vmatprep.subr.bf16.mxu0 0
          %3586 = vmatpush1.bf16.msra.mxu0 0
          %3587 = vmatprep.subr.bf16.mxu0 0
          %3588 = vmatpush1.bf16.msra.mxu0 0
          %3589 = vmatprep.subr.bf16.mxu0 0
          %3590 = vmatpush1.bf16.msra.mxu0 0
          %3591 = vmatprep.mubr.bf16.mxu0 %v3544
          %3592 = vmatmul.mubr.bf16.gmra.mrb[0].mxu0 %v3530
          %v3593 = vpop.f32.mrb[0].mxu0
          %v3594 = vadd.f32 0.0, %v3593
          %v3595 = vpop.f32.mrb[0].mxu0
          %v3596 = vpop.f32.mrb[0].mxu0
          %v3597 = vadd.f32 0.0, %v3596
          %v3598 = vpop.f32.mrb[0].mxu0
          %3599 = vmatprep.mubr.bf16.mxu0 %v3547
          %3600 = vmatmul.mubr.bf16.gmra.mrb[0].mxu0 %v3532
          %v3601 = vpop.f32.mrb[0].mxu0
          %v3602 = vadd.f32 0.0, %v3601
          %v3603 = vpop.f32.mrb[0].mxu0
          %v3604 = vpop.f32.mrb[0].mxu0
          %v3605 = vadd.f32 0.0, %v3604
          %v3606 = vpop.f32.mrb[0].mxu0
          %3607 = vmatprep.mubr.bf16.mxu0 %v3550
          %3608 = vmatmul.mubr.bf16.gmra.mrb[0].mxu0 %v3534
          %v3609 = vpop.f32.mrb[0].mxu0
          %v3610 = vadd.f32 0.0, %v3609
          %v3611 = vpop.f32.mrb[0].mxu0
          %v3612 = vpop.f32.mrb[0].mxu0
          %v3613 = vadd.f32 0.0, %v3612
          %v3614 = vpop.f32.mrb[0].mxu0
          %3615 = vmatprep.mubr.bf16.mxu0 %v3553
          %3616 = vmatmul.mubr.bf16.gmra.mrb[0].mxu0 %v3536
          %v3617 = vpop.f32.mrb[0].mxu0
          %v3618 = vadd.f32 0.0, %v3617
          %v3619 = vpop.f32.mrb[0].mxu0
          %v3620 = vpop.f32.mrb[0].mxu0
          %v3621 = vpop.f32.mrb[0].mxu0
          %3622 = vdwg.mxu0
          %v3623 = vld [vmem:[%s4] sm:$0xff]
          %s3624 = scalar_lea.vmem %s3, 56
          %v3625 = vld [vmem:[%s3624] sm:$0xff]
          %v3626 = vld [vmem:[%s3624 + $0x8] sm:$0xff]
          %v3627 = vld [vmem:[%s3624 + $0x10] sm:$0xff]
          %v3628 = vld [vmem:[%s3624 + $0x18] sm:$0xff]
          %v3629 = vld [vmem:[%s3624 + $0x20] sm:$0xff]
          %v3630 = vld [vmem:[%s3624 + $0x28] sm:$0xff]
          %v3631 = vld [vmem:[%s3624 + $0x30] sm:$0x11]
          %v3639 = vunpack.c.l.b16 %v3625
          %v3640 = vunpack.c.h.b16 %v3625
          %v3641 = vunpack.c.l.b16 %v3626
          %v3642 = vunpack.c.h.b16 %v3626
          %v3643 = vunpack.c.l.b16 %v3627
          %v3644 = vunpack.c.h.b16 %v3627
          %v3645 = vunpack.c.l.b16 %v3628
          %v3646 = vunpack.c.h.b16 %v3628
          %v3647 = vunpack.c.l.b16 %v3629
          %v3648 = vunpack.c.h.b16 %v3629
          %v3649 = vunpack.c.l.b16 %v3630
          %v3650 = vunpack.c.h.b16 %v3630
          %v3651 = vunpack.c.l.b16 %v3631
          %v3652 = vunpack.c.h.b16 %v3631
          %v3653 = vpack.c.b16 %v3641, %v3639
          %v3654 = vpack.c.b16 %v3642, %v3640
          %v3655 = vpack.c.b16 %v3645, %v3643
          %v3656 = vpack.c.b16 %v3646, %v3644
          %v3657 = vpack.c.b16 %v3649, %v3647
          %v3658 = vpack.c.b16 %v3650, %v3648
          %v3659 = vpack.c.b16 %v3651, %v3651
          %v3660 = vpack.c.b16 %v3652, %v3652
          %v3666 = vsel %vm3542, %v3654, 0
          %v3669 = vsel %vm3542, %v3656, 0
          %v3672 = vsel %vm3542, %v3658, 0
          %v3675 = vsel %vm3542, %v3660, 0
          %3677 = vmatprep.subr.bf16.mxu0 0
          %3678 = vmatpush1.bf16.msra.mxu0 %v3489
          %3679 = vmatprep.subr.bf16.mxu0 0
          %3680 = vmatpush1.bf16.msra.mxu0 %v3490
          %3681 = vmatprep.subr.bf16.mxu0 0
          %3682 = vmatpush1.bf16.msra.mxu0 %v3491
          %3683 = vmatprep.subr.bf16.mxu0 0
          %3684 = vmatpush1.bf16.msra.mxu0 %v3492
          %3685 = vmatprep.subr.bf16.mxu0 0
          %3686 = vmatpush1.bf16.msra.mxu0 %v3493
          %3687 = vmatprep.subr.bf16.mxu0 0
          %3688 = vmatpush1.bf16.msra.mxu0 %v3494
          %3689 = vmatprep.subr.bf16.mxu0 0
          %3690 = vmatpush1.bf16.msra.mxu0 %v3495
          %3691 = vmatprep.subr.bf16.mxu0 0
          %3692 = vmatpush1.bf16.msra.mxu0 %v3496
          %3693 = vmatprep.subr.bf16.mxu0 0
          %3694 = vmatpush1.bf16.msra.mxu0 %v3497
          %3695 = vmatprep.subr.bf16.mxu0 0
          %3696 = vmatpush1.bf16.msra.mxu0 %v3498
          %3697 = vmatprep.subr.bf16.mxu0 0
          %3698 = vmatpush1.bf16.msra.mxu0 %v3499
          %3699 = vmatprep.subr.bf16.mxu0 0
          %3700 = vmatpush1.bf16.msra.mxu0 %v3500
          %3701 = vmatprep.subr.bf16.mxu0 0
          %3702 = vmatpush1.bf16.msra.mxu0 %v3557
          %3703 = vmatprep.subr.bf16.mxu0 0
          %3704 = vmatpush1.bf16.msra.mxu0 0
          %3705 = vmatprep.subr.bf16.mxu0 0
          %3706 = vmatpush1.bf16.msra.mxu0 0
          %3707 = vmatprep.subr.bf16.mxu0 0
          %3708 = vmatpush1.bf16.msra.mxu0 0
          %3709 = vmatprep.mubr.bf16.mxu0 %v3666
          %3710 = vmatmul.mubr.bf16.gmra.mrb[0].mxu0 %v3653
          %v3711 = vpop.f32.mrb[0].mxu0
          %v3712 = vadd.f32 0.0, %v3711
          %v3713 = vpop.f32.mrb[0].mxu0
          %v3714 = vpop.f32.mrb[0].mxu0
          %v3715 = vadd.f32 0.0, %v3714
          %v3716 = vpop.f32.mrb[0].mxu0
          %3717 = vmatprep.mubr.bf16.mxu0 %v3669
          %3718 = vmatmul.mubr.bf16.gmra.mrb[0].mxu0 %v3655
          %v3719 = vpop.f32.mrb[0].mxu0
          %v3720 = vadd.f32 0.0, %v3719
          %v3721 = vpop.f32.mrb[0].mxu0
          %v3722 = vpop.f32.mrb[0].mxu0
          %v3723 = vadd.f32 0.0, %v3722
          %v3724 = vpop.f32.mrb[0].mxu0
          %3725 = vmatprep.mubr.bf16.mxu0 %v3672
          %3726 = vmatmul.mubr.bf16.gmra.mrb[0].mxu0 %v3657
          %v3727 = vpop.f32.mrb[0].mxu0
          %v3728 = vadd.f32 0.0, %v3727
          %v3729 = vpop.f32.mrb[0].mxu0
          %v3730 = vpop.f32.mrb[0].mxu0
          %v3731 = vadd.f32 0.0, %v3730
          %v3732 = vpop.f32.mrb[0].mxu0
          %3733 = vmatprep.mubr.bf16.mxu0 %v3675
          %3734 = vmatmul.mubr.bf16.gmra.mrb[0].mxu0 %v3659
          %v3735 = vpop.f32.mrb[0].mxu0
          %v3736 = vadd.f32 0.0, %v3735
          %v3737 = vpop.f32.mrb[0].mxu0
          %v3738 = vpop.f32.mrb[0].mxu0
          %v3739 = vpop.f32.mrb[0].mxu0
          %3740 = vdwg.mxu0
          %s3741 = scalar_lea.vmem %s4, 8
          %v3742 = vld [vmem:[%s3741] sm:$0xff]
          %vm3743 = vcmask 64512
          %v3745 = vsel %vm3743, %v3712, 0
          %v3748 = vsel %vm3743, %v3715, 0
          %v3751 = vsel %vm3743, %v3720, 0
          %v3754 = vsel %vm3743, %v3723, 0
          %v3757 = vsel %vm3743, %v3728, 0
          %v3760 = vsel %vm3743, %v3731, 0
          %v3763 = vsel %vm3743, %v3736, 0
          %3765 = vmatprep.subr.mxu0 0.0
          %3766 = vmatpush1.msra.mxu0 %v3742
          %3767 = vmatprep.subr.mxu0 0.0
          %3768 = vmatpush1.msra.mxu0 0.0
          %3769 = vmatprep.subr.mxu0 0.0
          %3770 = vmatpush1.msra.mxu0 0.0
          %3771 = vmatprep.subr.mxu0 0.0
          %3772 = vmatpush1.msra.mxu0 0.0
          %3773 = vmatprep.subr.mxu0 0.0
          %3774 = vmatpush1.msra.mxu0 0.0
          %3775 = vmatprep.subr.mxu0 0.0
          %3776 = vmatpush1.msra.mxu0 0.0
          %3777 = vmatprep.subr.mxu0 0.0
          %3778 = vmatpush1.msra.mxu0 0.0
          %3779 = vmatprep.subr.mxu0 0.0
          %3780 = vmatpush1.msra.mxu0 0.0
          %3781 = vmatprep.subr.mxu0 0.0
          %3782 = vmatpush1.msra.mxu0 0.0
          %3783 = vmatprep.subr.mxu0 0.0
          %3784 = vmatpush1.msra.mxu0 0.0
          %3785 = vmatprep.subr.mxu0 0.0
          %3786 = vmatpush1.msra.mxu0 0.0
          %3787 = vmatprep.subr.mxu0 0.0
          %3788 = vmatpush1.msra.mxu0 0.0
          %3789 = vmatprep.subr.mxu0 0.0
          %3790 = vmatpush1.msra.mxu0 0.0
          %3791 = vmatprep.subr.mxu0 0.0
          %3792 = vmatpush1.msra.mxu0 0.0
          %3793 = vmatprep.subr.mxu0 0.0
          %3794 = vmatpush1.msra.mxu0 0.0
          %3795 = vmatprep.subr.mxu0 0.0
          %3796 = vmatpush1.msra.mxu0 0.0
          %3797 = vmatprep.subr.mxu0 0.0
          %3798 = vmatpush1.msra.mxu0 0.0
          %3799 = vmatprep.subr.mxu0 0.0
          %3800 = vmatpush1.msra.mxu0 0.0
          %3801 = vmatprep.subr.mxu0 0.0
          %3802 = vmatpush1.msra.mxu0 0.0
          %3803 = vmatprep.subr.mxu0 0.0
          %3804 = vmatpush1.msra.mxu0 0.0
          %3805 = vmatprep.subr.mxu0 0.0
          %3806 = vmatpush1.msra.mxu0 0.0
          %3807 = vmatprep.subr.mxu0 0.0
          %3808 = vmatpush1.msra.mxu0 0.0
          %3809 = vmatprep.subr.mxu0 0.0
          %3810 = vmatpush1.msra.mxu0 0.0
          %3811 = vmatprep.subr.mxu0 0.0
          %3812 = vmatpush1.msra.mxu0 0.0
          %3813 = vmatprep.subr.mxu0 0.0
          %3814 = vmatpush1.msra.mxu0 0.0
          %3815 = vmatprep.subr.mxu0 0.0
          %3816 = vmatpush1.msra.mxu0 0.0
          %3817 = vmatprep.subr.mxu0 0.0
          %3818 = vmatpush1.msra.mxu0 0.0
          %3819 = vmatprep.subr.mxu0 0.0
          %3820 = vmatpush1.msra.mxu0 0.0
          %3821 = vmatprep.subr.mxu0 0.0
          %3822 = vmatpush1.msra.mxu0 0.0
          %3823 = vmatprep.subr.mxu0 0.0
          %3824 = vmatpush1.msra.mxu0 0.0
          %3825 = vmatprep.subr.mxu0 0.0
          %3826 = vmatpush1.msra.mxu0 0.0
          %3827 = vmatprep.subr.mxu0 0.0
          %3828 = vmatpush1.msra.mxu0 0.0
          %3829 = vmatprep.mubr.f32.mxu0 0.0
          %3830 = vmatmul.mubr.f32.gmra.mrb[0].mxu0 %v3745
          %v3831 = vpop.f32.mrb[0].mxu0
          %v3832 = vadd.f32 0.0, %v3831
          %v3833 = vpop.f32.mrb[0].mxu0
          %3834 = vmatprep.mubr.f32.mxu0 0.0
          %3835 = vmatmul.mubr.f32.gmra.mrb[0].mxu0 %v3748
          %v3836 = vpop.f32.mrb[0].mxu0
          %v3837 = vadd.f32 0.0, %v3836
          %v3838 = vpop.f32.mrb[0].mxu0
          %3839 = vmatprep.mubr.f32.mxu0 0.0
          %3840 = vmatmul.mubr.f32.gmra.mrb[0].mxu0 %v3751
          %v3841 = vpop.f32.mrb[0].mxu0
          %v3842 = vadd.f32 0.0, %v3841
          %v3843 = vpop.f32.mrb[0].mxu0
          %3844 = vmatprep.mubr.f32.mxu0 0.0
          %3845 = vmatmul.mubr.f32.gmra.mrb[0].mxu0 %v3754
          %v3846 = vpop.f32.mrb[0].mxu0
          %v3847 = vadd.f32 0.0, %v3846
          %v3848 = vpop.f32.mrb[0].mxu0
          %3849 = vmatprep.mubr.f32.mxu0 0.0
          %3850 = vmatmul.mubr.f32.gmra.mrb[0].mxu0 %v3757
          %v3851 = vpop.f32.mrb[0].mxu0
          %v3852 = vadd.f32 0.0, %v3851
          %v3853 = vpop.f32.mrb[0].mxu0
          %3854 = vmatprep.mubr.f32.mxu0 0.0
          %3855 = vmatmul.mubr.f32.gmra.mrb[0].mxu0 %v3760
          %v3856 = vpop.f32.mrb[0].mxu0
          %v3857 = vadd.f32 0.0, %v3856
          %v3858 = vpop.f32.mrb[0].mxu0
          %3859 = vmatprep.mubr.f32.mxu0 0.0
          %3860 = vmatmul.mubr.f32.gmra.mrb[0].mxu0 %v3763
          %v3861 = vpop.f32.mrb[0].mxu0
          %v3862 = vadd.f32 0.0, %v3861
          %v3863 = vpop.f32.mrb[0].mxu0
          %3864 = vdwg.mxu0
          %v3866 = vsel %vm3743, %v3594, 0
          %v3869 = vsel %vm3743, %v3597, 0
          %v3872 = vsel %vm3743, %v3602, 0
          %v3875 = vsel %vm3743, %v3605, 0
          %v3878 = vsel %vm3743, %v3610, 0
          %v3881 = vsel %vm3743, %v3613, 0
          %v3884 = vsel %vm3743, %v3618, 0
          %3886 = vmatprep.subr.mxu0 0.0
          %3887 = vmatpush1.msra.mxu0 %v3623
          %3888 = vmatprep.subr.mxu0 0.0
          %3889 = vmatpush1.msra.mxu0 0.0
          %3890 = vmatprep.subr.mxu0 0.0
          %3891 = vmatpush1.msra.mxu0 0.0
          %3892 = vmatprep.subr.mxu0 0.0
          %3893 = vmatpush1.msra.mxu0 0.0
          %3894 = vmatprep.subr.mxu0 0.0
          %3895 = vmatpush1.msra.mxu0 0.0
          %3896 = vmatprep.subr.mxu0 0.0
          %3897 = vmatpush1.msra.mxu0 0.0
          %3898 = vmatprep.subr.mxu0 0.0
          %3899 = vmatpush1.msra.mxu0 0.0
          %3900 = vmatprep.subr.mxu0 0.0
          %3901 = vmatpush1.msra.mxu0 0.0
          %3902 = vmatprep.subr.mxu0 0.0
          %3903 = vmatpush1.msra.mxu0 0.0
          %3904 = vmatprep.subr.mxu0 0.0
          %3905 = vmatpush1.msra.mxu0 0.0
          %3906 = vmatprep.subr.mxu0 0.0
          %3907 = vmatpush1.msra.mxu0 0.0
          %3908 = vmatprep.subr.mxu0 0.0
          %3909 = vmatpush1.msra.mxu0 0.0
          %3910 = vmatprep.subr.mxu0 0.0
          %3911 = vmatpush1.msra.mxu0 0.0
          %3912 = vmatprep.subr.mxu0 0.0
          %3913 = vmatpush1.msra.mxu0 0.0
          %3914 = vmatprep.subr.mxu0 0.0
          %3915 = vmatpush1.msra.mxu0 0.0
          %3916 = vmatprep.subr.mxu0 0.0
          %3917 = vmatpush1.msra.mxu0 0.0
          %3918 = vmatprep.subr.mxu0 0.0
          %3919 = vmatpush1.msra.mxu0 0.0
          %3920 = vmatprep.subr.mxu0 0.0
          %3921 = vmatpush1.msra.mxu0 0.0
          %3922 = vmatprep.subr.mxu0 0.0
          %3923 = vmatpush1.msra.mxu0 0.0
          %3924 = vmatprep.subr.mxu0 0.0
          %3925 = vmatpush1.msra.mxu0 0.0
          %3926 = vmatprep.subr.mxu0 0.0
          %3927 = vmatpush1.msra.mxu0 0.0
          %3928 = vmatprep.subr.mxu0 0.0
          %3929 = vmatpush1.msra.mxu0 0.0
          %3930 = vmatprep.subr.mxu0 0.0
          %3931 = vmatpush1.msra.mxu0 0.0
          %3932 = vmatprep.subr.mxu0 0.0
          %3933 = vmatpush1.msra.mxu0 0.0
          %3934 = vmatprep.subr.mxu0 0.0
          %3935 = vmatpush1.msra.mxu0 0.0
          %3936 = vmatprep.subr.mxu0 0.0
          %3937 = vmatpush1.msra.mxu0 0.0
          %3938 = vmatprep.subr.mxu0 0.0
          %3939 = vmatpush1.msra.mxu0 0.0
          %3940 = vmatprep.subr.mxu0 0.0
          %3941 = vmatpush1.msra.mxu0 0.0
          %3942 = vmatprep.subr.mxu0 0.0
          %3943 = vmatpush1.msra.mxu0 0.0
          %3944 = vmatprep.subr.mxu0 0.0
          %3945 = vmatpush1.msra.mxu0 0.0
          %3946 = vmatprep.subr.mxu0 0.0
          %3947 = vmatpush1.msra.mxu0 0.0
          %3948 = vmatprep.subr.mxu0 0.0
          %3949 = vmatpush1.msra.mxu0 0.0
          %3950 = vmatprep.mubr.f32.mxu0 0.0
          %3951 = vmatmul.mubr.f32.gmra.mrb[0].mxu0 %v3866
          %v3952 = vpop.f32.mrb[0].mxu0
          %v3953 = vadd.f32 %v3832, %v3952
          %v3954 = vpop.f32.mrb[0].mxu0
          %3955 = vmatprep.mubr.f32.mxu0 0.0
          %3956 = vmatmul.mubr.f32.gmra.mrb[0].mxu0 %v3869
          %v3957 = vpop.f32.mrb[0].mxu0
          %v3958 = vadd.f32 %v3837, %v3957
          %v3959 = vpop.f32.mrb[0].mxu0
          %3960 = vmatprep.mubr.f32.mxu0 0.0
          %3961 = vmatmul.mubr.f32.gmra.mrb[0].mxu0 %v3872
          %v3962 = vpop.f32.mrb[0].mxu0
          %v3963 = vadd.f32 %v3842, %v3962
          %v3964 = vpop.f32.mrb[0].mxu0
          %3965 = vmatprep.mubr.f32.mxu0 0.0
          %3966 = vmatmul.mubr.f32.gmra.mrb[0].mxu0 %v3875
          %v3967 = vpop.f32.mrb[0].mxu0
          %v3968 = vadd.f32 %v3847, %v3967
          %v3969 = vpop.f32.mrb[0].mxu0
          %3970 = vmatprep.mubr.f32.mxu0 0.0
          %3971 = vmatmul.mubr.f32.gmra.mrb[0].mxu0 %v3878
          %v3972 = vpop.f32.mrb[0].mxu0
          %v3973 = vadd.f32 %v3852, %v3972
          %v3974 = vpop.f32.mrb[0].mxu0
          %3975 = vmatprep.mubr.f32.mxu0 0.0
          %3976 = vmatmul.mubr.f32.gmra.mrb[0].mxu0 %v3881
          %v3977 = vpop.f32.mrb[0].mxu0
          %v3978 = vadd.f32 %v3857, %v3977
          %v3979 = vpop.f32.mrb[0].mxu0
          %3980 = vmatprep.mubr.f32.mxu0 0.0
          %3981 = vmatmul.mubr.f32.gmra.mrb[0].mxu0 %v3884
          %v3982 = vpop.f32.mrb[0].mxu0
          %v3983 = vadd.f32 %v3862, %v3982
          %v3984 = vpop.f32.mrb[0].mxu0
          %3985 = vdwg.mxu0
          %s3986 = scalar_lea.vmem %s3, 112
          %v3987 = vld [vmem:[%s3986] sm:$0xff]
          %v3988 = vld [vmem:[%s3986 + $0x8] sm:$0xff]
          %v3989 = vld [vmem:[%s3986 + $0x10] sm:$0xff]
          %v3990 = vld [vmem:[%s3986 + $0x18] sm:$0xff]
          %v3991 = vld [vmem:[%s3986 + $0x20] sm:$0xff]
          %v3992 = vld [vmem:[%s3986 + $0x28] sm:$0xff]
          %v3993 = vld [vmem:[%s3986 + $0x30] sm:$0x11]
          %v4001 = vunpack.c.l.b16 %v3987
          %v4002 = vunpack.c.h.b16 %v3987
          %v4003 = vunpack.c.l.b16 %v3988
          %v4004 = vunpack.c.h.b16 %v3988
          %v4005 = vunpack.c.l.b16 %v3989
          %v4006 = vunpack.c.h.b16 %v3989
          %v4007 = vunpack.c.l.b16 %v3990
          %v4008 = vunpack.c.h.b16 %v3990
          %v4009 = vunpack.c.l.b16 %v3991
          %v4010 = vunpack.c.h.b16 %v3991
          %v4011 = vunpack.c.l.b16 %v3992
          %v4012 = vunpack.c.h.b16 %v3992
          %v4013 = vunpack.c.l.b16 %v3993
          %v4014 = vunpack.c.h.b16 %v3993
          %v4015 = vpack.c.b16 %v4003, %v4001
          %v4016 = vpack.c.b16 %v4004, %v4002
          %v4017 = vpack.c.b16 %v4007, %v4005
          %v4018 = vpack.c.b16 %v4008, %v4006
          %v4019 = vpack.c.b16 %v4011, %v4009
          %v4020 = vpack.c.b16 %v4012, %v4010
          %v4021 = vpack.c.b16 %v4013, %v4013
          %v4022 = vpack.c.b16 %v4014, %v4014
          %v4028 = vsel %vm3542, %v4016, 0
          %v4031 = vsel %vm3542, %v4018, 0
          %v4034 = vsel %vm3542, %v4020, 0
          %v4037 = vsel %vm3542, %v4022, 0
          %4039 = vmatprep.subr.bf16.mxu0 0
          %4040 = vmatpush1.bf16.msra.mxu0 %v3489
          %4041 = vmatprep.subr.bf16.mxu0 0
          %4042 = vmatpush1.bf16.msra.mxu0 %v3490
          %4043 = vmatprep.subr.bf16.mxu0 0
          %4044 = vmatpush1.bf16.msra.mxu0 %v3491
          %4045 = vmatprep.subr.bf16.mxu0 0
          %4046 = vmatpush1.bf16.msra.mxu0 %v3492
          %4047 = vmatprep.subr.bf16.mxu0 0
          %4048 = vmatpush1.bf16.msra.mxu0 %v3493
          %4049 = vmatprep.subr.bf16.mxu0 0
          %4050 = vmatpush1.bf16.msra.mxu0 %v3494
          %4051 = vmatprep.subr.bf16.mxu0 0
          %4052 = vmatpush1.bf16.msra.mxu0 %v3495
          %4053 = vmatprep.subr.bf16.mxu0 0
          %4054 = vmatpush1.bf16.msra.mxu0 %v3496
          %4055 = vmatprep.subr.bf16.mxu0 0
          %4056 = vmatpush1.bf16.msra.mxu0 %v3497
          %4057 = vmatprep.subr.bf16.mxu0 0
          %4058 = vmatpush1.bf16.msra.mxu0 %v3498
          %4059 = vmatprep.subr.bf16.mxu0 0
          %4060 = vmatpush1.bf16.msra.mxu0 %v3499
          %4061 = vmatprep.subr.bf16.mxu0 0
          %4062 = vmatpush1.bf16.msra.mxu0 %v3500
          %4063 = vmatprep.subr.bf16.mxu0 0
          %4064 = vmatpush1.bf16.msra.mxu0 %v3557
          %4065 = vmatprep.subr.bf16.mxu0 0
          %4066 = vmatpush1.bf16.msra.mxu0 0
          %4067 = vmatprep.subr.bf16.mxu0 0
          %4068 = vmatpush1.bf16.msra.mxu0 0
          %4069 = vmatprep.subr.bf16.mxu0 0
          %4070 = vmatpush1.bf16.msra.mxu0 0
          %4071 = vmatprep.mubr.bf16.mxu0 %v4028
          %4072 = vmatmul.mubr.bf16.gmra.mrb[0].mxu0 %v4015
          %v4073 = vpop.f32.mrb[0].mxu0
          %v4074 = vadd.f32 0.0, %v4073
          %v4075 = vpop.f32.mrb[0].mxu0
          %v4076 = vpop.f32.mrb[0].mxu0
          %v4077 = vadd.f32 0.0, %v4076
          %v4078 = vpop.f32.mrb[0].mxu0
          %4079 = vmatprep.mubr.bf16.mxu0 %v4031
          %4080 = vmatmul.mubr.bf16.gmra.mrb[0].mxu0 %v4017
          %v4081 = vpop.f32.mrb[0].mxu0
          %v4082 = vadd.f32 0.0, %v4081
          %v4083 = vpop.f32.mrb[0].mxu0
          %v4084 = vpop.f32.mrb[0].mxu0
          %v4085 = vadd.f32 0.0, %v4084
          %v4086 = vpop.f32.mrb[0].mxu0
          %4087 = vmatprep.mubr.bf16.mxu0 %v4034
          %4088 = vmatmul.mubr.bf16.gmra.mrb[0].mxu0 %v4019
          %v4089 = vpop.f32.mrb[0].mxu0
          %v4090 = vadd.f32 0.0, %v4089
          %v4091 = vpop.f32.mrb[0].mxu0
          %v4092 = vpop.f32.mrb[0].mxu0
          %v4093 = vadd.f32 0.0, %v4092
          %v4094 = vpop.f32.mrb[0].mxu0
          %4095 = vmatprep.mubr.bf16.mxu0 %v4037
          %4096 = vmatmul.mubr.bf16.gmra.mrb[0].mxu0 %v4021
          %v4097 = vpop.f32.mrb[0].mxu0
          %v4098 = vadd.f32 0.0, %v4097
          %v4099 = vpop.f32.mrb[0].mxu0
          %v4100 = vpop.f32.mrb[0].mxu0
          %v4101 = vpop.f32.mrb[0].mxu0
          %4102 = vdwg.mxu0
          %s4103 = scalar_lea.vmem %s4, 16
          %v4104 = vld [vmem:[%s4103] sm:$0xff]
          %v4106 = vsel %vm3743, %v4074, 0
          %v4109 = vsel %vm3743, %v4077, 0
          %v4112 = vsel %vm3743, %v4082, 0
          %v4115 = vsel %vm3743, %v4085, 0
          %v4118 = vsel %vm3743, %v4090, 0
          %v4121 = vsel %vm3743, %v4093, 0
          %v4124 = vsel %vm3743, %v4098, 0
          %4126 = vmatprep.subr.mxu0 0.0
          %4127 = vmatpush1.msra.mxu0 %v4104
          %4128 = vmatprep.subr.mxu0 0.0
          %4129 = vmatpush1.msra.mxu0 0.0
          %4130 = vmatprep.subr.mxu0 0.0
          %4131 = vmatpush1.msra.mxu0 0.0
          %4132 = vmatprep.subr.mxu0 0.0
          %4133 = vmatpush1.msra.mxu0 0.0
          %4134 = vmatprep.subr.mxu0 0.0
          %4135 = vmatpush1.msra.mxu0 0.0
          %4136 = vmatprep.subr.mxu0 0.0
          %4137 = vmatpush1.msra.mxu0 0.0
          %4138 = vmatprep.subr.mxu0 0.0
          %4139 = vmatpush1.msra.mxu0 0.0
          %4140 = vmatprep.subr.mxu0 0.0
          %4141 = vmatpush1.msra.mxu0 0.0
          %4142 = vmatprep.subr.mxu0 0.0
          %4143 = vmatpush1.msra.mxu0 0.0
          %4144 = vmatprep.subr.mxu0 0.0
          %4145 = vmatpush1.msra.mxu0 0.0
          %4146 = vmatprep.subr.mxu0 0.0
          %4147 = vmatpush1.msra.mxu0 0.0
          %4148 = vmatprep.subr.mxu0 0.0
          %4149 = vmatpush1.msra.mxu0 0.0
          %4150 = vmatprep.subr.mxu0 0.0
          %4151 = vmatpush1.msra.mxu0 0.0
          %4152 = vmatprep.subr.mxu0 0.0
          %4153 = vmatpush1.msra.mxu0 0.0
          %4154 = vmatprep.subr.mxu0 0.0
          %4155 = vmatpush1.msra.mxu0 0.0
          %4156 = vmatprep.subr.mxu0 0.0
          %4157 = vmatpush1.msra.mxu0 0.0
          %4158 = vmatprep.subr.mxu0 0.0
          %4159 = vmatpush1.msra.mxu0 0.0
          %4160 = vmatprep.subr.mxu0 0.0
          %4161 = vmatpush1.msra.mxu0 0.0
          %4162 = vmatprep.subr.mxu0 0.0
          %4163 = vmatpush1.msra.mxu0 0.0
          %4164 = vmatprep.subr.mxu0 0.0
          %4165 = vmatpush1.msra.mxu0 0.0
          %4166 = vmatprep.subr.mxu0 0.0
          %4167 = vmatpush1.msra.mxu0 0.0
          %4168 = vmatprep.subr.mxu0 0.0
          %4169 = vmatpush1.msra.mxu0 0.0
          %4170 = vmatprep.subr.mxu0 0.0
          %4171 = vmatpush1.msra.mxu0 0.0
          %4172 = vmatprep.subr.mxu0 0.0
          %4173 = vmatpush1.msra.mxu0 0.0
          %4174 = vmatprep.subr.mxu0 0.0
          %4175 = vmatpush1.msra.mxu0 0.0
          %4176 = vmatprep.subr.mxu0 0.0
          %4177 = vmatpush1.msra.mxu0 0.0
          %4178 = vmatprep.subr.mxu0 0.0
          %4179 = vmatpush1.msra.mxu0 0.0
          %4180 = vmatprep.subr.mxu0 0.0
          %4181 = vmatpush1.msra.mxu0 0.0
          %4182 = vmatprep.subr.mxu0 0.0
          %4183 = vmatpush1.msra.mxu0 0.0
          %4184 = vmatprep.subr.mxu0 0.0
          %4185 = vmatpush1.msra.mxu0 0.0
          %4186 = vmatprep.subr.mxu0 0.0
          %4187 = vmatpush1.msra.mxu0 0.0
          %4188 = vmatprep.subr.mxu0 0.0
          %4189 = vmatpush1.msra.mxu0 0.0
          %4190 = vmatprep.mubr.f32.mxu0 0.0
          %4191 = vmatmul.mubr.f32.gmra.mrb[0].mxu0 %v4106
          %v4192 = vpop.f32.mrb[0].mxu0
          %v4193 = vadd.f32 0.0, %v4192
          %v4194 = vpop.f32.mrb[0].mxu0
          %4195 = vmatprep.mubr.f32.mxu0 0.0
          %4196 = vmatmul.mubr.f32.gmra.mrb[0].mxu0 %v4109
          %v4197 = vpop.f32.mrb[0].mxu0
          %v4198 = vadd.f32 0.0, %v4197
          %v4199 = vpop.f32.mrb[0].mxu0
          %4200 = vmatprep.mubr.f32.mxu0 0.0
          %4201 = vmatmul.mubr.f32.gmra.mrb[0].mxu0 %v4112
          %v4202 = vpop.f32.mrb[0].mxu0
          %v4203 = vadd.f32 0.0, %v4202
          %v4204 = vpop.f32.mrb[0].mxu0
          %4205 = vmatprep.mubr.f32.mxu0 0.0
          %4206 = vmatmul.mubr.f32.gmra.mrb[0].mxu0 %v4115
          %v4207 = vpop.f32.mrb[0].mxu0
          %v4208 = vadd.f32 0.0, %v4207
          %v4209 = vpop.f32.mrb[0].mxu0
          %4210 = vmatprep.mubr.f32.mxu0 0.0
          %4211 = vmatmul.mubr.f32.gmra.mrb[0].mxu0 %v4118
          %v4212 = vpop.f32.mrb[0].mxu0
          %v4213 = vadd.f32 0.0, %v4212
          %v4214 = vpop.f32.mrb[0].mxu0
          %4215 = vmatprep.mubr.f32.mxu0 0.0
          %4216 = vmatmul.mubr.f32.gmra.mrb[0].mxu0 %v4121
          %v4217 = vpop.f32.mrb[0].mxu0
          %v4218 = vadd.f32 0.0, %v4217
          %v4219 = vpop.f32.mrb[0].mxu0
          %4220 = vmatprep.mubr.f32.mxu0 0.0
          %4221 = vmatmul.mubr.f32.gmra.mrb[0].mxu0 %v4124
          %v4222 = vpop.f32.mrb[0].mxu0
          %v4223 = vadd.f32 0.0, %v4222
          %v4224 = vpop.f32.mrb[0].mxu0
          %4225 = vdwg.mxu0
          %v4226 = vadd.f32 %v3953, %v4193
          %v4227 = vadd.f32 %v3958, %v4198
          %v4228 = vadd.f32 %v3963, %v4203
          %v4229 = vadd.f32 %v3968, %v4208
          %v4230 = vadd.f32 %v3973, %v4213
          %v4231 = vadd.f32 %v3978, %v4218
          %v4232 = vadd.f32 %v3983, %v4223
          %s4233 = scalar_lea.vmem %s3, 168
          %v4234 = vld [vmem:[%s4233] sm:$0xff]
          %v4235 = vld [vmem:[%s4233 + $0x8] sm:$0xff]
          %v4236 = vld [vmem:[%s4233 + $0x10] sm:$0xff]
          %v4237 = vld [vmem:[%s4233 + $0x18] sm:$0xff]
          %v4238 = vld [vmem:[%s4233 + $0x20] sm:$0xff]
          %v4239 = vld [vmem:[%s4233 + $0x28] sm:$0xff]
          %v4240 = vld [vmem:[%s4233 + $0x30] sm:$0x11]
          %v4248 = vunpack.c.l.b16 %v4234
          %v4249 = vunpack.c.h.b16 %v4234
          %v4250 = vunpack.c.l.b16 %v4235
          %v4251 = vunpack.c.h.b16 %v4235
          %v4252 = vunpack.c.l.b16 %v4236
          %v4253 = vunpack.c.h.b16 %v4236
          %v4254 = vunpack.c.l.b16 %v4237
          %v4255 = vunpack.c.h.b16 %v4237
          %v4256 = vunpack.c.l.b16 %v4238
          %v4257 = vunpack.c.h.b16 %v4238
          %v4258 = vunpack.c.l.b16 %v4239
          %v4259 = vunpack.c.h.b16 %v4239
          %v4260 = vunpack.c.l.b16 %v4240
          %v4261 = vunpack.c.h.b16 %v4240
          %v4262 = vpack.c.b16 %v4250, %v4248
          %v4263 = vpack.c.b16 %v4251, %v4249
          %v4264 = vpack.c.b16 %v4254, %v4252
          %v4265 = vpack.c.b16 %v4255, %v4253
          %v4266 = vpack.c.b16 %v4258, %v4256
          %v4267 = vpack.c.b16 %v4259, %v4257
          %v4268 = vpack.c.b16 %v4260, %v4260
          %v4269 = vpack.c.b16 %v4261, %v4261
          %v4275 = vsel %vm3542, %v4263, 0
          %v4278 = vsel %vm3542, %v4265, 0
          %v4281 = vsel %vm3542, %v4267, 0
          %v4284 = vsel %vm3542, %v4269, 0
          %4286 = vmatprep.subr.bf16.mxu0 0
          %4287 = vmatpush1.bf16.msra.mxu0 %v3489
          %4288 = vmatprep.subr.bf16.mxu0 0
          %4289 = vmatpush1.bf16.msra.mxu0 %v3490
          %4290 = vmatprep.subr.bf16.mxu0 0
          %4291 = vmatpush1.bf16.msra.mxu0 %v3491
          %4292 = vmatprep.subr.bf16.mxu0 0
          %4293 = vmatpush1.bf16.msra.mxu0 %v3492
          %4294 = vmatprep.subr.bf16.mxu0 0
          %4295 = vmatpush1.bf16.msra.mxu0 %v3493
          %4296 = vmatprep.subr.bf16.mxu0 0
          %4297 = vmatpush1.bf16.msra.mxu0 %v3494
          %4298 = vmatprep.subr.bf16.mxu0 0
          %4299 = vmatpush1.bf16.msra.mxu0 %v3495
          %4300 = vmatprep.subr.bf16.mxu0 0
          %4301 = vmatpush1.bf16.msra.mxu0 %v3496
          %4302 = vmatprep.subr.bf16.mxu0 0
          %4303 = vmatpush1.bf16.msra.mxu0 %v3497
          %4304 = vmatprep.subr.bf16.mxu0 0
          %4305 = vmatpush1.bf16.msra.mxu0 %v3498
          %4306 = vmatprep.subr.bf16.mxu0 0
          %4307 = vmatpush1.bf16.msra.mxu0 %v3499
          %4308 = vmatprep.subr.bf16.mxu0 0
          %4309 = vmatpush1.bf16.msra.mxu0 %v3500
          %4310 = vmatprep.subr.bf16.mxu0 0
          %4311 = vmatpush1.bf16.msra.mxu0 %v3557
          %4312 = vmatprep.subr.bf16.mxu0 0
          %4313 = vmatpush1.bf16.msra.mxu0 0
          %4314 = vmatprep.subr.bf16.mxu0 0
          %4315 = vmatpush1.bf16.msra.mxu0 0
          %4316 = vmatprep.subr.bf16.mxu0 0
          %4317 = vmatpush1.bf16.msra.mxu0 0
          %4318 = vmatprep.mubr.bf16.mxu0 %v4275
          %4319 = vmatmul.mubr.bf16.gmra.mrb[0].mxu0 %v4262
          %v4320 = vpop.f32.mrb[0].mxu0
          %v4321 = vadd.f32 0.0, %v4320
          %v4322 = vpop.f32.mrb[0].mxu0
          %v4323 = vpop.f32.mrb[0].mxu0
          %v4324 = vadd.f32 0.0, %v4323
          %v4325 = vpop.f32.mrb[0].mxu0
          %4326 = vmatprep.mubr.bf16.mxu0 %v4278
          %4327 = vmatmul.mubr.bf16.gmra.mrb[0].mxu0 %v4264
          %v4328 = vpop.f32.mrb[0].mxu0
          %v4329 = vadd.f32 0.0, %v4328
          %v4330 = vpop.f32.mrb[0].mxu0
          %v4331 = vpop.f32.mrb[0].mxu0
          %v4332 = vadd.f32 0.0, %v4331
          %v4333 = vpop.f32.mrb[0].mxu0
          %4334 = vmatprep.mubr.bf16.mxu0 %v4281
          %4335 = vmatmul.mubr.bf16.gmra.mrb[0].mxu0 %v4266
          %v4336 = vpop.f32.mrb[0].mxu0
          %v4337 = vadd.f32 0.0, %v4336
          %v4338 = vpop.f32.mrb[0].mxu0
          %v4339 = vpop.f32.mrb[0].mxu0
          %v4340 = vadd.f32 0.0, %v4339
          %v4341 = vpop.f32.mrb[0].mxu0
          %4342 = vmatprep.mubr.bf16.mxu0 %v4284
          %4343 = vmatmul.mubr.bf16.gmra.mrb[0].mxu0 %v4268
          %v4344 = vpop.f32.mrb[0].mxu0
          %v4345 = vadd.f32 0.0, %v4344
          %v4346 = vpop.f32.mrb[0].mxu0
          %v4347 = vpop.f32.mrb[0].mxu0
          %v4348 = vpop.f32.mrb[0].mxu0
          %4349 = vdwg.mxu0
          %s4350 = scalar_lea.vmem %s4, 24
          %v4351 = vld [vmem:[%s4350] sm:$0xff]
          %v4353 = vsel %vm3743, %v4321, 0
          %v4356 = vsel %vm3743, %v4324, 0
          %v4359 = vsel %vm3743, %v4329, 0
          %v4362 = vsel %vm3743, %v4332, 0
          %v4365 = vsel %vm3743, %v4337, 0
          %v4368 = vsel %vm3743, %v4340, 0
          %v4371 = vsel %vm3743, %v4345, 0
          %4373 = vmatprep.subr.mxu0 0.0
          %4374 = vmatpush1.msra.mxu0 %v4351
          %4375 = vmatprep.subr.mxu0 0.0
          %4376 = vmatpush1.msra.mxu0 0.0
          %4377 = vmatprep.subr.mxu0 0.0
          %4378 = vmatpush1.msra.mxu0 0.0
          %4379 = vmatprep.subr.mxu0 0.0
          %4380 = vmatpush1.msra.mxu0 0.0
          %4381 = vmatprep.subr.mxu0 0.0
          %4382 = vmatpush1.msra.mxu0 0.0
          %4383 = vmatprep.subr.mxu0 0.0
          %4384 = vmatpush1.msra.mxu0 0.0
          %4385 = vmatprep.subr.mxu0 0.0
          %4386 = vmatpush1.msra.mxu0 0.0
          %4387 = vmatprep.subr.mxu0 0.0
          %4388 = vmatpush1.msra.mxu0 0.0
          %4389 = vmatprep.subr.mxu0 0.0
          %4390 = vmatpush1.msra.mxu0 0.0
          %4391 = vmatprep.subr.mxu0 0.0
          %4392 = vmatpush1.msra.mxu0 0.0
          %4393 = vmatprep.subr.mxu0 0.0
          %4394 = vmatpush1.msra.mxu0 0.0
          %4395 = vmatprep.subr.mxu0 0.0
          %4396 = vmatpush1.msra.mxu0 0.0
          %4397 = vmatprep.subr.mxu0 0.0
          %4398 = vmatpush1.msra.mxu0 0.0
          %4399 = vmatprep.subr.mxu0 0.0
          %4400 = vmatpush1.msra.mxu0 0.0
          %4401 = vmatprep.subr.mxu0 0.0
          %4402 = vmatpush1.msra.mxu0 0.0
          %4403 = vmatprep.subr.mxu0 0.0
          %4404 = vmatpush1.msra.mxu0 0.0
          %4405 = vmatprep.subr.mxu0 0.0
          %4406 = vmatpush1.msra.mxu0 0.0
          %4407 = vmatprep.subr.mxu0 0.0
          %4408 = vmatpush1.msra.mxu0 0.0
          %4409 = vmatprep.subr.mxu0 0.0
          %4410 = vmatpush1.msra.mxu0 0.0
          %4411 = vmatprep.subr.mxu0 0.0
          %4412 = vmatpush1.msra.mxu0 0.0
          %4413 = vmatprep.subr.mxu0 0.0
          %4414 = vmatpush1.msra.mxu0 0.0
          %4415 = vmatprep.subr.mxu0 0.0
          %4416 = vmatpush1.msra.mxu0 0.0
          %4417 = vmatprep.subr.mxu0 0.0
          %4418 = vmatpush1.msra.mxu0 0.0
          %4419 = vmatprep.subr.mxu0 0.0
          %4420 = vmatpush1.msra.mxu0 0.0
          %4421 = vmatprep.subr.mxu0 0.0
          %4422 = vmatpush1.msra.mxu0 0.0
          %4423 = vmatprep.subr.mxu0 0.0
          %4424 = vmatpush1.msra.mxu0 0.0
          %4425 = vmatprep.subr.mxu0 0.0
          %4426 = vmatpush1.msra.mxu0 0.0
          %4427 = vmatprep.subr.mxu0 0.0
          %4428 = vmatpush1.msra.mxu0 0.0
          %4429 = vmatprep.subr.mxu0 0.0
          %4430 = vmatpush1.msra.mxu0 0.0
          %4431 = vmatprep.subr.mxu0 0.0
          %4432 = vmatpush1.msra.mxu0 0.0
          %4433 = vmatprep.subr.mxu0 0.0
          %4434 = vmatpush1.msra.mxu0 0.0
          %4435 = vmatprep.subr.mxu0 0.0
          %4436 = vmatpush1.msra.mxu0 0.0
          %4437 = vmatprep.mubr.f32.mxu0 0.0
          %4438 = vmatmul.mubr.f32.gmra.mrb[0].mxu0 %v4353
          %v4439 = vpop.f32.mrb[0].mxu0
          %v4440 = vadd.f32 0.0, %v4439
          %v4441 = vpop.f32.mrb[0].mxu0
          %4442 = vmatprep.mubr.f32.mxu0 0.0
          %4443 = vmatmul.mubr.f32.gmra.mrb[0].mxu0 %v4356
          %v4444 = vpop.f32.mrb[0].mxu0
          %v4445 = vadd.f32 0.0, %v4444
          %v4446 = vpop.f32.mrb[0].mxu0
          %4447 = vmatprep.mubr.f32.mxu0 0.0
          %4448 = vmatmul.mubr.f32.gmra.mrb[0].mxu0 %v4359
          %v4449 = vpop.f32.mrb[0].mxu0
          %v4450 = vadd.f32 0.0, %v4449
          %v4451 = vpop.f32.mrb[0].mxu0
          %4452 = vmatprep.mubr.f32.mxu0 0.0
          %4453 = vmatmul.mubr.f32.gmra.mrb[0].mxu0 %v4362
          %v4454 = vpop.f32.mrb[0].mxu0
          %v4455 = vadd.f32 0.0, %v4454
          %v4456 = vpop.f32.mrb[0].mxu0
          %4457 = vmatprep.mubr.f32.mxu0 0.0
          %4458 = vmatmul.mubr.f32.gmra.mrb[0].mxu0 %v4365
          %v4459 = vpop.f32.mrb[0].mxu0
          %v4460 = vadd.f32 0.0, %v4459
          %v4461 = vpop.f32.mrb[0].mxu0
          %4462 = vmatprep.mubr.f32.mxu0 0.0
          %4463 = vmatmul.mubr.f32.gmra.mrb[0].mxu0 %v4368
          %v4464 = vpop.f32.mrb[0].mxu0
          %v4465 = vadd.f32 0.0, %v4464
          %v4466 = vpop.f32.mrb[0].mxu0
          %4467 = vmatprep.mubr.f32.mxu0 0.0
          %4468 = vmatmul.mubr.f32.gmra.mrb[0].mxu0 %v4371
          %v4469 = vpop.f32.mrb[0].mxu0
          %v4470 = vadd.f32 0.0, %v4469
          %v4471 = vpop.f32.mrb[0].mxu0
          %4472 = vdwg.mxu0
          %v4473 = vadd.f32 %v4226, %v4440
          %v4474 = vadd.f32 %v4227, %v4445
          %v4475 = vadd.f32 %v4228, %v4450
          %v4476 = vadd.f32 %v4229, %v4455
          %v4477 = vadd.f32 %v4230, %v4460
          %v4478 = vadd.f32 %v4231, %v4465
          %v4479 = vadd.f32 %v4232, %v4470
          %s4480 = scalar_lea.vmem %s3, 224
          %v4481 = vld [vmem:[%s4480] sm:$0xff]
          %v4482 = vld [vmem:[%s4480 + $0x8] sm:$0xff]
          %v4483 = vld [vmem:[%s4480 + $0x10] sm:$0xff]
          %v4484 = vld [vmem:[%s4480 + $0x18] sm:$0xff]
          %v4485 = vld [vmem:[%s4480 + $0x20] sm:$0xff]
          %v4486 = vld [vmem:[%s4480 + $0x28] sm:$0xff]
          %v4487 = vld [vmem:[%s4480 + $0x30] sm:$0x11]
          %v4495 = vunpack.c.l.b16 %v4481
          %v4496 = vunpack.c.h.b16 %v4481
          %v4497 = vunpack.c.l.b16 %v4482
          %v4498 = vunpack.c.h.b16 %v4482
          %v4499 = vunpack.c.l.b16 %v4483
          %v4500 = vunpack.c.h.b16 %v4483
          %v4501 = vunpack.c.l.b16 %v4484
          %v4502 = vunpack.c.h.b16 %v4484
          %v4503 = vunpack.c.l.b16 %v4485
          %v4504 = vunpack.c.h.b16 %v4485
          %v4505 = vunpack.c.l.b16 %v4486
          %v4506 = vunpack.c.h.b16 %v4486
          %v4507 = vunpack.c.l.b16 %v4487
          %v4508 = vunpack.c.h.b16 %v4487
          %v4509 = vpack.c.b16 %v4497, %v4495
          %v4510 = vpack.c.b16 %v4498, %v4496
          %v4511 = vpack.c.b16 %v4501, %v4499
          %v4512 = vpack.c.b16 %v4502, %v4500
          %v4513 = vpack.c.b16 %v4505, %v4503
          %v4514 = vpack.c.b16 %v4506, %v4504
          %v4515 = vpack.c.b16 %v4507, %v4507
          %v4516 = vpack.c.b16 %v4508, %v4508
          %v4522 = vsel %vm3542, %v4510, 0
          %v4525 = vsel %vm3542, %v4512, 0
          %v4528 = vsel %vm3542, %v4514, 0
          %v4531 = vsel %vm3542, %v4516, 0
          %4533 = vmatprep.subr.bf16.mxu0 0
          %4534 = vmatpush1.bf16.msra.mxu0 %v3489
          %4535 = vmatprep.subr.bf16.mxu0 0
          %4536 = vmatpush1.bf16.msra.mxu0 %v3490
          %4537 = vmatprep.subr.bf16.mxu0 0
          %4538 = vmatpush1.bf16.msra.mxu0 %v3491
          %4539 = vmatprep.subr.bf16.mxu0 0
          %4540 = vmatpush1.bf16.msra.mxu0 %v3492
          %4541 = vmatprep.subr.bf16.mxu0 0
          %4542 = vmatpush1.bf16.msra.mxu0 %v3493
          %4543 = vmatprep.subr.bf16.mxu0 0
          %4544 = vmatpush1.bf16.msra.mxu0 %v3494
          %4545 = vmatprep.subr.bf16.mxu0 0
          %4546 = vmatpush1.bf16.msra.mxu0 %v3495
          %4547 = vmatprep.subr.bf16.mxu0 0
          %4548 = vmatpush1.bf16.msra.mxu0 %v3496
          %4549 = vmatprep.subr.bf16.mxu0 0
          %4550 = vmatpush1.bf16.msra.mxu0 %v3497
          %4551 = vmatprep.subr.bf16.mxu0 0
          %4552 = vmatpush1.bf16.msra.mxu0 %v3498
          %4553 = vmatprep.subr.bf16.mxu0 0
          %4554 = vmatpush1.bf16.msra.mxu0 %v3499
          %4555 = vmatprep.subr.bf16.mxu0 0
          %4556 = vmatpush1.bf16.msra.mxu0 %v3500
          %4557 = vmatprep.subr.bf16.mxu0 0
          %4558 = vmatpush1.bf16.msra.mxu0 %v3557
          %4559 = vmatprep.subr.bf16.mxu0 0
          %4560 = vmatpush1.bf16.msra.mxu0 0
          %4561 = vmatprep.subr.bf16.mxu0 0
          %4562 = vmatpush1.bf16.msra.mxu0 0
          %4563 = vmatprep.subr.bf16.mxu0 0
          %4564 = vmatpush1.bf16.msra.mxu0 0
          %4565 = vmatprep.mubr.bf16.mxu0 %v4522
          %4566 = vmatmul.mubr.bf16.gmra.mrb[0].mxu0 %v4509
          %v4567 = vpop.f32.mrb[0].mxu0
          %v4568 = vadd.f32 0.0, %v4567
          %v4569 = vpop.f32.mrb[0].mxu0
          %v4570 = vpop.f32.mrb[0].mxu0
          %v4571 = vadd.f32 0.0, %v4570
          %v4572 = vpop.f32.mrb[0].mxu0
          %4573 = vmatprep.mubr.bf16.mxu0 %v4525
          %4574 = vmatmul.mubr.bf16.gmra.mrb[0].mxu0 %v4511
          %v4575 = vpop.f32.mrb[0].mxu0
          %v4576 = vadd.f32 0.0, %v4575
          %v4577 = vpop.f32.mrb[0].mxu0
          %v4578 = vpop.f32.mrb[0].mxu0
          %v4579 = vadd.f32 0.0, %v4578
          %v4580 = vpop.f32.mrb[0].mxu0
          %4581 = vmatprep.mubr.bf16.mxu0 %v4528
          %4582 = vmatmul.mubr.bf16.gmra.mrb[0].mxu0 %v4513
          %v4583 = vpop.f32.mrb[0].mxu0
          %v4584 = vadd.f32 0.0, %v4583
          %v4585 = vpop.f32.mrb[0].mxu0
          %v4586 = vpop.f32.mrb[0].mxu0
          %v4587 = vadd.f32 0.0, %v4586
          %v4588 = vpop.f32.mrb[0].mxu0
          %4589 = vmatprep.mubr.bf16.mxu0 %v4531
          %4590 = vmatmul.mubr.bf16.gmra.mrb[0].mxu0 %v4515
          %v4591 = vpop.f32.mrb[0].mxu0
          %v4592 = vadd.f32 0.0, %v4591
          %v4593 = vpop.f32.mrb[0].mxu0
          %v4594 = vpop.f32.mrb[0].mxu0
          %v4595 = vpop.f32.mrb[0].mxu0
          %4596 = vdwg.mxu0
          %s4597 = scalar_lea.vmem %s4, 32
          %v4598 = vld [vmem:[%s4597] sm:$0xff]
          %v4600 = vsel %vm3743, %v4568, 0
          %v4603 = vsel %vm3743, %v4571, 0
          %v4606 = vsel %vm3743, %v4576, 0
          %v4609 = vsel %vm3743, %v4579, 0
          %v4612 = vsel %vm3743, %v4584, 0
          %v4615 = vsel %vm3743, %v4587, 0
          %v4618 = vsel %vm3743, %v4592, 0
          %4620 = vmatprep.subr.mxu0 0.0
          %4621 = vmatpush1.msra.mxu0 %v4598
          %4622 = vmatprep.subr.mxu0 0.0
          %4623 = vmatpush1.msra.mxu0 0.0
          %4624 = vmatprep.subr.mxu0 0.0
          %4625 = vmatpush1.msra.mxu0 0.0
          %4626 = vmatprep.subr.mxu0 0.0
          %4627 = vmatpush1.msra.mxu0 0.0
          %4628 = vmatprep.subr.mxu0 0.0
          %4629 = vmatpush1.msra.mxu0 0.0
          %4630 = vmatprep.subr.mxu0 0.0
          %4631 = vmatpush1.msra.mxu0 0.0
          %4632 = vmatprep.subr.mxu0 0.0
          %4633 = vmatpush1.msra.mxu0 0.0
          %4634 = vmatprep.subr.mxu0 0.0
          %4635 = vmatpush1.msra.mxu0 0.0
          %4636 = vmatprep.subr.mxu0 0.0
          %4637 = vmatpush1.msra.mxu0 0.0
          %4638 = vmatprep.subr.mxu0 0.0
          %4639 = vmatpush1.msra.mxu0 0.0
          %4640 = vmatprep.subr.mxu0 0.0
          %4641 = vmatpush1.msra.mxu0 0.0
          %4642 = vmatprep.subr.mxu0 0.0
          %4643 = vmatpush1.msra.mxu0 0.0
          %4644 = vmatprep.subr.mxu0 0.0
          %4645 = vmatpush1.msra.mxu0 0.0
          %4646 = vmatprep.subr.mxu0 0.0
          %4647 = vmatpush1.msra.mxu0 0.0
          %4648 = vmatprep.subr.mxu0 0.0
          %4649 = vmatpush1.msra.mxu0 0.0
          %4650 = vmatprep.subr.mxu0 0.0
          %4651 = vmatpush1.msra.mxu0 0.0
          %4652 = vmatprep.subr.mxu0 0.0
          %4653 = vmatpush1.msra.mxu0 0.0
          %4654 = vmatprep.subr.mxu0 0.0
          %4655 = vmatpush1.msra.mxu0 0.0
          %4656 = vmatprep.subr.mxu0 0.0
          %4657 = vmatpush1.msra.mxu0 0.0
          %4658 = vmatprep.subr.mxu0 0.0
          %4659 = vmatpush1.msra.mxu0 0.0
          %4660 = vmatprep.subr.mxu0 0.0
          %4661 = vmatpush1.msra.mxu0 0.0
          %4662 = vmatprep.subr.mxu0 0.0
          %4663 = vmatpush1.msra.mxu0 0.0
          %4664 = vmatprep.subr.mxu0 0.0
          %4665 = vmatpush1.msra.mxu0 0.0
          %4666 = vmatprep.subr.mxu0 0.0
          %4667 = vmatpush1.msra.mxu0 0.0
          %4668 = vmatprep.subr.mxu0 0.0
          %4669 = vmatpush1.msra.mxu0 0.0
          %4670 = vmatprep.subr.mxu0 0.0
          %4671 = vmatpush1.msra.mxu0 0.0
          %4672 = vmatprep.subr.mxu0 0.0
          %4673 = vmatpush1.msra.mxu0 0.0
          %4674 = vmatprep.subr.mxu0 0.0
          %4675 = vmatpush1.msra.mxu0 0.0
          %4676 = vmatprep.subr.mxu0 0.0
          %4677 = vmatpush1.msra.mxu0 0.0
          %4678 = vmatprep.subr.mxu0 0.0
          %4679 = vmatpush1.msra.mxu0 0.0
          %4680 = vmatprep.subr.mxu0 0.0
          %4681 = vmatpush1.msra.mxu0 0.0
          %4682 = vmatprep.subr.mxu0 0.0
          %4683 = vmatpush1.msra.mxu0 0.0
          %4684 = vmatprep.mubr.f32.mxu0 0.0
          %4685 = vmatmul.mubr.f32.gmra.mrb[0].mxu0 %v4600
          %v4686 = vpop.f32.mrb[0].mxu0
          %v4687 = vadd.f32 0.0, %v4686
          %v4688 = vpop.f32.mrb[0].mxu0
          %4689 = vmatprep.mubr.f32.mxu0 0.0
          %4690 = vmatmul.mubr.f32.gmra.mrb[0].mxu0 %v4603
          %v4691 = vpop.f32.mrb[0].mxu0
          %v4692 = vadd.f32 0.0, %v4691
          %v4693 = vpop.f32.mrb[0].mxu0
          %4694 = vmatprep.mubr.f32.mxu0 0.0
          %4695 = vmatmul.mubr.f32.gmra.mrb[0].mxu0 %v4606
          %v4696 = vpop.f32.mrb[0].mxu0
          %v4697 = vadd.f32 0.0, %v4696
          %v4698 = vpop.f32.mrb[0].mxu0
          %4699 = vmatprep.mubr.f32.mxu0 0.0
          %4700 = vmatmul.mubr.f32.gmra.mrb[0].mxu0 %v4609
          %v4701 = vpop.f32.mrb[0].mxu0
          %v4702 = vadd.f32 0.0, %v4701
          %v4703 = vpop.f32.mrb[0].mxu0
          %4704 = vmatprep.mubr.f32.mxu0 0.0
          %4705 = vmatmul.mubr.f32.gmra.mrb[0].mxu0 %v4612
          %v4706 = vpop.f32.mrb[0].mxu0
          %v4707 = vadd.f32 0.0, %v4706
          %v4708 = vpop.f32.mrb[0].mxu0
          %4709 = vmatprep.mubr.f32.mxu0 0.0
          %4710 = vmatmul.mubr.f32.gmra.mrb[0].mxu0 %v4615
          %v4711 = vpop.f32.mrb[0].mxu0
          %v4712 = vadd.f32 0.0, %v4711
          %v4713 = vpop.f32.mrb[0].mxu0
          %4714 = vmatprep.mubr.f32.mxu0 0.0
          %4715 = vmatmul.mubr.f32.gmra.mrb[0].mxu0 %v4618
          %v4716 = vpop.f32.mrb[0].mxu0
          %v4717 = vadd.f32 0.0, %v4716
          %v4718 = vpop.f32.mrb[0].mxu0
          %4719 = vdwg.mxu0
          %v4720 = vadd.f32 %v4473, %v4687
          %v4721 = vadd.f32 %v4474, %v4692
          %v4722 = vadd.f32 %v4475, %v4697
          %v4723 = vadd.f32 %v4476, %v4702
          %v4724 = vadd.f32 %v4477, %v4707
          %v4725 = vadd.f32 %v4478, %v4712
          %v4726 = vadd.f32 %v4479, %v4717
          %s4727 = scalar_lea.vmem %s3, 280
          %v4728 = vld [vmem:[%s4727] sm:$0xff]
          %v4729 = vld [vmem:[%s4727 + $0x8] sm:$0xff]
          %v4730 = vld [vmem:[%s4727 + $0x10] sm:$0xff]
          %v4731 = vld [vmem:[%s4727 + $0x18] sm:$0xff]
          %v4732 = vld [vmem:[%s4727 + $0x20] sm:$0xff]
          %v4733 = vld [vmem:[%s4727 + $0x28] sm:$0xff]
          %v4734 = vld [vmem:[%s4727 + $0x30] sm:$0x11]
          %v4742 = vunpack.c.l.b16 %v4728
          %v4743 = vunpack.c.h.b16 %v4728
          %v4744 = vunpack.c.l.b16 %v4729
          %v4745 = vunpack.c.h.b16 %v4729
          %v4746 = vunpack.c.l.b16 %v4730
          %v4747 = vunpack.c.h.b16 %v4730
          %v4748 = vunpack.c.l.b16 %v4731
          %v4749 = vunpack.c.h.b16 %v4731
          %v4750 = vunpack.c.l.b16 %v4732
          %v4751 = vunpack.c.h.b16 %v4732
          %v4752 = vunpack.c.l.b16 %v4733
          %v4753 = vunpack.c.h.b16 %v4733
          %v4754 = vunpack.c.l.b16 %v4734
          %v4755 = vunpack.c.h.b16 %v4734
          %v4756 = vpack.c.b16 %v4744, %v4742
          %v4757 = vpack.c.b16 %v4745, %v4743
          %v4758 = vpack.c.b16 %v4748, %v4746
          %v4759 = vpack.c.b16 %v4749, %v4747
          %v4760 = vpack.c.b16 %v4752, %v4750
          %v4761 = vpack.c.b16 %v4753, %v4751
          %v4762 = vpack.c.b16 %v4754, %v4754
          %v4763 = vpack.c.b16 %v4755, %v4755
          %v4769 = vsel %vm3542, %v4757, 0
          %v4772 = vsel %vm3542, %v4759, 0
          %v4775 = vsel %vm3542, %v4761, 0
          %v4778 = vsel %vm3542, %v4763, 0
          %4780 = vmatprep.subr.bf16.mxu0 0
          %4781 = vmatpush1.bf16.msra.mxu0 %v3489
          %4782 = vmatprep.subr.bf16.mxu0 0
          %4783 = vmatpush1.bf16.msra.mxu0 %v3490
          %4784 = vmatprep.subr.bf16.mxu0 0
          %4785 = vmatpush1.bf16.msra.mxu0 %v3491
          %4786 = vmatprep.subr.bf16.mxu0 0
          %4787 = vmatpush1.bf16.msra.mxu0 %v3492
          %4788 = vmatprep.subr.bf16.mxu0 0
          %4789 = vmatpush1.bf16.msra.mxu0 %v3493
          %4790 = vmatprep.subr.bf16.mxu0 0
          %4791 = vmatpush1.bf16.msra.mxu0 %v3494
          %4792 = vmatprep.subr.bf16.mxu0 0
          %4793 = vmatpush1.bf16.msra.mxu0 %v3495
          %4794 = vmatprep.subr.bf16.mxu0 0
          %4795 = vmatpush1.bf16.msra.mxu0 %v3496
          %4796 = vmatprep.subr.bf16.mxu0 0
          %4797 = vmatpush1.bf16.msra.mxu0 %v3497
          %4798 = vmatprep.subr.bf16.mxu0 0
          %4799 = vmatpush1.bf16.msra.mxu0 %v3498
          %4800 = vmatprep.subr.bf16.mxu0 0
          %4801 = vmatpush1.bf16.msra.mxu0 %v3499
          %4802 = vmatprep.subr.bf16.mxu0 0
          %4803 = vmatpush1.bf16.msra.mxu0 %v3500
          %4804 = vmatprep.subr.bf16.mxu0 0
          %4805 = vmatpush1.bf16.msra.mxu0 %v3557
          %4806 = vmatprep.subr.bf16.mxu0 0
          %4807 = vmatpush1.bf16.msra.mxu0 0
          %4808 = vmatprep.subr.bf16.mxu0 0
          %4809 = vmatpush1.bf16.msra.mxu0 0
          %4810 = vmatprep.subr.bf16.mxu0 0
          %4811 = vmatpush1.bf16.msra.mxu0 0
          %4812 = vmatprep.mubr.bf16.mxu0 %v4769
          %4813 = vmatmul.mubr.bf16.gmra.mrb[0].mxu0 %v4756
          %v4814 = vpop.f32.mrb[0].mxu0
          %v4815 = vadd.f32 0.0, %v4814
          %v4816 = vpop.f32.mrb[0].mxu0
          %v4817 = vpop.f32.mrb[0].mxu0
          %v4818 = vadd.f32 0.0, %v4817
          %v4819 = vpop.f32.mrb[0].mxu0
          %4820 = vmatprep.mubr.bf16.mxu0 %v4772
          %4821 = vmatmul.mubr.bf16.gmra.mrb[0].mxu0 %v4758
          %v4822 = vpop.f32.mrb[0].mxu0
          %v4823 = vadd.f32 0.0, %v4822
          %v4824 = vpop.f32.mrb[0].mxu0
          %v4825 = vpop.f32.mrb[0].mxu0
          %v4826 = vadd.f32 0.0, %v4825
          %v4827 = vpop.f32.mrb[0].mxu0
          %4828 = vmatprep.mubr.bf16.mxu0 %v4775
          %4829 = vmatmul.mubr.bf16.gmra.mrb[0].mxu0 %v4760
          %v4830 = vpop.f32.mrb[0].mxu0
          %v4831 = vadd.f32 0.0, %v4830
          %v4832 = vpop.f32.mrb[0].mxu0
          %v4833 = vpop.f32.mrb[0].mxu0
          %v4834 = vadd.f32 0.0, %v4833
          %v4835 = vpop.f32.mrb[0].mxu0
          %4836 = vmatprep.mubr.bf16.mxu0 %v4778
          %4837 = vmatmul.mubr.bf16.gmra.mrb[0].mxu0 %v4762
          %v4838 = vpop.f32.mrb[0].mxu0
          %v4839 = vadd.f32 0.0, %v4838
          %v4840 = vpop.f32.mrb[0].mxu0
          %v4841 = vpop.f32.mrb[0].mxu0
          %v4842 = vpop.f32.mrb[0].mxu0
          %4843 = vdwg.mxu0
          %s4844 = scalar_lea.vmem %s4, 40
          %v4845 = vld [vmem:[%s4844] sm:$0xff]
          %v4847 = vsel %vm3743, %v4815, 0
          %v4850 = vsel %vm3743, %v4818, 0
          %v4853 = vsel %vm3743, %v4823, 0
          %v4856 = vsel %vm3743, %v4826, 0
          %v4859 = vsel %vm3743, %v4831, 0
          %v4862 = vsel %vm3743, %v4834, 0
          %v4865 = vsel %vm3743, %v4839, 0
          %4867 = vmatprep.subr.mxu0 0.0
          %4868 = vmatpush1.msra.mxu0 %v4845
          %4869 = vmatprep.subr.mxu0 0.0
          %4870 = vmatpush1.msra.mxu0 0.0
          %4871 = vmatprep.subr.mxu0 0.0
          %4872 = vmatpush1.msra.mxu0 0.0
          %4873 = vmatprep.subr.mxu0 0.0
          %4874 = vmatpush1.msra.mxu0 0.0
          %4875 = vmatprep.subr.mxu0 0.0
          %4876 = vmatpush1.msra.mxu0 0.0
          %4877 = vmatprep.subr.mxu0 0.0
          %4878 = vmatpush1.msra.mxu0 0.0
          %4879 = vmatprep.subr.mxu0 0.0
          %4880 = vmatpush1.msra.mxu0 0.0
          %4881 = vmatprep.subr.mxu0 0.0
          %4882 = vmatpush1.msra.mxu0 0.0
          %4883 = vmatprep.subr.mxu0 0.0
          %4884 = vmatpush1.msra.mxu0 0.0
          %4885 = vmatprep.subr.mxu0 0.0
          %4886 = vmatpush1.msra.mxu0 0.0
          %4887 = vmatprep.subr.mxu0 0.0
          %4888 = vmatpush1.msra.mxu0 0.0
          %4889 = vmatprep.subr.mxu0 0.0
          %4890 = vmatpush1.msra.mxu0 0.0
          %4891 = vmatprep.subr.mxu0 0.0
          %4892 = vmatpush1.msra.mxu0 0.0
          %4893 = vmatprep.subr.mxu0 0.0
          %4894 = vmatpush1.msra.mxu0 0.0
          %4895 = vmatprep.subr.mxu0 0.0
          %4896 = vmatpush1.msra.mxu0 0.0
          %4897 = vmatprep.subr.mxu0 0.0
          %4898 = vmatpush1.msra.mxu0 0.0
          %4899 = vmatprep.subr.mxu0 0.0
          %4900 = vmatpush1.msra.mxu0 0.0
          %4901 = vmatprep.subr.mxu0 0.0
          %4902 = vmatpush1.msra.mxu0 0.0
          %4903 = vmatprep.subr.mxu0 0.0
          %4904 = vmatpush1.msra.mxu0 0.0
          %4905 = vmatprep.subr.mxu0 0.0
          %4906 = vmatpush1.msra.mxu0 0.0
          %4907 = vmatprep.subr.mxu0 0.0
          %4908 = vmatpush1.msra.mxu0 0.0
          %4909 = vmatprep.subr.mxu0 0.0
          %4910 = vmatpush1.msra.mxu0 0.0
          %4911 = vmatprep.subr.mxu0 0.0
          %4912 = vmatpush1.msra.mxu0 0.0
          %4913 = vmatprep.subr.mxu0 0.0
          %4914 = vmatpush1.msra.mxu0 0.0
          %4915 = vmatprep.subr.mxu0 0.0
          %4916 = vmatpush1.msra.mxu0 0.0
          %4917 = vmatprep.subr.mxu0 0.0
          %4918 = vmatpush1.msra.mxu0 0.0
          %4919 = vmatprep.subr.mxu0 0.0
          %4920 = vmatpush1.msra.mxu0 0.0
          %4921 = vmatprep.subr.mxu0 0.0
          %4922 = vmatpush1.msra.mxu0 0.0
          %4923 = vmatprep.subr.mxu0 0.0
          %4924 = vmatpush1.msra.mxu0 0.0
          %4925 = vmatprep.subr.mxu0 0.0
          %4926 = vmatpush1.msra.mxu0 0.0
          %4927 = vmatprep.subr.mxu0 0.0
          %4928 = vmatpush1.msra.mxu0 0.0
          %4929 = vmatprep.subr.mxu0 0.0
          %4930 = vmatpush1.msra.mxu0 0.0
          %4931 = vmatprep.mubr.f32.mxu0 0.0
          %4932 = vmatmul.mubr.f32.gmra.mrb[0].mxu0 %v4847
          %v4933 = vpop.f32.mrb[0].mxu0
          %v4934 = vadd.f32 0.0, %v4933
          %v4935 = vpop.f32.mrb[0].mxu0
          %4936 = vmatprep.mubr.f32.mxu0 0.0
          %4937 = vmatmul.mubr.f32.gmra.mrb[0].mxu0 %v4850
          %v4938 = vpop.f32.mrb[0].mxu0
          %v4939 = vadd.f32 0.0, %v4938
          %v4940 = vpop.f32.mrb[0].mxu0
          %4941 = vmatprep.mubr.f32.mxu0 0.0
          %4942 = vmatmul.mubr.f32.gmra.mrb[0].mxu0 %v4853
          %v4943 = vpop.f32.mrb[0].mxu0
          %v4944 = vadd.f32 0.0, %v4943
          %v4945 = vpop.f32.mrb[0].mxu0
          %4946 = vmatprep.mubr.f32.mxu0 0.0
          %4947 = vmatmul.mubr.f32.gmra.mrb[0].mxu0 %v4856
          %v4948 = vpop.f32.mrb[0].mxu0
          %v4949 = vadd.f32 0.0, %v4948
          %v4950 = vpop.f32.mrb[0].mxu0
          %4951 = vmatprep.mubr.f32.mxu0 0.0
          %4952 = vmatmul.mubr.f32.gmra.mrb[0].mxu0 %v4859
          %v4953 = vpop.f32.mrb[0].mxu0
          %v4954 = vadd.f32 0.0, %v4953
          %v4955 = vpop.f32.mrb[0].mxu0
          %4956 = vmatprep.mubr.f32.mxu0 0.0
          %4957 = vmatmul.mubr.f32.gmra.mrb[0].mxu0 %v4862
          %v4958 = vpop.f32.mrb[0].mxu0
          %v4959 = vadd.f32 0.0, %v4958
          %v4960 = vpop.f32.mrb[0].mxu0
          %4961 = vmatprep.mubr.f32.mxu0 0.0
          %4962 = vmatmul.mubr.f32.gmra.mrb[0].mxu0 %v4865
          %v4963 = vpop.f32.mrb[0].mxu0
          %v4964 = vadd.f32 0.0, %v4963
          %v4965 = vpop.f32.mrb[0].mxu0
          %4966 = vdwg.mxu0
          %v4967 = vadd.f32 %v4720, %v4934
          %v4968 = vadd.f32 %v4721, %v4939
          %v4969 = vadd.f32 %v4722, %v4944
          %v4970 = vadd.f32 %v4723, %v4949
          %v4971 = vadd.f32 %v4724, %v4954
          %v4972 = vadd.f32 %v4725, %v4959
          %v4973 = vadd.f32 %v4726, %v4964
          %s4974 = scalar_lea.vmem %s3, 336
          %v4975 = vld [vmem:[%s4974] sm:$0xff]
          %v4976 = vld [vmem:[%s4974 + $0x8] sm:$0xff]
          %v4977 = vld [vmem:[%s4974 + $0x10] sm:$0xff]
          %v4978 = vld [vmem:[%s4974 + $0x18] sm:$0xff]
          %v4979 = vld [vmem:[%s4974 + $0x20] sm:$0xff]
          %v4980 = vld [vmem:[%s4974 + $0x28] sm:$0xff]
          %v4981 = vld [vmem:[%s4974 + $0x30] sm:$0x11]
          %v4989 = vunpack.c.l.b16 %v4975
          %v4990 = vunpack.c.h.b16 %v4975
          %v4991 = vunpack.c.l.b16 %v4976
          %v4992 = vunpack.c.h.b16 %v4976
          %v4993 = vunpack.c.l.b16 %v4977
          %v4994 = vunpack.c.h.b16 %v4977
          %v4995 = vunpack.c.l.b16 %v4978
          %v4996 = vunpack.c.h.b16 %v4978
          %v4997 = vunpack.c.l.b16 %v4979
          %v4998 = vunpack.c.h.b16 %v4979
          %v4999 = vunpack.c.l.b16 %v4980
          %v5000 = vunpack.c.h.b16 %v4980
          %v5001 = vunpack.c.l.b16 %v4981
          %v5002 = vunpack.c.h.b16 %v4981
          %v5003 = vpack.c.b16 %v4991, %v4989
          %v5004 = vpack.c.b16 %v4992, %v4990
          %v5005 = vpack.c.b16 %v4995, %v4993
          %v5006 = vpack.c.b16 %v4996, %v4994
          %v5007 = vpack.c.b16 %v4999, %v4997
          %v5008 = vpack.c.b16 %v5000, %v4998
          %v5009 = vpack.c.b16 %v5001, %v5001
          %v5010 = vpack.c.b16 %v5002, %v5002
          %v5016 = vsel %vm3542, %v5004, 0
          %v5019 = vsel %vm3542, %v5006, 0
          %v5022 = vsel %vm3542, %v5008, 0
          %v5025 = vsel %vm3542, %v5010, 0
          %5027 = vmatprep.subr.bf16.mxu0 0
          %5028 = vmatpush1.bf16.msra.mxu0 %v3489
          %5029 = vmatprep.subr.bf16.mxu0 0
          %5030 = vmatpush1.bf16.msra.mxu0 %v3490
          %5031 = vmatprep.subr.bf16.mxu0 0
          %5032 = vmatpush1.bf16.msra.mxu0 %v3491
          %5033 = vmatprep.subr.bf16.mxu0 0
          %5034 = vmatpush1.bf16.msra.mxu0 %v3492
          %5035 = vmatprep.subr.bf16.mxu0 0
          %5036 = vmatpush1.bf16.msra.mxu0 %v3493
          %5037 = vmatprep.subr.bf16.mxu0 0
          %5038 = vmatpush1.bf16.msra.mxu0 %v3494
          %5039 = vmatprep.subr.bf16.mxu0 0
          %5040 = vmatpush1.bf16.msra.mxu0 %v3495
          %5041 = vmatprep.subr.bf16.mxu0 0
          %5042 = vmatpush1.bf16.msra.mxu0 %v3496
          %5043 = vmatprep.subr.bf16.mxu0 0
          %5044 = vmatpush1.bf16.msra.mxu0 %v3497
          %5045 = vmatprep.subr.bf16.mxu0 0
          %5046 = vmatpush1.bf16.msra.mxu0 %v3498
          %5047 = vmatprep.subr.bf16.mxu0 0
          %5048 = vmatpush1.bf16.msra.mxu0 %v3499
          %5049 = vmatprep.subr.bf16.mxu0 0
          %5050 = vmatpush1.bf16.msra.mxu0 %v3500
          %5051 = vmatprep.subr.bf16.mxu0 0
          %5052 = vmatpush1.bf16.msra.mxu0 %v3557
          %5053 = vmatprep.subr.bf16.mxu0 0
          %5054 = vmatpush1.bf16.msra.mxu0 0
          %5055 = vmatprep.subr.bf16.mxu0 0
          %5056 = vmatpush1.bf16.msra.mxu0 0
          %5057 = vmatprep.subr.bf16.mxu0 0
          %5058 = vmatpush1.bf16.msra.mxu0 0
          %5059 = vmatprep.mubr.bf16.mxu0 %v5016
          %5060 = vmatmul.mubr.bf16.gmra.mrb[0].mxu0 %v5003
          %v5061 = vpop.f32.mrb[0].mxu0
          %v5062 = vadd.f32 0.0, %v5061
          %v5063 = vpop.f32.mrb[0].mxu0
          %v5064 = vpop.f32.mrb[0].mxu0
          %v5065 = vadd.f32 0.0, %v5064
          %v5066 = vpop.f32.mrb[0].mxu0
          %5067 = vmatprep.mubr.bf16.mxu0 %v5019
          %5068 = vmatmul.mubr.bf16.gmra.mrb[0].mxu0 %v5005
          %v5069 = vpop.f32.mrb[0].mxu0
          %v5070 = vadd.f32 0.0, %v5069
          %v5071 = vpop.f32.mrb[0].mxu0
          %v5072 = vpop.f32.mrb[0].mxu0
          %v5073 = vadd.f32 0.0, %v5072
          %v5074 = vpop.f32.mrb[0].mxu0
          %5075 = vmatprep.mubr.bf16.mxu0 %v5022
          %5076 = vmatmul.mubr.bf16.gmra.mrb[0].mxu0 %v5007
          %v5077 = vpop.f32.mrb[0].mxu0
          %v5078 = vadd.f32 0.0, %v5077
          %v5079 = vpop.f32.mrb[0].mxu0
          %v5080 = vpop.f32.mrb[0].mxu0
          %v5081 = vadd.f32 0.0, %v5080
          %v5082 = vpop.f32.mrb[0].mxu0
          %5083 = vmatprep.mubr.bf16.mxu0 %v5025
          %5084 = vmatmul.mubr.bf16.gmra.mrb[0].mxu0 %v5009
          %v5085 = vpop.f32.mrb[0].mxu0
          %v5086 = vadd.f32 0.0, %v5085
          %v5087 = vpop.f32.mrb[0].mxu0
          %v5088 = vpop.f32.mrb[0].mxu0
          %v5089 = vpop.f32.mrb[0].mxu0
          %5090 = vdwg.mxu0
          %s5091 = scalar_lea.vmem %s4, 48
          %v5092 = vld [vmem:[%s5091] sm:$0xff]
          %v5094 = vsel %vm3743, %v5062, 0
          %v5097 = vsel %vm3743, %v5065, 0
          %v5100 = vsel %vm3743, %v5070, 0
          %v5103 = vsel %vm3743, %v5073, 0
          %v5106 = vsel %vm3743, %v5078, 0
          %v5109 = vsel %vm3743, %v5081, 0
          %v5112 = vsel %vm3743, %v5086, 0
          %5114 = vmatprep.subr.mxu0 0.0
          %5115 = vmatpush1.msra.mxu0 %v5092
          %5116 = vmatprep.subr.mxu0 0.0
          %5117 = vmatpush1.msra.mxu0 0.0
          %5118 = vmatprep.subr.mxu0 0.0
          %5119 = vmatpush1.msra.mxu0 0.0
          %5120 = vmatprep.subr.mxu0 0.0
          %5121 = vmatpush1.msra.mxu0 0.0
          %5122 = vmatprep.subr.mxu0 0.0
          %5123 = vmatpush1.msra.mxu0 0.0
          %5124 = vmatprep.subr.mxu0 0.0
          %5125 = vmatpush1.msra.mxu0 0.0
          %5126 = vmatprep.subr.mxu0 0.0
          %5127 = vmatpush1.msra.mxu0 0.0
          %5128 = vmatprep.subr.mxu0 0.0
          %5129 = vmatpush1.msra.mxu0 0.0
          %5130 = vmatprep.subr.mxu0 0.0
          %5131 = vmatpush1.msra.mxu0 0.0
          %5132 = vmatprep.subr.mxu0 0.0
          %5133 = vmatpush1.msra.mxu0 0.0
          %5134 = vmatprep.subr.mxu0 0.0
          %5135 = vmatpush1.msra.mxu0 0.0
          %5136 = vmatprep.subr.mxu0 0.0
          %5137 = vmatpush1.msra.mxu0 0.0
          %5138 = vmatprep.subr.mxu0 0.0
          %5139 = vmatpush1.msra.mxu0 0.0
          %5140 = vmatprep.subr.mxu0 0.0
          %5141 = vmatpush1.msra.mxu0 0.0
          %5142 = vmatprep.subr.mxu0 0.0
          %5143 = vmatpush1.msra.mxu0 0.0
          %5144 = vmatprep.subr.mxu0 0.0
          %5145 = vmatpush1.msra.mxu0 0.0
          %5146 = vmatprep.subr.mxu0 0.0
          %5147 = vmatpush1.msra.mxu0 0.0
          %5148 = vmatprep.subr.mxu0 0.0
          %5149 = vmatpush1.msra.mxu0 0.0
          %5150 = vmatprep.subr.mxu0 0.0
          %5151 = vmatpush1.msra.mxu0 0.0
          %5152 = vmatprep.subr.mxu0 0.0
          %5153 = vmatpush1.msra.mxu0 0.0
          %5154 = vmatprep.subr.mxu0 0.0
          %5155 = vmatpush1.msra.mxu0 0.0
          %5156 = vmatprep.subr.mxu0 0.0
          %5157 = vmatpush1.msra.mxu0 0.0
          %5158 = vmatprep.subr.mxu0 0.0
          %5159 = vmatpush1.msra.mxu0 0.0
          %5160 = vmatprep.subr.mxu0 0.0
          %5161 = vmatpush1.msra.mxu0 0.0
          %5162 = vmatprep.subr.mxu0 0.0
          %5163 = vmatpush1.msra.mxu0 0.0
          %5164 = vmatprep.subr.mxu0 0.0
          %5165 = vmatpush1.msra.mxu0 0.0
          %5166 = vmatprep.subr.mxu0 0.0
          %5167 = vmatpush1.msra.mxu0 0.0
          %5168 = vmatprep.subr.mxu0 0.0
          %5169 = vmatpush1.msra.mxu0 0.0
          %5170 = vmatprep.subr.mxu0 0.0
          %5171 = vmatpush1.msra.mxu0 0.0
          %5172 = vmatprep.subr.mxu0 0.0
          %5173 = vmatpush1.msra.mxu0 0.0
          %5174 = vmatprep.subr.mxu0 0.0
          %5175 = vmatpush1.msra.mxu0 0.0
          %5176 = vmatprep.subr.mxu0 0.0
          %5177 = vmatpush1.msra.mxu0 0.0
          %5178 = vmatprep.mubr.f32.mxu0 0.0
          %5179 = vmatmul.mubr.f32.gmra.mrb[0].mxu0 %v5094
          %v5180 = vpop.f32.mrb[0].mxu0
          %v5181 = vadd.f32 0.0, %v5180
          %v5182 = vpop.f32.mrb[0].mxu0
          %5183 = vmatprep.mubr.f32.mxu0 0.0
          %5184 = vmatmul.mubr.f32.gmra.mrb[0].mxu0 %v5097
          %v5185 = vpop.f32.mrb[0].mxu0
          %v5186 = vadd.f32 0.0, %v5185
          %v5187 = vpop.f32.mrb[0].mxu0
          %5188 = vmatprep.mubr.f32.mxu0 0.0
          %5189 = vmatmul.mubr.f32.gmra.mrb[0].mxu0 %v5100
          %v5190 = vpop.f32.mrb[0].mxu0
          %v5191 = vadd.f32 0.0, %v5190
          %v5192 = vpop.f32.mrb[0].mxu0
          %5193 = vmatprep.mubr.f32.mxu0 0.0
          %5194 = vmatmul.mubr.f32.gmra.mrb[0].mxu0 %v5103
          %v5195 = vpop.f32.mrb[0].mxu0
          %v5196 = vadd.f32 0.0, %v5195
          %v5197 = vpop.f32.mrb[0].mxu0
          %5198 = vmatprep.mubr.f32.mxu0 0.0
          %5199 = vmatmul.mubr.f32.gmra.mrb[0].mxu0 %v5106
          %v5200 = vpop.f32.mrb[0].mxu0
          %v5201 = vadd.f32 0.0, %v5200
          %v5202 = vpop.f32.mrb[0].mxu0
          %5203 = vmatprep.mubr.f32.mxu0 0.0
          %5204 = vmatmul.mubr.f32.gmra.mrb[0].mxu0 %v5109
          %v5205 = vpop.f32.mrb[0].mxu0
          %v5206 = vadd.f32 0.0, %v5205
          %v5207 = vpop.f32.mrb[0].mxu0
          %5208 = vmatprep.mubr.f32.mxu0 0.0
          %5209 = vmatmul.mubr.f32.gmra.mrb[0].mxu0 %v5112
          %v5210 = vpop.f32.mrb[0].mxu0
          %v5211 = vadd.f32 0.0, %v5210
          %v5212 = vpop.f32.mrb[0].mxu0
          %5213 = vdwg.mxu0
          %v5214 = vadd.f32 %v4967, %v5181
          %v5215 = vadd.f32 %v4968, %v5186
          %v5216 = vadd.f32 %v4969, %v5191
          %v5217 = vadd.f32 %v4970, %v5196
          %v5218 = vadd.f32 %v4971, %v5201
          %v5219 = vadd.f32 %v4972, %v5206
          %v5220 = vadd.f32 %v4973, %v5211
          %s5221 = scalar_lea.vmem %s3, 392
          %v5222 = vld [vmem:[%s5221] sm:$0xff]
          %v5223 = vld [vmem:[%s5221 + $0x8] sm:$0xff]
          %v5224 = vld [vmem:[%s5221 + $0x10] sm:$0xff]
          %v5225 = vld [vmem:[%s5221 + $0x18] sm:$0xff]
          %v5226 = vld [vmem:[%s5221 + $0x20] sm:$0xff]
          %v5227 = vld [vmem:[%s5221 + $0x28] sm:$0xff]
          %v5228 = vld [vmem:[%s5221 + $0x30] sm:$0x11]
          %v5236 = vunpack.c.l.b16 %v5222
          %v5237 = vunpack.c.h.b16 %v5222
          %v5238 = vunpack.c.l.b16 %v5223
          %v5239 = vunpack.c.h.b16 %v5223
          %v5240 = vunpack.c.l.b16 %v5224
          %v5241 = vunpack.c.h.b16 %v5224
          %v5242 = vunpack.c.l.b16 %v5225
          %v5243 = vunpack.c.h.b16 %v5225
          %v5244 = vunpack.c.l.b16 %v5226
          %v5245 = vunpack.c.h.b16 %v5226
          %v5246 = vunpack.c.l.b16 %v5227
          %v5247 = vunpack.c.h.b16 %v5227
          %v5248 = vunpack.c.l.b16 %v5228
          %v5249 = vunpack.c.h.b16 %v5228
          %v5250 = vpack.c.b16 %v5238, %v5236
          %v5251 = vpack.c.b16 %v5239, %v5237
          %v5252 = vpack.c.b16 %v5242, %v5240
          %v5253 = vpack.c.b16 %v5243, %v5241
          %v5254 = vpack.c.b16 %v5246, %v5244
          %v5255 = vpack.c.b16 %v5247, %v5245
          %v5256 = vpack.c.b16 %v5248, %v5248
          %v5257 = vpack.c.b16 %v5249, %v5249
          %v5263 = vsel %vm3542, %v5251, 0
          %v5266 = vsel %vm3542, %v5253, 0
          %v5269 = vsel %vm3542, %v5255, 0
          %v5272 = vsel %vm3542, %v5257, 0
          %5274 = vmatprep.subr.bf16.mxu0 0
          %5275 = vmatpush1.bf16.msra.mxu0 %v3489
          %5276 = vmatprep.subr.bf16.mxu0 0
          %5277 = vmatpush1.bf16.msra.mxu0 %v3490
          %5278 = vmatprep.subr.bf16.mxu0 0
          %5279 = vmatpush1.bf16.msra.mxu0 %v3491
          %5280 = vmatprep.subr.bf16.mxu0 0
          %5281 = vmatpush1.bf16.msra.mxu0 %v3492
          %5282 = vmatprep.subr.bf16.mxu0 0
          %5283 = vmatpush1.bf16.msra.mxu0 %v3493
          %5284 = vmatprep.subr.bf16.mxu0 0
          %5285 = vmatpush1.bf16.msra.mxu0 %v3494
          %5286 = vmatprep.subr.bf16.mxu0 0
          %5287 = vmatpush1.bf16.msra.mxu0 %v3495
          %5288 = vmatprep.subr.bf16.mxu0 0
          %5289 = vmatpush1.bf16.msra.mxu0 %v3496
          %5290 = vmatprep.subr.bf16.mxu0 0
          %5291 = vmatpush1.bf16.msra.mxu0 %v3497
          %5292 = vmatprep.subr.bf16.mxu0 0
          %5293 = vmatpush1.bf16.msra.mxu0 %v3498
          %5294 = vmatprep.subr.bf16.mxu0 0
          %5295 = vmatpush1.bf16.msra.mxu0 %v3499
          %5296 = vmatprep.subr.bf16.mxu0 0
          %5297 = vmatpush1.bf16.msra.mxu0 %v3500
          %5298 = vmatprep.subr.bf16.mxu0 0
          %5299 = vmatpush1.bf16.msra.mxu0 %v3557
          %5300 = vmatprep.subr.bf16.mxu0 0
          %5301 = vmatpush1.bf16.msra.mxu0 0
          %5302 = vmatprep.subr.bf16.mxu0 0
          %5303 = vmatpush1.bf16.msra.mxu0 0
          %5304 = vmatprep.subr.bf16.mxu0 0
          %5305 = vmatpush1.bf16.msra.mxu0 0
          %5306 = vmatprep.mubr.bf16.mxu0 %v5263
          %5307 = vmatmul.mubr.bf16.gmra.mrb[0].mxu0 %v5250
          %v5308 = vpop.f32.mrb[0].mxu0
          %v5309 = vadd.f32 0.0, %v5308
          %v5310 = vpop.f32.mrb[0].mxu0
          %v5311 = vpop.f32.mrb[0].mxu0
          %v5312 = vadd.f32 0.0, %v5311
          %v5313 = vpop.f32.mrb[0].mxu0
          %5314 = vmatprep.mubr.bf16.mxu0 %v5266
          %5315 = vmatmul.mubr.bf16.gmra.mrb[0].mxu0 %v5252
          %v5316 = vpop.f32.mrb[0].mxu0
          %v5317 = vadd.f32 0.0, %v5316
          %v5318 = vpop.f32.mrb[0].mxu0
          %v5319 = vpop.f32.mrb[0].mxu0
          %v5320 = vadd.f32 0.0, %v5319
          %v5321 = vpop.f32.mrb[0].mxu0
          %5322 = vmatprep.mubr.bf16.mxu0 %v5269
          %5323 = vmatmul.mubr.bf16.gmra.mrb[0].mxu0 %v5254
          %v5324 = vpop.f32.mrb[0].mxu0
          %v5325 = vadd.f32 0.0, %v5324
          %v5326 = vpop.f32.mrb[0].mxu0
          %v5327 = vpop.f32.mrb[0].mxu0
          %v5328 = vadd.f32 0.0, %v5327
          %v5329 = vpop.f32.mrb[0].mxu0
          %5330 = vmatprep.mubr.bf16.mxu0 %v5272
          %5331 = vmatmul.mubr.bf16.gmra.mrb[0].mxu0 %v5256
          %v5332 = vpop.f32.mrb[0].mxu0
          %v5333 = vadd.f32 0.0, %v5332
          %v5334 = vpop.f32.mrb[0].mxu0
          %v5335 = vpop.f32.mrb[0].mxu0
          %v5336 = vpop.f32.mrb[0].mxu0
          %5337 = vdwg.mxu0
          %s5338 = scalar_lea.vmem %s4, 56
          %v5339 = vld [vmem:[%s5338] sm:$0xff]
          %v5341 = vsel %vm3743, %v5309, 0
          %v5344 = vsel %vm3743, %v5312, 0
          %v5347 = vsel %vm3743, %v5317, 0
          %v5350 = vsel %vm3743, %v5320, 0
          %v5353 = vsel %vm3743, %v5325, 0
          %v5356 = vsel %vm3743, %v5328, 0
          %v5359 = vsel %vm3743, %v5333, 0
          %5361 = vmatprep.subr.mxu0 0.0
          %5362 = vmatpush1.msra.mxu0 %v5339
          %5363 = vmatprep.subr.mxu0 0.0
          %5364 = vmatpush1.msra.mxu0 0.0
          %5365 = vmatprep.subr.mxu0 0.0
          %5366 = vmatpush1.msra.mxu0 0.0
          %5367 = vmatprep.subr.mxu0 0.0
          %5368 = vmatpush1.msra.mxu0 0.0
          %5369 = vmatprep.subr.mxu0 0.0
          %5370 = vmatpush1.msra.mxu0 0.0
          %5371 = vmatprep.subr.mxu0 0.0
          %5372 = vmatpush1.msra.mxu0 0.0
          %5373 = vmatprep.subr.mxu0 0.0
          %5374 = vmatpush1.msra.mxu0 0.0
          %5375 = vmatprep.subr.mxu0 0.0
          %5376 = vmatpush1.msra.mxu0 0.0
          %5377 = vmatprep.subr.mxu0 0.0
          %5378 = vmatpush1.msra.mxu0 0.0
          %5379 = vmatprep.subr.mxu0 0.0
          %5380 = vmatpush1.msra.mxu0 0.0
          %5381 = vmatprep.subr.mxu0 0.0
          %5382 = vmatpush1.msra.mxu0 0.0
          %5383 = vmatprep.subr.mxu0 0.0
          %5384 = vmatpush1.msra.mxu0 0.0
          %5385 = vmatprep.subr.mxu0 0.0
          %5386 = vmatpush1.msra.mxu0 0.0
          %5387 = vmatprep.subr.mxu0 0.0
          %5388 = vmatpush1.msra.mxu0 0.0
          %5389 = vmatprep.subr.mxu0 0.0
          %5390 = vmatpush1.msra.mxu0 0.0
          %5391 = vmatprep.subr.mxu0 0.0
          %5392 = vmatpush1.msra.mxu0 0.0
          %5393 = vmatprep.subr.mxu0 0.0
          %5394 = vmatpush1.msra.mxu0 0.0
          %5395 = vmatprep.subr.mxu0 0.0
          %5396 = vmatpush1.msra.mxu0 0.0
          %5397 = vmatprep.subr.mxu0 0.0
          %5398 = vmatpush1.msra.mxu0 0.0
          %5399 = vmatprep.subr.mxu0 0.0
          %5400 = vmatpush1.msra.mxu0 0.0
          %5401 = vmatprep.subr.mxu0 0.0
          %5402 = vmatpush1.msra.mxu0 0.0
          %5403 = vmatprep.subr.mxu0 0.0
          %5404 = vmatpush1.msra.mxu0 0.0
          %5405 = vmatprep.subr.mxu0 0.0
          %5406 = vmatpush1.msra.mxu0 0.0
          %5407 = vmatprep.subr.mxu0 0.0
          %5408 = vmatpush1.msra.mxu0 0.0
          %5409 = vmatprep.subr.mxu0 0.0
          %5410 = vmatpush1.msra.mxu0 0.0
          %5411 = vmatprep.subr.mxu0 0.0
          %5412 = vmatpush1.msra.mxu0 0.0
          %5413 = vmatprep.subr.mxu0 0.0
          %5414 = vmatpush1.msra.mxu0 0.0
          %5415 = vmatprep.subr.mxu0 0.0
          %5416 = vmatpush1.msra.mxu0 0.0
          %5417 = vmatprep.subr.mxu0 0.0
          %5418 = vmatpush1.msra.mxu0 0.0
          %5419 = vmatprep.subr.mxu0 0.0
          %5420 = vmatpush1.msra.mxu0 0.0
          %5421 = vmatprep.subr.mxu0 0.0
          %5422 = vmatpush1.msra.mxu0 0.0
          %5423 = vmatprep.subr.mxu0 0.0
          %5424 = vmatpush1.msra.mxu0 0.0
          %5425 = vmatprep.mubr.f32.mxu0 0.0
          %5426 = vmatmul.mubr.f32.gmra.mrb[0].mxu0 %v5341
          %v5427 = vpop.f32.mrb[0].mxu0
          %v5428 = vadd.f32 0.0, %v5427
          %v5429 = vpop.f32.mrb[0].mxu0
          %5430 = vmatprep.mubr.f32.mxu0 0.0
          %5431 = vmatmul.mubr.f32.gmra.mrb[0].mxu0 %v5344
          %v5432 = vpop.f32.mrb[0].mxu0
          %v5433 = vadd.f32 0.0, %v5432
          %v5434 = vpop.f32.mrb[0].mxu0
          %5435 = vmatprep.mubr.f32.mxu0 0.0
          %5436 = vmatmul.mubr.f32.gmra.mrb[0].mxu0 %v5347
          %v5437 = vpop.f32.mrb[0].mxu0
          %v5438 = vadd.f32 0.0, %v5437
          %v5439 = vpop.f32.mrb[0].mxu0
          %5440 = vmatprep.mubr.f32.mxu0 0.0
          %5441 = vmatmul.mubr.f32.gmra.mrb[0].mxu0 %v5350
          %v5442 = vpop.f32.mrb[0].mxu0
          %v5443 = vadd.f32 0.0, %v5442
          %v5444 = vpop.f32.mrb[0].mxu0
          %5445 = vmatprep.mubr.f32.mxu0 0.0
          %5446 = vmatmul.mubr.f32.gmra.mrb[0].mxu0 %v5353
          %v5447 = vpop.f32.mrb[0].mxu0
          %v5448 = vadd.f32 0.0, %v5447
          %v5449 = vpop.f32.mrb[0].mxu0
          %5450 = vmatprep.mubr.f32.mxu0 0.0
          %5451 = vmatmul.mubr.f32.gmra.mrb[0].mxu0 %v5356
          %v5452 = vpop.f32.mrb[0].mxu0
          %v5453 = vadd.f32 0.0, %v5452
          %v5454 = vpop.f32.mrb[0].mxu0
          %5455 = vmatprep.mubr.f32.mxu0 0.0
          %5456 = vmatmul.mubr.f32.gmra.mrb[0].mxu0 %v5359
          %v5457 = vpop.f32.mrb[0].mxu0
          %v5458 = vadd.f32 0.0, %v5457
          %v5459 = vpop.f32.mrb[0].mxu0
          %5460 = vdwg.mxu0
          %v5461 = vadd.f32 %v5214, %v5428
          %v5462 = vadd.f32 %v5215, %v5433
          %v5463 = vadd.f32 %v5216, %v5438
          %v5464 = vadd.f32 %v5217, %v5443
          %v5465 = vadd.f32 %v5218, %v5448
          %v5466 = vadd.f32 %v5219, %v5453
          %v5467 = vadd.f32 %v5220, %v5458
          %s5468 = scalar_lea.vmem %s3, 448
          %v5469 = vld [vmem:[%s5468] sm:$0xff]
          %v5470 = vld [vmem:[%s5468 + $0x8] sm:$0xff]
          %v5471 = vld [vmem:[%s5468 + $0x10] sm:$0xff]
          %v5472 = vld [vmem:[%s5468 + $0x18] sm:$0xff]
          %v5473 = vld [vmem:[%s5468 + $0x20] sm:$0xff]
          %v5474 = vld [vmem:[%s5468 + $0x28] sm:$0xff]
          %v5475 = vld [vmem:[%s5468 + $0x30] sm:$0x11]
          %v5483 = vunpack.c.l.b16 %v5469
          %v5484 = vunpack.c.h.b16 %v5469
          %v5485 = vunpack.c.l.b16 %v5470
          %v5486 = vunpack.c.h.b16 %v5470
          %v5487 = vunpack.c.l.b16 %v5471
          %v5488 = vunpack.c.h.b16 %v5471
          %v5489 = vunpack.c.l.b16 %v5472
          %v5490 = vunpack.c.h.b16 %v5472
          %v5491 = vunpack.c.l.b16 %v5473
          %v5492 = vunpack.c.h.b16 %v5473
          %v5493 = vunpack.c.l.b16 %v5474
          %v5494 = vunpack.c.h.b16 %v5474
          %v5495 = vunpack.c.l.b16 %v5475
          %v5496 = vunpack.c.h.b16 %v5475
          %v5497 = vpack.c.b16 %v5485, %v5483
          %v5498 = vpack.c.b16 %v5486, %v5484
          %v5499 = vpack.c.b16 %v5489, %v5487
          %v5500 = vpack.c.b16 %v5490, %v5488
          %v5501 = vpack.c.b16 %v5493, %v5491
          %v5502 = vpack.c.b16 %v5494, %v5492
          %v5503 = vpack.c.b16 %v5495, %v5495
          %v5504 = vpack.c.b16 %v5496, %v5496
          %v5510 = vsel %vm3542, %v5498, 0
          %v5513 = vsel %vm3542, %v5500, 0
          %v5516 = vsel %vm3542, %v5502, 0
          %v5519 = vsel %vm3542, %v5504, 0
          %5521 = vmatprep.subr.bf16.mxu0 0
          %5522 = vmatpush1.bf16.msra.mxu0 %v3489
          %5523 = vmatprep.subr.bf16.mxu0 0
          %5524 = vmatpush1.bf16.msra.mxu0 %v3490
          %5525 = vmatprep.subr.bf16.mxu0 0
          %5526 = vmatpush1.bf16.msra.mxu0 %v3491
          %5527 = vmatprep.subr.bf16.mxu0 0
          %5528 = vmatpush1.bf16.msra.mxu0 %v3492
          %5529 = vmatprep.subr.bf16.mxu0 0
          %5530 = vmatpush1.bf16.msra.mxu0 %v3493
          %5531 = vmatprep.subr.bf16.mxu0 0
          %5532 = vmatpush1.bf16.msra.mxu0 %v3494
          %5533 = vmatprep.subr.bf16.mxu0 0
          %5534 = vmatpush1.bf16.msra.mxu0 %v3495
          %5535 = vmatprep.subr.bf16.mxu0 0
          %5536 = vmatpush1.bf16.msra.mxu0 %v3496
          %5537 = vmatprep.subr.bf16.mxu0 0
          %5538 = vmatpush1.bf16.msra.mxu0 %v3497
          %5539 = vmatprep.subr.bf16.mxu0 0
          %5540 = vmatpush1.bf16.msra.mxu0 %v3498
          %5541 = vmatprep.subr.bf16.mxu0 0
          %5542 = vmatpush1.bf16.msra.mxu0 %v3499
          %5543 = vmatprep.subr.bf16.mxu0 0
          %5544 = vmatpush1.bf16.msra.mxu0 %v3500
          %5545 = vmatprep.subr.bf16.mxu0 0
          %5546 = vmatpush1.bf16.msra.mxu0 %v3557
          %5547 = vmatprep.subr.bf16.mxu0 0
          %5548 = vmatpush1.bf16.msra.mxu0 0
          %5549 = vmatprep.subr.bf16.mxu0 0
          %5550 = vmatpush1.bf16.msra.mxu0 0
          %5551 = vmatprep.subr.bf16.mxu0 0
          %5552 = vmatpush1.bf16.msra.mxu0 0
          %5553 = vmatprep.mubr.bf16.mxu0 %v5510
          %5554 = vmatmul.mubr.bf16.gmra.mrb[0].mxu0 %v5497
          %v5555 = vpop.f32.mrb[0].mxu0
          %v5556 = vadd.f32 0.0, %v5555
          %v5557 = vpop.f32.mrb[0].mxu0
          %v5558 = vpop.f32.mrb[0].mxu0
          %v5559 = vadd.f32 0.0, %v5558
          %v5560 = vpop.f32.mrb[0].mxu0
          %5561 = vmatprep.mubr.bf16.mxu0 %v5513
          %5562 = vmatmul.mubr.bf16.gmra.mrb[0].mxu0 %v5499
          %v5563 = vpop.f32.mrb[0].mxu0
          %v5564 = vadd.f32 0.0, %v5563
          %v5565 = vpop.f32.mrb[0].mxu0
          %v5566 = vpop.f32.mrb[0].mxu0
          %v5567 = vadd.f32 0.0, %v5566
          %v5568 = vpop.f32.mrb[0].mxu0
          %5569 = vmatprep.mubr.bf16.mxu0 %v5516
          %5570 = vmatmul.mubr.bf16.gmra.mrb[0].mxu0 %v5501
          %v5571 = vpop.f32.mrb[0].mxu0
          %v5572 = vadd.f32 0.0, %v5571
          %v5573 = vpop.f32.mrb[0].mxu0
          %v5574 = vpop.f32.mrb[0].mxu0
          %v5575 = vadd.f32 0.0, %v5574
          %v5576 = vpop.f32.mrb[0].mxu0
          %5577 = vmatprep.mubr.bf16.mxu0 %v5519
          %5578 = vmatmul.mubr.bf16.gmra.mrb[0].mxu0 %v5503
          %v5579 = vpop.f32.mrb[0].mxu0
          %v5580 = vadd.f32 0.0, %v5579
          %v5581 = vpop.f32.mrb[0].mxu0
          %v5582 = vpop.f32.mrb[0].mxu0
          %v5583 = vpop.f32.mrb[0].mxu0
          %5584 = vdwg.mxu0
          %s5585 = scalar_lea.vmem %s4, 64
          %v5586 = vld [vmem:[%s5585] sm:$0xff]
          %v5588 = vsel %vm3743, %v5556, 0
          %v5591 = vsel %vm3743, %v5559, 0
          %v5594 = vsel %vm3743, %v5564, 0
          %v5597 = vsel %vm3743, %v5567, 0
          %v5600 = vsel %vm3743, %v5572, 0
          %v5603 = vsel %vm3743, %v5575, 0
          %v5606 = vsel %vm3743, %v5580, 0
          %5608 = vmatprep.subr.mxu0 0.0
          %5609 = vmatpush1.msra.mxu0 %v5586
          %5610 = vmatprep.subr.mxu0 0.0
          %5611 = vmatpush1.msra.mxu0 0.0
          %5612 = vmatprep.subr.mxu0 0.0
          %5613 = vmatpush1.msra.mxu0 0.0
          %5614 = vmatprep.subr.mxu0 0.0
          %5615 = vmatpush1.msra.mxu0 0.0
          %5616 = vmatprep.subr.mxu0 0.0
          %5617 = vmatpush1.msra.mxu0 0.0
          %5618 = vmatprep.subr.mxu0 0.0
          %5619 = vmatpush1.msra.mxu0 0.0
          %5620 = vmatprep.subr.mxu0 0.0
          %5621 = vmatpush1.msra.mxu0 0.0
          %5622 = vmatprep.subr.mxu0 0.0
          %5623 = vmatpush1.msra.mxu0 0.0
          %5624 = vmatprep.subr.mxu0 0.0
          %5625 = vmatpush1.msra.mxu0 0.0
          %5626 = vmatprep.subr.mxu0 0.0
          %5627 = vmatpush1.msra.mxu0 0.0
          %5628 = vmatprep.subr.mxu0 0.0
          %5629 = vmatpush1.msra.mxu0 0.0
          %5630 = vmatprep.subr.mxu0 0.0
          %5631 = vmatpush1.msra.mxu0 0.0
          %5632 = vmatprep.subr.mxu0 0.0
          %5633 = vmatpush1.msra.mxu0 0.0
          %5634 = vmatprep.subr.mxu0 0.0
          %5635 = vmatpush1.msra.mxu0 0.0
          %5636 = vmatprep.subr.mxu0 0.0
          %5637 = vmatpush1.msra.mxu0 0.0
          %5638 = vmatprep.subr.mxu0 0.0
          %5639 = vmatpush1.msra.mxu0 0.0
          %5640 = vmatprep.subr.mxu0 0.0
          %5641 = vmatpush1.msra.mxu0 0.0
          %5642 = vmatprep.subr.mxu0 0.0
          %5643 = vmatpush1.msra.mxu0 0.0
          %5644 = vmatprep.subr.mxu0 0.0
          %5645 = vmatpush1.msra.mxu0 0.0
          %5646 = vmatprep.subr.mxu0 0.0
          %5647 = vmatpush1.msra.mxu0 0.0
          %5648 = vmatprep.subr.mxu0 0.0
          %5649 = vmatpush1.msra.mxu0 0.0
          %5650 = vmatprep.subr.mxu0 0.0
          %5651 = vmatpush1.msra.mxu0 0.0
          %5652 = vmatprep.subr.mxu0 0.0
          %5653 = vmatpush1.msra.mxu0 0.0
          %5654 = vmatprep.subr.mxu0 0.0
          %5655 = vmatpush1.msra.mxu0 0.0
          %5656 = vmatprep.subr.mxu0 0.0
          %5657 = vmatpush1.msra.mxu0 0.0
          %5658 = vmatprep.subr.mxu0 0.0
          %5659 = vmatpush1.msra.mxu0 0.0
          %5660 = vmatprep.subr.mxu0 0.0
          %5661 = vmatpush1.msra.mxu0 0.0
          %5662 = vmatprep.subr.mxu0 0.0
          %5663 = vmatpush1.msra.mxu0 0.0
          %5664 = vmatprep.subr.mxu0 0.0
          %5665 = vmatpush1.msra.mxu0 0.0
          %5666 = vmatprep.subr.mxu0 0.0
          %5667 = vmatpush1.msra.mxu0 0.0
          %5668 = vmatprep.subr.mxu0 0.0
          %5669 = vmatpush1.msra.mxu0 0.0
          %5670 = vmatprep.subr.mxu0 0.0
          %5671 = vmatpush1.msra.mxu0 0.0
          %5672 = vmatprep.mubr.f32.mxu0 0.0
          %5673 = vmatmul.mubr.f32.gmra.mrb[0].mxu0 %v5588
          %v5674 = vpop.f32.mrb[0].mxu0
          %v5675 = vadd.f32 0.0, %v5674
          %v5676 = vpop.f32.mrb[0].mxu0
          %5677 = vmatprep.mubr.f32.mxu0 0.0
          %5678 = vmatmul.mubr.f32.gmra.mrb[0].mxu0 %v5591
          %v5679 = vpop.f32.mrb[0].mxu0
          %v5680 = vadd.f32 0.0, %v5679
          %v5681 = vpop.f32.mrb[0].mxu0
          %5682 = vmatprep.mubr.f32.mxu0 0.0
          %5683 = vmatmul.mubr.f32.gmra.mrb[0].mxu0 %v5594
          %v5684 = vpop.f32.mrb[0].mxu0
          %v5685 = vadd.f32 0.0, %v5684
          %v5686 = vpop.f32.mrb[0].mxu0
          %5687 = vmatprep.mubr.f32.mxu0 0.0
          %5688 = vmatmul.mubr.f32.gmra.mrb[0].mxu0 %v5597
          %v5689 = vpop.f32.mrb[0].mxu0
          %v5690 = vadd.f32 0.0, %v5689
          %v5691 = vpop.f32.mrb[0].mxu0
          %5692 = vmatprep.mubr.f32.mxu0 0.0
          %5693 = vmatmul.mubr.f32.gmra.mrb[0].mxu0 %v5600
          %v5694 = vpop.f32.mrb[0].mxu0
          %v5695 = vadd.f32 0.0, %v5694
          %v5696 = vpop.f32.mrb[0].mxu0
          %5697 = vmatprep.mubr.f32.mxu0 0.0
          %5698 = vmatmul.mubr.f32.gmra.mrb[0].mxu0 %v5603
          %v5699 = vpop.f32.mrb[0].mxu0
          %v5700 = vadd.f32 0.0, %v5699
          %v5701 = vpop.f32.mrb[0].mxu0
          %5702 = vmatprep.mubr.f32.mxu0 0.0
          %5703 = vmatmul.mubr.f32.gmra.mrb[0].mxu0 %v5606
          %v5704 = vpop.f32.mrb[0].mxu0
          %v5705 = vadd.f32 0.0, %v5704
          %v5706 = vpop.f32.mrb[0].mxu0
          %5707 = vdwg.mxu0
          %v5708 = vadd.f32 %v5461, %v5675
          %v5709 = vadd.f32 %v5462, %v5680
          %v5710 = vadd.f32 %v5463, %v5685
          %v5711 = vadd.f32 %v5464, %v5690
          %v5712 = vadd.f32 %v5465, %v5695
          %v5713 = vadd.f32 %v5466, %v5700
          %v5714 = vadd.f32 %v5467, %v5705
          %v5715 = vld [vmem:[%s5] sm:$0x1]
          %v5717 = vlaneseq
          %v5718 = vshrl.u32 %v5717, 7
          %v5719 = vsub.s32 0, %v5718
          %v5720 = vrot.slane %v5715, %v5719
          %v5722 = vadd.f32 %v5708, %v5720
          %v5723 = vadd.f32 %v5709, %v5720
          %v5724 = vadd.f32 %v5710, %v5720
          %v5725 = vadd.f32 %v5711, %v5720
          %v5726 = vadd.f32 %v5712, %v5720
          %v5727 = vadd.f32 %v5713, %v5720
          %v5728 = vadd.f32 %v5714, %v5720
          %v5729 = vld [vmem:[#allocation2] sm:$0x1]
          %v5731 = vlaneseq
          %v5732 = vshrl.u32 %v5731, 7
          %v5733 = vsub.s32 0, %v5732
          %v5734 = vrot.slane %v5729, %v5733
          %v5736 = vsub.f32 %v5722, %v5734
          %v5737 = vsub.f32 %v5723, %v5734
          %v5738 = vsub.f32 %v5724, %v5734
          %v5739 = vsub.f32 %v5725, %v5734
          %v5740 = vsub.f32 %v5726, %v5734
          %v5741 = vsub.f32 %v5727, %v5734
          %v5742 = vsub.f32 %v5728, %v5734
          %v5743 = vld [vmem:[#allocation3] sm:$0x1]
          %v5745 = vlaneseq
          %v5746 = vshrl.u32 %v5745, 7
          %v5747 = vsub.s32 0, %v5746
          %v5748 = vrot.slane %v5743, %v5747
          %v5750 = vmul.f32 %v5736, %v5748
          %v5751 = vmul.f32 %v5737, %v5748
          %v5752 = vmul.f32 %v5738, %v5748
          %v5753 = vmul.f32 %v5739, %v5748
          %v5754 = vmul.f32 %v5740, %v5748
          %v5755 = vmul.f32 %v5741, %v5748
          %v5756 = vmul.f32 %v5742, %v5748
          %v5757 = vld [vmem:[%s6] sm:$0x1]
          %v5759 = vlaneseq
          %v5760 = vshrl.u32 %v5759, 7
          %v5761 = vsub.s32 0, %v5760
          %v5762 = vrot.slane %v5757, %v5761
          %v5764 = vmul.f32 %v5750, %v5762
          %v5765 = vmul.f32 %v5751, %v5762
          %v5766 = vmul.f32 %v5752, %v5762
          %v5767 = vmul.f32 %v5753, %v5762
          %v5768 = vmul.f32 %v5754, %v5762
          %v5769 = vmul.f32 %v5755, %v5762
          %v5770 = vmul.f32 %v5756, %v5762
          %v5771 = vld [vmem:[%s7] sm:$0x1]
          %v5773 = vlaneseq
          %v5774 = vshrl.u32 %v5773, 7
          %v5775 = vsub.s32 0, %v5774
          %v5776 = vrot.slane %v5771, %v5775
          %v5778 = vadd.f32 %v5764, %v5776
          %v5779 = vadd.f32 %v5765, %v5776
          %v5780 = vadd.f32 %v5766, %v5776
          %v5781 = vadd.f32 %v5767, %v5776
          %v5782 = vadd.f32 %v5768, %v5776
          %v5783 = vadd.f32 %v5769, %v5776
          %v5784 = vadd.f32 %v5770, %v5776
          %v5785 = vmax.f32 %v5778, 0.0
          %v5786 = vmax.f32 %v5779, 0.0
          %v5787 = vmax.f32 %v5780, 0.0
          %v5788 = vmax.f32 %v5781, 0.0
          %v5789 = vmax.f32 %v5782, 0.0
          %v5790 = vmax.f32 %v5783, 0.0
          %v5791 = vmax.f32 %v5784, 0.0
          %v5792 = vpack.c.bf16 %v5786, %v5785
          %v5793 = vpack.c.bf16 %v5788, %v5787
          %v5794 = vpack.c.bf16 %v5790, %v5789
          %v5795 = vpack.c.bf16 %v5791, %v5791
          %v5796 = vld [vmem:[%s8] sm:$0xf]
          %v5797 = vld [vmem:[%s8 + $0x4] sm:$0x1]
          %v5800 = vunpack.c.l.b16 %v5796
          %v5801 = vunpack.c.l.b16 %v5797
          %v5802 = vpack.c.b16 %v5801, %v5800
          %vm5803 = vcmask 400384
          %v5805 = vsel %vm5803, %v5802, 0
          %v5807 = vsel 0, 4294967295, 65535
          %v5808 = vsel %vm3270, %v5807, 0
          %v5810 = vand.u32 %v5795, %v5808
          %5812 = vmatprep.subr.bf16.mxu0 0
          %5813 = vmatpush1.bf16.msra.mxu0 %v5792
          %5814 = vmatprep.subr.bf16.mxu0 0
          %5815 = vmatpush1.bf16.msra.mxu0 %v5793
          %5816 = vmatprep.subr.bf16.mxu0 0
          %5817 = vmatpush1.bf16.msra.mxu0 %v5794
          %5818 = vmatprep.subr.bf16.mxu0 0
          %5819 = vmatpush1.bf16.msra.mxu0 %v5810
          %5820 = vmatprep.subr.bf16.mxu0 0
          %5821 = vmatpush1.bf16.msra.mxu0 0
          %5822 = vmatprep.subr.bf16.mxu0 0
          %5823 = vmatpush1.bf16.msra.mxu0 0
          %5824 = vmatprep.subr.bf16.mxu0 0
          %5825 = vmatpush1.bf16.msra.mxu0 0
          %5826 = vmatprep.subr.bf16.mxu0 0
          %5827 = vmatpush1.bf16.msra.mxu0 0
          %5828 = vmatprep.subr.bf16.mxu0 0
          %5829 = vmatpush1.bf16.msra.mxu0 0
          %5830 = vmatprep.subr.bf16.mxu0 0
          %5831 = vmatpush1.bf16.msra.mxu0 0
          %5832 = vmatprep.subr.bf16.mxu0 0
          %5833 = vmatpush1.bf16.msra.mxu0 0
          %5834 = vmatprep.subr.bf16.mxu0 0
          %5835 = vmatpush1.bf16.msra.mxu0 0
          %5836 = vmatprep.subr.bf16.mxu0 0
          %5837 = vmatpush1.bf16.msra.mxu0 0
          %5838 = vmatprep.subr.bf16.mxu0 0
          %5839 = vmatpush1.bf16.msra.mxu0 0
          %5840 = vmatprep.subr.bf16.mxu0 0
          %5841 = vmatpush1.bf16.msra.mxu0 0
          %5842 = vmatprep.subr.bf16.mxu0 0
          %5843 = vmatpush1.bf16.msra.mxu0 0
          %5844 = vmatprep.mubr.bf16.mxu0 0
          %5845 = vmatmul.mubr.bf16.gmra.mrb[0].mxu0 %v5805
          %v5846 = vpop.f32.mrb[0].mxu0
          %v5847 = vadd.f32 0.0, %v5846
          %v5848 = vpop.f32.mrb[0].mxu0
          %v5849 = vpop.f32.mrb[0].mxu0
          %v5850 = vadd.f32 0.0, %v5849
          %v5851 = vpop.f32.mrb[0].mxu0
          %5852 = vdwg.mxu0
          %v5853 = vld [vmem:[%s9] sm:$0xff]
          %v5854 = vld [vmem:[%s9 + $0x8] sm:$0xff]
          %s5855 = scalar_lea.vmem %s8, 8
          %v5856 = vld [vmem:[%s5855] sm:$0xf]
          %v5857 = vld [vmem:[%s5855 + $0x4] sm:$0x1]
          %v5860 = vunpack.c.l.b16 %v5856
          %v5861 = vunpack.c.l.b16 %v5857
          %v5862 = vpack.c.b16 %v5861, %v5860
          %v5864 = vsel %vm5803, %v5862, 0
          %5866 = vmatprep.subr.bf16.mxu0 0
          %5867 = vmatpush1.bf16.msra.mxu0 %v5792
          %5868 = vmatprep.subr.bf16.mxu0 0
          %5869 = vmatpush1.bf16.msra.mxu0 %v5793
          %5870 = vmatprep.subr.bf16.mxu0 0
          %5871 = vmatpush1.bf16.msra.mxu0 %v5794
          %5872 = vmatprep.subr.bf16.mxu0 0
          %5873 = vmatpush1.bf16.msra.mxu0 %v5810
          %5874 = vmatprep.subr.bf16.mxu0 0
          %5875 = vmatpush1.bf16.msra.mxu0 0
          %5876 = vmatprep.subr.bf16.mxu0 0
          %5877 = vmatpush1.bf16.msra.mxu0 0
          %5878 = vmatprep.subr.bf16.mxu0 0
          %5879 = vmatpush1.bf16.msra.mxu0 0
          %5880 = vmatprep.subr.bf16.mxu0 0
          %5881 = vmatpush1.bf16.msra.mxu0 0
          %5882 = vmatprep.subr.bf16.mxu0 0
          %5883 = vmatpush1.bf16.msra.mxu0 0
          %5884 = vmatprep.subr.bf16.mxu0 0
          %5885 = vmatpush1.bf16.msra.mxu0 0
          %5886 = vmatprep.subr.bf16.mxu0 0
          %5887 = vmatpush1.bf16.msra.mxu0 0
          %5888 = vmatprep.subr.bf16.mxu0 0
          %5889 = vmatpush1.bf16.msra.mxu0 0
          %5890 = vmatprep.subr.bf16.mxu0 0
          %5891 = vmatpush1.bf16.msra.mxu0 0
          %5892 = vmatprep.subr.bf16.mxu0 0
          %5893 = vmatpush1.bf16.msra.mxu0 0
          %5894 = vmatprep.subr.bf16.mxu0 0
          %5895 = vmatpush1.bf16.msra.mxu0 0
          %5896 = vmatprep.subr.bf16.mxu0 0
          %5897 = vmatpush1.bf16.msra.mxu0 0
          %5898 = vmatprep.mubr.bf16.mxu0 0
          %5899 = vmatmul.mubr.bf16.gmra.mrb[0].mxu0 %v5864
          %v5900 = vpop.f32.mrb[0].mxu0
          %v5901 = vadd.f32 0.0, %v5900
          %v5902 = vpop.f32.mrb[0].mxu0
          %v5903 = vpop.f32.mrb[0].mxu0
          %v5904 = vadd.f32 0.0, %v5903
          %v5905 = vpop.f32.mrb[0].mxu0
          %5906 = vdwg.mxu0
          %s5907 = scalar_lea.vmem %s9, 16
          %v5908 = vld [vmem:[%s5907] sm:$0xff]
          %v5909 = vld [vmem:[%s5907 + $0x8] sm:$0xff]
          %vm5910 = vcmask 130048
          %v5912 = vsel %vm5910, %v5901, 0
          %v5915 = vsel %vm5910, %v5904, 0
          %5917 = vmatprep.subr.mxu0 0.0
          %5918 = vmatpush1.msra.mxu0 %v5908
          %5919 = vmatprep.subr.mxu0 0.0
          %5920 = vmatpush1.msra.mxu0 %v5909
          %5921 = vmatprep.subr.mxu0 0.0
          %5922 = vmatpush1.msra.mxu0 0.0
          %5923 = vmatprep.subr.mxu0 0.0
          %5924 = vmatpush1.msra.mxu0 0.0
          %5925 = vmatprep.subr.mxu0 0.0
          %5926 = vmatpush1.msra.mxu0 0.0
          %5927 = vmatprep.subr.mxu0 0.0
          %5928 = vmatpush1.msra.mxu0 0.0
          %5929 = vmatprep.subr.mxu0 0.0
          %5930 = vmatpush1.msra.mxu0 0.0
          %5931 = vmatprep.subr.mxu0 0.0
          %5932 = vmatpush1.msra.mxu0 0.0
          %5933 = vmatprep.subr.mxu0 0.0
          %5934 = vmatpush1.msra.mxu0 0.0
          %5935 = vmatprep.subr.mxu0 0.0
          %5936 = vmatpush1.msra.mxu0 0.0
          %5937 = vmatprep.subr.mxu0 0.0
          %5938 = vmatpush1.msra.mxu0 0.0
          %5939 = vmatprep.subr.mxu0 0.0
          %5940 = vmatpush1.msra.mxu0 0.0
          %5941 = vmatprep.subr.mxu0 0.0
          %5942 = vmatpush1.msra.mxu0 0.0
          %5943 = vmatprep.subr.mxu0 0.0
          %5944 = vmatpush1.msra.mxu0 0.0
          %5945 = vmatprep.subr.mxu0 0.0
          %5946 = vmatpush1.msra.mxu0 0.0
          %5947 = vmatprep.subr.mxu0 0.0
          %5948 = vmatpush1.msra.mxu0 0.0
          %5949 = vmatprep.subr.mxu0 0.0
          %5950 = vmatpush1.msra.mxu0 0.0
          %5951 = vmatprep.subr.mxu0 0.0
          %5952 = vmatpush1.msra.mxu0 0.0
          %5953 = vmatprep.subr.mxu0 0.0
          %5954 = vmatpush1.msra.mxu0 0.0
          %5955 = vmatprep.subr.mxu0 0.0
          %5956 = vmatpush1.msra.mxu0 0.0
          %5957 = vmatprep.subr.mxu0 0.0
          %5958 = vmatpush1.msra.mxu0 0.0
          %5959 = vmatprep.subr.mxu0 0.0
          %5960 = vmatpush1.msra.mxu0 0.0
          %5961 = vmatprep.subr.mxu0 0.0
          %5962 = vmatpush1.msra.mxu0 0.0
          %5963 = vmatprep.subr.mxu0 0.0
          %5964 = vmatpush1.msra.mxu0 0.0
          %5965 = vmatprep.subr.mxu0 0.0
          %5966 = vmatpush1.msra.mxu0 0.0
          %5967 = vmatprep.subr.mxu0 0.0
          %5968 = vmatpush1.msra.mxu0 0.0
          %5969 = vmatprep.subr.mxu0 0.0
          %5970 = vmatpush1.msra.mxu0 0.0
          %5971 = vmatprep.subr.mxu0 0.0
          %5972 = vmatpush1.msra.mxu0 0.0
          %5973 = vmatprep.subr.mxu0 0.0
          %5974 = vmatpush1.msra.mxu0 0.0
          %5975 = vmatprep.subr.mxu0 0.0
          %5976 = vmatpush1.msra.mxu0 0.0
          %5977 = vmatprep.subr.mxu0 0.0
          %5978 = vmatpush1.msra.mxu0 0.0
          %5979 = vmatprep.subr.mxu0 0.0
          %5980 = vmatpush1.msra.mxu0 0.0
          %5981 = vmatprep.mubr.f32.mxu0 0.0
          %5982 = vmatmul.mubr.f32.gmra.mrb[0].mxu0 %v5912
          %v5983 = vpop.f32.mrb[0].mxu0
          %v5984 = vadd.f32 0.0, %v5983
          %v5985 = vpop.f32.mrb[0].mxu0
          %5986 = vmatprep.mubr.f32.mxu0 0.0
          %5987 = vmatmul.mubr.f32.gmra.mrb[0].mxu0 %v5915
          %v5988 = vpop.f32.mrb[0].mxu0
          %v5989 = vadd.f32 0.0, %v5988
          %v5990 = vpop.f32.mrb[0].mxu0
          %5991 = vdwg.mxu0
          %v5993 = vsel %vm5910, %v5847, 0
          %v5996 = vsel %vm5910, %v5850, 0
          %5998 = vmatprep.subr.mxu0 0.0
          %5999 = vmatpush1.msra.mxu0 %v5853
          %6000 = vmatprep.subr.mxu0 0.0
          %6001 = vmatpush1.msra.mxu0 %v5854
          %6002 = vmatprep.subr.mxu0 0.0
          %6003 = vmatpush1.msra.mxu0 0.0
          %6004 = vmatprep.subr.mxu0 0.0
          %6005 = vmatpush1.msra.mxu0 0.0
          %6006 = vmatprep.subr.mxu0 0.0
          %6007 = vmatpush1.msra.mxu0 0.0
          %6008 = vmatprep.subr.mxu0 0.0
          %6009 = vmatpush1.msra.mxu0 0.0
          %6010 = vmatprep.subr.mxu0 0.0
          %6011 = vmatpush1.msra.mxu0 0.0
          %6012 = vmatprep.subr.mxu0 0.0
          %6013 = vmatpush1.msra.mxu0 0.0
          %6014 = vmatprep.subr.mxu0 0.0
          %6015 = vmatpush1.msra.mxu0 0.0
          %6016 = vmatprep.subr.mxu0 0.0
          %6017 = vmatpush1.msra.mxu0 0.0
          %6018 = vmatprep.subr.mxu0 0.0
          %6019 = vmatpush1.msra.mxu0 0.0
          %6020 = vmatprep.subr.mxu0 0.0
          %6021 = vmatpush1.msra.mxu0 0.0
          %6022 = vmatprep.subr.mxu0 0.0
          %6023 = vmatpush1.msra.mxu0 0.0
          %6024 = vmatprep.subr.mxu0 0.0
          %6025 = vmatpush1.msra.mxu0 0.0
          %6026 = vmatprep.subr.mxu0 0.0
          %6027 = vmatpush1.msra.mxu0 0.0
          %6028 = vmatprep.subr.mxu0 0.0
          %6029 = vmatpush1.msra.mxu0 0.0
          %6030 = vmatprep.subr.mxu0 0.0
          %6031 = vmatpush1.msra.mxu0 0.0
          %6032 = vmatprep.subr.mxu0 0.0
          %6033 = vmatpush1.msra.mxu0 0.0
          %6034 = vmatprep.subr.mxu0 0.0
          %6035 = vmatpush1.msra.mxu0 0.0
          %6036 = vmatprep.subr.mxu0 0.0
          %6037 = vmatpush1.msra.mxu0 0.0
          %6038 = vmatprep.subr.mxu0 0.0
          %6039 = vmatpush1.msra.mxu0 0.0
          %6040 = vmatprep.subr.mxu0 0.0
          %6041 = vmatpush1.msra.mxu0 0.0
          %6042 = vmatprep.subr.mxu0 0.0
          %6043 = vmatpush1.msra.mxu0 0.0
          %6044 = vmatprep.subr.mxu0 0.0
          %6045 = vmatpush1.msra.mxu0 0.0
          %6046 = vmatprep.subr.mxu0 0.0
          %6047 = vmatpush1.msra.mxu0 0.0
          %6048 = vmatprep.subr.mxu0 0.0
          %6049 = vmatpush1.msra.mxu0 0.0
          %6050 = vmatprep.subr.mxu0 0.0
          %6051 = vmatpush1.msra.mxu0 0.0
          %6052 = vmatprep.subr.mxu0 0.0
          %6053 = vmatpush1.msra.mxu0 0.0
          %6054 = vmatprep.subr.mxu0 0.0
          %6055 = vmatpush1.msra.mxu0 0.0
          %6056 = vmatprep.subr.mxu0 0.0
          %6057 = vmatpush1.msra.mxu0 0.0
          %6058 = vmatprep.subr.mxu0 0.0
          %6059 = vmatpush1.msra.mxu0 0.0
          %6060 = vmatprep.subr.mxu0 0.0
          %6061 = vmatpush1.msra.mxu0 0.0
          %6062 = vmatprep.mubr.f32.mxu0 0.0
          %6063 = vmatmul.mubr.f32.gmra.mrb[0].mxu0 %v5993
          %v6064 = vpop.f32.mrb[0].mxu0
          %v6065 = vadd.f32 %v5984, %v6064
          %v6066 = vpop.f32.mrb[0].mxu0
          %6067 = vmatprep.mubr.f32.mxu0 0.0
          %6068 = vmatmul.mubr.f32.gmra.mrb[0].mxu0 %v5996
          %v6069 = vpop.f32.mrb[0].mxu0
          %v6070 = vadd.f32 %v5989, %v6069
          %v6071 = vpop.f32.mrb[0].mxu0
          %6072 = vdwg.mxu0
          %s6073 = scalar_lea.vmem %s8, 16
          %v6074 = vld [vmem:[%s6073] sm:$0xf]
          %v6075 = vld [vmem:[%s6073 + $0x4] sm:$0x1]
          %v6078 = vunpack.c.l.b16 %v6074
          %v6079 = vunpack.c.l.b16 %v6075
          %v6080 = vpack.c.b16 %v6079, %v6078
          %v6082 = vsel %vm5803, %v6080, 0
          %6084 = vmatprep.subr.bf16.mxu0 0
          %6085 = vmatpush1.bf16.msra.mxu0 %v5792
          %6086 = vmatprep.subr.bf16.mxu0 0
          %6087 = vmatpush1.bf16.msra.mxu0 %v5793
          %6088 = vmatprep.subr.bf16.mxu0 0
          %6089 = vmatpush1.bf16.msra.mxu0 %v5794
          %6090 = vmatprep.subr.bf16.mxu0 0
          %6091 = vmatpush1.bf16.msra.mxu0 %v5810
          %6092 = vmatprep.subr.bf16.mxu0 0
          %6093 = vmatpush1.bf16.msra.mxu0 0
          %6094 = vmatprep.subr.bf16.mxu0 0
          %6095 = vmatpush1.bf16.msra.mxu0 0
          %6096 = vmatprep.subr.bf16.mxu0 0
          %6097 = vmatpush1.bf16.msra.mxu0 0
          %6098 = vmatprep.subr.bf16.mxu0 0
          %6099 = vmatpush1.bf16.msra.mxu0 0
          %6100 = vmatprep.subr.bf16.mxu0 0
          %6101 = vmatpush1.bf16.msra.mxu0 0
          %6102 = vmatprep.subr.bf16.mxu0 0
          %6103 = vmatpush1.bf16.msra.mxu0 0
          %6104 = vmatprep.subr.bf16.mxu0 0
          %6105 = vmatpush1.bf16.msra.mxu0 0
          %6106 = vmatprep.subr.bf16.mxu0 0
          %6107 = vmatpush1.bf16.msra.mxu0 0
          %6108 = vmatprep.subr.bf16.mxu0 0
          %6109 = vmatpush1.bf16.msra.mxu0 0
          %6110 = vmatprep.subr.bf16.mxu0 0
          %6111 = vmatpush1.bf16.msra.mxu0 0
          %6112 = vmatprep.subr.bf16.mxu0 0
          %6113 = vmatpush1.bf16.msra.mxu0 0
          %6114 = vmatprep.subr.bf16.mxu0 0
          %6115 = vmatpush1.bf16.msra.mxu0 0
          %6116 = vmatprep.mubr.bf16.mxu0 0
          %6117 = vmatmul.mubr.bf16.gmra.mrb[0].mxu0 %v6082
          %v6118 = vpop.f32.mrb[0].mxu0
          %v6119 = vadd.f32 0.0, %v6118
          %v6120 = vpop.f32.mrb[0].mxu0
          %v6121 = vpop.f32.mrb[0].mxu0
          %v6122 = vadd.f32 0.0, %v6121
          %v6123 = vpop.f32.mrb[0].mxu0
          %6124 = vdwg.mxu0
          %s6125 = scalar_lea.vmem %s9, 32
          %v6126 = vld [vmem:[%s6125] sm:$0xff]
          %v6127 = vld [vmem:[%s6125 + $0x8] sm:$0xff]
          %v6129 = vsel %vm5910, %v6119, 0
          %v6132 = vsel %vm5910, %v6122, 0
          %6134 = vmatprep.subr.mxu0 0.0
          %6135 = vmatpush1.msra.mxu0 %v6126
          %6136 = vmatprep.subr.mxu0 0.0
          %6137 = vmatpush1.msra.mxu0 %v6127
          %6138 = vmatprep.subr.mxu0 0.0
          %6139 = vmatpush1.msra.mxu0 0.0
          %6140 = vmatprep.subr.mxu0 0.0
          %6141 = vmatpush1.msra.mxu0 0.0
          %6142 = vmatprep.subr.mxu0 0.0
          %6143 = vmatpush1.msra.mxu0 0.0
          %6144 = vmatprep.subr.mxu0 0.0
          %6145 = vmatpush1.msra.mxu0 0.0
          %6146 = vmatprep.subr.mxu0 0.0
          %6147 = vmatpush1.msra.mxu0 0.0
          %6148 = vmatprep.subr.mxu0 0.0
          %6149 = vmatpush1.msra.mxu0 0.0
          %6150 = vmatprep.subr.mxu0 0.0
          %6151 = vmatpush1.msra.mxu0 0.0
          %6152 = vmatprep.subr.mxu0 0.0
          %6153 = vmatpush1.msra.mxu0 0.0
          %6154 = vmatprep.subr.mxu0 0.0
          %6155 = vmatpush1.msra.mxu0 0.0
          %6156 = vmatprep.subr.mxu0 0.0
          %6157 = vmatpush1.msra.mxu0 0.0
          %6158 = vmatprep.subr.mxu0 0.0
          %6159 = vmatpush1.msra.mxu0 0.0
          %6160 = vmatprep.subr.mxu0 0.0
          %6161 = vmatpush1.msra.mxu0 0.0
          %6162 = vmatprep.subr.mxu0 0.0
          %6163 = vmatpush1.msra.mxu0 0.0
          %6164 = vmatprep.subr.mxu0 0.0
          %6165 = vmatpush1.msra.mxu0 0.0
          %6166 = vmatprep.subr.mxu0 0.0
          %6167 = vmatpush1.msra.mxu0 0.0
          %6168 = vmatprep.subr.mxu0 0.0
          %6169 = vmatpush1.msra.mxu0 0.0
          %6170 = vmatprep.subr.mxu0 0.0
          %6171 = vmatpush1.msra.mxu0 0.0
          %6172 = vmatprep.subr.mxu0 0.0
          %6173 = vmatpush1.msra.mxu0 0.0
          %6174 = vmatprep.subr.mxu0 0.0
          %6175 = vmatpush1.msra.mxu0 0.0
          %6176 = vmatprep.subr.mxu0 0.0
          %6177 = vmatpush1.msra.mxu0 0.0
          %6178 = vmatprep.subr.mxu0 0.0
          %6179 = vmatpush1.msra.mxu0 0.0
          %6180 = vmatprep.subr.mxu0 0.0
          %6181 = vmatpush1.msra.mxu0 0.0
          %6182 = vmatprep.subr.mxu0 0.0
          %6183 = vmatpush1.msra.mxu0 0.0
          %6184 = vmatprep.subr.mxu0 0.0
          %6185 = vmatpush1.msra.mxu0 0.0
          %6186 = vmatprep.subr.mxu0 0.0
          %6187 = vmatpush1.msra.mxu0 0.0
          %6188 = vmatprep.subr.mxu0 0.0
          %6189 = vmatpush1.msra.mxu0 0.0
          %6190 = vmatprep.subr.mxu0 0.0
          %6191 = vmatpush1.msra.mxu0 0.0
          %6192 = vmatprep.subr.mxu0 0.0
          %6193 = vmatpush1.msra.mxu0 0.0
          %6194 = vmatprep.subr.mxu0 0.0
          %6195 = vmatpush1.msra.mxu0 0.0
          %6196 = vmatprep.subr.mxu0 0.0
          %6197 = vmatpush1.msra.mxu0 0.0
          %6198 = vmatprep.mubr.f32.mxu0 0.0
          %6199 = vmatmul.mubr.f32.gmra.mrb[0].mxu0 %v6129
          %v6200 = vpop.f32.mrb[0].mxu0
          %v6201 = vadd.f32 0.0, %v6200
          %v6202 = vpop.f32.mrb[0].mxu0
          %6203 = vmatprep.mubr.f32.mxu0 0.0
          %6204 = vmatmul.mubr.f32.gmra.mrb[0].mxu0 %v6132
          %v6205 = vpop.f32.mrb[0].mxu0
          %v6206 = vadd.f32 0.0, %v6205
          %v6207 = vpop.f32.mrb[0].mxu0
          %6208 = vdwg.mxu0
          %v6209 = vadd.f32 %v6065, %v6201
          %v6210 = vadd.f32 %v6070, %v6206
          %s6211 = scalar_lea.vmem %s8, 24
          %v6212 = vld [vmem:[%s6211] sm:$0xf]
          %v6213 = vld [vmem:[%s6211 + $0x4] sm:$0x1]
          %v6216 = vunpack.c.l.b16 %v6212
          %v6217 = vunpack.c.l.b16 %v6213
          %v6218 = vpack.c.b16 %v6217, %v6216
          %v6220 = vsel %vm5803, %v6218, 0
          %6222 = vmatprep.subr.bf16.mxu0 0
          %6223 = vmatpush1.bf16.msra.mxu0 %v5792
          %6224 = vmatprep.subr.bf16.mxu0 0
          %6225 = vmatpush1.bf16.msra.mxu0 %v5793
          %6226 = vmatprep.subr.bf16.mxu0 0
          %6227 = vmatpush1.bf16.msra.mxu0 %v5794
          %6228 = vmatprep.subr.bf16.mxu0 0
          %6229 = vmatpush1.bf16.msra.mxu0 %v5810
          %6230 = vmatprep.subr.bf16.mxu0 0
          %6231 = vmatpush1.bf16.msra.mxu0 0
          %6232 = vmatprep.subr.bf16.mxu0 0
          %6233 = vmatpush1.bf16.msra.mxu0 0
          %6234 = vmatprep.subr.bf16.mxu0 0
          %6235 = vmatpush1.bf16.msra.mxu0 0
          %6236 = vmatprep.subr.bf16.mxu0 0
          %6237 = vmatpush1.bf16.msra.mxu0 0
          %6238 = vmatprep.subr.bf16.mxu0 0
          %6239 = vmatpush1.bf16.msra.mxu0 0
          %6240 = vmatprep.subr.bf16.mxu0 0
          %6241 = vmatpush1.bf16.msra.mxu0 0
          %6242 = vmatprep.subr.bf16.mxu0 0
          %6243 = vmatpush1.bf16.msra.mxu0 0
          %6244 = vmatprep.subr.bf16.mxu0 0
          %6245 = vmatpush1.bf16.msra.mxu0 0
          %6246 = vmatprep.subr.bf16.mxu0 0
          %6247 = vmatpush1.bf16.msra.mxu0 0
          %6248 = vmatprep.subr.bf16.mxu0 0
          %6249 = vmatpush1.bf16.msra.mxu0 0
          %6250 = vmatprep.subr.bf16.mxu0 0
          %6251 = vmatpush1.bf16.msra.mxu0 0
          %6252 = vmatprep.subr.bf16.mxu0 0
          %6253 = vmatpush1.bf16.msra.mxu0 0
          %6254 = vmatprep.mubr.bf16.mxu0 0
          %6255 = vmatmul.mubr.bf16.gmra.mrb[0].mxu0 %v6220
          %v6256 = vpop.f32.mrb[0].mxu0
          %v6257 = vadd.f32 0.0, %v6256
          %v6258 = vpop.f32.mrb[0].mxu0
          %v6259 = vpop.f32.mrb[0].mxu0
          %v6260 = vadd.f32 0.0, %v6259
          %v6261 = vpop.f32.mrb[0].mxu0
          %6262 = vdwg.mxu0
          %s6263 = scalar_lea.vmem %s9, 48
          %v6264 = vld [vmem:[%s6263] sm:$0xff]
          %v6265 = vld [vmem:[%s6263 + $0x8] sm:$0xff]
          %v6267 = vsel %vm5910, %v6257, 0
          %v6270 = vsel %vm5910, %v6260, 0
          %6272 = vmatprep.subr.mxu0 0.0
          %6273 = vmatpush1.msra.mxu0 %v6264
          %6274 = vmatprep.subr.mxu0 0.0
          %6275 = vmatpush1.msra.mxu0 %v6265
          %6276 = vmatprep.subr.mxu0 0.0
          %6277 = vmatpush1.msra.mxu0 0.0
          %6278 = vmatprep.subr.mxu0 0.0
          %6279 = vmatpush1.msra.mxu0 0.0
          %6280 = vmatprep.subr.mxu0 0.0
          %6281 = vmatpush1.msra.mxu0 0.0
          %6282 = vmatprep.subr.mxu0 0.0
          %6283 = vmatpush1.msra.mxu0 0.0
          %6284 = vmatprep.subr.mxu0 0.0
          %6285 = vmatpush1.msra.mxu0 0.0
          %6286 = vmatprep.subr.mxu0 0.0
          %6287 = vmatpush1.msra.mxu0 0.0
          %6288 = vmatprep.subr.mxu0 0.0
          %6289 = vmatpush1.msra.mxu0 0.0
          %6290 = vmatprep.subr.mxu0 0.0
          %6291 = vmatpush1.msra.mxu0 0.0
          %6292 = vmatprep.subr.mxu0 0.0
          %6293 = vmatpush1.msra.mxu0 0.0
          %6294 = vmatprep.subr.mxu0 0.0
          %6295 = vmatpush1.msra.mxu0 0.0
          %6296 = vmatprep.subr.mxu0 0.0
          %6297 = vmatpush1.msra.mxu0 0.0
          %6298 = vmatprep.subr.mxu0 0.0
          %6299 = vmatpush1.msra.mxu0 0.0
          %6300 = vmatprep.subr.mxu0 0.0
          %6301 = vmatpush1.msra.mxu0 0.0
          %6302 = vmatprep.subr.mxu0 0.0
          %6303 = vmatpush1.msra.mxu0 0.0
          %6304 = vmatprep.subr.mxu0 0.0
          %6305 = vmatpush1.msra.mxu0 0.0
          %6306 = vmatprep.subr.mxu0 0.0
          %6307 = vmatpush1.msra.mxu0 0.0
          %6308 = vmatprep.subr.mxu0 0.0
          %6309 = vmatpush1.msra.mxu0 0.0
          %6310 = vmatprep.subr.mxu0 0.0
          %6311 = vmatpush1.msra.mxu0 0.0
          %6312 = vmatprep.subr.mxu0 0.0
          %6313 = vmatpush1.msra.mxu0 0.0
          %6314 = vmatprep.subr.mxu0 0.0
          %6315 = vmatpush1.msra.mxu0 0.0
          %6316 = vmatprep.subr.mxu0 0.0
          %6317 = vmatpush1.msra.mxu0 0.0
          %6318 = vmatprep.subr.mxu0 0.0
          %6319 = vmatpush1.msra.mxu0 0.0
          %6320 = vmatprep.subr.mxu0 0.0
          %6321 = vmatpush1.msra.mxu0 0.0
          %6322 = vmatprep.subr.mxu0 0.0
          %6323 = vmatpush1.msra.mxu0 0.0
          %6324 = vmatprep.subr.mxu0 0.0
          %6325 = vmatpush1.msra.mxu0 0.0
          %6326 = vmatprep.subr.mxu0 0.0
          %6327 = vmatpush1.msra.mxu0 0.0
          %6328 = vmatprep.subr.mxu0 0.0
          %6329 = vmatpush1.msra.mxu0 0.0
          %6330 = vmatprep.subr.mxu0 0.0
          %6331 = vmatpush1.msra.mxu0 0.0
          %6332 = vmatprep.subr.mxu0 0.0
          %6333 = vmatpush1.msra.mxu0 0.0
          %6334 = vmatprep.subr.mxu0 0.0
          %6335 = vmatpush1.msra.mxu0 0.0
          %6336 = vmatprep.mubr.f32.mxu0 0.0
          %6337 = vmatmul.mubr.f32.gmra.mrb[0].mxu0 %v6267
          %v6338 = vpop.f32.mrb[0].mxu0
          %v6339 = vadd.f32 0.0, %v6338
          %v6340 = vpop.f32.mrb[0].mxu0
          %6341 = vmatprep.mubr.f32.mxu0 0.0
          %6342 = vmatmul.mubr.f32.gmra.mrb[0].mxu0 %v6270
          %v6343 = vpop.f32.mrb[0].mxu0
          %v6344 = vadd.f32 0.0, %v6343
          %v6345 = vpop.f32.mrb[0].mxu0
          %6346 = vdwg.mxu0
          %v6347 = vadd.f32 %v6209, %v6339
          %v6348 = vadd.f32 %v6210, %v6344
          %s6349 = scalar_lea.vmem %s8, 32
          %v6350 = vld [vmem:[%s6349] sm:$0xf]
          %v6351 = vld [vmem:[%s6349 + $0x4] sm:$0x1]
          %v6354 = vunpack.c.l.b16 %v6350
          %v6355 = vunpack.c.l.b16 %v6351
          %v6356 = vpack.c.b16 %v6355, %v6354
          %v6358 = vsel %vm5803, %v6356, 0
          %6360 = vmatprep.subr.bf16.mxu0 0
          %6361 = vmatpush1.bf16.msra.mxu0 %v5792
          %6362 = vmatprep.subr.bf16.mxu0 0
          %6363 = vmatpush1.bf16.msra.mxu0 %v5793
          %6364 = vmatprep.subr.bf16.mxu0 0
          %6365 = vmatpush1.bf16.msra.mxu0 %v5794
          %6366 = vmatprep.subr.bf16.mxu0 0
          %6367 = vmatpush1.bf16.msra.mxu0 %v5810
          %6368 = vmatprep.subr.bf16.mxu0 0
          %6369 = vmatpush1.bf16.msra.mxu0 0
          %6370 = vmatprep.subr.bf16.mxu0 0
          %6371 = vmatpush1.bf16.msra.mxu0 0
          %6372 = vmatprep.subr.bf16.mxu0 0
          %6373 = vmatpush1.bf16.msra.mxu0 0
          %6374 = vmatprep.subr.bf16.mxu0 0
          %6375 = vmatpush1.bf16.msra.mxu0 0
          %6376 = vmatprep.subr.bf16.mxu0 0
          %6377 = vmatpush1.bf16.msra.mxu0 0
          %6378 = vmatprep.subr.bf16.mxu0 0
          %6379 = vmatpush1.bf16.msra.mxu0 0
          %6380 = vmatprep.subr.bf16.mxu0 0
          %6381 = vmatpush1.bf16.msra.mxu0 0
          %6382 = vmatprep.subr.bf16.mxu0 0
          %6383 = vmatpush1.bf16.msra.mxu0 0
          %6384 = vmatprep.subr.bf16.mxu0 0
          %6385 = vmatpush1.bf16.msra.mxu0 0
          %6386 = vmatprep.subr.bf16.mxu0 0
          %6387 = vmatpush1.bf16.msra.mxu0 0
          %6388 = vmatprep.subr.bf16.mxu0 0
          %6389 = vmatpush1.bf16.msra.mxu0 0
          %6390 = vmatprep.subr.bf16.mxu0 0
          %6391 = vmatpush1.bf16.msra.mxu0 0
          %6392 = vmatprep.mubr.bf16.mxu0 0
          %6393 = vmatmul.mubr.bf16.gmra.mrb[0].mxu0 %v6358
          %v6394 = vpop.f32.mrb[0].mxu0
          %v6395 = vadd.f32 0.0, %v6394
          %v6396 = vpop.f32.mrb[0].mxu0
          %v6397 = vpop.f32.mrb[0].mxu0
          %v6398 = vadd.f32 0.0, %v6397
          %v6399 = vpop.f32.mrb[0].mxu0
          %6400 = vdwg.mxu0
          %s6401 = scalar_lea.vmem %s9, 64
          %v6402 = vld [vmem:[%s6401] sm:$0xff]
          %v6403 = vld [vmem:[%s6401 + $0x8] sm:$0xff]
          %v6405 = vsel %vm5910, %v6395, 0
          %v6408 = vsel %vm5910, %v6398, 0
          %6410 = vmatprep.subr.mxu0 0.0
          %6411 = vmatpush1.msra.mxu0 %v6402
          %6412 = vmatprep.subr.mxu0 0.0
          %6413 = vmatpush1.msra.mxu0 %v6403
          %6414 = vmatprep.subr.mxu0 0.0
          %6415 = vmatpush1.msra.mxu0 0.0
          %6416 = vmatprep.subr.mxu0 0.0
          %6417 = vmatpush1.msra.mxu0 0.0
          %6418 = vmatprep.subr.mxu0 0.0
          %6419 = vmatpush1.msra.mxu0 0.0
          %6420 = vmatprep.subr.mxu0 0.0
          %6421 = vmatpush1.msra.mxu0 0.0
          %6422 = vmatprep.subr.mxu0 0.0
          %6423 = vmatpush1.msra.mxu0 0.0
          %6424 = vmatprep.subr.mxu0 0.0
          %6425 = vmatpush1.msra.mxu0 0.0
          %6426 = vmatprep.subr.mxu0 0.0
          %6427 = vmatpush1.msra.mxu0 0.0
          %6428 = vmatprep.subr.mxu0 0.0
          %6429 = vmatpush1.msra.mxu0 0.0
          %6430 = vmatprep.subr.mxu0 0.0
          %6431 = vmatpush1.msra.mxu0 0.0
          %6432 = vmatprep.subr.mxu0 0.0
          %6433 = vmatpush1.msra.mxu0 0.0
          %6434 = vmatprep.subr.mxu0 0.0
          %6435 = vmatpush1.msra.mxu0 0.0
          %6436 = vmatprep.subr.mxu0 0.0
          %6437 = vmatpush1.msra.mxu0 0.0
          %6438 = vmatprep.subr.mxu0 0.0
          %6439 = vmatpush1.msra.mxu0 0.0
          %6440 = vmatprep.subr.mxu0 0.0
          %6441 = vmatpush1.msra.mxu0 0.0
          %6442 = vmatprep.subr.mxu0 0.0
          %6443 = vmatpush1.msra.mxu0 0.0
          %6444 = vmatprep.subr.mxu0 0.0
          %6445 = vmatpush1.msra.mxu0 0.0
          %6446 = vmatprep.subr.mxu0 0.0
          %6447 = vmatpush1.msra.mxu0 0.0
          %6448 = vmatprep.subr.mxu0 0.0
          %6449 = vmatpush1.msra.mxu0 0.0
          %6450 = vmatprep.subr.mxu0 0.0
          %6451 = vmatpush1.msra.mxu0 0.0
          %6452 = vmatprep.subr.mxu0 0.0
          %6453 = vmatpush1.msra.mxu0 0.0
          %6454 = vmatprep.subr.mxu0 0.0
          %6455 = vmatpush1.msra.mxu0 0.0
          %6456 = vmatprep.subr.mxu0 0.0
          %6457 = vmatpush1.msra.mxu0 0.0
          %6458 = vmatprep.subr.mxu0 0.0
          %6459 = vmatpush1.msra.mxu0 0.0
          %6460 = vmatprep.subr.mxu0 0.0
          %6461 = vmatpush1.msra.mxu0 0.0
          %6462 = vmatprep.subr.mxu0 0.0
          %6463 = vmatpush1.msra.mxu0 0.0
          %6464 = vmatprep.subr.mxu0 0.0
          %6465 = vmatpush1.msra.mxu0 0.0
          %6466 = vmatprep.subr.mxu0 0.0
          %6467 = vmatpush1.msra.mxu0 0.0
          %6468 = vmatprep.subr.mxu0 0.0
          %6469 = vmatpush1.msra.mxu0 0.0
          %6470 = vmatprep.subr.mxu0 0.0
          %6471 = vmatpush1.msra.mxu0 0.0
          %6472 = vmatprep.subr.mxu0 0.0
          %6473 = vmatpush1.msra.mxu0 0.0
          %6474 = vmatprep.mubr.f32.mxu0 0.0
          %6475 = vmatmul.mubr.f32.gmra.mrb[0].mxu0 %v6405
          %v6476 = vpop.f32.mrb[0].mxu0
          %v6477 = vadd.f32 0.0, %v6476
          %v6478 = vpop.f32.mrb[0].mxu0
          %6479 = vmatprep.mubr.f32.mxu0 0.0
          %6480 = vmatmul.mubr.f32.gmra.mrb[0].mxu0 %v6408
          %v6481 = vpop.f32.mrb[0].mxu0
          %v6482 = vadd.f32 0.0, %v6481
          %v6483 = vpop.f32.mrb[0].mxu0
          %6484 = vdwg.mxu0
          %v6485 = vadd.f32 %v6347, %v6477
          %v6486 = vadd.f32 %v6348, %v6482
          %s6487 = scalar_lea.vmem %s8, 40
          %v6488 = vld [vmem:[%s6487] sm:$0xf]
          %v6489 = vld [vmem:[%s6487 + $0x4] sm:$0x1]
          %v6492 = vunpack.c.l.b16 %v6488
          %v6493 = vunpack.c.l.b16 %v6489
          %v6494 = vpack.c.b16 %v6493, %v6492
          %v6496 = vsel %vm5803, %v6494, 0
          %6498 = vmatprep.subr.bf16.mxu0 0
          %6499 = vmatpush1.bf16.msra.mxu0 %v5792
          %6500 = vmatprep.subr.bf16.mxu0 0
          %6501 = vmatpush1.bf16.msra.mxu0 %v5793
          %6502 = vmatprep.subr.bf16.mxu0 0
          %6503 = vmatpush1.bf16.msra.mxu0 %v5794
          %6504 = vmatprep.subr.bf16.mxu0 0
          %6505 = vmatpush1.bf16.msra.mxu0 %v5810
          %6506 = vmatprep.subr.bf16.mxu0 0
          %6507 = vmatpush1.bf16.msra.mxu0 0
          %6508 = vmatprep.subr.bf16.mxu0 0
          %6509 = vmatpush1.bf16.msra.mxu0 0
          %6510 = vmatprep.subr.bf16.mxu0 0
          %6511 = vmatpush1.bf16.msra.mxu0 0
          %6512 = vmatprep.subr.bf16.mxu0 0
          %6513 = vmatpush1.bf16.msra.mxu0 0
          %6514 = vmatprep.subr.bf16.mxu0 0
          %6515 = vmatpush1.bf16.msra.mxu0 0
          %6516 = vmatprep.subr.bf16.mxu0 0
          %6517 = vmatpush1.bf16.msra.mxu0 0
          %6518 = vmatprep.subr.bf16.mxu0 0
          %6519 = vmatpush1.bf16.msra.mxu0 0
          %6520 = vmatprep.subr.bf16.mxu0 0
          %6521 = vmatpush1.bf16.msra.mxu0 0
          %6522 = vmatprep.subr.bf16.mxu0 0
          %6523 = vmatpush1.bf16.msra.mxu0 0
          %6524 = vmatprep.subr.bf16.mxu0 0
          %6525 = vmatpush1.bf16.msra.mxu0 0
          %6526 = vmatprep.subr.bf16.mxu0 0
          %6527 = vmatpush1.bf16.msra.mxu0 0
          %6528 = vmatprep.subr.bf16.mxu0 0
          %6529 = vmatpush1.bf16.msra.mxu0 0
          %6530 = vmatprep.mubr.bf16.mxu0 0
          %6531 = vmatmul.mubr.bf16.gmra.mrb[0].mxu0 %v6496
          %v6532 = vpop.f32.mrb[0].mxu0
          %v6533 = vadd.f32 0.0, %v6532
          %v6534 = vpop.f32.mrb[0].mxu0
          %v6535 = vpop.f32.mrb[0].mxu0
          %v6536 = vadd.f32 0.0, %v6535
          %v6537 = vpop.f32.mrb[0].mxu0
          %6538 = vdwg.mxu0
          %s6539 = scalar_lea.vmem %s9, 80
          %v6540 = vld [vmem:[%s6539] sm:$0xff]
          %v6541 = vld [vmem:[%s6539 + $0x8] sm:$0xff]
          %v6543 = vsel %vm5910, %v6533, 0
          %v6546 = vsel %vm5910, %v6536, 0
          %6548 = vmatprep.subr.mxu0 0.0
          %6549 = vmatpush1.msra.mxu0 %v6540
          %6550 = vmatprep.subr.mxu0 0.0
          %6551 = vmatpush1.msra.mxu0 %v6541
          %6552 = vmatprep.subr.mxu0 0.0
          %6553 = vmatpush1.msra.mxu0 0.0
          %6554 = vmatprep.subr.mxu0 0.0
          %6555 = vmatpush1.msra.mxu0 0.0
          %6556 = vmatprep.subr.mxu0 0.0
          %6557 = vmatpush1.msra.mxu0 0.0
          %6558 = vmatprep.subr.mxu0 0.0
          %6559 = vmatpush1.msra.mxu0 0.0
          %6560 = vmatprep.subr.mxu0 0.0
          %6561 = vmatpush1.msra.mxu0 0.0
          %6562 = vmatprep.subr.mxu0 0.0
          %6563 = vmatpush1.msra.mxu0 0.0
          %6564 = vmatprep.subr.mxu0 0.0
          %6565 = vmatpush1.msra.mxu0 0.0
          %6566 = vmatprep.subr.mxu0 0.0
          %6567 = vmatpush1.msra.mxu0 0.0
          %6568 = vmatprep.subr.mxu0 0.0
          %6569 = vmatpush1.msra.mxu0 0.0
          %6570 = vmatprep.subr.mxu0 0.0
          %6571 = vmatpush1.msra.mxu0 0.0
          %6572 = vmatprep.subr.mxu0 0.0
          %6573 = vmatpush1.msra.mxu0 0.0
          %6574 = vmatprep.subr.mxu0 0.0
          %6575 = vmatpush1.msra.mxu0 0.0
          %6576 = vmatprep.subr.mxu0 0.0
          %6577 = vmatpush1.msra.mxu0 0.0
          %6578 = vmatprep.subr.mxu0 0.0
          %6579 = vmatpush1.msra.mxu0 0.0
          %6580 = vmatprep.subr.mxu0 0.0
          %6581 = vmatpush1.msra.mxu0 0.0
          %6582 = vmatprep.subr.mxu0 0.0
          %6583 = vmatpush1.msra.mxu0 0.0
          %6584 = vmatprep.subr.mxu0 0.0
          %6585 = vmatpush1.msra.mxu0 0.0
          %6586 = vmatprep.subr.mxu0 0.0
          %6587 = vmatpush1.msra.mxu0 0.0
          %6588 = vmatprep.subr.mxu0 0.0
          %6589 = vmatpush1.msra.mxu0 0.0
          %6590 = vmatprep.subr.mxu0 0.0
          %6591 = vmatpush1.msra.mxu0 0.0
          %6592 = vmatprep.subr.mxu0 0.0
          %6593 = vmatpush1.msra.mxu0 0.0
          %6594 = vmatprep.subr.mxu0 0.0
          %6595 = vmatpush1.msra.mxu0 0.0
          %6596 = vmatprep.subr.mxu0 0.0
          %6597 = vmatpush1.msra.mxu0 0.0
          %6598 = vmatprep.subr.mxu0 0.0
          %6599 = vmatpush1.msra.mxu0 0.0
          %6600 = vmatprep.subr.mxu0 0.0
          %6601 = vmatpush1.msra.mxu0 0.0
          %6602 = vmatprep.subr.mxu0 0.0
          %6603 = vmatpush1.msra.mxu0 0.0
          %6604 = vmatprep.subr.mxu0 0.0
          %6605 = vmatpush1.msra.mxu0 0.0
          %6606 = vmatprep.subr.mxu0 0.0
          %6607 = vmatpush1.msra.mxu0 0.0
          %6608 = vmatprep.subr.mxu0 0.0
          %6609 = vmatpush1.msra.mxu0 0.0
          %6610 = vmatprep.subr.mxu0 0.0
          %6611 = vmatpush1.msra.mxu0 0.0
          %6612 = vmatprep.mubr.f32.mxu0 0.0
          %6613 = vmatmul.mubr.f32.gmra.mrb[0].mxu0 %v6543
          %v6614 = vpop.f32.mrb[0].mxu0
          %v6615 = vadd.f32 0.0, %v6614
          %v6616 = vpop.f32.mrb[0].mxu0
          %6617 = vmatprep.mubr.f32.mxu0 0.0
          %6618 = vmatmul.mubr.f32.gmra.mrb[0].mxu0 %v6546
          %v6619 = vpop.f32.mrb[0].mxu0
          %v6620 = vadd.f32 0.0, %v6619
          %v6621 = vpop.f32.mrb[0].mxu0
          %6622 = vdwg.mxu0
          %v6623 = vadd.f32 %v6485, %v6615
          %v6624 = vadd.f32 %v6486, %v6620
          %s6625 = scalar_lea.vmem %s8, 48
          %v6626 = vld [vmem:[%s6625] sm:$0xf]
          %v6627 = vld [vmem:[%s6625 + $0x4] sm:$0x1]
          %v6630 = vunpack.c.l.b16 %v6626
          %v6631 = vunpack.c.l.b16 %v6627
          %v6632 = vpack.c.b16 %v6631, %v6630
          %v6634 = vsel %vm5803, %v6632, 0
          %6636 = vmatprep.subr.bf16.mxu0 0
          %6637 = vmatpush1.bf16.msra.mxu0 %v5792
          %6638 = vmatprep.subr.bf16.mxu0 0
          %6639 = vmatpush1.bf16.msra.mxu0 %v5793
          %6640 = vmatprep.subr.bf16.mxu0 0
          %6641 = vmatpush1.bf16.msra.mxu0 %v5794
          %6642 = vmatprep.subr.bf16.mxu0 0
          %6643 = vmatpush1.bf16.msra.mxu0 %v5810
          %6644 = vmatprep.subr.bf16.mxu0 0
          %6645 = vmatpush1.bf16.msra.mxu0 0
          %6646 = vmatprep.subr.bf16.mxu0 0
          %6647 = vmatpush1.bf16.msra.mxu0 0
          %6648 = vmatprep.subr.bf16.mxu0 0
          %6649 = vmatpush1.bf16.msra.mxu0 0
          %6650 = vmatprep.subr.bf16.mxu0 0
          %6651 = vmatpush1.bf16.msra.mxu0 0
          %6652 = vmatprep.subr.bf16.mxu0 0
          %6653 = vmatpush1.bf16.msra.mxu0 0
          %6654 = vmatprep.subr.bf16.mxu0 0
          %6655 = vmatpush1.bf16.msra.mxu0 0
          %6656 = vmatprep.subr.bf16.mxu0 0
          %6657 = vmatpush1.bf16.msra.mxu0 0
          %6658 = vmatprep.subr.bf16.mxu0 0
          %6659 = vmatpush1.bf16.msra.mxu0 0
          %6660 = vmatprep.subr.bf16.mxu0 0
          %6661 = vmatpush1.bf16.msra.mxu0 0
          %6662 = vmatprep.subr.bf16.mxu0 0
          %6663 = vmatpush1.bf16.msra.mxu0 0
          %6664 = vmatprep.subr.bf16.mxu0 0
          %6665 = vmatpush1.bf16.msra.mxu0 0
          %6666 = vmatprep.subr.bf16.mxu0 0
          %6667 = vmatpush1.bf16.msra.mxu0 0
          %6668 = vmatprep.mubr.bf16.mxu0 0
          %6669 = vmatmul.mubr.bf16.gmra.mrb[0].mxu0 %v6634
          %v6670 = vpop.f32.mrb[0].mxu0
          %v6671 = vadd.f32 0.0, %v6670
          %v6672 = vpop.f32.mrb[0].mxu0
          %v6673 = vpop.f32.mrb[0].mxu0
          %v6674 = vadd.f32 0.0, %v6673
          %v6675 = vpop.f32.mrb[0].mxu0
          %6676 = vdwg.mxu0
          %s6677 = scalar_lea.vmem %s9, 96
          %v6678 = vld [vmem:[%s6677] sm:$0xff]
          %v6679 = vld [vmem:[%s6677 + $0x8] sm:$0xff]
          %v6681 = vsel %vm5910, %v6671, 0
          %v6684 = vsel %vm5910, %v6674, 0
          %6686 = vmatprep.subr.mxu0 0.0
          %6687 = vmatpush1.msra.mxu0 %v6678
          %6688 = vmatprep.subr.mxu0 0.0
          %6689 = vmatpush1.msra.mxu0 %v6679
          %6690 = vmatprep.subr.mxu0 0.0
          %6691 = vmatpush1.msra.mxu0 0.0
          %6692 = vmatprep.subr.mxu0 0.0
          %6693 = vmatpush1.msra.mxu0 0.0
          %6694 = vmatprep.subr.mxu0 0.0
          %6695 = vmatpush1.msra.mxu0 0.0
          %6696 = vmatprep.subr.mxu0 0.0
          %6697 = vmatpush1.msra.mxu0 0.0
          %6698 = vmatprep.subr.mxu0 0.0
          %6699 = vmatpush1.msra.mxu0 0.0
          %6700 = vmatprep.subr.mxu0 0.0
          %6701 = vmatpush1.msra.mxu0 0.0
          %6702 = vmatprep.subr.mxu0 0.0
          %6703 = vmatpush1.msra.mxu0 0.0
          %6704 = vmatprep.subr.mxu0 0.0
          %6705 = vmatpush1.msra.mxu0 0.0
          %6706 = vmatprep.subr.mxu0 0.0
          %6707 = vmatpush1.msra.mxu0 0.0
          %6708 = vmatprep.subr.mxu0 0.0
          %6709 = vmatpush1.msra.mxu0 0.0
          %6710 = vmatprep.subr.mxu0 0.0
          %6711 = vmatpush1.msra.mxu0 0.0
          %6712 = vmatprep.subr.mxu0 0.0
          %6713 = vmatpush1.msra.mxu0 0.0
          %6714 = vmatprep.subr.mxu0 0.0
          %6715 = vmatpush1.msra.mxu0 0.0
          %6716 = vmatprep.subr.mxu0 0.0
          %6717 = vmatpush1.msra.mxu0 0.0
          %6718 = vmatprep.subr.mxu0 0.0
          %6719 = vmatpush1.msra.mxu0 0.0
          %6720 = vmatprep.subr.mxu0 0.0
          %6721 = vmatpush1.msra.mxu0 0.0
          %6722 = vmatprep.subr.mxu0 0.0
          %6723 = vmatpush1.msra.mxu0 0.0
          %6724 = vmatprep.subr.mxu0 0.0
          %6725 = vmatpush1.msra.mxu0 0.0
          %6726 = vmatprep.subr.mxu0 0.0
          %6727 = vmatpush1.msra.mxu0 0.0
          %6728 = vmatprep.subr.mxu0 0.0
          %6729 = vmatpush1.msra.mxu0 0.0
          %6730 = vmatprep.subr.mxu0 0.0
          %6731 = vmatpush1.msra.mxu0 0.0
          %6732 = vmatprep.subr.mxu0 0.0
          %6733 = vmatpush1.msra.mxu0 0.0
          %6734 = vmatprep.subr.mxu0 0.0
          %6735 = vmatpush1.msra.mxu0 0.0
          %6736 = vmatprep.subr.mxu0 0.0
          %6737 = vmatpush1.msra.mxu0 0.0
          %6738 = vmatprep.subr.mxu0 0.0
          %6739 = vmatpush1.msra.mxu0 0.0
          %6740 = vmatprep.subr.mxu0 0.0
          %6741 = vmatpush1.msra.mxu0 0.0
          %6742 = vmatprep.subr.mxu0 0.0
          %6743 = vmatpush1.msra.mxu0 0.0
          %6744 = vmatprep.subr.mxu0 0.0
          %6745 = vmatpush1.msra.mxu0 0.0
          %6746 = vmatprep.subr.mxu0 0.0
          %6747 = vmatpush1.msra.mxu0 0.0
          %6748 = vmatprep.subr.mxu0 0.0
          %6749 = vmatpush1.msra.mxu0 0.0
          %6750 = vmatprep.mubr.f32.mxu0 0.0
          %6751 = vmatmul.mubr.f32.gmra.mrb[0].mxu0 %v6681
          %v6752 = vpop.f32.mrb[0].mxu0
          %v6753 = vadd.f32 0.0, %v6752
          %v6754 = vpop.f32.mrb[0].mxu0
          %6755 = vmatprep.mubr.f32.mxu0 0.0
          %6756 = vmatmul.mubr.f32.gmra.mrb[0].mxu0 %v6684
          %v6757 = vpop.f32.mrb[0].mxu0
          %v6758 = vadd.f32 0.0, %v6757
          %v6759 = vpop.f32.mrb[0].mxu0
          %6760 = vdwg.mxu0
          %v6761 = vadd.f32 %v6623, %v6753
          %v6762 = vadd.f32 %v6624, %v6758
          %s6763 = scalar_lea.vmem %s8, 56
          %v6764 = vld [vmem:[%s6763] sm:$0xf]
          %v6765 = vld [vmem:[%s6763 + $0x4] sm:$0x1]
          %v6768 = vunpack.c.l.b16 %v6764
          %v6769 = vunpack.c.l.b16 %v6765
          %v6770 = vpack.c.b16 %v6769, %v6768
          %v6772 = vsel %vm5803, %v6770, 0
          %6774 = vmatprep.subr.bf16.mxu0 0
          %6775 = vmatpush1.bf16.msra.mxu0 %v5792
          %6776 = vmatprep.subr.bf16.mxu0 0
          %6777 = vmatpush1.bf16.msra.mxu0 %v5793
          %6778 = vmatprep.subr.bf16.mxu0 0
          %6779 = vmatpush1.bf16.msra.mxu0 %v5794
          %6780 = vmatprep.subr.bf16.mxu0 0
          %6781 = vmatpush1.bf16.msra.mxu0 %v5810
          %6782 = vmatprep.subr.bf16.mxu0 0
          %6783 = vmatpush1.bf16.msra.mxu0 0
          %6784 = vmatprep.subr.bf16.mxu0 0
          %6785 = vmatpush1.bf16.msra.mxu0 0
          %6786 = vmatprep.subr.bf16.mxu0 0
          %6787 = vmatpush1.bf16.msra.mxu0 0
          %6788 = vmatprep.subr.bf16.mxu0 0
          %6789 = vmatpush1.bf16.msra.mxu0 0
          %6790 = vmatprep.subr.bf16.mxu0 0
          %6791 = vmatpush1.bf16.msra.mxu0 0
          %6792 = vmatprep.subr.bf16.mxu0 0
          %6793 = vmatpush1.bf16.msra.mxu0 0
          %6794 = vmatprep.subr.bf16.mxu0 0
          %6795 = vmatpush1.bf16.msra.mxu0 0
          %6796 = vmatprep.subr.bf16.mxu0 0
          %6797 = vmatpush1.bf16.msra.mxu0 0
          %6798 = vmatprep.subr.bf16.mxu0 0
          %6799 = vmatpush1.bf16.msra.mxu0 0
          %6800 = vmatprep.subr.bf16.mxu0 0
          %6801 = vmatpush1.bf16.msra.mxu0 0
          %6802 = vmatprep.subr.bf16.mxu0 0
          %6803 = vmatpush1.bf16.msra.mxu0 0
          %6804 = vmatprep.subr.bf16.mxu0 0
          %6805 = vmatpush1.bf16.msra.mxu0 0
          %6806 = vmatprep.mubr.bf16.mxu0 0
          %6807 = vmatmul.mubr.bf16.gmra.mrb[0].mxu0 %v6772
          %v6808 = vpop.f32.mrb[0].mxu0
          %v6809 = vadd.f32 0.0, %v6808
          %v6810 = vpop.f32.mrb[0].mxu0
          %v6811 = vpop.f32.mrb[0].mxu0
          %v6812 = vadd.f32 0.0, %v6811
          %v6813 = vpop.f32.mrb[0].mxu0
          %6814 = vdwg.mxu0
          %s6815 = scalar_lea.vmem %s9, 112
          %v6816 = vld [vmem:[%s6815] sm:$0xff]
          %v6817 = vld [vmem:[%s6815 + $0x8] sm:$0xff]
          %v6819 = vsel %vm5910, %v6809, 0
          %v6822 = vsel %vm5910, %v6812, 0
          %6824 = vmatprep.subr.mxu0 0.0
          %6825 = vmatpush1.msra.mxu0 %v6816
          %6826 = vmatprep.subr.mxu0 0.0
          %6827 = vmatpush1.msra.mxu0 %v6817
          %6828 = vmatprep.subr.mxu0 0.0
          %6829 = vmatpush1.msra.mxu0 0.0
          %6830 = vmatprep.subr.mxu0 0.0
          %6831 = vmatpush1.msra.mxu0 0.0
          %6832 = vmatprep.subr.mxu0 0.0
          %6833 = vmatpush1.msra.mxu0 0.0
          %6834 = vmatprep.subr.mxu0 0.0
          %6835 = vmatpush1.msra.mxu0 0.0
          %6836 = vmatprep.subr.mxu0 0.0
          %6837 = vmatpush1.msra.mxu0 0.0
          %6838 = vmatprep.subr.mxu0 0.0
          %6839 = vmatpush1.msra.mxu0 0.0
          %6840 = vmatprep.subr.mxu0 0.0
          %6841 = vmatpush1.msra.mxu0 0.0
          %6842 = vmatprep.subr.mxu0 0.0
          %6843 = vmatpush1.msra.mxu0 0.0
          %6844 = vmatprep.subr.mxu0 0.0
          %6845 = vmatpush1.msra.mxu0 0.0
          %6846 = vmatprep.subr.mxu0 0.0
          %6847 = vmatpush1.msra.mxu0 0.0
          %6848 = vmatprep.subr.mxu0 0.0
          %6849 = vmatpush1.msra.mxu0 0.0
          %6850 = vmatprep.subr.mxu0 0.0
          %6851 = vmatpush1.msra.mxu0 0.0
          %6852 = vmatprep.subr.mxu0 0.0
          %6853 = vmatpush1.msra.mxu0 0.0
          %6854 = vmatprep.subr.mxu0 0.0
          %6855 = vmatpush1.msra.mxu0 0.0
          %6856 = vmatprep.subr.mxu0 0.0
          %6857 = vmatpush1.msra.mxu0 0.0
          %6858 = vmatprep.subr.mxu0 0.0
          %6859 = vmatpush1.msra.mxu0 0.0
          %6860 = vmatprep.subr.mxu0 0.0
          %6861 = vmatpush1.msra.mxu0 0.0
          %6862 = vmatprep.subr.mxu0 0.0
          %6863 = vmatpush1.msra.mxu0 0.0
          %6864 = vmatprep.subr.mxu0 0.0
          %6865 = vmatpush1.msra.mxu0 0.0
          %6866 = vmatprep.subr.mxu0 0.0
          %6867 = vmatpush1.msra.mxu0 0.0
          %6868 = vmatprep.subr.mxu0 0.0
          %6869 = vmatpush1.msra.mxu0 0.0
          %6870 = vmatprep.subr.mxu0 0.0
          %6871 = vmatpush1.msra.mxu0 0.0
          %6872 = vmatprep.subr.mxu0 0.0
          %6873 = vmatpush1.msra.mxu0 0.0
          %6874 = vmatprep.subr.mxu0 0.0
          %6875 = vmatpush1.msra.mxu0 0.0
          %6876 = vmatprep.subr.mxu0 0.0
          %6877 = vmatpush1.msra.mxu0 0.0
          %6878 = vmatprep.subr.mxu0 0.0
          %6879 = vmatpush1.msra.mxu0 0.0
          %6880 = vmatprep.subr.mxu0 0.0
          %6881 = vmatpush1.msra.mxu0 0.0
          %6882 = vmatprep.subr.mxu0 0.0
          %6883 = vmatpush1.msra.mxu0 0.0
          %6884 = vmatprep.subr.mxu0 0.0
          %6885 = vmatpush1.msra.mxu0 0.0
          %6886 = vmatprep.subr.mxu0 0.0
          %6887 = vmatpush1.msra.mxu0 0.0
          %6888 = vmatprep.mubr.f32.mxu0 0.0
          %6889 = vmatmul.mubr.f32.gmra.mrb[0].mxu0 %v6819
          %v6890 = vpop.f32.mrb[0].mxu0
          %v6891 = vadd.f32 0.0, %v6890
          %v6892 = vpop.f32.mrb[0].mxu0
          %6893 = vmatprep.mubr.f32.mxu0 0.0
          %6894 = vmatmul.mubr.f32.gmra.mrb[0].mxu0 %v6822
          %v6895 = vpop.f32.mrb[0].mxu0
          %v6896 = vadd.f32 0.0, %v6895
          %v6897 = vpop.f32.mrb[0].mxu0
          %6898 = vdwg.mxu0
          %v6899 = vadd.f32 %v6761, %v6891
          %v6900 = vadd.f32 %v6762, %v6896
          %s6901 = scalar_lea.vmem %s8, 64
          %v6902 = vld [vmem:[%s6901] sm:$0xf]
          %v6903 = vld [vmem:[%s6901 + $0x4] sm:$0x1]
          %v6906 = vunpack.c.l.b16 %v6902
          %v6907 = vunpack.c.l.b16 %v6903
          %v6908 = vpack.c.b16 %v6907, %v6906
          %v6910 = vsel %vm5803, %v6908, 0
          %6912 = vmatprep.subr.bf16.mxu0 0
          %6913 = vmatpush1.bf16.msra.mxu0 %v5792
          %6914 = vmatprep.subr.bf16.mxu0 0
          %6915 = vmatpush1.bf16.msra.mxu0 %v5793
          %6916 = vmatprep.subr.bf16.mxu0 0
          %6917 = vmatpush1.bf16.msra.mxu0 %v5794
          %6918 = vmatprep.subr.bf16.mxu0 0
          %6919 = vmatpush1.bf16.msra.mxu0 %v5810
          %6920 = vmatprep.subr.bf16.mxu0 0
          %6921 = vmatpush1.bf16.msra.mxu0 0
          %6922 = vmatprep.subr.bf16.mxu0 0
          %6923 = vmatpush1.bf16.msra.mxu0 0
          %6924 = vmatprep.subr.bf16.mxu0 0
          %6925 = vmatpush1.bf16.msra.mxu0 0
          %6926 = vmatprep.subr.bf16.mxu0 0
          %6927 = vmatpush1.bf16.msra.mxu0 0
          %6928 = vmatprep.subr.bf16.mxu0 0
          %6929 = vmatpush1.bf16.msra.mxu0 0
          %6930 = vmatprep.subr.bf16.mxu0 0
          %6931 = vmatpush1.bf16.msra.mxu0 0
          %6932 = vmatprep.subr.bf16.mxu0 0
          %6933 = vmatpush1.bf16.msra.mxu0 0
          %6934 = vmatprep.subr.bf16.mxu0 0
          %6935 = vmatpush1.bf16.msra.mxu0 0
          %6936 = vmatprep.subr.bf16.mxu0 0
          %6937 = vmatpush1.bf16.msra.mxu0 0
          %6938 = vmatprep.subr.bf16.mxu0 0
          %6939 = vmatpush1.bf16.msra.mxu0 0
          %6940 = vmatprep.subr.bf16.mxu0 0
          %6941 = vmatpush1.bf16.msra.mxu0 0
          %6942 = vmatprep.subr.bf16.mxu0 0
          %6943 = vmatpush1.bf16.msra.mxu0 0
          %6944 = vmatprep.mubr.bf16.mxu0 0
          %6945 = vmatmul.mubr.bf16.gmra.mrb[0].mxu0 %v6910
          %v6946 = vpop.f32.mrb[0].mxu0
          %v6947 = vadd.f32 0.0, %v6946
          %v6948 = vpop.f32.mrb[0].mxu0
          %v6949 = vpop.f32.mrb[0].mxu0
          %v6950 = vadd.f32 0.0, %v6949
          %v6951 = vpop.f32.mrb[0].mxu0
          %6952 = vdwg.mxu0
          %s6953 = scalar_lea.vmem %s9, 128
          %v6954 = vld [vmem:[%s6953] sm:$0xff]
          %v6955 = vld [vmem:[%s6953 + $0x8] sm:$0xff]
          %v6957 = vsel %vm5910, %v6947, 0
          %v6960 = vsel %vm5910, %v6950, 0
          %6962 = vmatprep.subr.mxu0 0.0
          %6963 = vmatpush1.msra.mxu0 %v6954
          %6964 = vmatprep.subr.mxu0 0.0
          %6965 = vmatpush1.msra.mxu0 %v6955
          %6966 = vmatprep.subr.mxu0 0.0
          %6967 = vmatpush1.msra.mxu0 0.0
          %6968 = vmatprep.subr.mxu0 0.0
          %6969 = vmatpush1.msra.mxu0 0.0
          %6970 = vmatprep.subr.mxu0 0.0
          %6971 = vmatpush1.msra.mxu0 0.0
          %6972 = vmatprep.subr.mxu0 0.0
          %6973 = vmatpush1.msra.mxu0 0.0
          %6974 = vmatprep.subr.mxu0 0.0
          %6975 = vmatpush1.msra.mxu0 0.0
          %6976 = vmatprep.subr.mxu0 0.0
          %6977 = vmatpush1.msra.mxu0 0.0
          %6978 = vmatprep.subr.mxu0 0.0
          %6979 = vmatpush1.msra.mxu0 0.0
          %6980 = vmatprep.subr.mxu0 0.0
          %6981 = vmatpush1.msra.mxu0 0.0
          %6982 = vmatprep.subr.mxu0 0.0
          %6983 = vmatpush1.msra.mxu0 0.0
          %6984 = vmatprep.subr.mxu0 0.0
          %6985 = vmatpush1.msra.mxu0 0.0
          %6986 = vmatprep.subr.mxu0 0.0
          %6987 = vmatpush1.msra.mxu0 0.0
          %6988 = vmatprep.subr.mxu0 0.0
          %6989 = vmatpush1.msra.mxu0 0.0
          %6990 = vmatprep.subr.mxu0 0.0
          %6991 = vmatpush1.msra.mxu0 0.0
          %6992 = vmatprep.subr.mxu0 0.0
          %6993 = vmatpush1.msra.mxu0 0.0
          %6994 = vmatprep.subr.mxu0 0.0
          %6995 = vmatpush1.msra.mxu0 0.0
          %6996 = vmatprep.subr.mxu0 0.0
          %6997 = vmatpush1.msra.mxu0 0.0
          %6998 = vmatprep.subr.mxu0 0.0
          %6999 = vmatpush1.msra.mxu0 0.0
          %7000 = vmatprep.subr.mxu0 0.0
          %7001 = vmatpush1.msra.mxu0 0.0
          %7002 = vmatprep.subr.mxu0 0.0
          %7003 = vmatpush1.msra.mxu0 0.0
          %7004 = vmatprep.subr.mxu0 0.0
          %7005 = vmatpush1.msra.mxu0 0.0
          %7006 = vmatprep.subr.mxu0 0.0
          %7007 = vmatpush1.msra.mxu0 0.0
          %7008 = vmatprep.subr.mxu0 0.0
          %7009 = vmatpush1.msra.mxu0 0.0
          %7010 = vmatprep.subr.mxu0 0.0
          %7011 = vmatpush1.msra.mxu0 0.0
          %7012 = vmatprep.subr.mxu0 0.0
          %7013 = vmatpush1.msra.mxu0 0.0
          %7014 = vmatprep.subr.mxu0 0.0
          %7015 = vmatpush1.msra.mxu0 0.0
          %7016 = vmatprep.subr.mxu0 0.0
          %7017 = vmatpush1.msra.mxu0 0.0
          %7018 = vmatprep.subr.mxu0 0.0
          %7019 = vmatpush1.msra.mxu0 0.0
          %7020 = vmatprep.subr.mxu0 0.0
          %7021 = vmatpush1.msra.mxu0 0.0
          %7022 = vmatprep.subr.mxu0 0.0
          %7023 = vmatpush1.msra.mxu0 0.0
          %7024 = vmatprep.subr.mxu0 0.0
          %7025 = vmatpush1.msra.mxu0 0.0
          %7026 = vmatprep.mubr.f32.mxu0 0.0
          %7027 = vmatmul.mubr.f32.gmra.mrb[0].mxu0 %v6957
          %v7028 = vpop.f32.mrb[0].mxu0
          %v7029 = vadd.f32 0.0, %v7028
          %v7030 = vpop.f32.mrb[0].mxu0
          %7031 = vmatprep.mubr.f32.mxu0 0.0
          %7032 = vmatmul.mubr.f32.gmra.mrb[0].mxu0 %v6960
          %v7033 = vpop.f32.mrb[0].mxu0
          %v7034 = vadd.f32 0.0, %v7033
          %v7035 = vpop.f32.mrb[0].mxu0
          %7036 = vdwg.mxu0
          %v7037 = vadd.f32 %v6899, %v7029
          %v7038 = vadd.f32 %v6900, %v7034
          %v7039 = vld [vmem:[%s10] sm:$0x1]
          %v7041 = vlaneseq
          %v7042 = vshrl.u32 %v7041, 7
          %v7043 = vsub.s32 0, %v7042
          %v7044 = vrot.slane %v7039, %v7043
          %v7046 = vadd.f32 %v7037, %v7044
          %v7047 = vadd.f32 %v7038, %v7044
          %v7048 = vmax.f32 %v7046, 0.0
          %v7049 = vmax.f32 %v7047, 0.0
          %v7050 = vld [vmem:[%s12] sm:$0x1]
          %v7051 = vld [vmem:[%s11] sm:$0xff]
          %v7052 = vld [vmem:[%s11 + $0x8] sm:$0xff]
          %v7053 = vld [vmem:[%s11 + $0x10] sm:$0xff]
          %v7054 = vld [vmem:[%s11 + $0x18] sm:$0xff]
          %vm7055 = vcmask 261120
          %v7057 = vsel %vm7055, %v7048, 0
          %7059 = vmatprep.subr.mxu0 0.0
          %7060 = vmatpush1.msra.mxu0 %v7051
          %7061 = vmatprep.subr.mxu0 0.0
          %7062 = vmatpush1.msra.mxu0 %v7052
          %7063 = vmatprep.subr.mxu0 0.0
          %7064 = vmatpush1.msra.mxu0 %v7053
          %7065 = vmatprep.subr.mxu0 0.0
          %7066 = vmatpush1.msra.mxu0 %v7054
          %7067 = vmatprep.subr.mxu0 0.0
          %7068 = vmatpush1.msra.mxu0 0.0
          %7069 = vmatprep.subr.mxu0 0.0
          %7070 = vmatpush1.msra.mxu0 0.0
          %7071 = vmatprep.subr.mxu0 0.0
          %7072 = vmatpush1.msra.mxu0 0.0
          %7073 = vmatprep.subr.mxu0 0.0
          %7074 = vmatpush1.msra.mxu0 0.0
          %7075 = vmatprep.subr.mxu0 0.0
          %7076 = vmatpush1.msra.mxu0 0.0
          %7077 = vmatprep.subr.mxu0 0.0
          %7078 = vmatpush1.msra.mxu0 0.0
          %7079 = vmatprep.subr.mxu0 0.0
          %7080 = vmatpush1.msra.mxu0 0.0
          %7081 = vmatprep.subr.mxu0 0.0
          %7082 = vmatpush1.msra.mxu0 0.0
          %7083 = vmatprep.subr.mxu0 0.0
          %7084 = vmatpush1.msra.mxu0 0.0
          %7085 = vmatprep.subr.mxu0 0.0
          %7086 = vmatpush1.msra.mxu0 0.0
          %7087 = vmatprep.subr.mxu0 0.0
          %7088 = vmatpush1.msra.mxu0 0.0
          %7089 = vmatprep.subr.mxu0 0.0
          %7090 = vmatpush1.msra.mxu0 0.0
          %7091 = vmatprep.subr.mxu0 0.0
          %7092 = vmatpush1.msra.mxu0 0.0
          %7093 = vmatprep.subr.mxu0 0.0
          %7094 = vmatpush1.msra.mxu0 0.0
          %7095 = vmatprep.subr.mxu0 0.0
          %7096 = vmatpush1.msra.mxu0 0.0
          %7097 = vmatprep.subr.mxu0 0.0
          %7098 = vmatpush1.msra.mxu0 0.0
          %7099 = vmatprep.subr.mxu0 0.0
          %7100 = vmatpush1.msra.mxu0 0.0
          %7101 = vmatprep.subr.mxu0 0.0
          %7102 = vmatpush1.msra.mxu0 0.0
          %7103 = vmatprep.subr.mxu0 0.0
          %7104 = vmatpush1.msra.mxu0 0.0
          %7105 = vmatprep.subr.mxu0 0.0
          %7106 = vmatpush1.msra.mxu0 0.0
          %7107 = vmatprep.subr.mxu0 0.0
          %7108 = vmatpush1.msra.mxu0 0.0
          %7109 = vmatprep.subr.mxu0 0.0
          %7110 = vmatpush1.msra.mxu0 0.0
          %7111 = vmatprep.subr.mxu0 0.0
          %7112 = vmatpush1.msra.mxu0 0.0
          %7113 = vmatprep.subr.mxu0 0.0
          %7114 = vmatpush1.msra.mxu0 0.0
          %7115 = vmatprep.subr.mxu0 0.0
          %7116 = vmatpush1.msra.mxu0 0.0
          %7117 = vmatprep.subr.mxu0 0.0
          %7118 = vmatpush1.msra.mxu0 0.0
          %7119 = vmatprep.subr.mxu0 0.0
          %7120 = vmatpush1.msra.mxu0 0.0
          %7121 = vmatprep.subr.mxu0 0.0
          %7122 = vmatpush1.msra.mxu0 0.0
          %7123 = vmatprep.mubr.f32.mxu0 0.0
          %7124 = vmatmul.mubr.f32.gmra.mrb[0].mxu0 %v7057
          %v7125 = vpop.f32.mrb[0].mxu0
          %v7126 = vadd.f32 0.0, %v7125
          %v7127 = vpop.f32.mrb[0].mxu0
          %7128 = vdwg.mxu0
          %v7129 = vadd.f32 %v7050, %v7126
          %s7130 = scalar_lea.vmem %s11, 32
          %v7131 = vld [vmem:[%s7130] sm:$0xff]
          %v7132 = vld [vmem:[%s7130 + $0x8] sm:$0xff]
          %v7133 = vld [vmem:[%s7130 + $0x10] sm:$0xff]
          %v7134 = vld [vmem:[%s7130 + $0x18] sm:$0xff]
          %v7135 = vrot.slane %v7048, 1
          %v7136 = vsel %vm7055, %v7135, 0
          %7138 = vmatprep.subr.mxu0 0.0
          %7139 = vmatpush1.msra.mxu0 %v7131
          %7140 = vmatprep.subr.mxu0 0.0
          %7141 = vmatpush1.msra.mxu0 %v7132
          %7142 = vmatprep.subr.mxu0 0.0
          %7143 = vmatpush1.msra.mxu0 %v7133
          %7144 = vmatprep.subr.mxu0 0.0
          %7145 = vmatpush1.msra.mxu0 %v7134
          %7146 = vmatprep.subr.mxu0 0.0
          %7147 = vmatpush1.msra.mxu0 0.0
          %7148 = vmatprep.subr.mxu0 0.0
          %7149 = vmatpush1.msra.mxu0 0.0
          %7150 = vmatprep.subr.mxu0 0.0
          %7151 = vmatpush1.msra.mxu0 0.0
          %7152 = vmatprep.subr.mxu0 0.0
          %7153 = vmatpush1.msra.mxu0 0.0
          %7154 = vmatprep.subr.mxu0 0.0
          %7155 = vmatpush1.msra.mxu0 0.0
          %7156 = vmatprep.subr.mxu0 0.0
          %7157 = vmatpush1.msra.mxu0 0.0
          %7158 = vmatprep.subr.mxu0 0.0
          %7159 = vmatpush1.msra.mxu0 0.0
          %7160 = vmatprep.subr.mxu0 0.0
          %7161 = vmatpush1.msra.mxu0 0.0
          %7162 = vmatprep.subr.mxu0 0.0
          %7163 = vmatpush1.msra.mxu0 0.0
          %7164 = vmatprep.subr.mxu0 0.0
          %7165 = vmatpush1.msra.mxu0 0.0
          %7166 = vmatprep.subr.mxu0 0.0
          %7167 = vmatpush1.msra.mxu0 0.0
          %7168 = vmatprep.subr.mxu0 0.0
          %7169 = vmatpush1.msra.mxu0 0.0
          %7170 = vmatprep.subr.mxu0 0.0
          %7171 = vmatpush1.msra.mxu0 0.0
          %7172 = vmatprep.subr.mxu0 0.0
          %7173 = vmatpush1.msra.mxu0 0.0
          %7174 = vmatprep.subr.mxu0 0.0
          %7175 = vmatpush1.msra.mxu0 0.0
          %7176 = vmatprep.subr.mxu0 0.0
          %7177 = vmatpush1.msra.mxu0 0.0
          %7178 = vmatprep.subr.mxu0 0.0
          %7179 = vmatpush1.msra.mxu0 0.0
          %7180 = vmatprep.subr.mxu0 0.0
          %7181 = vmatpush1.msra.mxu0 0.0
          %7182 = vmatprep.subr.mxu0 0.0
          %7183 = vmatpush1.msra.mxu0 0.0
          %7184 = vmatprep.subr.mxu0 0.0
          %7185 = vmatpush1.msra.mxu0 0.0
          %7186 = vmatprep.subr.mxu0 0.0
          %7187 = vmatpush1.msra.mxu0 0.0
          %7188 = vmatprep.subr.mxu0 0.0
          %7189 = vmatpush1.msra.mxu0 0.0
          %7190 = vmatprep.subr.mxu0 0.0
          %7191 = vmatpush1.msra.mxu0 0.0
          %7192 = vmatprep.subr.mxu0 0.0
          %7193 = vmatpush1.msra.mxu0 0.0
          %7194 = vmatprep.subr.mxu0 0.0
          %7195 = vmatpush1.msra.mxu0 0.0
          %7196 = vmatprep.subr.mxu0 0.0
          %7197 = vmatpush1.msra.mxu0 0.0
          %7198 = vmatprep.subr.mxu0 0.0
          %7199 = vmatpush1.msra.mxu0 0.0
          %7200 = vmatprep.subr.mxu0 0.0
          %7201 = vmatpush1.msra.mxu0 0.0
          %7202 = vmatprep.mubr.f32.mxu0 0.0
          %7203 = vmatmul.mubr.f32.gmra.mrb[0].mxu0 %v7136
          %v7204 = vpop.f32.mrb[0].mxu0
          %v7205 = vadd.f32 0.0, %v7204
          %v7206 = vpop.f32.mrb[0].mxu0
          %7207 = vdwg.mxu0
          %v7208 = vadd.f32 %v7129, %v7205
          %s7209 = scalar_lea.vmem %s11, 64
          %v7210 = vld [vmem:[%s7209] sm:$0xff]
          %v7211 = vld [vmem:[%s7209 + $0x8] sm:$0xff]
          %v7212 = vld [vmem:[%s7209 + $0x10] sm:$0xff]
          %v7213 = vld [vmem:[%s7209 + $0x18] sm:$0xff]
          %v7214 = vrot.slane %v7048, 2
          %v7215 = vsel %vm7055, %v7214, 0
          %7217 = vmatprep.subr.mxu0 0.0
          %7218 = vmatpush1.msra.mxu0 %v7210
          %7219 = vmatprep.subr.mxu0 0.0
          %7220 = vmatpush1.msra.mxu0 %v7211
          %7221 = vmatprep.subr.mxu0 0.0
          %7222 = vmatpush1.msra.mxu0 %v7212
          %7223 = vmatprep.subr.mxu0 0.0
          %7224 = vmatpush1.msra.mxu0 %v7213
          %7225 = vmatprep.subr.mxu0 0.0
          %7226 = vmatpush1.msra.mxu0 0.0
          %7227 = vmatprep.subr.mxu0 0.0
          %7228 = vmatpush1.msra.mxu0 0.0
          %7229 = vmatprep.subr.mxu0 0.0
          %7230 = vmatpush1.msra.mxu0 0.0
          %7231 = vmatprep.subr.mxu0 0.0
          %7232 = vmatpush1.msra.mxu0 0.0
          %7233 = vmatprep.subr.mxu0 0.0
          %7234 = vmatpush1.msra.mxu0 0.0
          %7235 = vmatprep.subr.mxu0 0.0
          %7236 = vmatpush1.msra.mxu0 0.0
          %7237 = vmatprep.subr.mxu0 0.0
          %7238 = vmatpush1.msra.mxu0 0.0
          %7239 = vmatprep.subr.mxu0 0.0
          %7240 = vmatpush1.msra.mxu0 0.0
          %7241 = vmatprep.subr.mxu0 0.0
          %7242 = vmatpush1.msra.mxu0 0.0
          %7243 = vmatprep.subr.mxu0 0.0
          %7244 = vmatpush1.msra.mxu0 0.0
          %7245 = vmatprep.subr.mxu0 0.0
          %7246 = vmatpush1.msra.mxu0 0.0
          %7247 = vmatprep.subr.mxu0 0.0
          %7248 = vmatpush1.msra.mxu0 0.0
          %7249 = vmatprep.subr.mxu0 0.0
          %7250 = vmatpush1.msra.mxu0 0.0
          %7251 = vmatprep.subr.mxu0 0.0
          %7252 = vmatpush1.msra.mxu0 0.0
          %7253 = vmatprep.subr.mxu0 0.0
          %7254 = vmatpush1.msra.mxu0 0.0
          %7255 = vmatprep.subr.mxu0 0.0
          %7256 = vmatpush1.msra.mxu0 0.0
          %7257 = vmatprep.subr.mxu0 0.0
          %7258 = vmatpush1.msra.mxu0 0.0
          %7259 = vmatprep.subr.mxu0 0.0
          %7260 = vmatpush1.msra.mxu0 0.0
          %7261 = vmatprep.subr.mxu0 0.0
          %7262 = vmatpush1.msra.mxu0 0.0
          %7263 = vmatprep.subr.mxu0 0.0
          %7264 = vmatpush1.msra.mxu0 0.0
          %7265 = vmatprep.subr.mxu0 0.0
          %7266 = vmatpush1.msra.mxu0 0.0
          %7267 = vmatprep.subr.mxu0 0.0
          %7268 = vmatpush1.msra.mxu0 0.0
          %7269 = vmatprep.subr.mxu0 0.0
          %7270 = vmatpush1.msra.mxu0 0.0
          %7271 = vmatprep.subr.mxu0 0.0
          %7272 = vmatpush1.msra.mxu0 0.0
          %7273 = vmatprep.subr.mxu0 0.0
          %7274 = vmatpush1.msra.mxu0 0.0
          %7275 = vmatprep.subr.mxu0 0.0
          %7276 = vmatpush1.msra.mxu0 0.0
          %7277 = vmatprep.subr.mxu0 0.0
          %7278 = vmatpush1.msra.mxu0 0.0
          %7279 = vmatprep.subr.mxu0 0.0
          %7280 = vmatpush1.msra.mxu0 0.0
          %7281 = vmatprep.mubr.f32.mxu0 0.0
          %7282 = vmatmul.mubr.f32.gmra.mrb[0].mxu0 %v7215
          %v7283 = vpop.f32.mrb[0].mxu0
          %v7284 = vadd.f32 0.0, %v7283
          %v7285 = vpop.f32.mrb[0].mxu0
          %7286 = vdwg.mxu0
          %v7287 = vadd.f32 %v7208, %v7284
          %s7288 = scalar_lea.vmem %s11, 96
          %v7289 = vld [vmem:[%s7288] sm:$0xff]
          %v7290 = vld [vmem:[%s7288 + $0x8] sm:$0xff]
          %v7291 = vld [vmem:[%s7288 + $0x10] sm:$0xff]
          %v7292 = vld [vmem:[%s7288 + $0x18] sm:$0xff]
          %v7293 = vrot.slane %v7048, 3
          %v7294 = vsel %vm7055, %v7293, 0
          %7296 = vmatprep.subr.mxu0 0.0
          %7297 = vmatpush1.msra.mxu0 %v7289
          %7298 = vmatprep.subr.mxu0 0.0
          %7299 = vmatpush1.msra.mxu0 %v7290
          %7300 = vmatprep.subr.mxu0 0.0
          %7301 = vmatpush1.msra.mxu0 %v7291
          %7302 = vmatprep.subr.mxu0 0.0
          %7303 = vmatpush1.msra.mxu0 %v7292
          %7304 = vmatprep.subr.mxu0 0.0
          %7305 = vmatpush1.msra.mxu0 0.0
          %7306 = vmatprep.subr.mxu0 0.0
          %7307 = vmatpush1.msra.mxu0 0.0
          %7308 = vmatprep.subr.mxu0 0.0
          %7309 = vmatpush1.msra.mxu0 0.0
          %7310 = vmatprep.subr.mxu0 0.0
          %7311 = vmatpush1.msra.mxu0 0.0
          %7312 = vmatprep.subr.mxu0 0.0
          %7313 = vmatpush1.msra.mxu0 0.0
          %7314 = vmatprep.subr.mxu0 0.0
          %7315 = vmatpush1.msra.mxu0 0.0
          %7316 = vmatprep.subr.mxu0 0.0
          %7317 = vmatpush1.msra.mxu0 0.0
          %7318 = vmatprep.subr.mxu0 0.0
          %7319 = vmatpush1.msra.mxu0 0.0
          %7320 = vmatprep.subr.mxu0 0.0
          %7321 = vmatpush1.msra.mxu0 0.0
          %7322 = vmatprep.subr.mxu0 0.0
          %7323 = vmatpush1.msra.mxu0 0.0
          %7324 = vmatprep.subr.mxu0 0.0
          %7325 = vmatpush1.msra.mxu0 0.0
          %7326 = vmatprep.subr.mxu0 0.0
          %7327 = vmatpush1.msra.mxu0 0.0
          %7328 = vmatprep.subr.mxu0 0.0
          %7329 = vmatpush1.msra.mxu0 0.0
          %7330 = vmatprep.subr.mxu0 0.0
          %7331 = vmatpush1.msra.mxu0 0.0
          %7332 = vmatprep.subr.mxu0 0.0
          %7333 = vmatpush1.msra.mxu0 0.0
          %7334 = vmatprep.subr.mxu0 0.0
          %7335 = vmatpush1.msra.mxu0 0.0
          %7336 = vmatprep.subr.mxu0 0.0
          %7337 = vmatpush1.msra.mxu0 0.0
          %7338 = vmatprep.subr.mxu0 0.0
          %7339 = vmatpush1.msra.mxu0 0.0
          %7340 = vmatprep.subr.mxu0 0.0
          %7341 = vmatpush1.msra.mxu0 0.0
          %7342 = vmatprep.subr.mxu0 0.0
          %7343 = vmatpush1.msra.mxu0 0.0
          %7344 = vmatprep.subr.mxu0 0.0
          %7345 = vmatpush1.msra.mxu0 0.0
          %7346 = vmatprep.subr.mxu0 0.0
          %7347 = vmatpush1.msra.mxu0 0.0
          %7348 = vmatprep.subr.mxu0 0.0
          %7349 = vmatpush1.msra.mxu0 0.0
          %7350 = vmatprep.subr.mxu0 0.0
          %7351 = vmatpush1.msra.mxu0 0.0
          %7352 = vmatprep.subr.mxu0 0.0
          %7353 = vmatpush1.msra.mxu0 0.0
          %7354 = vmatprep.subr.mxu0 0.0
          %7355 = vmatpush1.msra.mxu0 0.0
          %7356 = vmatprep.subr.mxu0 0.0
          %7357 = vmatpush1.msra.mxu0 0.0
          %7358 = vmatprep.subr.mxu0 0.0
          %7359 = vmatpush1.msra.mxu0 0.0
          %7360 = vmatprep.mubr.f32.mxu0 0.0
          %7361 = vmatmul.mubr.f32.gmra.mrb[0].mxu0 %v7294
          %v7362 = vpop.f32.mrb[0].mxu0
          %v7363 = vadd.f32 0.0, %v7362
          %v7364 = vpop.f32.mrb[0].mxu0
          %7365 = vdwg.mxu0
          %v7366 = vadd.f32 %v7287, %v7363
          %s7367 = scalar_lea.vmem %s11, 128
          %v7368 = vld [vmem:[%s7367] sm:$0xff]
          %v7369 = vld [vmem:[%s7367 + $0x8] sm:$0xff]
          %v7370 = vld [vmem:[%s7367 + $0x10] sm:$0xff]
          %v7371 = vld [vmem:[%s7367 + $0x18] sm:$0xff]
          %v7372 = vrot.slane %v7048, 4
          %v7373 = vsel %vm7055, %v7372, 0
          %7375 = vmatprep.subr.mxu0 0.0
          %7376 = vmatpush1.msra.mxu0 %v7368
          %7377 = vmatprep.subr.mxu0 0.0
          %7378 = vmatpush1.msra.mxu0 %v7369
          %7379 = vmatprep.subr.mxu0 0.0
          %7380 = vmatpush1.msra.mxu0 %v7370
          %7381 = vmatprep.subr.mxu0 0.0
          %7382 = vmatpush1.msra.mxu0 %v7371
          %7383 = vmatprep.subr.mxu0 0.0
          %7384 = vmatpush1.msra.mxu0 0.0
          %7385 = vmatprep.subr.mxu0 0.0
          %7386 = vmatpush1.msra.mxu0 0.0
          %7387 = vmatprep.subr.mxu0 0.0
          %7388 = vmatpush1.msra.mxu0 0.0
          %7389 = vmatprep.subr.mxu0 0.0
          %7390 = vmatpush1.msra.mxu0 0.0
          %7391 = vmatprep.subr.mxu0 0.0
          %7392 = vmatpush1.msra.mxu0 0.0
          %7393 = vmatprep.subr.mxu0 0.0
          %7394 = vmatpush1.msra.mxu0 0.0
          %7395 = vmatprep.subr.mxu0 0.0
          %7396 = vmatpush1.msra.mxu0 0.0
          %7397 = vmatprep.subr.mxu0 0.0
          %7398 = vmatpush1.msra.mxu0 0.0
          %7399 = vmatprep.subr.mxu0 0.0
          %7400 = vmatpush1.msra.mxu0 0.0
          %7401 = vmatprep.subr.mxu0 0.0
          %7402 = vmatpush1.msra.mxu0 0.0
          %7403 = vmatprep.subr.mxu0 0.0
          %7404 = vmatpush1.msra.mxu0 0.0
          %7405 = vmatprep.subr.mxu0 0.0
          %7406 = vmatpush1.msra.mxu0 0.0
          %7407 = vmatprep.subr.mxu0 0.0
          %7408 = vmatpush1.msra.mxu0 0.0
          %7409 = vmatprep.subr.mxu0 0.0
          %7410 = vmatpush1.msra.mxu0 0.0
          %7411 = vmatprep.subr.mxu0 0.0
          %7412 = vmatpush1.msra.mxu0 0.0
          %7413 = vmatprep.subr.mxu0 0.0
          %7414 = vmatpush1.msra.mxu0 0.0
          %7415 = vmatprep.subr.mxu0 0.0
          %7416 = vmatpush1.msra.mxu0 0.0
          %7417 = vmatprep.subr.mxu0 0.0
          %7418 = vmatpush1.msra.mxu0 0.0
          %7419 = vmatprep.subr.mxu0 0.0
          %7420 = vmatpush1.msra.mxu0 0.0
          %7421 = vmatprep.subr.mxu0 0.0
          %7422 = vmatpush1.msra.mxu0 0.0
          %7423 = vmatprep.subr.mxu0 0.0
          %7424 = vmatpush1.msra.mxu0 0.0
          %7425 = vmatprep.subr.mxu0 0.0
          %7426 = vmatpush1.msra.mxu0 0.0
          %7427 = vmatprep.subr.mxu0 0.0
          %7428 = vmatpush1.msra.mxu0 0.0
          %7429 = vmatprep.subr.mxu0 0.0
          %7430 = vmatpush1.msra.mxu0 0.0
          %7431 = vmatprep.subr.mxu0 0.0
          %7432 = vmatpush1.msra.mxu0 0.0
          %7433 = vmatprep.subr.mxu0 0.0
          %7434 = vmatpush1.msra.mxu0 0.0
          %7435 = vmatprep.subr.mxu0 0.0
          %7436 = vmatpush1.msra.mxu0 0.0
          %7437 = vmatprep.subr.mxu0 0.0
          %7438 = vmatpush1.msra.mxu0 0.0
          %7439 = vmatprep.mubr.f32.mxu0 0.0
          %7440 = vmatmul.mubr.f32.gmra.mrb[0].mxu0 %v7373
          %v7441 = vpop.f32.mrb[0].mxu0
          %v7442 = vadd.f32 0.0, %v7441
          %v7443 = vpop.f32.mrb[0].mxu0
          %7444 = vdwg.mxu0
          %v7445 = vadd.f32 %v7366, %v7442
          %s7446 = scalar_lea.vmem %s11, 160
          %v7447 = vld [vmem:[%s7446] sm:$0xff]
          %v7448 = vld [vmem:[%s7446 + $0x8] sm:$0xff]
          %v7449 = vld [vmem:[%s7446 + $0x10] sm:$0xff]
          %v7450 = vld [vmem:[%s7446 + $0x18] sm:$0xff]
          %v7451 = vrot.slane %v7048, 5
          %v7452 = vsel %vm7055, %v7451, 0
          %7454 = vmatprep.subr.mxu0 0.0
          %7455 = vmatpush1.msra.mxu0 %v7447
          %7456 = vmatprep.subr.mxu0 0.0
          %7457 = vmatpush1.msra.mxu0 %v7448
          %7458 = vmatprep.subr.mxu0 0.0
          %7459 = vmatpush1.msra.mxu0 %v7449
          %7460 = vmatprep.subr.mxu0 0.0
          %7461 = vmatpush1.msra.mxu0 %v7450
          %7462 = vmatprep.subr.mxu0 0.0
          %7463 = vmatpush1.msra.mxu0 0.0
          %7464 = vmatprep.subr.mxu0 0.0
          %7465 = vmatpush1.msra.mxu0 0.0
          %7466 = vmatprep.subr.mxu0 0.0
          %7467 = vmatpush1.msra.mxu0 0.0
          %7468 = vmatprep.subr.mxu0 0.0
          %7469 = vmatpush1.msra.mxu0 0.0
          %7470 = vmatprep.subr.mxu0 0.0
          %7471 = vmatpush1.msra.mxu0 0.0
          %7472 = vmatprep.subr.mxu0 0.0
          %7473 = vmatpush1.msra.mxu0 0.0
          %7474 = vmatprep.subr.mxu0 0.0
          %7475 = vmatpush1.msra.mxu0 0.0
          %7476 = vmatprep.subr.mxu0 0.0
          %7477 = vmatpush1.msra.mxu0 0.0
          %7478 = vmatprep.subr.mxu0 0.0
          %7479 = vmatpush1.msra.mxu0 0.0
          %7480 = vmatprep.subr.mxu0 0.0
          %7481 = vmatpush1.msra.mxu0 0.0
          %7482 = vmatprep.subr.mxu0 0.0
          %7483 = vmatpush1.msra.mxu0 0.0
          %7484 = vmatprep.subr.mxu0 0.0
          %7485 = vmatpush1.msra.mxu0 0.0
          %7486 = vmatprep.subr.mxu0 0.0
          %7487 = vmatpush1.msra.mxu0 0.0
          %7488 = vmatprep.subr.mxu0 0.0
          %7489 = vmatpush1.msra.mxu0 0.0
          %7490 = vmatprep.subr.mxu0 0.0
          %7491 = vmatpush1.msra.mxu0 0.0
          %7492 = vmatprep.subr.mxu0 0.0
          %7493 = vmatpush1.msra.mxu0 0.0
          %7494 = vmatprep.subr.mxu0 0.0
          %7495 = vmatpush1.msra.mxu0 0.0
          %7496 = vmatprep.subr.mxu0 0.0
          %7497 = vmatpush1.msra.mxu0 0.0
          %7498 = vmatprep.subr.mxu0 0.0
          %7499 = vmatpush1.msra.mxu0 0.0
          %7500 = vmatprep.subr.mxu0 0.0
          %7501 = vmatpush1.msra.mxu0 0.0
          %7502 = vmatprep.subr.mxu0 0.0
          %7503 = vmatpush1.msra.mxu0 0.0
          %7504 = vmatprep.subr.mxu0 0.0
          %7505 = vmatpush1.msra.mxu0 0.0
          %7506 = vmatprep.subr.mxu0 0.0
          %7507 = vmatpush1.msra.mxu0 0.0
          %7508 = vmatprep.subr.mxu0 0.0
          %7509 = vmatpush1.msra.mxu0 0.0
          %7510 = vmatprep.subr.mxu0 0.0
          %7511 = vmatpush1.msra.mxu0 0.0
          %7512 = vmatprep.subr.mxu0 0.0
          %7513 = vmatpush1.msra.mxu0 0.0
          %7514 = vmatprep.subr.mxu0 0.0
          %7515 = vmatpush1.msra.mxu0 0.0
          %7516 = vmatprep.subr.mxu0 0.0
          %7517 = vmatpush1.msra.mxu0 0.0
          %7518 = vmatprep.mubr.f32.mxu0 0.0
          %7519 = vmatmul.mubr.f32.gmra.mrb[0].mxu0 %v7452
          %v7520 = vpop.f32.mrb[0].mxu0
          %v7521 = vadd.f32 0.0, %v7520
          %v7522 = vpop.f32.mrb[0].mxu0
          %7523 = vdwg.mxu0
          %v7524 = vadd.f32 %v7445, %v7521
          %s7525 = scalar_lea.vmem %s11, 192
          %v7526 = vld [vmem:[%s7525] sm:$0xff]
          %v7527 = vld [vmem:[%s7525 + $0x8] sm:$0xff]
          %v7528 = vld [vmem:[%s7525 + $0x10] sm:$0xff]
          %v7529 = vld [vmem:[%s7525 + $0x18] sm:$0xff]
          %v7530 = vrot.slane %v7048, 6
          %v7531 = vsel %vm7055, %v7530, 0
          %7533 = vmatprep.subr.mxu0 0.0
          %7534 = vmatpush1.msra.mxu0 %v7526
          %7535 = vmatprep.subr.mxu0 0.0
          %7536 = vmatpush1.msra.mxu0 %v7527
          %7537 = vmatprep.subr.mxu0 0.0
          %7538 = vmatpush1.msra.mxu0 %v7528
          %7539 = vmatprep.subr.mxu0 0.0
          %7540 = vmatpush1.msra.mxu0 %v7529
          %7541 = vmatprep.subr.mxu0 0.0
          %7542 = vmatpush1.msra.mxu0 0.0
          %7543 = vmatprep.subr.mxu0 0.0
          %7544 = vmatpush1.msra.mxu0 0.0
          %7545 = vmatprep.subr.mxu0 0.0
          %7546 = vmatpush1.msra.mxu0 0.0
          %7547 = vmatprep.subr.mxu0 0.0
          %7548 = vmatpush1.msra.mxu0 0.0
          %7549 = vmatprep.subr.mxu0 0.0
          %7550 = vmatpush1.msra.mxu0 0.0
          %7551 = vmatprep.subr.mxu0 0.0
          %7552 = vmatpush1.msra.mxu0 0.0
          %7553 = vmatprep.subr.mxu0 0.0
          %7554 = vmatpush1.msra.mxu0 0.0
          %7555 = vmatprep.subr.mxu0 0.0
          %7556 = vmatpush1.msra.mxu0 0.0
          %7557 = vmatprep.subr.mxu0 0.0
          %7558 = vmatpush1.msra.mxu0 0.0
          %7559 = vmatprep.subr.mxu0 0.0
          %7560 = vmatpush1.msra.mxu0 0.0
          %7561 = vmatprep.subr.mxu0 0.0
          %7562 = vmatpush1.msra.mxu0 0.0
          %7563 = vmatprep.subr.mxu0 0.0
          %7564 = vmatpush1.msra.mxu0 0.0
          %7565 = vmatprep.subr.mxu0 0.0
          %7566 = vmatpush1.msra.mxu0 0.0
          %7567 = vmatprep.subr.mxu0 0.0
          %7568 = vmatpush1.msra.mxu0 0.0
          %7569 = vmatprep.subr.mxu0 0.0
          %7570 = vmatpush1.msra.mxu0 0.0
          %7571 = vmatprep.subr.mxu0 0.0
          %7572 = vmatpush1.msra.mxu0 0.0
          %7573 = vmatprep.subr.mxu0 0.0
          %7574 = vmatpush1.msra.mxu0 0.0
          %7575 = vmatprep.subr.mxu0 0.0
          %7576 = vmatpush1.msra.mxu0 0.0
          %7577 = vmatprep.subr.mxu0 0.0
          %7578 = vmatpush1.msra.mxu0 0.0
          %7579 = vmatprep.subr.mxu0 0.0
          %7580 = vmatpush1.msra.mxu0 0.0
          %7581 = vmatprep.subr.mxu0 0.0
          %7582 = vmatpush1.msra.mxu0 0.0
          %7583 = vmatprep.subr.mxu0 0.0
          %7584 = vmatpush1.msra.mxu0 0.0
          %7585 = vmatprep.subr.mxu0 0.0
          %7586 = vmatpush1.msra.mxu0 0.0
          %7587 = vmatprep.subr.mxu0 0.0
          %7588 = vmatpush1.msra.mxu0 0.0
          %7589 = vmatprep.subr.mxu0 0.0
          %7590 = vmatpush1.msra.mxu0 0.0
          %7591 = vmatprep.subr.mxu0 0.0
          %7592 = vmatpush1.msra.mxu0 0.0
          %7593 = vmatprep.subr.mxu0 0.0
          %7594 = vmatpush1.msra.mxu0 0.0
          %7595 = vmatprep.subr.mxu0 0.0
          %7596 = vmatpush1.msra.mxu0 0.0
          %7597 = vmatprep.mubr.f32.mxu0 0.0
          %7598 = vmatmul.mubr.f32.gmra.mrb[0].mxu0 %v7531
          %v7599 = vpop.f32.mrb[0].mxu0
          %v7600 = vadd.f32 0.0, %v7599
          %v7601 = vpop.f32.mrb[0].mxu0
          %7602 = vdwg.mxu0
          %v7603 = vadd.f32 %v7524, %v7600
          %s7604 = scalar_lea.vmem %s11, 224
          %v7605 = vld [vmem:[%s7604] sm:$0xff]
          %v7606 = vld [vmem:[%s7604 + $0x8] sm:$0xff]
          %v7607 = vld [vmem:[%s7604 + $0x10] sm:$0xff]
          %v7608 = vld [vmem:[%s7604 + $0x18] sm:$0xff]
          %v7609 = vrot.slane %v7048, 7
          %v7610 = vsel %vm7055, %v7609, 0
          %7612 = vmatprep.subr.mxu0 0.0
          %7613 = vmatpush1.msra.mxu0 %v7605
          %7614 = vmatprep.subr.mxu0 0.0
          %7615 = vmatpush1.msra.mxu0 %v7606
          %7616 = vmatprep.subr.mxu0 0.0
          %7617 = vmatpush1.msra.mxu0 %v7607
          %7618 = vmatprep.subr.mxu0 0.0
          %7619 = vmatpush1.msra.mxu0 %v7608
          %7620 = vmatprep.subr.mxu0 0.0
          %7621 = vmatpush1.msra.mxu0 0.0
          %7622 = vmatprep.subr.mxu0 0.0
          %7623 = vmatpush1.msra.mxu0 0.0
          %7624 = vmatprep.subr.mxu0 0.0
          %7625 = vmatpush1.msra.mxu0 0.0
          %7626 = vmatprep.subr.mxu0 0.0
          %7627 = vmatpush1.msra.mxu0 0.0
          %7628 = vmatprep.subr.mxu0 0.0
          %7629 = vmatpush1.msra.mxu0 0.0
          %7630 = vmatprep.subr.mxu0 0.0
          %7631 = vmatpush1.msra.mxu0 0.0
          %7632 = vmatprep.subr.mxu0 0.0
          %7633 = vmatpush1.msra.mxu0 0.0
          %7634 = vmatprep.subr.mxu0 0.0
          %7635 = vmatpush1.msra.mxu0 0.0
          %7636 = vmatprep.subr.mxu0 0.0
          %7637 = vmatpush1.msra.mxu0 0.0
          %7638 = vmatprep.subr.mxu0 0.0
          %7639 = vmatpush1.msra.mxu0 0.0
          %7640 = vmatprep.subr.mxu0 0.0
          %7641 = vmatpush1.msra.mxu0 0.0
          %7642 = vmatprep.subr.mxu0 0.0
          %7643 = vmatpush1.msra.mxu0 0.0
          %7644 = vmatprep.subr.mxu0 0.0
          %7645 = vmatpush1.msra.mxu0 0.0
          %7646 = vmatprep.subr.mxu0 0.0
          %7647 = vmatpush1.msra.mxu0 0.0
          %7648 = vmatprep.subr.mxu0 0.0
          %7649 = vmatpush1.msra.mxu0 0.0
          %7650 = vmatprep.subr.mxu0 0.0
          %7651 = vmatpush1.msra.mxu0 0.0
          %7652 = vmatprep.subr.mxu0 0.0
          %7653 = vmatpush1.msra.mxu0 0.0
          %7654 = vmatprep.subr.mxu0 0.0
          %7655 = vmatpush1.msra.mxu0 0.0
          %7656 = vmatprep.subr.mxu0 0.0
          %7657 = vmatpush1.msra.mxu0 0.0
          %7658 = vmatprep.subr.mxu0 0.0
          %7659 = vmatpush1.msra.mxu0 0.0
          %7660 = vmatprep.subr.mxu0 0.0
          %7661 = vmatpush1.msra.mxu0 0.0
          %7662 = vmatprep.subr.mxu0 0.0
          %7663 = vmatpush1.msra.mxu0 0.0
          %7664 = vmatprep.subr.mxu0 0.0
          %7665 = vmatpush1.msra.mxu0 0.0
          %7666 = vmatprep.subr.mxu0 0.0
          %7667 = vmatpush1.msra.mxu0 0.0
          %7668 = vmatprep.subr.mxu0 0.0
          %7669 = vmatpush1.msra.mxu0 0.0
          %7670 = vmatprep.subr.mxu0 0.0
          %7671 = vmatpush1.msra.mxu0 0.0
          %7672 = vmatprep.subr.mxu0 0.0
          %7673 = vmatpush1.msra.mxu0 0.0
          %7674 = vmatprep.subr.mxu0 0.0
          %7675 = vmatpush1.msra.mxu0 0.0
          %7676 = vmatprep.mubr.f32.mxu0 0.0
          %7677 = vmatmul.mubr.f32.gmra.mrb[0].mxu0 %v7610
          %v7678 = vpop.f32.mrb[0].mxu0
          %v7679 = vadd.f32 0.0, %v7678
          %v7680 = vpop.f32.mrb[0].mxu0
          %7681 = vdwg.mxu0
          %v7682 = vadd.f32 %v7603, %v7679
          %s7683 = scalar_lea.vmem %s11, 256
          %v7684 = vld [vmem:[%s7683] sm:$0xff]
          %v7685 = vld [vmem:[%s7683 + $0x8] sm:$0xff]
          %v7686 = vld [vmem:[%s7683 + $0x10] sm:$0xff]
          %v7687 = vld [vmem:[%s7683 + $0x18] sm:$0xff]
          %v7689 = vsel %vm7055, %v7049, 0
          %7691 = vmatprep.subr.mxu0 0.0
          %7692 = vmatpush1.msra.mxu0 %v7684
          %7693 = vmatprep.subr.mxu0 0.0
          %7694 = vmatpush1.msra.mxu0 %v7685
          %7695 = vmatprep.subr.mxu0 0.0
          %7696 = vmatpush1.msra.mxu0 %v7686
          %7697 = vmatprep.subr.mxu0 0.0
          %7698 = vmatpush1.msra.mxu0 %v7687
          %7699 = vmatprep.subr.mxu0 0.0
          %7700 = vmatpush1.msra.mxu0 0.0
          %7701 = vmatprep.subr.mxu0 0.0
          %7702 = vmatpush1.msra.mxu0 0.0
          %7703 = vmatprep.subr.mxu0 0.0
          %7704 = vmatpush1.msra.mxu0 0.0
          %7705 = vmatprep.subr.mxu0 0.0
          %7706 = vmatpush1.msra.mxu0 0.0
          %7707 = vmatprep.subr.mxu0 0.0
          %7708 = vmatpush1.msra.mxu0 0.0
          %7709 = vmatprep.subr.mxu0 0.0
          %7710 = vmatpush1.msra.mxu0 0.0
          %7711 = vmatprep.subr.mxu0 0.0
          %7712 = vmatpush1.msra.mxu0 0.0
          %7713 = vmatprep.subr.mxu0 0.0
          %7714 = vmatpush1.msra.mxu0 0.0
          %7715 = vmatprep.subr.mxu0 0.0
          %7716 = vmatpush1.msra.mxu0 0.0
          %7717 = vmatprep.subr.mxu0 0.0
          %7718 = vmatpush1.msra.mxu0 0.0
          %7719 = vmatprep.subr.mxu0 0.0
          %7720 = vmatpush1.msra.mxu0 0.0
          %7721 = vmatprep.subr.mxu0 0.0
          %7722 = vmatpush1.msra.mxu0 0.0
          %7723 = vmatprep.subr.mxu0 0.0
          %7724 = vmatpush1.msra.mxu0 0.0
          %7725 = vmatprep.subr.mxu0 0.0
          %7726 = vmatpush1.msra.mxu0 0.0
          %7727 = vmatprep.subr.mxu0 0.0
          %7728 = vmatpush1.msra.mxu0 0.0
          %7729 = vmatprep.subr.mxu0 0.0
          %7730 = vmatpush1.msra.mxu0 0.0
          %7731 = vmatprep.subr.mxu0 0.0
          %7732 = vmatpush1.msra.mxu0 0.0
          %7733 = vmatprep.subr.mxu0 0.0
          %7734 = vmatpush1.msra.mxu0 0.0
          %7735 = vmatprep.subr.mxu0 0.0
          %7736 = vmatpush1.msra.mxu0 0.0
          %7737 = vmatprep.subr.mxu0 0.0
          %7738 = vmatpush1.msra.mxu0 0.0
          %7739 = vmatprep.subr.mxu0 0.0
          %7740 = vmatpush1.msra.mxu0 0.0
          %7741 = vmatprep.subr.mxu0 0.0
          %7742 = vmatpush1.msra.mxu0 0.0
          %7743 = vmatprep.subr.mxu0 0.0
          %7744 = vmatpush1.msra.mxu0 0.0
          %7745 = vmatprep.subr.mxu0 0.0
          %7746 = vmatpush1.msra.mxu0 0.0
          %7747 = vmatprep.subr.mxu0 0.0
          %7748 = vmatpush1.msra.mxu0 0.0
          %7749 = vmatprep.subr.mxu0 0.0
          %7750 = vmatpush1.msra.mxu0 0.0
          %7751 = vmatprep.subr.mxu0 0.0
          %7752 = vmatpush1.msra.mxu0 0.0
          %7753 = vmatprep.subr.mxu0 0.0
          %7754 = vmatpush1.msra.mxu0 0.0
          %7755 = vmatprep.mubr.f32.mxu0 0.0
          %7756 = vmatmul.mubr.f32.gmra.mrb[0].mxu0 %v7689
          %v7757 = vpop.f32.mrb[0].mxu0
          %v7758 = vadd.f32 0.0, %v7757
          %v7759 = vpop.f32.mrb[0].mxu0
          %7760 = vdwg.mxu0
          %v7761 = vadd.f32 %v7682, %v7758
          %v7762 = vmax.f32 %v7761, 0.0
          %v7763 = vld [vmem:[%s13] sm:$0xff]
          %v7764 = vld [vmem:[%s13 + $0x8] sm:$0xff]
          %v7765 = vld [vmem:[%s13 + $0x10] sm:$0xff]
          %v7766 = vld [vmem:[%s13 + $0x18] sm:$0xff]
          %v7767 = vld [vmem:[%s13 + $0x20] sm:$0xff]
          %v7768 = vld [vmem:[%s13 + $0x28] sm:$0xff]
          %v7769 = vld [vmem:[%s13 + $0x30] sm:$0xff]
          %v7770 = vld [vmem:[%s13 + $0x38] sm:$0xff]
          %v7771 = vld [vmem:[%s13 + $0x40] sm:$0xff]
          %v7772 = vld [vmem:[%s13 + $0x48] sm:$0xff]
          %v7773 = vld [vmem:[%s13 + $0x50] sm:$0xff]
          %v7774 = vld [vmem:[%s13 + $0x58] sm:$0xff]
          %v7775 = vld [vmem:[%s13 + $0x60] sm:$0xff]
          %v7776 = vld [vmem:[%s13 + $0x68] sm:$0xff]
          %v7777 = vld [vmem:[%s13 + $0x70] sm:$0xff]
          %v7778 = vld [vmem:[%s13 + $0x78] sm:$0xff]
          %v7779 = vld [vmem:[%s14] sm:$0x1]
          %7780 = vmatprep.subr.mxu0 0.0
          %7781 = vmatpush1.msra.mxu0 %v7763
          %7782 = vmatprep.subr.mxu0 0.0
          %7783 = vmatpush1.msra.mxu0 %v7764
          %7784 = vmatprep.subr.mxu0 0.0
          %7785 = vmatpush1.msra.mxu0 %v7765
          %7786 = vmatprep.subr.mxu0 0.0
          %7787 = vmatpush1.msra.mxu0 %v7766
          %7788 = vmatprep.subr.mxu0 0.0
          %7789 = vmatpush1.msra.mxu0 %v7767
          %7790 = vmatprep.subr.mxu0 0.0
          %7791 = vmatpush1.msra.mxu0 %v7768
          %7792 = vmatprep.subr.mxu0 0.0
          %7793 = vmatpush1.msra.mxu0 %v7769
          %7794 = vmatprep.subr.mxu0 0.0
          %7795 = vmatpush1.msra.mxu0 %v7770
          %7796 = vmatprep.subr.mxu0 0.0
          %7797 = vmatpush1.msra.mxu0 %v7771
          %7798 = vmatprep.subr.mxu0 0.0
          %7799 = vmatpush1.msra.mxu0 %v7772
          %7800 = vmatprep.subr.mxu0 0.0
          %7801 = vmatpush1.msra.mxu0 %v7773
          %7802 = vmatprep.subr.mxu0 0.0
          %7803 = vmatpush1.msra.mxu0 %v7774
          %7804 = vmatprep.subr.mxu0 0.0
          %7805 = vmatpush1.msra.mxu0 %v7775
          %7806 = vmatprep.subr.mxu0 0.0
          %7807 = vmatpush1.msra.mxu0 %v7776
          %7808 = vmatprep.subr.mxu0 0.0
          %7809 = vmatpush1.msra.mxu0 %v7777
          %7810 = vmatprep.subr.mxu0 0.0
          %7811 = vmatpush1.msra.mxu0 %v7778
          %7812 = vmatprep.subr.mxu0 0.0
          %7813 = vmatpush1.msra.mxu0 0.0
          %7814 = vmatprep.subr.mxu0 0.0
          %7815 = vmatpush1.msra.mxu0 0.0
          %7816 = vmatprep.subr.mxu0 0.0
          %7817 = vmatpush1.msra.mxu0 0.0
          %7818 = vmatprep.subr.mxu0 0.0
          %7819 = vmatpush1.msra.mxu0 0.0
          %7820 = vmatprep.subr.mxu0 0.0
          %7821 = vmatpush1.msra.mxu0 0.0
          %7822 = vmatprep.subr.mxu0 0.0
          %7823 = vmatpush1.msra.mxu0 0.0
          %7824 = vmatprep.subr.mxu0 0.0
          %7825 = vmatpush1.msra.mxu0 0.0
          %7826 = vmatprep.subr.mxu0 0.0
          %7827 = vmatpush1.msra.mxu0 0.0
          %7828 = vmatprep.subr.mxu0 0.0
          %7829 = vmatpush1.msra.mxu0 0.0
          %7830 = vmatprep.subr.mxu0 0.0
          %7831 = vmatpush1.msra.mxu0 0.0
          %7832 = vmatprep.subr.mxu0 0.0
          %7833 = vmatpush1.msra.mxu0 0.0
          %7834 = vmatprep.subr.mxu0 0.0
          %7835 = vmatpush1.msra.mxu0 0.0
          %7836 = vmatprep.subr.mxu0 0.0
          %7837 = vmatpush1.msra.mxu0 0.0
          %7838 = vmatprep.subr.mxu0 0.0
          %7839 = vmatpush1.msra.mxu0 0.0
          %7840 = vmatprep.subr.mxu0 0.0
          %7841 = vmatpush1.msra.mxu0 0.0
          %7842 = vmatprep.subr.mxu0 0.0
          %7843 = vmatpush1.msra.mxu0 0.0
          %7844 = vmatprep.mubr.f32.mxu0 0.0
          %7845 = vmatmul.mubr.f32.gmra.mrb[0].mxu0 %v7762
          %v7846 = vpop.f32.mrb[0].mxu0
          %v7847 = vadd.f32 %v7779, %v7846
          %v7848 = vpop.f32.mrb[0].mxu0
          %7849 = vdwg.mxu0
          %7850 = vst [vmem:[%s498] sm:$0x1] %v7847
        $region92: #{encoder_forward.1} parent=79 // pred_fallthru
          _
        %s7851 = sand.u32 %s369, 1
        %s7852 = scalar_lea.sflag [#allocation5], %s7851
        %s7853 = sand.u32 %s369, 1
        %s7854 = scalar_lea.vmem [#allocation4], %s7853
        // Predicated region
        $region97: #{encoder_forward.1} parent=79 // pred_check
          %p7855 = pneg %p379
        $region98: #{encoder_forward.1} parent=79 // pred_check_branch
          %7857 = sbr.rel (%p7855) target = $region100
        $region99: #{encoder_forward.1} parent=79 // pred_region
          %s7859 = ssub.s32 16, 16
          %7860 = vsyncadd %s7852, %s7859
          %s7861 = smul.addr %s34, 16
          %s7862 = scalar_lea.hbm %s15, %s7861
          %s7864 = sshll.u32 %s7854, 4
          %s7865 = int_to_ptr.vmem [resolvable:$true] %s7864
          %7867 = dma.vmem_to_hbm [thread:$0]  %s7865, 16, %s7862, %s7852
        $region100: #{encoder_forward.1} parent=79 // pred_fallthru
          _
      $region80: #{encoder_forward.1} parent=5 // pred_fallthru
        _
      %p7868 = scmp.le.s32.totalorder 2, %s24
      // Predicated region
      $region101: #{encoder_forward.1} parent=5 // pred_check
        %p7869 = pneg %p7868
      $region102: #{encoder_forward.1} parent=5 // pred_check_branch
        %7871 = sbr.rel (%p7869) target = $region104
      $region103: #{encoder_forward.1} parent=5 // pred_region
        %s7872 = ssub.s32 %s24, 2
        // Predicated region
        $region105: #{encoder_forward.1} parent=103 // pred_check
          %p7873 = pneg %p385
        $region106: #{encoder_forward.1} parent=103 // pred_check_branch
          %7875 = sbr.rel (%p7873) target = $region108
        $region107: #{encoder_forward.1} parent=103 // pred_region
          %s7876 = sand.u32 %s370, 1
          %s7877 = scalar_lea.sflag [#allocation5], %s7876
          %s7878 = sand.u32 %s370, 1
          %s7879 = scalar_lea.vmem [#allocation4], %s7878
          %7880 = dma.done %s7877, 16
        $region108: #{encoder_forward.1} parent=103 // pred_fallthru
          _
      $region104: #{encoder_forward.1} parent=5 // pred_fallthru
        _
    $region6: #{encoder_forward.1} parent=1 // loop_footer
      %s28 = sadd.s32 1, %s24
    $region7: #{encoder_forward.1} parent=1 // loop_footer_branch
      %23 = sbr.rel target = $region3
    $region8: #{encoder_forward.1} parent=1 // loop_exit
      _
    %7881 = vsyncpa [#allocation5], 1
    %s7882 = scalar_lea.sflag [#allocation5], 1
    %7883 = vsyncpa %s7882, 1

</llo_original>
